<compile_context>
chip_gen: v7x
topology: tpu7x:2x2x1
jax: 0.10.0
libtpu: 0.0.40
codegen_flags: <defaults>
</compile_context>

<pallas_src>
import math
import jax
import jax.numpy as jnp
import numpy as np
from jax.experimental import pallas as pl
from jax.experimental.pallas import tpu as pltpu

# ---- small, self-consistent hyperparameters -------------------------------
B = 2
NX = 32                       # x tokens (injector query / extractor feat)
HS = WS = 4                   # xs token grid (ConvFFN DWConv needs a square grid)
NS = HS * WS                  # xs tokens = 16
D_MODEL = 96                  # divisible by both head counts
HEADS_INJ = 8                 # Injector n_heads
HEADS_EXT = 6                 # Extractor num_heads
HIDDEN = int(D_MODEL * 0.2)   # ConvFFN hidden_features = 19
LN_EPS = 1e-6
N_EXT = 2                     # extractor + 1 extra extractor


# ---- shared math (used identically by the kernel and the pure-JAX reference) ----
def _layer_norm(x, w, b):
    mu = jnp.mean(x, axis=-1, keepdims=True)
    xc = x - mu
    var = jnp.mean(xc * xc, axis=-1, keepdims=True)
    return xc * jax.lax.rsqrt(var + LN_EPS) * w + b


def _gelu_tanh(x):
    c = math.sqrt(2.0 / math.pi)
    return 0.5 * x * (1.0 + jnp.tanh(c * (x + 0.044715 * x * x * x)))


def _mm(a, b):
    # bf16 operands, f32 accumulate: native single-pass MXU path on all generations.
    return jnp.dot(a.astype(jnp.bfloat16), b.astype(jnp.bfloat16),
                   preferred_element_type=jnp.float32)


# ---- in-kernel building blocks ---------------------------------------------
def _mha(qn, fn, num_heads, wq, bq, wkv, bkv, wo, bo):
    """LN'd query (Nq,E) x LN'd feat (Nf,E) -> attention output (Nq,E)."""
    E = qn.shape[-1]
    hd = E // num_heads
    scale = 1.0 / math.sqrt(hd)
    qf = _mm(qn, wq) + bq                     # (Nq, E)   full-width Q projection
    kvf = _mm(fn, wkv) + bkv                  # (Nf, 2E)  fused K|V projection
    kf = kvf[:, :E]
    vf = kvf[:, E:]
    ctxs = []
    for h in range(num_heads):                # per-head score/context on lane slices
        qh = qf[:, h * hd:(h + 1) * hd]
        kh = kf[:, h * hd:(h + 1) * hd]
        vh = vf[:, h * hd:(h + 1) * hd]
        s = jax.lax.dot_general(qh.astype(jnp.bfloat16), kh.astype(jnp.bfloat16),
                                (((1,), (1,)), ((), ())),
                                preferred_element_type=jnp.float32) * scale
        s = s - jnp.max(s, axis=-1, keepdims=True)
        p = jnp.exp(s)
        p = p * pl.reciprocal(jnp.sum(p, axis=-1, keepdims=True), approx=False)
        ctxs.append(_mm(p, vh))               # (Nq, hd)
    ctx = jnp.concatenate(ctxs, axis=-1)      # (Nq, E)
    return _mm(ctx, wo) + bo


def _conv_ffn(xn, w1, b1, w_dw, b_dw, w2, b2):
    """LN'd xs (NS,E) -> fc1 -> depthwise 3x3 over (HS,WS) grid -> GELU -> fc2."""
    hid = w1.shape[-1]
    h1 = _mm(xn, w1) + b1                     # (NS, hid)
    pad = WS + 1                              # covers all offsets |di*WS + dj| <= WS+1
    zpad = jnp.zeros((pad, hid), jnp.float32)
    hpad = jnp.concatenate([zpad, h1, zpad], axis=0)
    col = jax.lax.broadcasted_iota(jnp.int32, (NS, 1), 0) % WS
    acc = jnp.zeros((NS, hid), jnp.float32)
    k = 0
    for di in (-1, 0, 1):
        for dj in (-1, 0, 1):
            start = pad + di * WS + dj
            window = hpad[start:start + NS, :]
            valid = jnp.logical_and(col + dj >= 0, col + dj < WS)
            acc = acc + window * valid.astype(jnp.float32) * w_dw[k:k + 1, :]
            k += 1
    acc = acc + b_dw
    return _mm(_gelu_tanh(acc), w2) + b2


# ---- the single fused kernel ------------------------------------------------
def fused_kernel(x_ref, xs_ref,
                 # injector
                 i_lnq_w, i_lnq_b, i_lnf_w, i_lnf_b,
                 i_wq, i_bq, i_wkv, i_bkv, i_wo, i_bo, i_gamma,
                 # extractors (stacked on a leading axis of N_EXT)
                 e_lnq_w, e_lnq_b, e_lnf_w, e_lnf_b,
                 e_wq, e_bq, e_wkv, e_bkv, e_wo, e_bo,
                 e_fln_w, e_fln_b, e_w1, e_b1, e_wdw, e_bdw, e_w2, e_b2,
                 # outputs
                 x_out_ref, xs_out_ref):
    x = x_ref[0]                              # (NX, E)
    xs = xs_ref[0]                            # (NS, E)

    # ---- Injector: x = x + gamma * MHA(LN(x), LN(xs), LN(xs)) ----
    qn = _layer_norm(x, i_lnq_w[...], i_lnq_b[...])
    fn = _layer_norm(xs, i_lnf_w[...], i_lnf_b[...])
    attn = _mha(qn, fn, HEADS_INJ,
                i_wq[...], i_bq[...], i_wkv[...], i_bkv[...], i_wo[...], i_bo[...])
    x = x + i_gamma[...] * attn
    x_out_ref[0] = x.astype(x_out_ref.dtype)
    # TODO(synk): external backbone `blocks` applied to x here -> identity.

    # ---- Extractor + extra extractor ----
    for i in range(N_EXT):
        qn = _layer_norm(xs, e_lnq_w[i], e_lnq_b[i])
        fn = _layer_norm(x, e_lnf_w[i], e_lnf_b[i])
        xs = xs + _mha(qn, fn, HEADS_EXT,
                       e_wq[i], e_bq[i], e_wkv[i], e_bkv[i], e_wo[i], e_bo[i])
        xn = _layer_norm(xs, e_fln_w[i], e_fln_b[i])
        xs = xs + _conv_ffn(xn, e_w1[i], e_b1[i], e_wdw[i], e_bdw[i],
                            e_w2[i], e_b2[i])
    xs_out_ref[0] = xs.astype(xs_out_ref.dtype)


# ---- wrapper ----------------------------------------------------------------
def _rep_spec(a):
    nd = a.ndim
    return pl.BlockSpec(a.shape, lambda b, _nd=nd: (0,) * _nd)


def interaction_block(x, xs, inj_p, ext_ps):
    Bn, Nq, E = x.shape
    Ns = xs.shape[1]
    HID = ext_ps[0]["ffn"]["w1"].shape[1]

    def attn_pack(p):
        return dict(
            lnq_w=p["ln_q_w"].reshape(1, E), lnq_b=p["ln_q_b"].reshape(1, E),
            lnf_w=p["ln_f_w"].reshape(1, E), lnf_b=p["ln_f_b"].reshape(1, E),
            wq=p["wq"], bq=p["bq"].reshape(1, E),
            wkv=jnp.concatenate([p["wk"], p["wv"]], axis=1),          # (E, 2E)
            bkv=jnp.concatenate([p["bk"], p["bv"]]).reshape(1, 2 * E),
            wo=p["wo"], bo=p["bo"].reshape(1, E))

    inj = attn_pack(inj_p)
    inj_gamma = inj_p["gamma"].reshape(1, E)

    ea = [attn_pack(ep["attn"]) for ep in ext_ps]
    ef = [ep["ffn"] for ep in ext_ps]

    def stack(key):
        return jnp.stack([a[key] for a in ea])

    def stackf(key, shape=None):
        return jnp.stack([f[key] if shape is None else f[key].reshape(shape)
                          for f in ef])

    param_args = (
        inj["lnq_w"], inj["lnq_b"], inj["lnf_w"], inj["lnf_b"],
        inj["wq"], inj["bq"], inj["wkv"], inj["bkv"], inj["wo"], inj["bo"], inj_gamma,
        stack("lnq_w"), stack("lnq_b"), stack("lnf_w"), stack("lnf_b"),
        stack("wq"), stack("bq"), stack("wkv"), stack("bkv"), stack("wo"), stack("bo"),
        stackf("ln_w", (1, E)), stackf("ln_b", (1, E)),
        stackf("w1"), stackf("b1", (1, HID)),
        stackf("w_dw"), stackf("b_dw", (1, HID)),
        stackf("w2"), stackf("b2", (1, E)),
    )
    args = (x, xs) + param_args

    in_specs = [pl.BlockSpec((1, Nq, E), lambda b: (b, 0, 0)),
                pl.BlockSpec((1, Ns, E), lambda b: (b, 0, 0))]
    in_specs += [_rep_spec(a) for a in param_args]

    # Cost estimate for the fused block (advisory).
    def attn_flops(nq, nf):
        return 4 * nq * E * E + 4 * nf * E * E + 4 * nq * nf * E
    ffn_flops = 2 * Ns * (E * HID + 9 * HID + HID * E)
    flops = Bn * (attn_flops(Nq, Ns) + N_EXT * (attn_flops(Ns, Nq) + ffn_flops))
    transc = Bn * (HEADS_INJ * Nq * Ns + N_EXT * (HEADS_EXT * Ns * Nq + Ns * HID))
    nbytes = 4 * (2 * Bn * Nq * E + 2 * Bn * Ns * E
                  + sum(int(np.prod(a.shape)) for a in param_args))
    cost = pl.CostEstimate(flops=int(flops), transcendentals=int(transc),
                           bytes_accessed=int(nbytes))

    x_out, xs_out = pl.pallas_call(
        fused_kernel,
        grid=(Bn,),
        in_specs=in_specs,
        out_specs=(pl.BlockSpec((1, Nq, E), lambda b: (b, 0, 0)),
                   pl.BlockSpec((1, Ns, E), lambda b: (b, 0, 0))),
        out_shape=(jax.ShapeDtypeStruct((Bn, Nq, E), jnp.float32),
                   jax.ShapeDtypeStruct((Bn, Ns, E), jnp.float32)),
        compiler_params=pltpu.CompilerParams(dimension_semantics=("parallel",)),
        cost_estimate=cost,
    )(*args)
    return x_out, xs_out


# ---- pure-JAX reference (same math, no Pallas) ------------------------------
def attn_residual_ref(q_tok, f_tok, p, num_heads):
    E = q_tok.shape[-1]
    hd = E // num_heads
    qn = _layer_norm(q_tok, p["ln_q_w"], p["ln_q_b"])
    fn = _layer_norm(f_tok, p["ln_f_w"], p["ln_f_b"])
    q = _mm(qn, p["wq"]) + p["bq"]
    k = _mm(fn, p["wk"]) + p["bk"]
    v = _mm(fn, p["wv"]) + p["bv"]
    Bn, Nq, _ = q.shape
    Nf = k.shape[1]
    q = q.reshape(Bn, Nq, num_heads, hd).transpose(0, 2, 1, 3)
    k = k.reshape(Bn, Nf, num_heads, hd).transpose(0, 2, 1, 3)
    v = v.reshape(Bn, Nf, num_heads, hd).transpose(0, 2, 1, 3)
    s = jnp.einsum("bhqd,bhkd->bhqk", q.astype(jnp.bfloat16), k.astype(jnp.bfloat16),
                   preferred_element_type=jnp.float32) * (1.0 / math.sqrt(hd))
    s = s - jnp.max(s, axis=-1, keepdims=True)
    pr = jnp.exp(s)
    pr = pr / jnp.sum(pr, axis=-1, keepdims=True)
    ctx = jnp.einsum("bhqk,bhkd->bhqd", pr.astype(jnp.bfloat16), v.astype(jnp.bfloat16),
                     preferred_element_type=jnp.float32)
    ctx = ctx.transpose(0, 2, 1, 3).reshape(Bn, Nq, E)
    attn = _mm(ctx, p["wo"]) + p["bo"]
    g = p["gamma"] if "gamma" in p else 1.0
    return q_tok + g * attn


def conv_ffn_residual_ref(x_tok, p, hs, ws):
    Bn, N, E = x_tok.shape
    HID = p["w1"].shape[1]
    xn = _layer_norm(x_tok, p["ln_w"], p["ln_b"])
    h = _mm(xn, p["w1"]) + p["b1"]
    hc = h.reshape(Bn, hs, ws, HID).transpose(0, 3, 1, 2)          # NCHW
    w_conv = p["w_dw"].T.reshape(HID, 3, 3)[:, None, :, :]          # (HID,1,3,3)
    conv = jax.lax.conv_general_dilated(
        hc, w_conv, window_strides=(1, 1), padding=((1, 1), (1, 1)),
        dimension_numbers=("NCHW", "OIHW", "NCHW"), feature_group_count=HID,
        precision=jax.lax.Precision.HIGHEST)
    conv = conv + p["b_dw"][None, :, None, None]
    h2 = conv.transpose(0, 2, 3, 1).reshape(Bn, N, HID)
    y = _mm(_gelu_tanh(h2), p["w2"]) + p["b2"]
    return x_tok + y


def interaction_block_ref(x, xs, inj_p, ext_ps):
    x = attn_residual_ref(x, xs, inj_p, HEADS_INJ)
    for ep in ext_ps:
        xs = attn_residual_ref(xs, x, ep["attn"], HEADS_EXT)
        xs = conv_ffn_residual_ref(xs, ep["ffn"], HS, WS)
    return x, xs


# ---- deterministic parameter init (mirrors module shapes) -------------------
def init_attn_params(key, E):
    ks = jax.random.split(key, 8)
    s = 1.0 / math.sqrt(E)
    return dict(
        ln_q_w=jnp.ones((E,), jnp.float32), ln_q_b=jnp.zeros((E,), jnp.float32),
        ln_f_w=jnp.ones((E,), jnp.float32), ln_f_b=jnp.zeros((E,), jnp.float32),
        wq=jax.random.normal(ks[0], (E, E), jnp.float32) * s,
        bq=jax.random.normal(ks[1], (E,), jnp.float32) * 0.02,
        wk=jax.random.normal(ks[2], (E, E), jnp.float32) * s,
        bk=jax.random.normal(ks[3], (E,), jnp.float32) * 0.02,
        wv=jax.random.normal(ks[4], (E, E), jnp.float32) * s,
        bv=jax.random.normal(ks[5], (E,), jnp.float32) * 0.02,
        wo=jax.random.normal(ks[6], (E, E), jnp.float32) * s,
        bo=jax.random.normal(ks[7], (E,), jnp.float32) * 0.02,
    )


def init_ffn_params(key, E, HID):
    ks = jax.random.split(key, 6)
    return dict(
        ln_w=jnp.ones((E,), jnp.float32), ln_b=jnp.zeros((E,), jnp.float32),
        w1=jax.random.normal(ks[0], (E, HID), jnp.float32) / math.sqrt(E),
        b1=jax.random.normal(ks[1], (HID,), jnp.float32) * 0.02,
        # depthwise 3x3 weight stored as (9, HID): row a*3+b holds w[:, 0, a, b]
        w_dw=jax.random.normal(ks[2], (9, HID), jnp.float32) / 3.0,
        b_dw=jax.random.normal(ks[3], (HID,), jnp.float32) * 0.02,
        w2=jax.random.normal(ks[4], (HID, E), jnp.float32) / math.sqrt(HID),
        b2=jax.random.normal(ks[5], (E,), jnp.float32) * 0.02,
    )


if __name__ == "__main__":
    key = jax.random.PRNGKey(0)
    k_x, k_xs, k_inj, k_g, k_e1, k_e2 = jax.random.split(key, 6)

    x = jax.random.normal(k_x, (B, NX, D_MODEL), jnp.float32)
    xs = jax.random.normal(k_xs, (B, NS, D_MODEL), jnp.float32)

    # Injector gamma is init to 0 in the module; use small nonzero values so the
    # injector attention path is actually exercised numerically.
    inj_gamma = 0.1 * jax.random.normal(k_g, (D_MODEL,), jnp.float32)
    inj_p = dict(init_attn_params(k_inj, D_MODEL), gamma=inj_gamma)
    ext_ps = []
    for ke in (k_e1, k_e2):
        ka, kf = jax.random.split(ke)
        ext_ps.append(dict(attn=init_attn_params(ka, D_MODEL),
                           ffn=init_ffn_params(kf, D_MODEL, HIDDEN)))

    fwd = jax.jit(interaction_block)
    x_out, xs_out = fwd(x, xs, inj_p, ext_ps)
    x_out = jax.block_until_ready(x_out)
    xs_out = jax.block_until_ready(xs_out)

    x_ref, xs_ref = interaction_block_ref(x, xs, inj_p, ext_ps)

    assert x_out.shape == (B, NX, D_MODEL) and xs_out.shape == (B, NS, D_MODEL)
    assert np.all(np.isfinite(np.asarray(x_out)))
    assert np.all(np.isfinite(np.asarray(xs_out)))
    np.testing.assert_allclose(np.asarray(x_out), np.asarray(x_ref), atol=2e-3, rtol=2e-3)
    np.testing.assert_allclose(np.asarray(xs_out), np.asarray(xs_ref), atol=2e-3, rtol=2e-3)

    print("KERNEL_OK")
</pallas_src>

<mosaic_0001>
module attributes {stable_mosaic.version = 11 : i64} {
  func.func @fused_kernel(%arg0: i32, %arg1: memref<1x32x96xf32, #tpu.memory_space<vmem>>, %arg2: memref<1x16x96xf32, #tpu.memory_space<vmem>>, %arg3: memref<1x96xf32, #tpu.memory_space<vmem>>, %arg4: memref<1x96xf32, #tpu.memory_space<vmem>>, %arg5: memref<1x96xf32, #tpu.memory_space<vmem>>, %arg6: memref<1x96xf32, #tpu.memory_space<vmem>>, %arg7: memref<96x96xf32, #tpu.memory_space<vmem>>, %arg8: memref<1x96xf32, #tpu.memory_space<vmem>>, %arg9: memref<96x192xf32, #tpu.memory_space<vmem>>, %arg10: memref<1x192xf32, #tpu.memory_space<vmem>>, %arg11: memref<96x96xf32, #tpu.memory_space<vmem>>, %arg12: memref<1x96xf32, #tpu.memory_space<vmem>>, %arg13: memref<1x96xf32, #tpu.memory_space<vmem>>, %arg14: memref<2x1x96xf32, #tpu.memory_space<vmem>>, %arg15: memref<2x1x96xf32, #tpu.memory_space<vmem>>, %arg16: memref<2x1x96xf32, #tpu.memory_space<vmem>>, %arg17: memref<2x1x96xf32, #tpu.memory_space<vmem>>, %arg18: memref<2x96x96xf32, #tpu.memory_space<vmem>>, %arg19: memref<2x1x96xf32, #tpu.memory_space<vmem>>, %arg20: memref<2x96x192xf32, #tpu.memory_space<vmem>>, %arg21: memref<2x1x192xf32, #tpu.memory_space<vmem>>, %arg22: memref<2x96x96xf32, #tpu.memory_space<vmem>>, %arg23: memref<2x1x96xf32, #tpu.memory_space<vmem>>, %arg24: memref<2x1x96xf32, #tpu.memory_space<vmem>>, %arg25: memref<2x1x96xf32, #tpu.memory_space<vmem>>, %arg26: memref<2x96x19xf32, #tpu.memory_space<vmem>>, %arg27: memref<2x1x19xf32, #tpu.memory_space<vmem>>, %arg28: memref<2x9x19xf32, #tpu.memory_space<vmem>>, %arg29: memref<2x1x19xf32, #tpu.memory_space<vmem>>, %arg30: memref<2x19x96xf32, #tpu.memory_space<vmem>>, %arg31: memref<2x1x96xf32, #tpu.memory_space<vmem>>, %arg32: memref<1x32x96xf32, #tpu.memory_space<vmem>>, %arg33: memref<1x16x96xf32, #tpu.memory_space<vmem>>) attributes {dimension_semantics = [#tpu.dimension_semantics<parallel>], iteration_bounds = array<i64: 2>, scalar_prefetch = 0 : i64, scratch_operands = 0 : i64, tpu.core_type = #tpu.core_type<tc>, window_params = [{transform_indices = @transform_0, window_bounds = array<i64: 1, 32, 96>}, {transform_indices = @transform_1, window_bounds = array<i64: 1, 16, 96>}, {pipeline_mode = #tpu.pipeline_mode<synchronous>, transform_indices = @transform_2, window_bounds = array<i64: 1, 96>}, {pipeline_mode = #tpu.pipeline_mode<synchronous>, transform_indices = @transform_3, window_bounds = array<i64: 1, 96>}, {pipeline_mode = #tpu.pipeline_mode<synchronous>, transform_indices = @transform_4, window_bounds = array<i64: 1, 96>}, {pipeline_mode = #tpu.pipeline_mode<synchronous>, transform_indices = @transform_5, window_bounds = array<i64: 1, 96>}, {pipeline_mode = #tpu.pipeline_mode<synchronous>, transform_indices = @transform_6, window_bounds = array<i64: 96, 96>}, {pipeline_mode = #tpu.pipeline_mode<synchronous>, transform_indices = @transform_7, window_bounds = array<i64: 1, 96>}, {pipeline_mode = #tpu.pipeline_mode<synchronous>, transform_indices = @transform_8, window_bounds = array<i64: 96, 192>}, {pipeline_mode = #tpu.pipeline_mode<synchronous>, transform_indices = @transform_9, window_bounds = array<i64: 1, 192>}, {pipeline_mode = #tpu.pipeline_mode<synchronous>, transform_indices = @transform_10, window_bounds = array<i64: 96, 96>}, {pipeline_mode = #tpu.pipeline_mode<synchronous>, transform_indices = @transform_11, window_bounds = array<i64: 1, 96>}, {pipeline_mode = #tpu.pipeline_mode<synchronous>, transform_indices = @transform_12, window_bounds = array<i64: 1, 96>}, {pipeline_mode = #tpu.pipeline_mode<synchronous>, transform_indices = @transform_13, window_bounds = array<i64: 2, 1, 96>}, {pipeline_mode = #tpu.pipeline_mode<synchronous>, transform_indices = @transform_14, window_bounds = array<i64: 2, 1, 96>}, {pipeline_mode = #tpu.pipeline_mode<synchronous>, transform_indices = @transform_15, window_bounds = array<i64: 2, 1, 96>}, {pipeline_mode = #tpu.pipeline_mode<synchronous>, transform_indices = @transform_16, window_bounds = array<i64: 2, 1, 96>}, {pipeline_mode = #tpu.pipeline_mode<synchronous>, transform_indices = @transform_17, window_bounds = array<i64: 2, 96, 96>}, {pipeline_mode = #tpu.pipeline_mode<synchronous>, transform_indices = @transform_18, window_bounds = array<i64: 2, 1, 96>}, {pipeline_mode = #tpu.pipeline_mode<synchronous>, transform_indices = @transform_19, window_bounds = array<i64: 2, 96, 192>}, {pipeline_mode = #tpu.pipeline_mode<synchronous>, transform_indices = @transform_20, window_bounds = array<i64: 2, 1, 192>}, {pipeline_mode = #tpu.pipeline_mode<synchronous>, transform_indices = @transform_21, window_bounds = array<i64: 2, 96, 96>}, {pipeline_mode = #tpu.pipeline_mode<synchronous>, transform_indices = @transform_22, window_bounds = array<i64: 2, 1, 96>}, {pipeline_mode = #tpu.pipeline_mode<synchronous>, transform_indices = @transform_23, window_bounds = array<i64: 2, 1, 96>}, {pipeline_mode = #tpu.pipeline_mode<synchronous>, transform_indices = @transform_24, window_bounds = array<i64: 2, 1, 96>}, {pipeline_mode = #tpu.pipeline_mode<synchronous>, transform_indices = @transform_25, window_bounds = array<i64: 2, 96, 19>}, {pipeline_mode = #tpu.pipeline_mode<synchronous>, transform_indices = @transform_26, window_bounds = array<i64: 2, 1, 19>}, {pipeline_mode = #tpu.pipeline_mode<synchronous>, transform_indices = @transform_27, window_bounds = array<i64: 2, 9, 19>}, {pipeline_mode = #tpu.pipeline_mode<synchronous>, transform_indices = @transform_28, window_bounds = array<i64: 2, 1, 19>}, {pipeline_mode = #tpu.pipeline_mode<synchronous>, transform_indices = @transform_29, window_bounds = array<i64: 2, 19, 96>}, {pipeline_mode = #tpu.pipeline_mode<synchronous>, transform_indices = @transform_30, window_bounds = array<i64: 2, 1, 96>}, {transform_indices = @transform_31, window_bounds = array<i64: 1, 32, 96>}, {transform_indices = @transform_32, window_bounds = array<i64: 1, 16, 96>}]} {
    %c0 = arith.constant 0 : index
    %c0_0 = arith.constant 0 : index
    %c0_1 = arith.constant 0 : index
    %0 = vector.load %arg1[%c0, %c0_0, %c0_1] : memref<1x32x96xf32, #tpu.memory_space<vmem>>, vector<1x32x96xf32>
    %1 = vector.shape_cast %0 : vector<1x32x96xf32> to vector<32x96xf32>
    %c0_2 = arith.constant 0 : index
    %c0_3 = arith.constant 0 : index
    %c0_4 = arith.constant 0 : index
    %2 = vector.load %arg2[%c0_2, %c0_3, %c0_4] : memref<1x16x96xf32, #tpu.memory_space<vmem>>, vector<1x16x96xf32>
    %3 = vector.shape_cast %2 : vector<1x16x96xf32> to vector<16x96xf32>
    %c0_5 = arith.constant 0 : index
    %c0_6 = arith.constant 0 : index
    %4 = vector.load %arg3[%c0_5, %c0_6] : memref<1x96xf32, #tpu.memory_space<vmem>>, vector<1x96xf32>
    %c0_7 = arith.constant 0 : index
    %c0_8 = arith.constant 0 : index
    %5 = vector.load %arg4[%c0_7, %c0_8] : memref<1x96xf32, #tpu.memory_space<vmem>>, vector<1x96xf32>
    %cst = arith.constant dense<0.000000e+00> : vector<32xf32>
    %6 = vector.multi_reduction <add>, %1, %cst [1] : vector<32x96xf32> to vector<32xf32>
    %7 = vector.shape_cast %6 : vector<32xf32> to vector<32x1xf32>
    %cst_9 = arith.constant 9.600000e+01 : f32
    %8 = vector.broadcast %cst_9 : f32 to vector<32x1xf32>
    %9 = arith.divf %7, %8 : vector<32x1xf32>
    %10 = vector.broadcast %9 : vector<32x1xf32> to vector<32x96xf32>
    %11 = arith.subf %1, %10 : vector<32x96xf32>
    %12 = arith.mulf %11, %11 : vector<32x96xf32>
    %cst_10 = arith.constant dense<0.000000e+00> : vector<32xf32>
    %13 = vector.multi_reduction <add>, %12, %cst_10 [1] : vector<32x96xf32> to vector<32xf32>
    %14 = vector.shape_cast %13 : vector<32xf32> to vector<32x1xf32>
    %cst_11 = arith.constant 9.600000e+01 : f32
    %15 = vector.broadcast %cst_11 : f32 to vector<32x1xf32>
    %16 = arith.divf %14, %15 : vector<32x1xf32>
    %cst_12 = arith.constant 9.99999997E-7 : f32
    %17 = vector.broadcast %cst_12 : f32 to vector<32x1xf32>
    %18 = arith.addf %16, %17 : vector<32x1xf32>
    %19 = math.rsqrt %18 : vector<32x1xf32>
    %20 = vector.broadcast %19 : vector<32x1xf32> to vector<32x96xf32>
    %21 = arith.mulf %11, %20 : vector<32x96xf32>
    %22 = vector.broadcast %4 : vector<1x96xf32> to vector<32x96xf32>
    %23 = arith.mulf %21, %22 : vector<32x96xf32>
    %24 = vector.broadcast %5 : vector<1x96xf32> to vector<32x96xf32>
    %25 = arith.addf %23, %24 : vector<32x96xf32>
    %c0_13 = arith.constant 0 : index
    %c0_14 = arith.constant 0 : index
    %26 = vector.load %arg5[%c0_13, %c0_14] : memref<1x96xf32, #tpu.memory_space<vmem>>, vector<1x96xf32>
    %c0_15 = arith.constant 0 : index
    %c0_16 = arith.constant 0 : index
    %27 = vector.load %arg6[%c0_15, %c0_16] : memref<1x96xf32, #tpu.memory_space<vmem>>, vector<1x96xf32>
    %cst_17 = arith.constant dense<0.000000e+00> : vector<16xf32>
    %28 = vector.multi_reduction <add>, %3, %cst_17 [1] : vector<16x96xf32> to vector<16xf32>
    %29 = vector.shape_cast %28 : vector<16xf32> to vector<16x1xf32>
    %cst_18 = arith.constant 9.600000e+01 : f32
    %30 = vector.broadcast %cst_18 : f32 to vector<16x1xf32>
    %31 = arith.divf %29, %30 : vector<16x1xf32>
    %32 = vector.broadcast %31 : vector<16x1xf32> to vector<16x96xf32>
    %33 = arith.subf %3, %32 : vector<16x96xf32>
    %34 = arith.mulf %33, %33 : vector<16x96xf32>
    %cst_19 = arith.constant dense<0.000000e+00> : vector<16xf32>
    %35 = vector.multi_reduction <add>, %34, %cst_19 [1] : vector<16x96xf32> to vector<16xf32>
    %36 = vector.shape_cast %35 : vector<16xf32> to vector<16x1xf32>
    %cst_20 = arith.constant 9.600000e+01 : f32
    %37 = vector.broadcast %cst_20 : f32 to vector<16x1xf32>
    %38 = arith.divf %36, %37 : vector<16x1xf32>
    %cst_21 = arith.constant 9.99999997E-7 : f32
    %39 = vector.broadcast %cst_21 : f32 to vector<16x1xf32>
    %40 = arith.addf %38, %39 : vector<16x1xf32>
    %41 = math.rsqrt %40 : vector<16x1xf32>
    %42 = vector.broadcast %41 : vector<16x1xf32> to vector<16x96xf32>
    %43 = arith.mulf %33, %42 : vector<16x96xf32>
    %44 = vector.broadcast %26 : vector<1x96xf32> to vector<16x96xf32>
    %45 = arith.mulf %43, %44 : vector<16x96xf32>
    %46 = vector.broadcast %27 : vector<1x96xf32> to vector<16x96xf32>
    %47 = arith.addf %45, %46 : vector<16x96xf32>
    %c0_22 = arith.constant 0 : index
    %c0_23 = arith.constant 0 : index
    %48 = vector.load %arg7[%c0_22, %c0_23] : memref<96x96xf32, #tpu.memory_space<vmem>>, vector<96x96xf32>
    %c0_24 = arith.constant 0 : index
    %c0_25 = arith.constant 0 : index
    %49 = vector.load %arg8[%c0_24, %c0_25] : memref<1x96xf32, #tpu.memory_space<vmem>>, vector<1x96xf32>
    %c0_26 = arith.constant 0 : index
    %c0_27 = arith.constant 0 : index
    %50 = vector.load %arg9[%c0_26, %c0_27] : memref<96x192xf32, #tpu.memory_space<vmem>>, vector<96x192xf32>
    %c0_28 = arith.constant 0 : index
    %c0_29 = arith.constant 0 : index
    %51 = vector.load %arg10[%c0_28, %c0_29] : memref<1x192xf32, #tpu.memory_space<vmem>>, vector<1x192xf32>
    %c0_30 = arith.constant 0 : index
    %c0_31 = arith.constant 0 : index
    %52 = vector.load %arg11[%c0_30, %c0_31] : memref<96x96xf32, #tpu.memory_space<vmem>>, vector<96x96xf32>
    %c0_32 = arith.constant 0 : index
    %c0_33 = arith.constant 0 : index
    %53 = vector.load %arg12[%c0_32, %c0_33] : memref<1x96xf32, #tpu.memory_space<vmem>>, vector<1x96xf32>
    %54 = arith.truncf %25 : vector<32x96xf32> to vector<32x96xbf16>
    %55 = arith.truncf %48 : vector<96x96xf32> to vector<96x96xbf16>
    %cst_34 = arith.constant dense<0.000000e+00> : vector<32x96xf32>
    %56 = tpu.matmul %54, %55, %cst_34 {dimension_numbers = #tpu.dot_dimension_numbers<[1], [0], [0], [1], [0, 0, 1, 1], [], []>} : vector<32x96xbf16>, vector<96x96xbf16>, vector<32x96xf32> -> vector<32x96xf32>
    %57 = vector.broadcast %49 : vector<1x96xf32> to vector<32x96xf32>
    %58 = arith.addf %56, %57 : vector<32x96xf32>
    %59 = arith.truncf %47 : vector<16x96xf32> to vector<16x96xbf16>
    %60 = arith.truncf %50 : vector<96x192xf32> to vector<96x192xbf16>
    %cst_35 = arith.constant dense<0.000000e+00> : vector<16x192xf32>
    %61 = tpu.matmul %59, %60, %cst_35 {dimension_numbers = #tpu.dot_dimension_numbers<[1], [0], [0], [1], [0, 0, 1, 1], [], []>} : vector<16x96xbf16>, vector<96x192xbf16>, vector<16x192xf32> -> vector<16x192xf32>
    %62 = vector.broadcast %51 : vector<1x192xf32> to vector<16x192xf32>
    %63 = arith.addf %61, %62 : vector<16x192xf32>
    %64 = vector.extract_strided_slice %63 {offsets = [0, 0], sizes = [16, 96], strides = [1, 1]} : vector<16x192xf32> to vector<16x96xf32>
    %65 = vector.extract_strided_slice %63 {offsets = [0, 96], sizes = [16, 96], strides = [1, 1]} : vector<16x192xf32> to vector<16x96xf32>
    %66 = vector.extract_strided_slice %58 {offsets = [0, 0], sizes = [32, 12], strides = [1, 1]} : vector<32x96xf32> to vector<32x12xf32>
    %67 = vector.extract_strided_slice %64 {offsets = [0, 0], sizes = [16, 12], strides = [1, 1]} : vector<16x96xf32> to vector<16x12xf32>
    %68 = vector.extract_strided_slice %65 {offsets = [0, 0], sizes = [16, 12], strides = [1, 1]} : vector<16x96xf32> to vector<16x12xf32>
    %69 = arith.truncf %66 : vector<32x12xf32> to vector<32x12xbf16>
    %70 = arith.truncf %67 : vector<16x12xf32> to vector<16x12xbf16>
    %cst_36 = arith.constant dense<0.000000e+00> : vector<32x16xf32>
    %71 = tpu.matmul %69, %70, %cst_36 {dimension_numbers = #tpu.dot_dimension_numbers<[1], [1], [0], [0], [0, 0, 1, 0], [], []>} : vector<32x12xbf16>, vector<16x12xbf16>, vector<32x16xf32> -> vector<32x16xf32>
    %cst_37 = arith.constant 0.288675129 : f32
    %72 = vector.broadcast %cst_37 : f32 to vector<32x16xf32>
    %73 = arith.mulf %71, %72 : vector<32x16xf32>
    %cst_38 = arith.constant dense<0xFF800000> : vector<32xf32>
    %74 = vector.multi_reduction <maximumf>, %73, %cst_38 [1] : vector<32x16xf32> to vector<32xf32>
    %75 = vector.shape_cast %74 : vector<32xf32> to vector<32x1xf32>
    %76 = vector.broadcast %75 : vector<32x1xf32> to vector<32x16xf32>
    %77 = arith.subf %73, %76 : vector<32x16xf32>
    %78 = math.exp %77 : vector<32x16xf32>
    %cst_39 = arith.constant dense<0.000000e+00> : vector<32xf32>
    %79 = vector.multi_reduction <add>, %78, %cst_39 [1] : vector<32x16xf32> to vector<32xf32>
    %80 = vector.shape_cast %79 : vector<32xf32> to vector<32x1xf32>
    %81 = tpu.reciprocal %80 : vector<32x1xf32> -> vector<32x1xf32>
    %82 = vector.broadcast %81 : vector<32x1xf32> to vector<32x16xf32>
    %83 = arith.mulf %78, %82 : vector<32x16xf32>
    %84 = arith.truncf %83 : vector<32x16xf32> to vector<32x16xbf16>
    %85 = arith.truncf %68 : vector<16x12xf32> to vector<16x12xbf16>
    %cst_40 = arith.constant dense<0.000000e+00> : vector<32x12xf32>
    %86 = tpu.matmul %84, %85, %cst_40 {dimension_numbers = #tpu.dot_dimension_numbers<[1], [0], [0], [1], [0, 0, 1, 1], [], []>} : vector<32x16xbf16>, vector<16x12xbf16>, vector<32x12xf32> -> vector<32x12xf32>
    %87 = vector.extract_strided_slice %58 {offsets = [0, 12], sizes = [32, 12], strides = [1, 1]} : vector<32x96xf32> to vector<32x12xf32>
    %88 = vector.extract_strided_slice %64 {offsets = [0, 12], sizes = [16, 12], strides = [1, 1]} : vector<16x96xf32> to vector<16x12xf32>
    %89 = vector.extract_strided_slice %65 {offsets = [0, 12], sizes = [16, 12], strides = [1, 1]} : vector<16x96xf32> to vector<16x12xf32>
    %90 = arith.truncf %87 : vector<32x12xf32> to vector<32x12xbf16>
    %91 = arith.truncf %88 : vector<16x12xf32> to vector<16x12xbf16>
    %cst_41 = arith.constant dense<0.000000e+00> : vector<32x16xf32>
    %92 = tpu.matmul %90, %91, %cst_41 {dimension_numbers = #tpu.dot_dimension_numbers<[1], [1], [0], [0], [0, 0, 1, 0], [], []>} : vector<32x12xbf16>, vector<16x12xbf16>, vector<32x16xf32> -> vector<32x16xf32>
    %cst_42 = arith.constant 0.288675129 : f32
    %93 = vector.broadcast %cst_42 : f32 to vector<32x16xf32>
    %94 = arith.mulf %92, %93 : vector<32x16xf32>
    %cst_43 = arith.constant dense<0xFF800000> : vector<32xf32>
    %95 = vector.multi_reduction <maximumf>, %94, %cst_43 [1] : vector<32x16xf32> to vector<32xf32>
    %96 = vector.shape_cast %95 : vector<32xf32> to vector<32x1xf32>
    %97 = vector.broadcast %96 : vector<32x1xf32> to vector<32x16xf32>
    %98 = arith.subf %94, %97 : vector<32x16xf32>
    %99 = math.exp %98 : vector<32x16xf32>
    %cst_44 = arith.constant dense<0.000000e+00> : vector<32xf32>
    %100 = vector.multi_reduction <add>, %99, %cst_44 [1] : vector<32x16xf32> to vector<32xf32>
    %101 = vector.shape_cast %100 : vector<32xf32> to vector<32x1xf32>
    %102 = tpu.reciprocal %101 : vector<32x1xf32> -> vector<32x1xf32>
    %103 = vector.broadcast %102 : vector<32x1xf32> to vector<32x16xf32>
    %104 = arith.mulf %99, %103 : vector<32x16xf32>
    %105 = arith.truncf %104 : vector<32x16xf32> to vector<32x16xbf16>
    %106 = arith.truncf %89 : vector<16x12xf32> to vector<16x12xbf16>
    %cst_45 = arith.constant dense<0.000000e+00> : vector<32x12xf32>
    %107 = tpu.matmul %105, %106, %cst_45 {dimension_numbers = #tpu.dot_dimension_numbers<[1], [0], [0], [1], [0, 0, 1, 1], [], []>} : vector<32x16xbf16>, vector<16x12xbf16>, vector<32x12xf32> -> vector<32x12xf32>
    %108 = vector.extract_strided_slice %58 {offsets = [0, 24], sizes = [32, 12], strides = [1, 1]} : vector<32x96xf32> to vector<32x12xf32>
    %109 = vector.extract_strided_slice %64 {offsets = [0, 24], sizes = [16, 12], strides = [1, 1]} : vector<16x96xf32> to vector<16x12xf32>
    %110 = vector.extract_strided_slice %65 {offsets = [0, 24], sizes = [16, 12], strides = [1, 1]} : vector<16x96xf32> to vector<16x12xf32>
    %111 = arith.truncf %108 : vector<32x12xf32> to vector<32x12xbf16>
    %112 = arith.truncf %109 : vector<16x12xf32> to vector<16x12xbf16>
    %cst_46 = arith.constant dense<0.000000e+00> : vector<32x16xf32>
    %113 = tpu.matmul %111, %112, %cst_46 {dimension_numbers = #tpu.dot_dimension_numbers<[1], [1], [0], [0], [0, 0, 1, 0], [], []>} : vector<32x12xbf16>, vector<16x12xbf16>, vector<32x16xf32> -> vector<32x16xf32>
    %cst_47 = arith.constant 0.288675129 : f32
    %114 = vector.broadcast %cst_47 : f32 to vector<32x16xf32>
    %115 = arith.mulf %113, %114 : vector<32x16xf32>
    %cst_48 = arith.constant dense<0xFF800000> : vector<32xf32>
    %116 = vector.multi_reduction <maximumf>, %115, %cst_48 [1] : vector<32x16xf32> to vector<32xf32>
    %117 = vector.shape_cast %116 : vector<32xf32> to vector<32x1xf32>
    %118 = vector.broadcast %117 : vector<32x1xf32> to vector<32x16xf32>
    %119 = arith.subf %115, %118 : vector<32x16xf32>
    %120 = math.exp %119 : vector<32x16xf32>
    %cst_49 = arith.constant dense<0.000000e+00> : vector<32xf32>
    %121 = vector.multi_reduction <add>, %120, %cst_49 [1] : vector<32x16xf32> to vector<32xf32>
    %122 = vector.shape_cast %121 : vector<32xf32> to vector<32x1xf32>
    %123 = tpu.reciprocal %122 : vector<32x1xf32> -> vector<32x1xf32>
    %124 = vector.broadcast %123 : vector<32x1xf32> to vector<32x16xf32>
    %125 = arith.mulf %120, %124 : vector<32x16xf32>
    %126 = arith.truncf %125 : vector<32x16xf32> to vector<32x16xbf16>
    %127 = arith.truncf %110 : vector<16x12xf32> to vector<16x12xbf16>
    %cst_50 = arith.constant dense<0.000000e+00> : vector<32x12xf32>
    %128 = tpu.matmul %126, %127, %cst_50 {dimension_numbers = #tpu.dot_dimension_numbers<[1], [0], [0], [1], [0, 0, 1, 1], [], []>} : vector<32x16xbf16>, vector<16x12xbf16>, vector<32x12xf32> -> vector<32x12xf32>
    %129 = vector.extract_strided_slice %58 {offsets = [0, 36], sizes = [32, 12], strides = [1, 1]} : vector<32x96xf32> to vector<32x12xf32>
    %130 = vector.extract_strided_slice %64 {offsets = [0, 36], sizes = [16, 12], strides = [1, 1]} : vector<16x96xf32> to vector<16x12xf32>
    %131 = vector.extract_strided_slice %65 {offsets = [0, 36], sizes = [16, 12], strides = [1, 1]} : vector<16x96xf32> to vector<16x12xf32>
    %132 = arith.truncf %129 : vector<32x12xf32> to vector<32x12xbf16>
    %133 = arith.truncf %130 : vector<16x12xf32> to vector<16x12xbf16>
    %cst_51 = arith.constant dense<0.000000e+00> : vector<32x16xf32>
    %134 = tpu.matmul %132, %133, %cst_51 {dimension_numbers = #tpu.dot_dimension_numbers<[1], [1], [0], [0], [0, 0, 1, 0], [], []>} : vector<32x12xbf16>, vector<16x12xbf16>, vector<32x16xf32> -> vector<32x16xf32>
    %cst_52 = arith.constant 0.288675129 : f32
    %135 = vector.broadcast %cst_52 : f32 to vector<32x16xf32>
    %136 = arith.mulf %134, %135 : vector<32x16xf32>
    %cst_53 = arith.constant dense<0xFF800000> : vector<32xf32>
    %137 = vector.multi_reduction <maximumf>, %136, %cst_53 [1] : vector<32x16xf32> to vector<32xf32>
    %138 = vector.shape_cast %137 : vector<32xf32> to vector<32x1xf32>
    %139 = vector.broadcast %138 : vector<32x1xf32> to vector<32x16xf32>
    %140 = arith.subf %136, %139 : vector<32x16xf32>
    %141 = math.exp %140 : vector<32x16xf32>
    %cst_54 = arith.constant dense<0.000000e+00> : vector<32xf32>
    %142 = vector.multi_reduction <add>, %141, %cst_54 [1] : vector<32x16xf32> to vector<32xf32>
    %143 = vector.shape_cast %142 : vector<32xf32> to vector<32x1xf32>
    %144 = tpu.reciprocal %143 : vector<32x1xf32> -> vector<32x1xf32>
    %145 = vector.broadcast %144 : vector<32x1xf32> to vector<32x16xf32>
    %146 = arith.mulf %141, %145 : vector<32x16xf32>
    %147 = arith.truncf %146 : vector<32x16xf32> to vector<32x16xbf16>
    %148 = arith.truncf %131 : vector<16x12xf32> to vector<16x12xbf16>
    %cst_55 = arith.constant dense<0.000000e+00> : vector<32x12xf32>
    %149 = tpu.matmul %147, %148, %cst_55 {dimension_numbers = #tpu.dot_dimension_numbers<[1], [0], [0], [1], [0, 0, 1, 1], [], []>} : vector<32x16xbf16>, vector<16x12xbf16>, vector<32x12xf32> -> vector<32x12xf32>
    %150 = vector.extract_strided_slice %58 {offsets = [0, 48], sizes = [32, 12], strides = [1, 1]} : vector<32x96xf32> to vector<32x12xf32>
    %151 = vector.extract_strided_slice %64 {offsets = [0, 48], sizes = [16, 12], strides = [1, 1]} : vector<16x96xf32> to vector<16x12xf32>
    %152 = vector.extract_strided_slice %65 {offsets = [0, 48], sizes = [16, 12], strides = [1, 1]} : vector<16x96xf32> to vector<16x12xf32>
    %153 = arith.truncf %150 : vector<32x12xf32> to vector<32x12xbf16>
    %154 = arith.truncf %151 : vector<16x12xf32> to vector<16x12xbf16>
    %cst_56 = arith.constant dense<0.000000e+00> : vector<32x16xf32>
    %155 = tpu.matmul %153, %154, %cst_56 {dimension_numbers = #tpu.dot_dimension_numbers<[1], [1], [0], [0], [0, 0, 1, 0], [], []>} : vector<32x12xbf16>, vector<16x12xbf16>, vector<32x16xf32> -> vector<32x16xf32>
    %cst_57 = arith.constant 0.288675129 : f32
    %156 = vector.broadcast %cst_57 : f32 to vector<32x16xf32>
    %157 = arith.mulf %155, %156 : vector<32x16xf32>
    %cst_58 = arith.constant dense<0xFF800000> : vector<32xf32>
    %158 = vector.multi_reduction <maximumf>, %157, %cst_58 [1] : vector<32x16xf32> to vector<32xf32>
    %159 = vector.shape_cast %158 : vector<32xf32> to vector<32x1xf32>
    %160 = vector.broadcast %159 : vector<32x1xf32> to vector<32x16xf32>
    %161 = arith.subf %157, %160 : vector<32x16xf32>
    %162 = math.exp %161 : vector<32x16xf32>
    %cst_59 = arith.constant dense<0.000000e+00> : vector<32xf32>
    %163 = vector.multi_reduction <add>, %162, %cst_59 [1] : vector<32x16xf32> to vector<32xf32>
    %164 = vector.shape_cast %163 : vector<32xf32> to vector<32x1xf32>
    %165 = tpu.reciprocal %164 : vector<32x1xf32> -> vector<32x1xf32>
    %166 = vector.broadcast %165 : vector<32x1xf32> to vector<32x16xf32>
    %167 = arith.mulf %162, %166 : vector<32x16xf32>
    %168 = arith.truncf %167 : vector<32x16xf32> to vector<32x16xbf16>
    %169 = arith.truncf %152 : vector<16x12xf32> to vector<16x12xbf16>
    %cst_60 = arith.constant dense<0.000000e+00> : vector<32x12xf32>
    %170 = tpu.matmul %168, %169, %cst_60 {dimension_numbers = #tpu.dot_dimension_numbers<[1], [0], [0], [1], [0, 0, 1, 1], [], []>} : vector<32x16xbf16>, vector<16x12xbf16>, vector<32x12xf32> -> vector<32x12xf32>
    %171 = vector.extract_strided_slice %58 {offsets = [0, 60], sizes = [32, 12], strides = [1, 1]} : vector<32x96xf32> to vector<32x12xf32>
    %172 = vector.extract_strided_slice %64 {offsets = [0, 60], sizes = [16, 12], strides = [1, 1]} : vector<16x96xf32> to vector<16x12xf32>
    %173 = vector.extract_strided_slice %65 {offsets = [0, 60], sizes = [16, 12], strides = [1, 1]} : vector<16x96xf32> to vector<16x12xf32>
    %174 = arith.truncf %171 : vector<32x12xf32> to vector<32x12xbf16>
    %175 = arith.truncf %172 : vector<16x12xf32> to vector<16x12xbf16>
    %cst_61 = arith.constant dense<0.000000e+00> : vector<32x16xf32>
    %176 = tpu.matmul %174, %175, %cst_61 {dimension_numbers = #tpu.dot_dimension_numbers<[1], [1], [0], [0], [0, 0, 1, 0], [], []>} : vector<32x12xbf16>, vector<16x12xbf16>, vector<32x16xf32> -> vector<32x16xf32>
    %cst_62 = arith.constant 0.288675129 : f32
    %177 = vector.broadcast %cst_62 : f32 to vector<32x16xf32>
    %178 = arith.mulf %176, %177 : vector<32x16xf32>
    %cst_63 = arith.constant dense<0xFF800000> : vector<32xf32>
    %179 = vector.multi_reduction <maximumf>, %178, %cst_63 [1] : vector<32x16xf32> to vector<32xf32>
    %180 = vector.shape_cast %179 : vector<32xf32> to vector<32x1xf32>
    %181 = vector.broadcast %180 : vector<32x1xf32> to vector<32x16xf32>
    %182 = arith.subf %178, %181 : vector<32x16xf32>
    %183 = math.exp %182 : vector<32x16xf32>
    %cst_64 = arith.constant dense<0.000000e+00> : vector<32xf32>
    %184 = vector.multi_reduction <add>, %183, %cst_64 [1] : vector<32x16xf32> to vector<32xf32>
    %185 = vector.shape_cast %184 : vector<32xf32> to vector<32x1xf32>
    %186 = tpu.reciprocal %185 : vector<32x1xf32> -> vector<32x1xf32>
    %187 = vector.broadcast %186 : vector<32x1xf32> to vector<32x16xf32>
    %188 = arith.mulf %183, %187 : vector<32x16xf32>
    %189 = arith.truncf %188 : vector<32x16xf32> to vector<32x16xbf16>
    %190 = arith.truncf %173 : vector<16x12xf32> to vector<16x12xbf16>
    %cst_65 = arith.constant dense<0.000000e+00> : vector<32x12xf32>
    %191 = tpu.matmul %189, %190, %cst_65 {dimension_numbers = #tpu.dot_dimension_numbers<[1], [0], [0], [1], [0, 0, 1, 1], [], []>} : vector<32x16xbf16>, vector<16x12xbf16>, vector<32x12xf32> -> vector<32x12xf32>
    %192 = vector.extract_strided_slice %58 {offsets = [0, 72], sizes = [32, 12], strides = [1, 1]} : vector<32x96xf32> to vector<32x12xf32>
    %193 = vector.extract_strided_slice %64 {offsets = [0, 72], sizes = [16, 12], strides = [1, 1]} : vector<16x96xf32> to vector<16x12xf32>
    %194 = vector.extract_strided_slice %65 {offsets = [0, 72], sizes = [16, 12], strides = [1, 1]} : vector<16x96xf32> to vector<16x12xf32>
    %195 = arith.truncf %192 : vector<32x12xf32> to vector<32x12xbf16>
    %196 = arith.truncf %193 : vector<16x12xf32> to vector<16x12xbf16>
    %cst_66 = arith.constant dense<0.000000e+00> : vector<32x16xf32>
    %197 = tpu.matmul %195, %196, %cst_66 {dimension_numbers = #tpu.dot_dimension_numbers<[1], [1], [0], [0], [0, 0, 1, 0], [], []>} : vector<32x12xbf16>, vector<16x12xbf16>, vector<32x16xf32> -> vector<32x16xf32>
    %cst_67 = arith.constant 0.288675129 : f32
    %198 = vector.broadcast %cst_67 : f32 to vector<32x16xf32>
    %199 = arith.mulf %197, %198 : vector<32x16xf32>
    %cst_68 = arith.constant dense<0xFF800000> : vector<32xf32>
    %200 = vector.multi_reduction <maximumf>, %199, %cst_68 [1] : vector<32x16xf32> to vector<32xf32>
    %201 = vector.shape_cast %200 : vector<32xf32> to vector<32x1xf32>
    %202 = vector.broadcast %201 : vector<32x1xf32> to vector<32x16xf32>
    %203 = arith.subf %199, %202 : vector<32x16xf32>
    %204 = math.exp %203 : vector<32x16xf32>
    %cst_69 = arith.constant dense<0.000000e+00> : vector<32xf32>
    %205 = vector.multi_reduction <add>, %204, %cst_69 [1] : vector<32x16xf32> to vector<32xf32>
    %206 = vector.shape_cast %205 : vector<32xf32> to vector<32x1xf32>
    %207 = tpu.reciprocal %206 : vector<32x1xf32> -> vector<32x1xf32>
    %208 = vector.broadcast %207 : vector<32x1xf32> to vector<32x16xf32>
    %209 = arith.mulf %204, %208 : vector<32x16xf32>
    %210 = arith.truncf %209 : vector<32x16xf32> to vector<32x16xbf16>
    %211 = arith.truncf %194 : vector<16x12xf32> to vector<16x12xbf16>
    %cst_70 = arith.constant dense<0.000000e+00> : vector<32x12xf32>
    %212 = tpu.matmul %210, %211, %cst_70 {dimension_numbers = #tpu.dot_dimension_numbers<[1], [0], [0], [1], [0, 0, 1, 1], [], []>} : vector<32x16xbf16>, vector<16x12xbf16>, vector<32x12xf32> -> vector<32x12xf32>
    %213 = vector.extract_strided_slice %58 {offsets = [0, 84], sizes = [32, 12], strides = [1, 1]} : vector<32x96xf32> to vector<32x12xf32>
    %214 = vector.extract_strided_slice %64 {offsets = [0, 84], sizes = [16, 12], strides = [1, 1]} : vector<16x96xf32> to vector<16x12xf32>
    %215 = vector.extract_strided_slice %65 {offsets = [0, 84], sizes = [16, 12], strides = [1, 1]} : vector<16x96xf32> to vector<16x12xf32>
    %216 = arith.truncf %213 : vector<32x12xf32> to vector<32x12xbf16>
    %217 = arith.truncf %214 : vector<16x12xf32> to vector<16x12xbf16>
    %cst_71 = arith.constant dense<0.000000e+00> : vector<32x16xf32>
    %218 = tpu.matmul %216, %217, %cst_71 {dimension_numbers = #tpu.dot_dimension_numbers<[1], [1], [0], [0], [0, 0, 1, 0], [], []>} : vector<32x12xbf16>, vector<16x12xbf16>, vector<32x16xf32> -> vector<32x16xf32>
    %cst_72 = arith.constant 0.288675129 : f32
    %219 = vector.broadcast %cst_72 : f32 to vector<32x16xf32>
    %220 = arith.mulf %218, %219 : vector<32x16xf32>
    %cst_73 = arith.constant dense<0xFF800000> : vector<32xf32>
    %221 = vector.multi_reduction <maximumf>, %220, %cst_73 [1] : vector<32x16xf32> to vector<32xf32>
    %222 = vector.shape_cast %221 : vector<32xf32> to vector<32x1xf32>
    %223 = vector.broadcast %222 : vector<32x1xf32> to vector<32x16xf32>
    %224 = arith.subf %220, %223 : vector<32x16xf32>
    %225 = math.exp %224 : vector<32x16xf32>
    %cst_74 = arith.constant dense<0.000000e+00> : vector<32xf32>
    %226 = vector.multi_reduction <add>, %225, %cst_74 [1] : vector<32x16xf32> to vector<32xf32>
    %227 = vector.shape_cast %226 : vector<32xf32> to vector<32x1xf32>
    %228 = tpu.reciprocal %227 : vector<32x1xf32> -> vector<32x1xf32>
    %229 = vector.broadcast %228 : vector<32x1xf32> to vector<32x16xf32>
    %230 = arith.mulf %225, %229 : vector<32x16xf32>
    %231 = arith.truncf %230 : vector<32x16xf32> to vector<32x16xbf16>
    %232 = arith.truncf %215 : vector<16x12xf32> to vector<16x12xbf16>
    %cst_75 = arith.constant dense<0.000000e+00> : vector<32x12xf32>
    %233 = tpu.matmul %231, %232, %cst_75 {dimension_numbers = #tpu.dot_dimension_numbers<[1], [0], [0], [1], [0, 0, 1, 1], [], []>} : vector<32x16xbf16>, vector<16x12xbf16>, vector<32x12xf32> -> vector<32x12xf32>
    %234 = tpu.concatenate %86, %107, %128, %149, %170, %191, %212, %233 in 1 : vector<32x12xf32>, vector<32x12xf32>, vector<32x12xf32>, vector<32x12xf32>, vector<32x12xf32>, vector<32x12xf32>, vector<32x12xf32>, vector<32x12xf32> -> vector<32x96xf32>
    %235 = arith.truncf %234 : vector<32x96xf32> to vector<32x96xbf16>
    %236 = arith.truncf %52 : vector<96x96xf32> to vector<96x96xbf16>
    %cst_76 = arith.constant dense<0.000000e+00> : vector<32x96xf32>
    %237 = tpu.matmul %235, %236, %cst_76 {dimension_numbers = #tpu.dot_dimension_numbers<[1], [0], [0], [1], [0, 0, 1, 1], [], []>} : vector<32x96xbf16>, vector<96x96xbf16>, vector<32x96xf32> -> vector<32x96xf32>
    %238 = vector.broadcast %53 : vector<1x96xf32> to vector<32x96xf32>
    %239 = arith.addf %237, %238 : vector<32x96xf32>
    %c0_77 = arith.constant 0 : index
    %c0_78 = arith.constant 0 : index
    %240 = vector.load %arg13[%c0_77, %c0_78] : memref<1x96xf32, #tpu.memory_space<vmem>>, vector<1x96xf32>
    %241 = vector.broadcast %240 : vector<1x96xf32> to vector<32x96xf32>
    %242 = arith.mulf %241, %239 : vector<32x96xf32>
    %243 = arith.addf %1, %242 : vector<32x96xf32>
    %c0_79 = arith.constant 0 : index
    %c0_80 = arith.constant 0 : index
    %c0_81 = arith.constant 0 : index
    %244 = vector.load %arg32[%c0_79, %c0_80, %c0_81] : memref<1x32x96xf32, #tpu.memory_space<vmem>>, vector<1x32x96xf32>
    %245 = vector.shape_cast %244 : vector<1x32x96xf32> to vector<32x96xf32>
    %246 = vector.shape_cast %243 : vector<32x96xf32> to vector<1x32x96xf32>
    tpu.vector_store %arg32[%c0_79, %c0_80, %c0_81], %246 {strides = array<i32>} : memref<1x32x96xf32, #tpu.memory_space<vmem>>, vector<1x32x96xf32>,
    %c0_82 = arith.constant 0 : index
    %c0_83 = arith.constant 0 : index
    %c0_84 = arith.constant 0 : index
    %247 = vector.load %arg14[%c0_82, %c0_83, %c0_84] : memref<2x1x96xf32, #tpu.memory_space<vmem>>, vector<1x1x96xf32>
    %248 = vector.shape_cast %247 : vector<1x1x96xf32> to vector<1x96xf32>
    %c0_85 = arith.constant 0 : index
    %c0_86 = arith.constant 0 : index
    %c0_87 = arith.constant 0 : index
    %249 = vector.load %arg15[%c0_85, %c0_86, %c0_87] : memref<2x1x96xf32, #tpu.memory_space<vmem>>, vector<1x1x96xf32>
    %250 = vector.shape_cast %249 : vector<1x1x96xf32> to vector<1x96xf32>
    %cst_88 = arith.constant dense<0.000000e+00> : vector<16xf32>
    %251 = vector.multi_reduction <add>, %3, %cst_88 [1] : vector<16x96xf32> to vector<16xf32>
    %252 = vector.shape_cast %251 : vector<16xf32> to vector<16x1xf32>
    %cst_89 = arith.constant 9.600000e+01 : f32
    %253 = vector.broadcast %cst_89 : f32 to vector<16x1xf32>
    %254 = arith.divf %252, %253 : vector<16x1xf32>
    %255 = vector.broadcast %254 : vector<16x1xf32> to vector<16x96xf32>
    %256 = arith.subf %3, %255 : vector<16x96xf32>
    %257 = arith.mulf %256, %256 : vector<16x96xf32>
    %cst_90 = arith.constant dense<0.000000e+00> : vector<16xf32>
    %258 = vector.multi_reduction <add>, %257, %cst_90 [1] : vector<16x96xf32> to vector<16xf32>
    %259 = vector.shape_cast %258 : vector<16xf32> to vector<16x1xf32>
    %cst_91 = arith.constant 9.600000e+01 : f32
    %260 = vector.broadcast %cst_91 : f32 to vector<16x1xf32>
    %261 = arith.divf %259, %260 : vector<16x1xf32>
    %cst_92 = arith.constant 9.99999997E-7 : f32
    %262 = vector.broadcast %cst_92 : f32 to vector<16x1xf32>
    %263 = arith.addf %261, %262 : vector<16x1xf32>
    %264 = math.rsqrt %263 : vector<16x1xf32>
    %265 = vector.broadcast %264 : vector<16x1xf32> to vector<16x96xf32>
    %266 = arith.mulf %256, %265 : vector<16x96xf32>
    %267 = vector.broadcast %248 : vector<1x96xf32> to vector<16x96xf32>
    %268 = arith.mulf %266, %267 : vector<16x96xf32>
    %269 = vector.broadcast %250 : vector<1x96xf32> to vector<16x96xf32>
    %270 = arith.addf %268, %269 : vector<16x96xf32>
    %c0_93 = arith.constant 0 : index
    %c0_94 = arith.constant 0 : index
    %c0_95 = arith.constant 0 : index
    %271 = vector.load %arg16[%c0_93, %c0_94, %c0_95] : memref<2x1x96xf32, #tpu.memory_space<vmem>>, vector<1x1x96xf32>
    %272 = vector.shape_cast %271 : vector<1x1x96xf32> to vector<1x96xf32>
    %c0_96 = arith.constant 0 : index
    %c0_97 = arith.constant 0 : index
    %c0_98 = arith.constant 0 : index
    %273 = vector.load %arg17[%c0_96, %c0_97, %c0_98] : memref<2x1x96xf32, #tpu.memory_space<vmem>>, vector<1x1x96xf32>
    %274 = vector.shape_cast %273 : vector<1x1x96xf32> to vector<1x96xf32>
    %cst_99 = arith.constant dense<0.000000e+00> : vector<32xf32>
    %275 = vector.multi_reduction <add>, %243, %cst_99 [1] : vector<32x96xf32> to vector<32xf32>
    %276 = vector.shape_cast %275 : vector<32xf32> to vector<32x1xf32>
    %cst_100 = arith.constant 9.600000e+01 : f32
    %277 = vector.broadcast %cst_100 : f32 to vector<32x1xf32>
    %278 = arith.divf %276, %277 : vector<32x1xf32>
    %279 = vector.broadcast %278 : vector<32x1xf32> to vector<32x96xf32>
    %280 = arith.subf %243, %279 : vector<32x96xf32>
    %281 = arith.mulf %280, %280 : vector<32x96xf32>
    %cst_101 = arith.constant dense<0.000000e+00> : vector<32xf32>
    %282 = vector.multi_reduction <add>, %281, %cst_101 [1] : vector<32x96xf32> to vector<32xf32>
    %283 = vector.shape_cast %282 : vector<32xf32> to vector<32x1xf32>
    %cst_102 = arith.constant 9.600000e+01 : f32
    %284 = vector.broadcast %cst_102 : f32 to vector<32x1xf32>
    %285 = arith.divf %283, %284 : vector<32x1xf32>
    %cst_103 = arith.constant 9.99999997E-7 : f32
    %286 = vector.broadcast %cst_103 : f32 to vector<32x1xf32>
    %287 = arith.addf %285, %286 : vector<32x1xf32>
    %288 = math.rsqrt %287 : vector<32x1xf32>
    %289 = vector.broadcast %288 : vector<32x1xf32> to vector<32x96xf32>
    %290 = arith.mulf %280, %289 : vector<32x96xf32>
    %291 = vector.broadcast %272 : vector<1x96xf32> to vector<32x96xf32>
    %292 = arith.mulf %290, %291 : vector<32x96xf32>
    %293 = vector.broadcast %274 : vector<1x96xf32> to vector<32x96xf32>
    %294 = arith.addf %292, %293 : vector<32x96xf32>
    %c0_104 = arith.constant 0 : index
    %c0_105 = arith.constant 0 : index
    %c0_106 = arith.constant 0 : index
    %295 = vector.load %arg18[%c0_104, %c0_105, %c0_106] : memref<2x96x96xf32, #tpu.memory_space<vmem>>, vector<1x96x96xf32>
    %296 = vector.shape_cast %295 : vector<1x96x96xf32> to vector<96x96xf32>
    %c0_107 = arith.constant 0 : index
    %c0_108 = arith.constant 0 : index
    %c0_109 = arith.constant 0 : index
    %297 = vector.load %arg19[%c0_107, %c0_108, %c0_109] : memref<2x1x96xf32, #tpu.memory_space<vmem>>, vector<1x1x96xf32>
    %298 = vector.shape_cast %297 : vector<1x1x96xf32> to vector<1x96xf32>
    %c0_110 = arith.constant 0 : index
    %c0_111 = arith.constant 0 : index
    %c0_112 = arith.constant 0 : index
    %299 = vector.load %arg20[%c0_110, %c0_111, %c0_112] : memref<2x96x192xf32, #tpu.memory_space<vmem>>, vector<1x96x192xf32>
    %300 = vector.shape_cast %299 : vector<1x96x192xf32> to vector<96x192xf32>
    %c0_113 = arith.constant 0 : index
    %c0_114 = arith.constant 0 : index
    %c0_115 = arith.constant 0 : index
    %301 = vector.load %arg21[%c0_113, %c0_114, %c0_115] : memref<2x1x192xf32, #tpu.memory_space<vmem>>, vector<1x1x192xf32>
    %302 = vector.shape_cast %301 : vector<1x1x192xf32> to vector<1x192xf32>
    %c0_116 = arith.constant 0 : index
    %c0_117 = arith.constant 0 : index
    %c0_118 = arith.constant 0 : index
    %303 = vector.load %arg22[%c0_116, %c0_117, %c0_118] : memref<2x96x96xf32, #tpu.memory_space<vmem>>, vector<1x96x96xf32>
    %304 = vector.shape_cast %303 : vector<1x96x96xf32> to vector<96x96xf32>
    %c0_119 = arith.constant 0 : index
    %c0_120 = arith.constant 0 : index
    %c0_121 = arith.constant 0 : index
    %305 = vector.load %arg23[%c0_119, %c0_120, %c0_121] : memref<2x1x96xf32, #tpu.memory_space<vmem>>, vector<1x1x96xf32>
    %306 = vector.shape_cast %305 : vector<1x1x96xf32> to vector<1x96xf32>
    %307 = arith.truncf %270 : vector<16x96xf32> to vector<16x96xbf16>
    %308 = arith.truncf %296 : vector<96x96xf32> to vector<96x96xbf16>
    %cst_122 = arith.constant dense<0.000000e+00> : vector<16x96xf32>
    %309 = tpu.matmul %307, %308, %cst_122 {dimension_numbers = #tpu.dot_dimension_numbers<[1], [0], [0], [1], [0, 0, 1, 1], [], []>} : vector<16x96xbf16>, vector<96x96xbf16>, vector<16x96xf32> -> vector<16x96xf32>
    %310 = vector.broadcast %298 : vector<1x96xf32> to vector<16x96xf32>
    %311 = arith.addf %309, %310 : vector<16x96xf32>
    %312 = arith.truncf %294 : vector<32x96xf32> to vector<32x96xbf16>
    %313 = arith.truncf %300 : vector<96x192xf32> to vector<96x192xbf16>
    %cst_123 = arith.constant dense<0.000000e+00> : vector<32x192xf32>
    %314 = tpu.matmul %312, %313, %cst_123 {dimension_numbers = #tpu.dot_dimension_numbers<[1], [0], [0], [1], [0, 0, 1, 1], [], []>} : vector<32x96xbf16>, vector<96x192xbf16>, vector<32x192xf32> -> vector<32x192xf32>
    %315 = vector.broadcast %302 : vector<1x192xf32> to vector<32x192xf32>
    %316 = arith.addf %314, %315 : vector<32x192xf32>
    %317 = vector.extract_strided_slice %316 {offsets = [0, 0], sizes = [32, 96], strides = [1, 1]} : vector<32x192xf32> to vector<32x96xf32>
    %318 = vector.extract_strided_slice %316 {offsets = [0, 96], sizes = [32, 96], strides = [1, 1]} : vector<32x192xf32> to vector<32x96xf32>
    %319 = vector.extract_strided_slice %311 {offsets = [0, 0], sizes = [16, 16], strides = [1, 1]} : vector<16x96xf32> to vector<16x16xf32>
    %320 = vector.extract_strided_slice %317 {offsets = [0, 0], sizes = [32, 16], strides = [1, 1]} : vector<32x96xf32> to vector<32x16xf32>
    %321 = vector.extract_strided_slice %318 {offsets = [0, 0], sizes = [32, 16], strides = [1, 1]} : vector<32x96xf32> to vector<32x16xf32>
    %322 = arith.truncf %319 : vector<16x16xf32> to vector<16x16xbf16>
    %323 = arith.truncf %320 : vector<32x16xf32> to vector<32x16xbf16>
    %cst_124 = arith.constant dense<0.000000e+00> : vector<16x32xf32>
    %324 = tpu.matmul %322, %323, %cst_124 {dimension_numbers = #tpu.dot_dimension_numbers<[1], [1], [0], [0], [0, 0, 1, 0], [], []>} : vector<16x16xbf16>, vector<32x16xbf16>, vector<16x32xf32> -> vector<16x32xf32>
    %cst_125 = arith.constant 2.500000e-01 : f32
    %325 = vector.broadcast %cst_125 : f32 to vector<16x32xf32>
    %326 = arith.mulf %324, %325 : vector<16x32xf32>
    %cst_126 = arith.constant dense<0xFF800000> : vector<16xf32>
    %327 = vector.multi_reduction <maximumf>, %326, %cst_126 [1] : vector<16x32xf32> to vector<16xf32>
    %328 = vector.shape_cast %327 : vector<16xf32> to vector<16x1xf32>
    %329 = vector.broadcast %328 : vector<16x1xf32> to vector<16x32xf32>
    %330 = arith.subf %326, %329 : vector<16x32xf32>
    %331 = math.exp %330 : vector<16x32xf32>
    %cst_127 = arith.constant dense<0.000000e+00> : vector<16xf32>
    %332 = vector.multi_reduction <add>, %331, %cst_127 [1] : vector<16x32xf32> to vector<16xf32>
    %333 = vector.shape_cast %332 : vector<16xf32> to vector<16x1xf32>
    %334 = tpu.reciprocal %333 : vector<16x1xf32> -> vector<16x1xf32>
    %335 = vector.broadcast %334 : vector<16x1xf32> to vector<16x32xf32>
    %336 = arith.mulf %331, %335 : vector<16x32xf32>
    %337 = arith.truncf %336 : vector<16x32xf32> to vector<16x32xbf16>
    %338 = arith.truncf %321 : vector<32x16xf32> to vector<32x16xbf16>
    %cst_128 = arith.constant dense<0.000000e+00> : vector<16x16xf32>
    %339 = tpu.matmul %337, %338, %cst_128 {dimension_numbers = #tpu.dot_dimension_numbers<[1], [0], [0], [1], [0, 0, 1, 1], [], []>} : vector<16x32xbf16>, vector<32x16xbf16>, vector<16x16xf32> -> vector<16x16xf32>
    %340 = vector.extract_strided_slice %311 {offsets = [0, 16], sizes = [16, 16], strides = [1, 1]} : vector<16x96xf32> to vector<16x16xf32>
    %341 = vector.extract_strided_slice %317 {offsets = [0, 16], sizes = [32, 16], strides = [1, 1]} : vector<32x96xf32> to vector<32x16xf32>
    %342 = vector.extract_strided_slice %318 {offsets = [0, 16], sizes = [32, 16], strides = [1, 1]} : vector<32x96xf32> to vector<32x16xf32>
    %343 = arith.truncf %340 : vector<16x16xf32> to vector<16x16xbf16>
    %344 = arith.truncf %341 : vector<32x16xf32> to vector<32x16xbf16>
    %cst_129 = arith.constant dense<0.000000e+00> : vector<16x32xf32>
    %345 = tpu.matmul %343, %344, %cst_129 {dimension_numbers = #tpu.dot_dimension_numbers<[1], [1], [0], [0], [0, 0, 1, 0], [], []>} : vector<16x16xbf16>, vector<32x16xbf16>, vector<16x32xf32> -> vector<16x32xf32>
    %cst_130 = arith.constant 2.500000e-01 : f32
    %346 = vector.broadcast %cst_130 : f32 to vector<16x32xf32>
    %347 = arith.mulf %345, %346 : vector<16x32xf32>
    %cst_131 = arith.constant dense<0xFF800000> : vector<16xf32>
    %348 = vector.multi_reduction <maximumf>, %347, %cst_131 [1] : vector<16x32xf32> to vector<16xf32>
    %349 = vector.shape_cast %348 : vector<16xf32> to vector<16x1xf32>
    %350 = vector.broadcast %349 : vector<16x1xf32> to vector<16x32xf32>
    %351 = arith.subf %347, %350 : vector<16x32xf32>
    %352 = math.exp %351 : vector<16x32xf32>
    %cst_132 = arith.constant dense<0.000000e+00> : vector<16xf32>
    %353 = vector.multi_reduction <add>, %352, %cst_132 [1] : vector<16x32xf32> to vector<16xf32>
    %354 = vector.shape_cast %353 : vector<16xf32> to vector<16x1xf32>
    %355 = tpu.reciprocal %354 : vector<16x1xf32> -> vector<16x1xf32>
    %356 = vector.broadcast %355 : vector<16x1xf32> to vector<16x32xf32>
    %357 = arith.mulf %352, %356 : vector<16x32xf32>
    %358 = arith.truncf %357 : vector<16x32xf32> to vector<16x32xbf16>
    %359 = arith.truncf %342 : vector<32x16xf32> to vector<32x16xbf16>
    %cst_133 = arith.constant dense<0.000000e+00> : vector<16x16xf32>
    %360 = tpu.matmul %358, %359, %cst_133 {dimension_numbers = #tpu.dot_dimension_numbers<[1], [0], [0], [1], [0, 0, 1, 1], [], []>} : vector<16x32xbf16>, vector<32x16xbf16>, vector<16x16xf32> -> vector<16x16xf32>
    %361 = vector.extract_strided_slice %311 {offsets = [0, 32], sizes = [16, 16], strides = [1, 1]} : vector<16x96xf32> to vector<16x16xf32>
    %362 = vector.extract_strided_slice %317 {offsets = [0, 32], sizes = [32, 16], strides = [1, 1]} : vector<32x96xf32> to vector<32x16xf32>
    %363 = vector.extract_strided_slice %318 {offsets = [0, 32], sizes = [32, 16], strides = [1, 1]} : vector<32x96xf32> to vector<32x16xf32>
    %364 = arith.truncf %361 : vector<16x16xf32> to vector<16x16xbf16>
    %365 = arith.truncf %362 : vector<32x16xf32> to vector<32x16xbf16>
    %cst_134 = arith.constant dense<0.000000e+00> : vector<16x32xf32>
    %366 = tpu.matmul %364, %365, %cst_134 {dimension_numbers = #tpu.dot_dimension_numbers<[1], [1], [0], [0], [0, 0, 1, 0], [], []>} : vector<16x16xbf16>, vector<32x16xbf16>, vector<16x32xf32> -> vector<16x32xf32>
    %cst_135 = arith.constant 2.500000e-01 : f32
    %367 = vector.broadcast %cst_135 : f32 to vector<16x32xf32>
    %368 = arith.mulf %366, %367 : vector<16x32xf32>
    %cst_136 = arith.constant dense<0xFF800000> : vector<16xf32>
    %369 = vector.multi_reduction <maximumf>, %368, %cst_136 [1] : vector<16x32xf32> to vector<16xf32>
    %370 = vector.shape_cast %369 : vector<16xf32> to vector<16x1xf32>
    %371 = vector.broadcast %370 : vector<16x1xf32> to vector<16x32xf32>
    %372 = arith.subf %368, %371 : vector<16x32xf32>
    %373 = math.exp %372 : vector<16x32xf32>
    %cst_137 = arith.constant dense<0.000000e+00> : vector<16xf32>
    %374 = vector.multi_reduction <add>, %373, %cst_137 [1] : vector<16x32xf32> to vector<16xf32>
    %375 = vector.shape_cast %374 : vector<16xf32> to vector<16x1xf32>
    %376 = tpu.reciprocal %375 : vector<16x1xf32> -> vector<16x1xf32>
    %377 = vector.broadcast %376 : vector<16x1xf32> to vector<16x32xf32>
    %378 = arith.mulf %373, %377 : vector<16x32xf32>
    %379 = arith.truncf %378 : vector<16x32xf32> to vector<16x32xbf16>
    %380 = arith.truncf %363 : vector<32x16xf32> to vector<32x16xbf16>
    %cst_138 = arith.constant dense<0.000000e+00> : vector<16x16xf32>
    %381 = tpu.matmul %379, %380, %cst_138 {dimension_numbers = #tpu.dot_dimension_numbers<[1], [0], [0], [1], [0, 0, 1, 1], [], []>} : vector<16x32xbf16>, vector<32x16xbf16>, vector<16x16xf32> -> vector<16x16xf32>
    %382 = vector.extract_strided_slice %311 {offsets = [0, 48], sizes = [16, 16], strides = [1, 1]} : vector<16x96xf32> to vector<16x16xf32>
    %383 = vector.extract_strided_slice %317 {offsets = [0, 48], sizes = [32, 16], strides = [1, 1]} : vector<32x96xf32> to vector<32x16xf32>
    %384 = vector.extract_strided_slice %318 {offsets = [0, 48], sizes = [32, 16], strides = [1, 1]} : vector<32x96xf32> to vector<32x16xf32>
    %385 = arith.truncf %382 : vector<16x16xf32> to vector<16x16xbf16>
    %386 = arith.truncf %383 : vector<32x16xf32> to vector<32x16xbf16>
    %cst_139 = arith.constant dense<0.000000e+00> : vector<16x32xf32>
    %387 = tpu.matmul %385, %386, %cst_139 {dimension_numbers = #tpu.dot_dimension_numbers<[1], [1], [0], [0], [0, 0, 1, 0], [], []>} : vector<16x16xbf16>, vector<32x16xbf16>, vector<16x32xf32> -> vector<16x32xf32>
    %cst_140 = arith.constant 2.500000e-01 : f32
    %388 = vector.broadcast %cst_140 : f32 to vector<16x32xf32>
    %389 = arith.mulf %387, %388 : vector<16x32xf32>
    %cst_141 = arith.constant dense<0xFF800000> : vector<16xf32>
    %390 = vector.multi_reduction <maximumf>, %389, %cst_141 [1] : vector<16x32xf32> to vector<16xf32>
    %391 = vector.shape_cast %390 : vector<16xf32> to vector<16x1xf32>
    %392 = vector.broadcast %391 : vector<16x1xf32> to vector<16x32xf32>
    %393 = arith.subf %389, %392 : vector<16x32xf32>
    %394 = math.exp %393 : vector<16x32xf32>
    %cst_142 = arith.constant dense<0.000000e+00> : vector<16xf32>
    %395 = vector.multi_reduction <add>, %394, %cst_142 [1] : vector<16x32xf32> to vector<16xf32>
    %396 = vector.shape_cast %395 : vector<16xf32> to vector<16x1xf32>
    %397 = tpu.reciprocal %396 : vector<16x1xf32> -> vector<16x1xf32>
    %398 = vector.broadcast %397 : vector<16x1xf32> to vector<16x32xf32>
    %399 = arith.mulf %394, %398 : vector<16x32xf32>
    %400 = arith.truncf %399 : vector<16x32xf32> to vector<16x32xbf16>
    %401 = arith.truncf %384 : vector<32x16xf32> to vector<32x16xbf16>
    %cst_143 = arith.constant dense<0.000000e+00> : vector<16x16xf32>
    %402 = tpu.matmul %400, %401, %cst_143 {dimension_numbers = #tpu.dot_dimension_numbers<[1], [0], [0], [1], [0, 0, 1, 1], [], []>} : vector<16x32xbf16>, vector<32x16xbf16>, vector<16x16xf32> -> vector<16x16xf32>
    %403 = vector.extract_strided_slice %311 {offsets = [0, 64], sizes = [16, 16], strides = [1, 1]} : vector<16x96xf32> to vector<16x16xf32>
    %404 = vector.extract_strided_slice %317 {offsets = [0, 64], sizes = [32, 16], strides = [1, 1]} : vector<32x96xf32> to vector<32x16xf32>
    %405 = vector.extract_strided_slice %318 {offsets = [0, 64], sizes = [32, 16], strides = [1, 1]} : vector<32x96xf32> to vector<32x16xf32>
    %406 = arith.truncf %403 : vector<16x16xf32> to vector<16x16xbf16>
    %407 = arith.truncf %404 : vector<32x16xf32> to vector<32x16xbf16>
    %cst_144 = arith.constant dense<0.000000e+00> : vector<16x32xf32>
    %408 = tpu.matmul %406, %407, %cst_144 {dimension_numbers = #tpu.dot_dimension_numbers<[1], [1], [0], [0], [0, 0, 1, 0], [], []>} : vector<16x16xbf16>, vector<32x16xbf16>, vector<16x32xf32> -> vector<16x32xf32>
    %cst_145 = arith.constant 2.500000e-01 : f32
    %409 = vector.broadcast %cst_145 : f32 to vector<16x32xf32>
    %410 = arith.mulf %408, %409 : vector<16x32xf32>
    %cst_146 = arith.constant dense<0xFF800000> : vector<16xf32>
    %411 = vector.multi_reduction <maximumf>, %410, %cst_146 [1] : vector<16x32xf32> to vector<16xf32>
    %412 = vector.shape_cast %411 : vector<16xf32> to vector<16x1xf32>
    %413 = vector.broadcast %412 : vector<16x1xf32> to vector<16x32xf32>
    %414 = arith.subf %410, %413 : vector<16x32xf32>
    %415 = math.exp %414 : vector<16x32xf32>
    %cst_147 = arith.constant dense<0.000000e+00> : vector<16xf32>
    %416 = vector.multi_reduction <add>, %415, %cst_147 [1] : vector<16x32xf32> to vector<16xf32>
    %417 = vector.shape_cast %416 : vector<16xf32> to vector<16x1xf32>
    %418 = tpu.reciprocal %417 : vector<16x1xf32> -> vector<16x1xf32>
    %419 = vector.broadcast %418 : vector<16x1xf32> to vector<16x32xf32>
    %420 = arith.mulf %415, %419 : vector<16x32xf32>
    %421 = arith.truncf %420 : vector<16x32xf32> to vector<16x32xbf16>
    %422 = arith.truncf %405 : vector<32x16xf32> to vector<32x16xbf16>
    %cst_148 = arith.constant dense<0.000000e+00> : vector<16x16xf32>
    %423 = tpu.matmul %421, %422, %cst_148 {dimension_numbers = #tpu.dot_dimension_numbers<[1], [0], [0], [1], [0, 0, 1, 1], [], []>} : vector<16x32xbf16>, vector<32x16xbf16>, vector<16x16xf32> -> vector<16x16xf32>
    %424 = vector.extract_strided_slice %311 {offsets = [0, 80], sizes = [16, 16], strides = [1, 1]} : vector<16x96xf32> to vector<16x16xf32>
    %425 = vector.extract_strided_slice %317 {offsets = [0, 80], sizes = [32, 16], strides = [1, 1]} : vector<32x96xf32> to vector<32x16xf32>
    %426 = vector.extract_strided_slice %318 {offsets = [0, 80], sizes = [32, 16], strides = [1, 1]} : vector<32x96xf32> to vector<32x16xf32>
    %427 = arith.truncf %424 : vector<16x16xf32> to vector<16x16xbf16>
    %428 = arith.truncf %425 : vector<32x16xf32> to vector<32x16xbf16>
    %cst_149 = arith.constant dense<0.000000e+00> : vector<16x32xf32>
    %429 = tpu.matmul %427, %428, %cst_149 {dimension_numbers = #tpu.dot_dimension_numbers<[1], [1], [0], [0], [0, 0, 1, 0], [], []>} : vector<16x16xbf16>, vector<32x16xbf16>, vector<16x32xf32> -> vector<16x32xf32>
    %cst_150 = arith.constant 2.500000e-01 : f32
    %430 = vector.broadcast %cst_150 : f32 to vector<16x32xf32>
    %431 = arith.mulf %429, %430 : vector<16x32xf32>
    %cst_151 = arith.constant dense<0xFF800000> : vector<16xf32>
    %432 = vector.multi_reduction <maximumf>, %431, %cst_151 [1] : vector<16x32xf32> to vector<16xf32>
    %433 = vector.shape_cast %432 : vector<16xf32> to vector<16x1xf32>
    %434 = vector.broadcast %433 : vector<16x1xf32> to vector<16x32xf32>
    %435 = arith.subf %431, %434 : vector<16x32xf32>
    %436 = math.exp %435 : vector<16x32xf32>
    %cst_152 = arith.constant dense<0.000000e+00> : vector<16xf32>
    %437 = vector.multi_reduction <add>, %436, %cst_152 [1] : vector<16x32xf32> to vector<16xf32>
    %438 = vector.shape_cast %437 : vector<16xf32> to vector<16x1xf32>
    %439 = tpu.reciprocal %438 : vector<16x1xf32> -> vector<16x1xf32>
    %440 = vector.broadcast %439 : vector<16x1xf32> to vector<16x32xf32>
    %441 = arith.mulf %436, %440 : vector<16x32xf32>
    %442 = arith.truncf %441 : vector<16x32xf32> to vector<16x32xbf16>
    %443 = arith.truncf %426 : vector<32x16xf32> to vector<32x16xbf16>
    %cst_153 = arith.constant dense<0.000000e+00> : vector<16x16xf32>
    %444 = tpu.matmul %442, %443, %cst_153 {dimension_numbers = #tpu.dot_dimension_numbers<[1], [0], [0], [1], [0, 0, 1, 1], [], []>} : vector<16x32xbf16>, vector<32x16xbf16>, vector<16x16xf32> -> vector<16x16xf32>
    %445 = tpu.concatenate %339, %360, %381, %402, %423, %444 in 1 : vector<16x16xf32>, vector<16x16xf32>, vector<16x16xf32>, vector<16x16xf32>, vector<16x16xf32>, vector<16x16xf32> -> vector<16x96xf32>
    %446 = arith.truncf %445 : vector<16x96xf32> to vector<16x96xbf16>
    %447 = arith.truncf %304 : vector<96x96xf32> to vector<96x96xbf16>
    %cst_154 = arith.constant dense<0.000000e+00> : vector<16x96xf32>
    %448 = tpu.matmul %446, %447, %cst_154 {dimension_numbers = #tpu.dot_dimension_numbers<[1], [0], [0], [1], [0, 0, 1, 1], [], []>} : vector<16x96xbf16>, vector<96x96xbf16>, vector<16x96xf32> -> vector<16x96xf32>
    %449 = vector.broadcast %306 : vector<1x96xf32> to vector<16x96xf32>
    %450 = arith.addf %448, %449 : vector<16x96xf32>
    %451 = arith.addf %3, %450 : vector<16x96xf32>
    %c0_155 = arith.constant 0 : index
    %c0_156 = arith.constant 0 : index
    %c0_157 = arith.constant 0 : index
    %452 = vector.load %arg24[%c0_155, %c0_156, %c0_157] : memref<2x1x96xf32, #tpu.memory_space<vmem>>, vector<1x1x96xf32>
    %453 = vector.shape_cast %452 : vector<1x1x96xf32> to vector<1x96xf32>
    %c0_158 = arith.constant 0 : index
    %c0_159 = arith.constant 0 : index
    %c0_160 = arith.constant 0 : index
    %454 = vector.load %arg25[%c0_158, %c0_159, %c0_160] : memref<2x1x96xf32, #tpu.memory_space<vmem>>, vector<1x1x96xf32>
    %455 = vector.shape_cast %454 : vector<1x1x96xf32> to vector<1x96xf32>
    %cst_161 = arith.constant dense<0.000000e+00> : vector<16xf32>
    %456 = vector.multi_reduction <add>, %451, %cst_161 [1] : vector<16x96xf32> to vector<16xf32>
    %457 = vector.shape_cast %456 : vector<16xf32> to vector<16x1xf32>
    %cst_162 = arith.constant 9.600000e+01 : f32
    %458 = vector.broadcast %cst_162 : f32 to vector<16x1xf32>
    %459 = arith.divf %457, %458 : vector<16x1xf32>
    %460 = vector.broadcast %459 : vector<16x1xf32> to vector<16x96xf32>
    %461 = arith.subf %451, %460 : vector<16x96xf32>
    %462 = arith.mulf %461, %461 : vector<16x96xf32>
    %cst_163 = arith.constant dense<0.000000e+00> : vector<16xf32>
    %463 = vector.multi_reduction <add>, %462, %cst_163 [1] : vector<16x96xf32> to vector<16xf32>
    %464 = vector.shape_cast %463 : vector<16xf32> to vector<16x1xf32>
    %cst_164 = arith.constant 9.600000e+01 : f32
    %465 = vector.broadcast %cst_164 : f32 to vector<16x1xf32>
    %466 = arith.divf %464, %465 : vector<16x1xf32>
    %cst_165 = arith.constant 9.99999997E-7 : f32
    %467 = vector.broadcast %cst_165 : f32 to vector<16x1xf32>
    %468 = arith.addf %466, %467 : vector<16x1xf32>
    %469 = math.rsqrt %468 : vector<16x1xf32>
    %470 = vector.broadcast %469 : vector<16x1xf32> to vector<16x96xf32>
    %471 = arith.mulf %461, %470 : vector<16x96xf32>
    %472 = vector.broadcast %453 : vector<1x96xf32> to vector<16x96xf32>
    %473 = arith.mulf %471, %472 : vector<16x96xf32>
    %474 = vector.broadcast %455 : vector<1x96xf32> to vector<16x96xf32>
    %475 = arith.addf %473, %474 : vector<16x96xf32>
    %c0_166 = arith.constant 0 : index
    %c0_167 = arith.constant 0 : index
    %c0_168 = arith.constant 0 : index
    %476 = vector.load %arg26[%c0_166, %c0_167, %c0_168] : memref<2x96x19xf32, #tpu.memory_space<vmem>>, vector<1x96x19xf32>
    %477 = vector.shape_cast %476 : vector<1x96x19xf32> to vector<96x19xf32>
    %c0_169 = arith.constant 0 : index
    %c0_170 = arith.constant 0 : index
    %c0_171 = arith.constant 0 : index
    %478 = vector.load %arg27[%c0_169, %c0_170, %c0_171] : memref<2x1x19xf32, #tpu.memory_space<vmem>>, vector<1x1x19xf32>
    %479 = vector.shape_cast %478 : vector<1x1x19xf32> to vector<1x19xf32>
    %c0_172 = arith.constant 0 : index
    %c0_173 = arith.constant 0 : index
    %c0_174 = arith.constant 0 : index
    %480 = vector.load %arg28[%c0_172, %c0_173, %c0_174] : memref<2x9x19xf32, #tpu.memory_space<vmem>>, vector<1x9x19xf32>
    %481 = vector.shape_cast %480 : vector<1x9x19xf32> to vector<9x19xf32>
    %c0_175 = arith.constant 0 : index
    %c0_176 = arith.constant 0 : index
    %c0_177 = arith.constant 0 : index
    %482 = vector.load %arg29[%c0_175, %c0_176, %c0_177] : memref<2x1x19xf32, #tpu.memory_space<vmem>>, vector<1x1x19xf32>
    %483 = vector.shape_cast %482 : vector<1x1x19xf32> to vector<1x19xf32>
    %c0_178 = arith.constant 0 : index
    %c0_179 = arith.constant 0 : index
    %c0_180 = arith.constant 0 : index
    %484 = vector.load %arg30[%c0_178, %c0_179, %c0_180] : memref<2x19x96xf32, #tpu.memory_space<vmem>>, vector<1x19x96xf32>
    %485 = vector.shape_cast %484 : vector<1x19x96xf32> to vector<19x96xf32>
    %c0_181 = arith.constant 0 : index
    %c0_182 = arith.constant 0 : index
    %c0_183 = arith.constant 0 : index
    %486 = vector.load %arg31[%c0_181, %c0_182, %c0_183] : memref<2x1x96xf32, #tpu.memory_space<vmem>>, vector<1x1x96xf32>
    %487 = vector.shape_cast %486 : vector<1x1x96xf32> to vector<1x96xf32>
    %488 = arith.truncf %475 : vector<16x96xf32> to vector<16x96xbf16>
    %489 = arith.truncf %477 : vector<96x19xf32> to vector<96x19xbf16>
    %cst_184 = arith.constant dense<0.000000e+00> : vector<16x19xf32>
    %490 = tpu.matmul %488, %489, %cst_184 {dimension_numbers = #tpu.dot_dimension_numbers<[1], [0], [0], [1], [0, 0, 1, 1], [], []>} : vector<16x96xbf16>, vector<96x19xbf16>, vector<16x19xf32> -> vector<16x19xf32>
    %491 = vector.broadcast %479 : vector<1x19xf32> to vector<16x19xf32>
    %492 = arith.addf %490, %491 : vector<16x19xf32>
    %cst_185 = arith.constant 0.000000e+00 : f32
    %493 = vector.broadcast %cst_185 : f32 to vector<5x19xf32>
    %494 = tpu.concatenate %493, %492, %493 in 0 : vector<5x19xf32>, vector<16x19xf32>, vector<5x19xf32> -> vector<26x19xf32>
    %495 = tpu.iota {dimensions = array<i32: 0>} : vector<16x1xi32>
    %c4_i32 = arith.constant 4 : i32
    %c0_i32 = arith.constant 0 : i32
    %496 = arith.cmpi eq, %c4_i32, %c0_i32 : i32
    %c1_i32 = arith.constant 1 : i32
    %497 = arith.select %496, %c1_i32, %c4_i32 : i32
    %498 = vector.broadcast %497 : i32 to vector<16x1xi32>
    %499 = arith.remsi %495, %498 : vector<16x1xi32>
    %c0_i32_186 = arith.constant 0 : i32
    %500 = vector.broadcast %c0_i32_186 : i32 to vector<16x1xi32>
    %501 = arith.cmpi ne, %499, %500 : vector<16x1xi32>
    %c0_i32_187 = arith.constant 0 : i32
    %502 = vector.broadcast %c0_i32_187 : i32 to vector<16x1xi32>
    %503 = arith.cmpi slt, %499, %502 : vector<16x1xi32>
    %c0_i32_188 = arith.constant 0 : i32
    %504 = arith.cmpi slt, %497, %c0_i32_188 : i32
    %505 = vector.broadcast %504 : i1 to vector<16x1xi1>
    %506 = vector.broadcast %505 : vector<16x1xi1> to vector<16x1xi1>
    %507 = arith.xori %503, %506 : vector<16x1xi1>
    %508 = arith.andi %507, %501 : vector<16x1xi1>
    %509 = vector.broadcast %497 : i32 to vector<16x1xi32>
    %510 = arith.addi %499, %509 : vector<16x1xi32>
    %511 = arith.select %508, %510, %499 : vector<16x1xi1>, vector<16x1xi32>
    %cst_189 = arith.constant 0.000000e+00 : f32
    %512 = vector.broadcast %cst_189 : f32 to vector<16x19xf32>
    %513 = vector.extract_strided_slice %494 {offsets = [0, 0], sizes = [16, 19], strides = [1, 1]} : vector<26x19xf32> to vector<16x19xf32>
    %c-1_i32 = arith.constant -1 : i32
    %514 = vector.broadcast %c-1_i32 : i32 to vector<16x1xi32>
    %515 = arith.addi %511, %514 : vector<16x1xi32>
    %c0_i32_190 = arith.constant 0 : i32
    %516 = vector.broadcast %c0_i32_190 : i32 to vector<16x1xi32>
    %517 = arith.cmpi sge, %515, %516 : vector<16x1xi32>
    %c-1_i32_191 = arith.constant -1 : i32
    %518 = vector.broadcast %c-1_i32_191 : i32 to vector<16x1xi32>
    %519 = arith.addi %511, %518 : vector<16x1xi32>
    %c4_i32_192 = arith.constant 4 : i32
    %520 = vector.broadcast %c4_i32_192 : i32 to vector<16x1xi32>
    %521 = arith.cmpi slt, %519, %520 : vector<16x1xi32>
    %522 = arith.andi %517, %521 : vector<16x1xi1>
    %523 = arith.extui %522 : vector<16x1xi1> to vector<16x1xi32>
    %524 = arith.sitofp %523 : vector<16x1xi32> to vector<16x1xf32>
    %525 = vector.broadcast %524 : vector<16x1xf32> to vector<16x19xf32>
    %526 = arith.mulf %513, %525 : vector<16x19xf32>
    %527 = vector.extract_strided_slice %481 {offsets = [0, 0], sizes = [1, 19], strides = [1, 1]} : vector<9x19xf32> to vector<1x19xf32>
    %528 = vector.broadcast %527 : vector<1x19xf32> to vector<16x19xf32>
    %529 = arith.mulf %526, %528 : vector<16x19xf32>
    %530 = arith.addf %512, %529 : vector<16x19xf32>
    %531 = vector.extract_strided_slice %494 {offsets = [1, 0], sizes = [16, 19], strides = [1, 1]} : vector<26x19xf32> to vector<16x19xf32>
    %c0_i32_193 = arith.constant 0 : i32
    %532 = vector.broadcast %c0_i32_193 : i32 to vector<16x1xi32>
    %533 = arith.addi %511, %532 : vector<16x1xi32>
    %c0_i32_194 = arith.constant 0 : i32
    %534 = vector.broadcast %c0_i32_194 : i32 to vector<16x1xi32>
    %535 = arith.cmpi sge, %533, %534 : vector<16x1xi32>
    %c0_i32_195 = arith.constant 0 : i32
    %536 = vector.broadcast %c0_i32_195 : i32 to vector<16x1xi32>
    %537 = arith.addi %511, %536 : vector<16x1xi32>
    %c4_i32_196 = arith.constant 4 : i32
    %538 = vector.broadcast %c4_i32_196 : i32 to vector<16x1xi32>
    %539 = arith.cmpi slt, %537, %538 : vector<16x1xi32>
    %540 = arith.andi %535, %539 : vector<16x1xi1>
    %541 = arith.extui %540 : vector<16x1xi1> to vector<16x1xi32>
    %542 = arith.sitofp %541 : vector<16x1xi32> to vector<16x1xf32>
    %543 = vector.broadcast %542 : vector<16x1xf32> to vector<16x19xf32>
    %544 = arith.mulf %531, %543 : vector<16x19xf32>
    %545 = vector.extract_strided_slice %481 {offsets = [1, 0], sizes = [1, 19], strides = [1, 1]} : vector<9x19xf32> to vector<1x19xf32>
    %546 = vector.broadcast %545 : vector<1x19xf32> to vector<16x19xf32>
    %547 = arith.mulf %544, %546 : vector<16x19xf32>
    %548 = arith.addf %530, %547 : vector<16x19xf32>
    %549 = vector.extract_strided_slice %494 {offsets = [2, 0], sizes = [16, 19], strides = [1, 1]} : vector<26x19xf32> to vector<16x19xf32>
    %c1_i32_197 = arith.constant 1 : i32
    %550 = vector.broadcast %c1_i32_197 : i32 to vector<16x1xi32>
    %551 = arith.addi %511, %550 : vector<16x1xi32>
    %c0_i32_198 = arith.constant 0 : i32
    %552 = vector.broadcast %c0_i32_198 : i32 to vector<16x1xi32>
    %553 = arith.cmpi sge, %551, %552 : vector<16x1xi32>
    %c1_i32_199 = arith.constant 1 : i32
    %554 = vector.broadcast %c1_i32_199 : i32 to vector<16x1xi32>
    %555 = arith.addi %511, %554 : vector<16x1xi32>
    %c4_i32_200 = arith.constant 4 : i32
    %556 = vector.broadcast %c4_i32_200 : i32 to vector<16x1xi32>
    %557 = arith.cmpi slt, %555, %556 : vector<16x1xi32>
    %558 = arith.andi %553, %557 : vector<16x1xi1>
    %559 = arith.extui %558 : vector<16x1xi1> to vector<16x1xi32>
    %560 = arith.sitofp %559 : vector<16x1xi32> to vector<16x1xf32>
    %561 = vector.broadcast %560 : vector<16x1xf32> to vector<16x19xf32>
    %562 = arith.mulf %549, %561 : vector<16x19xf32>
    %563 = vector.extract_strided_slice %481 {offsets = [2, 0], sizes = [1, 19], strides = [1, 1]} : vector<9x19xf32> to vector<1x19xf32>
    %564 = vector.broadcast %563 : vector<1x19xf32> to vector<16x19xf32>
    %565 = arith.mulf %562, %564 : vector<16x19xf32>
    %566 = arith.addf %548, %565 : vector<16x19xf32>
    %567 = vector.extract_strided_slice %494 {offsets = [4, 0], sizes = [16, 19], strides = [1, 1]} : vector<26x19xf32> to vector<16x19xf32>
    %c-1_i32_201 = arith.constant -1 : i32
    %568 = vector.broadcast %c-1_i32_201 : i32 to vector<16x1xi32>
    %569 = arith.addi %511, %568 : vector<16x1xi32>
    %c0_i32_202 = arith.constant 0 : i32
    %570 = vector.broadcast %c0_i32_202 : i32 to vector<16x1xi32>
    %571 = arith.cmpi sge, %569, %570 : vector<16x1xi32>
    %c-1_i32_203 = arith.constant -1 : i32
    %572 = vector.broadcast %c-1_i32_203 : i32 to vector<16x1xi32>
    %573 = arith.addi %511, %572 : vector<16x1xi32>
    %c4_i32_204 = arith.constant 4 : i32
    %574 = vector.broadcast %c4_i32_204 : i32 to vector<16x1xi32>
    %575 = arith.cmpi slt, %573, %574 : vector<16x1xi32>
    %576 = arith.andi %571, %575 : vector<16x1xi1>
    %577 = arith.extui %576 : vector<16x1xi1> to vector<16x1xi32>
    %578 = arith.sitofp %577 : vector<16x1xi32> to vector<16x1xf32>
    %579 = vector.broadcast %578 : vector<16x1xf32> to vector<16x19xf32>
    %580 = arith.mulf %567, %579 : vector<16x19xf32>
    %581 = vector.extract_strided_slice %481 {offsets = [3, 0], sizes = [1, 19], strides = [1, 1]} : vector<9x19xf32> to vector<1x19xf32>
    %582 = vector.broadcast %581 : vector<1x19xf32> to vector<16x19xf32>
    %583 = arith.mulf %580, %582 : vector<16x19xf32>
    %584 = arith.addf %566, %583 : vector<16x19xf32>
    %585 = vector.extract_strided_slice %494 {offsets = [5, 0], sizes = [16, 19], strides = [1, 1]} : vector<26x19xf32> to vector<16x19xf32>
    %c0_i32_205 = arith.constant 0 : i32
    %586 = vector.broadcast %c0_i32_205 : i32 to vector<16x1xi32>
    %587 = arith.addi %511, %586 : vector<16x1xi32>
    %c0_i32_206 = arith.constant 0 : i32
    %588 = vector.broadcast %c0_i32_206 : i32 to vector<16x1xi32>
    %589 = arith.cmpi sge, %587, %588 : vector<16x1xi32>
    %c0_i32_207 = arith.constant 0 : i32
    %590 = vector.broadcast %c0_i32_207 : i32 to vector<16x1xi32>
    %591 = arith.addi %511, %590 : vector<16x1xi32>
    %c4_i32_208 = arith.constant 4 : i32
    %592 = vector.broadcast %c4_i32_208 : i32 to vector<16x1xi32>
    %593 = arith.cmpi slt, %591, %592 : vector<16x1xi32>
    %594 = arith.andi %589, %593 : vector<16x1xi1>
    %595 = arith.extui %594 : vector<16x1xi1> to vector<16x1xi32>
    %596 = arith.sitofp %595 : vector<16x1xi32> to vector<16x1xf32>
    %597 = vector.broadcast %596 : vector<16x1xf32> to vector<16x19xf32>
    %598 = arith.mulf %585, %597 : vector<16x19xf32>
    %599 = vector.extract_strided_slice %481 {offsets = [4, 0], sizes = [1, 19], strides = [1, 1]} : vector<9x19xf32> to vector<1x19xf32>
    %600 = vector.broadcast %599 : vector<1x19xf32> to vector<16x19xf32>
    %601 = arith.mulf %598, %600 : vector<16x19xf32>
    %602 = arith.addf %584, %601 : vector<16x19xf32>
    %603 = vector.extract_strided_slice %494 {offsets = [6, 0], sizes = [16, 19], strides = [1, 1]} : vector<26x19xf32> to vector<16x19xf32>
    %c1_i32_209 = arith.constant 1 : i32
    %604 = vector.broadcast %c1_i32_209 : i32 to vector<16x1xi32>
    %605 = arith.addi %511, %604 : vector<16x1xi32>
    %c0_i32_210 = arith.constant 0 : i32
    %606 = vector.broadcast %c0_i32_210 : i32 to vector<16x1xi32>
    %607 = arith.cmpi sge, %605, %606 : vector<16x1xi32>
    %c1_i32_211 = arith.constant 1 : i32
    %608 = vector.broadcast %c1_i32_211 : i32 to vector<16x1xi32>
    %609 = arith.addi %511, %608 : vector<16x1xi32>
    %c4_i32_212 = arith.constant 4 : i32
    %610 = vector.broadcast %c4_i32_212 : i32 to vector<16x1xi32>
    %611 = arith.cmpi slt, %609, %610 : vector<16x1xi32>
    %612 = arith.andi %607, %611 : vector<16x1xi1>
    %613 = arith.extui %612 : vector<16x1xi1> to vector<16x1xi32>
    %614 = arith.sitofp %613 : vector<16x1xi32> to vector<16x1xf32>
    %615 = vector.broadcast %614 : vector<16x1xf32> to vector<16x19xf32>
    %616 = arith.mulf %603, %615 : vector<16x19xf32>
    %617 = vector.extract_strided_slice %481 {offsets = [5, 0], sizes = [1, 19], strides = [1, 1]} : vector<9x19xf32> to vector<1x19xf32>
    %618 = vector.broadcast %617 : vector<1x19xf32> to vector<16x19xf32>
    %619 = arith.mulf %616, %618 : vector<16x19xf32>
    %620 = arith.addf %602, %619 : vector<16x19xf32>
    %621 = vector.extract_strided_slice %494 {offsets = [8, 0], sizes = [16, 19], strides = [1, 1]} : vector<26x19xf32> to vector<16x19xf32>
    %c-1_i32_213 = arith.constant -1 : i32
    %622 = vector.broadcast %c-1_i32_213 : i32 to vector<16x1xi32>
    %623 = arith.addi %511, %622 : vector<16x1xi32>
    %c0_i32_214 = arith.constant 0 : i32
    %624 = vector.broadcast %c0_i32_214 : i32 to vector<16x1xi32>
    %625 = arith.cmpi sge, %623, %624 : vector<16x1xi32>
    %c-1_i32_215 = arith.constant -1 : i32
    %626 = vector.broadcast %c-1_i32_215 : i32 to vector<16x1xi32>
    %627 = arith.addi %511, %626 : vector<16x1xi32>
    %c4_i32_216 = arith.constant 4 : i32
    %628 = vector.broadcast %c4_i32_216 : i32 to vector<16x1xi32>
    %629 = arith.cmpi slt, %627, %628 : vector<16x1xi32>
    %630 = arith.andi %625, %629 : vector<16x1xi1>
    %631 = arith.extui %630 : vector<16x1xi1> to vector<16x1xi32>
    %632 = arith.sitofp %631 : vector<16x1xi32> to vector<16x1xf32>
    %633 = vector.broadcast %632 : vector<16x1xf32> to vector<16x19xf32>
    %634 = arith.mulf %621, %633 : vector<16x19xf32>
    %635 = vector.extract_strided_slice %481 {offsets = [6, 0], sizes = [1, 19], strides = [1, 1]} : vector<9x19xf32> to vector<1x19xf32>
    %636 = vector.broadcast %635 : vector<1x19xf32> to vector<16x19xf32>
    %637 = arith.mulf %634, %636 : vector<16x19xf32>
    %638 = arith.addf %620, %637 : vector<16x19xf32>
    %639 = vector.extract_strided_slice %494 {offsets = [9, 0], sizes = [16, 19], strides = [1, 1]} : vector<26x19xf32> to vector<16x19xf32>
    %c0_i32_217 = arith.constant 0 : i32
    %640 = vector.broadcast %c0_i32_217 : i32 to vector<16x1xi32>
    %641 = arith.addi %511, %640 : vector<16x1xi32>
    %c0_i32_218 = arith.constant 0 : i32
    %642 = vector.broadcast %c0_i32_218 : i32 to vector<16x1xi32>
    %643 = arith.cmpi sge, %641, %642 : vector<16x1xi32>
    %c0_i32_219 = arith.constant 0 : i32
    %644 = vector.broadcast %c0_i32_219 : i32 to vector<16x1xi32>
    %645 = arith.addi %511, %644 : vector<16x1xi32>
    %c4_i32_220 = arith.constant 4 : i32
    %646 = vector.broadcast %c4_i32_220 : i32 to vector<16x1xi32>
    %647 = arith.cmpi slt, %645, %646 : vector<16x1xi32>
    %648 = arith.andi %643, %647 : vector<16x1xi1>
    %649 = arith.extui %648 : vector<16x1xi1> to vector<16x1xi32>
    %650 = arith.sitofp %649 : vector<16x1xi32> to vector<16x1xf32>
    %651 = vector.broadcast %650 : vector<16x1xf32> to vector<16x19xf32>
    %652 = arith.mulf %639, %651 : vector<16x19xf32>
    %653 = vector.extract_strided_slice %481 {offsets = [7, 0], sizes = [1, 19], strides = [1, 1]} : vector<9x19xf32> to vector<1x19xf32>
    %654 = vector.broadcast %653 : vector<1x19xf32> to vector<16x19xf32>
    %655 = arith.mulf %652, %654 : vector<16x19xf32>
    %656 = arith.addf %638, %655 : vector<16x19xf32>
    %657 = vector.extract_strided_slice %494 {offsets = [10, 0], sizes = [16, 19], strides = [1, 1]} : vector<26x19xf32> to vector<16x19xf32>
    %c1_i32_221 = arith.constant 1 : i32
    %658 = vector.broadcast %c1_i32_221 : i32 to vector<16x1xi32>
    %659 = arith.addi %511, %658 : vector<16x1xi32>
    %c0_i32_222 = arith.constant 0 : i32
    %660 = vector.broadcast %c0_i32_222 : i32 to vector<16x1xi32>
    %661 = arith.cmpi sge, %659, %660 : vector<16x1xi32>
    %c1_i32_223 = arith.constant 1 : i32
    %662 = vector.broadcast %c1_i32_223 : i32 to vector<16x1xi32>
    %663 = arith.addi %511, %662 : vector<16x1xi32>
    %c4_i32_224 = arith.constant 4 : i32
    %664 = vector.broadcast %c4_i32_224 : i32 to vector<16x1xi32>
    %665 = arith.cmpi slt, %663, %664 : vector<16x1xi32>
    %666 = arith.andi %661, %665 : vector<16x1xi1>
    %667 = arith.extui %666 : vector<16x1xi1> to vector<16x1xi32>
    %668 = arith.sitofp %667 : vector<16x1xi32> to vector<16x1xf32>
    %669 = vector.broadcast %668 : vector<16x1xf32> to vector<16x19xf32>
    %670 = arith.mulf %657, %669 : vector<16x19xf32>
    %671 = vector.extract_strided_slice %481 {offsets = [8, 0], sizes = [1, 19], strides = [1, 1]} : vector<9x19xf32> to vector<1x19xf32>
    %672 = vector.broadcast %671 : vector<1x19xf32> to vector<16x19xf32>
    %673 = arith.mulf %670, %672 : vector<16x19xf32>
    %674 = arith.addf %656, %673 : vector<16x19xf32>
    %675 = vector.broadcast %483 : vector<1x19xf32> to vector<16x19xf32>
    %676 = arith.addf %674, %675 : vector<16x19xf32>
    %cst_225 = arith.constant 5.000000e-01 : f32
    %677 = vector.broadcast %cst_225 : f32 to vector<16x19xf32>
    %678 = arith.mulf %677, %676 : vector<16x19xf32>
    %cst_226 = arith.constant 4.471500e-02 : f32
    %679 = vector.broadcast %cst_226 : f32 to vector<16x19xf32>
    %680 = arith.mulf %679, %676 : vector<16x19xf32>
    %681 = arith.mulf %680, %676 : vector<16x19xf32>
    %682 = arith.mulf %681, %676 : vector<16x19xf32>
    %683 = arith.addf %676, %682 : vector<16x19xf32>
    %cst_227 = arith.constant 0.797884583 : f32
    %684 = vector.broadcast %cst_227 : f32 to vector<16x19xf32>
    %685 = arith.mulf %684, %683 : vector<16x19xf32>
    %686 = math.tanh %685 : vector<16x19xf32>
    %cst_228 = arith.constant 1.000000e+00 : f32
    %687 = vector.broadcast %cst_228 : f32 to vector<16x19xf32>
    %688 = arith.addf %687, %686 : vector<16x19xf32>
    %689 = arith.mulf %678, %688 : vector<16x19xf32>
    %690 = arith.truncf %689 : vector<16x19xf32> to vector<16x19xbf16>
    %691 = arith.truncf %485 : vector<19x96xf32> to vector<19x96xbf16>
    %cst_229 = arith.constant dense<0.000000e+00> : vector<16x96xf32>
    %692 = tpu.matmul %690, %691, %cst_229 {dimension_numbers = #tpu.dot_dimension_numbers<[1], [0], [0], [1], [0, 0, 1, 1], [], []>} : vector<16x19xbf16>, vector<19x96xbf16>, vector<16x96xf32> -> vector<16x96xf32>
    %693 = vector.broadcast %487 : vector<1x96xf32> to vector<16x96xf32>
    %694 = arith.addf %692, %693 : vector<16x96xf32>
    %695 = arith.addf %451, %694 : vector<16x96xf32>
    %c1 = arith.constant 1 : index
    %c0_230 = arith.constant 0 : index
    %c0_231 = arith.constant 0 : index
    %696 = vector.load %arg14[%c1, %c0_230, %c0_231] : memref<2x1x96xf32, #tpu.memory_space<vmem>>, vector<1x1x96xf32>
    %697 = vector.shape_cast %696 : vector<1x1x96xf32> to vector<1x96xf32>
    %c1_232 = arith.constant 1 : index
    %c0_233 = arith.constant 0 : index
    %c0_234 = arith.constant 0 : index
    %698 = vector.load %arg15[%c1_232, %c0_233, %c0_234] : memref<2x1x96xf32, #tpu.memory_space<vmem>>, vector<1x1x96xf32>
    %699 = vector.shape_cast %698 : vector<1x1x96xf32> to vector<1x96xf32>
    %cst_235 = arith.constant dense<0.000000e+00> : vector<16xf32>
    %700 = vector.multi_reduction <add>, %695, %cst_235 [1] : vector<16x96xf32> to vector<16xf32>
    %701 = vector.shape_cast %700 : vector<16xf32> to vector<16x1xf32>
    %cst_236 = arith.constant 9.600000e+01 : f32
    %702 = vector.broadcast %cst_236 : f32 to vector<16x1xf32>
    %703 = arith.divf %701, %702 : vector<16x1xf32>
    %704 = vector.broadcast %703 : vector<16x1xf32> to vector<16x96xf32>
    %705 = arith.subf %695, %704 : vector<16x96xf32>
    %706 = arith.mulf %705, %705 : vector<16x96xf32>
    %cst_237 = arith.constant dense<0.000000e+00> : vector<16xf32>
    %707 = vector.multi_reduction <add>, %706, %cst_237 [1] : vector<16x96xf32> to vector<16xf32>
    %708 = vector.shape_cast %707 : vector<16xf32> to vector<16x1xf32>
    %cst_238 = arith.constant 9.600000e+01 : f32
    %709 = vector.broadcast %cst_238 : f32 to vector<16x1xf32>
    %710 = arith.divf %708, %709 : vector<16x1xf32>
    %cst_239 = arith.constant 9.99999997E-7 : f32
    %711 = vector.broadcast %cst_239 : f32 to vector<16x1xf32>
    %712 = arith.addf %710, %711 : vector<16x1xf32>
    %713 = math.rsqrt %712 : vector<16x1xf32>
    %714 = vector.broadcast %713 : vector<16x1xf32> to vector<16x96xf32>
    %715 = arith.mulf %705, %714 : vector<16x96xf32>
    %716 = vector.broadcast %697 : vector<1x96xf32> to vector<16x96xf32>
    %717 = arith.mulf %715, %716 : vector<16x96xf32>
    %718 = vector.broadcast %699 : vector<1x96xf32> to vector<16x96xf32>
    %719 = arith.addf %717, %718 : vector<16x96xf32>
    %c1_240 = arith.constant 1 : index
    %c0_241 = arith.constant 0 : index
    %c0_242 = arith.constant 0 : index
    %720 = vector.load %arg16[%c1_240, %c0_241, %c0_242] : memref<2x1x96xf32, #tpu.memory_space<vmem>>, vector<1x1x96xf32>
    %721 = vector.shape_cast %720 : vector<1x1x96xf32> to vector<1x96xf32>
    %c1_243 = arith.constant 1 : index
    %c0_244 = arith.constant 0 : index
    %c0_245 = arith.constant 0 : index
    %722 = vector.load %arg17[%c1_243, %c0_244, %c0_245] : memref<2x1x96xf32, #tpu.memory_space<vmem>>, vector<1x1x96xf32>
    %723 = vector.shape_cast %722 : vector<1x1x96xf32> to vector<1x96xf32>
    %cst_246 = arith.constant dense<0.000000e+00> : vector<32xf32>
    %724 = vector.multi_reduction <add>, %243, %cst_246 [1] : vector<32x96xf32> to vector<32xf32>
    %725 = vector.shape_cast %724 : vector<32xf32> to vector<32x1xf32>
    %cst_247 = arith.constant 9.600000e+01 : f32
    %726 = vector.broadcast %cst_247 : f32 to vector<32x1xf32>
    %727 = arith.divf %725, %726 : vector<32x1xf32>
    %728 = vector.broadcast %727 : vector<32x1xf32> to vector<32x96xf32>
    %729 = arith.subf %243, %728 : vector<32x96xf32>
    %730 = arith.mulf %729, %729 : vector<32x96xf32>
    %cst_248 = arith.constant dense<0.000000e+00> : vector<32xf32>
    %731 = vector.multi_reduction <add>, %730, %cst_248 [1] : vector<32x96xf32> to vector<32xf32>
    %732 = vector.shape_cast %731 : vector<32xf32> to vector<32x1xf32>
    %cst_249 = arith.constant 9.600000e+01 : f32
    %733 = vector.broadcast %cst_249 : f32 to vector<32x1xf32>
    %734 = arith.divf %732, %733 : vector<32x1xf32>
    %cst_250 = arith.constant 9.99999997E-7 : f32
    %735 = vector.broadcast %cst_250 : f32 to vector<32x1xf32>
    %736 = arith.addf %734, %735 : vector<32x1xf32>
    %737 = math.rsqrt %736 : vector<32x1xf32>
    %738 = vector.broadcast %737 : vector<32x1xf32> to vector<32x96xf32>
    %739 = arith.mulf %729, %738 : vector<32x96xf32>
    %740 = vector.broadcast %721 : vector<1x96xf32> to vector<32x96xf32>
    %741 = arith.mulf %739, %740 : vector<32x96xf32>
    %742 = vector.broadcast %723 : vector<1x96xf32> to vector<32x96xf32>
    %743 = arith.addf %741, %742 : vector<32x96xf32>
    %c1_251 = arith.constant 1 : index
    %c0_252 = arith.constant 0 : index
    %c0_253 = arith.constant 0 : index
    %744 = vector.load %arg18[%c1_251, %c0_252, %c0_253] : memref<2x96x96xf32, #tpu.memory_space<vmem>>, vector<1x96x96xf32>
    %745 = vector.shape_cast %744 : vector<1x96x96xf32> to vector<96x96xf32>
    %c1_254 = arith.constant 1 : index
    %c0_255 = arith.constant 0 : index
    %c0_256 = arith.constant 0 : index
    %746 = vector.load %arg19[%c1_254, %c0_255, %c0_256] : memref<2x1x96xf32, #tpu.memory_space<vmem>>, vector<1x1x96xf32>
    %747 = vector.shape_cast %746 : vector<1x1x96xf32> to vector<1x96xf32>
    %c1_257 = arith.constant 1 : index
    %c0_258 = arith.constant 0 : index
    %c0_259 = arith.constant 0 : index
    %748 = vector.load %arg20[%c1_257, %c0_258, %c0_259] : memref<2x96x192xf32, #tpu.memory_space<vmem>>, vector<1x96x192xf32>
    %749 = vector.shape_cast %748 : vector<1x96x192xf32> to vector<96x192xf32>
    %c1_260 = arith.constant 1 : index
    %c0_261 = arith.constant 0 : index
    %c0_262 = arith.constant 0 : index
    %750 = vector.load %arg21[%c1_260, %c0_261, %c0_262] : memref<2x1x192xf32, #tpu.memory_space<vmem>>, vector<1x1x192xf32>
    %751 = vector.shape_cast %750 : vector<1x1x192xf32> to vector<1x192xf32>
    %c1_263 = arith.constant 1 : index
    %c0_264 = arith.constant 0 : index
    %c0_265 = arith.constant 0 : index
    %752 = vector.load %arg22[%c1_263, %c0_264, %c0_265] : memref<2x96x96xf32, #tpu.memory_space<vmem>>, vector<1x96x96xf32>
    %753 = vector.shape_cast %752 : vector<1x96x96xf32> to vector<96x96xf32>
    %c1_266 = arith.constant 1 : index
    %c0_267 = arith.constant 0 : index
    %c0_268 = arith.constant 0 : index
    %754 = vector.load %arg23[%c1_266, %c0_267, %c0_268] : memref<2x1x96xf32, #tpu.memory_space<vmem>>, vector<1x1x96xf32>
    %755 = vector.shape_cast %754 : vector<1x1x96xf32> to vector<1x96xf32>
    %756 = arith.truncf %719 : vector<16x96xf32> to vector<16x96xbf16>
    %757 = arith.truncf %745 : vector<96x96xf32> to vector<96x96xbf16>
    %cst_269 = arith.constant dense<0.000000e+00> : vector<16x96xf32>
    %758 = tpu.matmul %756, %757, %cst_269 {dimension_numbers = #tpu.dot_dimension_numbers<[1], [0], [0], [1], [0, 0, 1, 1], [], []>} : vector<16x96xbf16>, vector<96x96xbf16>, vector<16x96xf32> -> vector<16x96xf32>
    %759 = vector.broadcast %747 : vector<1x96xf32> to vector<16x96xf32>
    %760 = arith.addf %758, %759 : vector<16x96xf32>
    %761 = arith.truncf %743 : vector<32x96xf32> to vector<32x96xbf16>
    %762 = arith.truncf %749 : vector<96x192xf32> to vector<96x192xbf16>
    %cst_270 = arith.constant dense<0.000000e+00> : vector<32x192xf32>
    %763 = tpu.matmul %761, %762, %cst_270 {dimension_numbers = #tpu.dot_dimension_numbers<[1], [0], [0], [1], [0, 0, 1, 1], [], []>} : vector<32x96xbf16>, vector<96x192xbf16>, vector<32x192xf32> -> vector<32x192xf32>
    %764 = vector.broadcast %751 : vector<1x192xf32> to vector<32x192xf32>
    %765 = arith.addf %763, %764 : vector<32x192xf32>
    %766 = vector.extract_strided_slice %765 {offsets = [0, 0], sizes = [32, 96], strides = [1, 1]} : vector<32x192xf32> to vector<32x96xf32>
    %767 = vector.extract_strided_slice %765 {offsets = [0, 96], sizes = [32, 96], strides = [1, 1]} : vector<32x192xf32> to vector<32x96xf32>
    %768 = vector.extract_strided_slice %760 {offsets = [0, 0], sizes = [16, 16], strides = [1, 1]} : vector<16x96xf32> to vector<16x16xf32>
    %769 = vector.extract_strided_slice %766 {offsets = [0, 0], sizes = [32, 16], strides = [1, 1]} : vector<32x96xf32> to vector<32x16xf32>
    %770 = vector.extract_strided_slice %767 {offsets = [0, 0], sizes = [32, 16], strides = [1, 1]} : vector<32x96xf32> to vector<32x16xf32>
    %771 = arith.truncf %768 : vector<16x16xf32> to vector<16x16xbf16>
    %772 = arith.truncf %769 : vector<32x16xf32> to vector<32x16xbf16>
    %cst_271 = arith.constant dense<0.000000e+00> : vector<16x32xf32>
    %773 = tpu.matmul %771, %772, %cst_271 {dimension_numbers = #tpu.dot_dimension_numbers<[1], [1], [0], [0], [0, 0, 1, 0], [], []>} : vector<16x16xbf16>, vector<32x16xbf16>, vector<16x32xf32> -> vector<16x32xf32>
    %cst_272 = arith.constant 2.500000e-01 : f32
    %774 = vector.broadcast %cst_272 : f32 to vector<16x32xf32>
    %775 = arith.mulf %773, %774 : vector<16x32xf32>
    %cst_273 = arith.constant dense<0xFF800000> : vector<16xf32>
    %776 = vector.multi_reduction <maximumf>, %775, %cst_273 [1] : vector<16x32xf32> to vector<16xf32>
    %777 = vector.shape_cast %776 : vector<16xf32> to vector<16x1xf32>
    %778 = vector.broadcast %777 : vector<16x1xf32> to vector<16x32xf32>
    %779 = arith.subf %775, %778 : vector<16x32xf32>
    %780 = math.exp %779 : vector<16x32xf32>
    %cst_274 = arith.constant dense<0.000000e+00> : vector<16xf32>
    %781 = vector.multi_reduction <add>, %780, %cst_274 [1] : vector<16x32xf32> to vector<16xf32>
    %782 = vector.shape_cast %781 : vector<16xf32> to vector<16x1xf32>
    %783 = tpu.reciprocal %782 : vector<16x1xf32> -> vector<16x1xf32>
    %784 = vector.broadcast %783 : vector<16x1xf32> to vector<16x32xf32>
    %785 = arith.mulf %780, %784 : vector<16x32xf32>
    %786 = arith.truncf %785 : vector<16x32xf32> to vector<16x32xbf16>
    %787 = arith.truncf %770 : vector<32x16xf32> to vector<32x16xbf16>
    %cst_275 = arith.constant dense<0.000000e+00> : vector<16x16xf32>
    %788 = tpu.matmul %786, %787, %cst_275 {dimension_numbers = #tpu.dot_dimension_numbers<[1], [0], [0], [1], [0, 0, 1, 1], [], []>} : vector<16x32xbf16>, vector<32x16xbf16>, vector<16x16xf32> -> vector<16x16xf32>
    %789 = vector.extract_strided_slice %760 {offsets = [0, 16], sizes = [16, 16], strides = [1, 1]} : vector<16x96xf32> to vector<16x16xf32>
    %790 = vector.extract_strided_slice %766 {offsets = [0, 16], sizes = [32, 16], strides = [1, 1]} : vector<32x96xf32> to vector<32x16xf32>
    %791 = vector.extract_strided_slice %767 {offsets = [0, 16], sizes = [32, 16], strides = [1, 1]} : vector<32x96xf32> to vector<32x16xf32>
    %792 = arith.truncf %789 : vector<16x16xf32> to vector<16x16xbf16>
    %793 = arith.truncf %790 : vector<32x16xf32> to vector<32x16xbf16>
    %cst_276 = arith.constant dense<0.000000e+00> : vector<16x32xf32>
    %794 = tpu.matmul %792, %793, %cst_276 {dimension_numbers = #tpu.dot_dimension_numbers<[1], [1], [0], [0], [0, 0, 1, 0], [], []>} : vector<16x16xbf16>, vector<32x16xbf16>, vector<16x32xf32> -> vector<16x32xf32>
    %cst_277 = arith.constant 2.500000e-01 : f32
    %795 = vector.broadcast %cst_277 : f32 to vector<16x32xf32>
    %796 = arith.mulf %794, %795 : vector<16x32xf32>
    %cst_278 = arith.constant dense<0xFF800000> : vector<16xf32>
    %797 = vector.multi_reduction <maximumf>, %796, %cst_278 [1] : vector<16x32xf32> to vector<16xf32>
    %798 = vector.shape_cast %797 : vector<16xf32> to vector<16x1xf32>
    %799 = vector.broadcast %798 : vector<16x1xf32> to vector<16x32xf32>
    %800 = arith.subf %796, %799 : vector<16x32xf32>
    %801 = math.exp %800 : vector<16x32xf32>
    %cst_279 = arith.constant dense<0.000000e+00> : vector<16xf32>
    %802 = vector.multi_reduction <add>, %801, %cst_279 [1] : vector<16x32xf32> to vector<16xf32>
    %803 = vector.shape_cast %802 : vector<16xf32> to vector<16x1xf32>
    %804 = tpu.reciprocal %803 : vector<16x1xf32> -> vector<16x1xf32>
    %805 = vector.broadcast %804 : vector<16x1xf32> to vector<16x32xf32>
    %806 = arith.mulf %801, %805 : vector<16x32xf32>
    %807 = arith.truncf %806 : vector<16x32xf32> to vector<16x32xbf16>
    %808 = arith.truncf %791 : vector<32x16xf32> to vector<32x16xbf16>
    %cst_280 = arith.constant dense<0.000000e+00> : vector<16x16xf32>
    %809 = tpu.matmul %807, %808, %cst_280 {dimension_numbers = #tpu.dot_dimension_numbers<[1], [0], [0], [1], [0, 0, 1, 1], [], []>} : vector<16x32xbf16>, vector<32x16xbf16>, vector<16x16xf32> -> vector<16x16xf32>
    %810 = vector.extract_strided_slice %760 {offsets = [0, 32], sizes = [16, 16], strides = [1, 1]} : vector<16x96xf32> to vector<16x16xf32>
    %811 = vector.extract_strided_slice %766 {offsets = [0, 32], sizes = [32, 16], strides = [1, 1]} : vector<32x96xf32> to vector<32x16xf32>
    %812 = vector.extract_strided_slice %767 {offsets = [0, 32], sizes = [32, 16], strides = [1, 1]} : vector<32x96xf32> to vector<32x16xf32>
    %813 = arith.truncf %810 : vector<16x16xf32> to vector<16x16xbf16>
    %814 = arith.truncf %811 : vector<32x16xf32> to vector<32x16xbf16>
    %cst_281 = arith.constant dense<0.000000e+00> : vector<16x32xf32>
    %815 = tpu.matmul %813, %814, %cst_281 {dimension_numbers = #tpu.dot_dimension_numbers<[1], [1], [0], [0], [0, 0, 1, 0], [], []>} : vector<16x16xbf16>, vector<32x16xbf16>, vector<16x32xf32> -> vector<16x32xf32>
    %cst_282 = arith.constant 2.500000e-01 : f32
    %816 = vector.broadcast %cst_282 : f32 to vector<16x32xf32>
    %817 = arith.mulf %815, %816 : vector<16x32xf32>
    %cst_283 = arith.constant dense<0xFF800000> : vector<16xf32>
    %818 = vector.multi_reduction <maximumf>, %817, %cst_283 [1] : vector<16x32xf32> to vector<16xf32>
    %819 = vector.shape_cast %818 : vector<16xf32> to vector<16x1xf32>
    %820 = vector.broadcast %819 : vector<16x1xf32> to vector<16x32xf32>
    %821 = arith.subf %817, %820 : vector<16x32xf32>
    %822 = math.exp %821 : vector<16x32xf32>
    %cst_284 = arith.constant dense<0.000000e+00> : vector<16xf32>
    %823 = vector.multi_reduction <add>, %822, %cst_284 [1] : vector<16x32xf32> to vector<16xf32>
    %824 = vector.shape_cast %823 : vector<16xf32> to vector<16x1xf32>
    %825 = tpu.reciprocal %824 : vector<16x1xf32> -> vector<16x1xf32>
    %826 = vector.broadcast %825 : vector<16x1xf32> to vector<16x32xf32>
    %827 = arith.mulf %822, %826 : vector<16x32xf32>
    %828 = arith.truncf %827 : vector<16x32xf32> to vector<16x32xbf16>
    %829 = arith.truncf %812 : vector<32x16xf32> to vector<32x16xbf16>
    %cst_285 = arith.constant dense<0.000000e+00> : vector<16x16xf32>
    %830 = tpu.matmul %828, %829, %cst_285 {dimension_numbers = #tpu.dot_dimension_numbers<[1], [0], [0], [1], [0, 0, 1, 1], [], []>} : vector<16x32xbf16>, vector<32x16xbf16>, vector<16x16xf32> -> vector<16x16xf32>
    %831 = vector.extract_strided_slice %760 {offsets = [0, 48], sizes = [16, 16], strides = [1, 1]} : vector<16x96xf32> to vector<16x16xf32>
    %832 = vector.extract_strided_slice %766 {offsets = [0, 48], sizes = [32, 16], strides = [1, 1]} : vector<32x96xf32> to vector<32x16xf32>
    %833 = vector.extract_strided_slice %767 {offsets = [0, 48], sizes = [32, 16], strides = [1, 1]} : vector<32x96xf32> to vector<32x16xf32>
    %834 = arith.truncf %831 : vector<16x16xf32> to vector<16x16xbf16>
    %835 = arith.truncf %832 : vector<32x16xf32> to vector<32x16xbf16>
    %cst_286 = arith.constant dense<0.000000e+00> : vector<16x32xf32>
    %836 = tpu.matmul %834, %835, %cst_286 {dimension_numbers = #tpu.dot_dimension_numbers<[1], [1], [0], [0], [0, 0, 1, 0], [], []>} : vector<16x16xbf16>, vector<32x16xbf16>, vector<16x32xf32> -> vector<16x32xf32>
    %cst_287 = arith.constant 2.500000e-01 : f32
    %837 = vector.broadcast %cst_287 : f32 to vector<16x32xf32>
    %838 = arith.mulf %836, %837 : vector<16x32xf32>
    %cst_288 = arith.constant dense<0xFF800000> : vector<16xf32>
    %839 = vector.multi_reduction <maximumf>, %838, %cst_288 [1] : vector<16x32xf32> to vector<16xf32>
    %840 = vector.shape_cast %839 : vector<16xf32> to vector<16x1xf32>
    %841 = vector.broadcast %840 : vector<16x1xf32> to vector<16x32xf32>
    %842 = arith.subf %838, %841 : vector<16x32xf32>
    %843 = math.exp %842 : vector<16x32xf32>
    %cst_289 = arith.constant dense<0.000000e+00> : vector<16xf32>
    %844 = vector.multi_reduction <add>, %843, %cst_289 [1] : vector<16x32xf32> to vector<16xf32>
    %845 = vector.shape_cast %844 : vector<16xf32> to vector<16x1xf32>
    %846 = tpu.reciprocal %845 : vector<16x1xf32> -> vector<16x1xf32>
    %847 = vector.broadcast %846 : vector<16x1xf32> to vector<16x32xf32>
    %848 = arith.mulf %843, %847 : vector<16x32xf32>
    %849 = arith.truncf %848 : vector<16x32xf32> to vector<16x32xbf16>
    %850 = arith.truncf %833 : vector<32x16xf32> to vector<32x16xbf16>
    %cst_290 = arith.constant dense<0.000000e+00> : vector<16x16xf32>
    %851 = tpu.matmul %849, %850, %cst_290 {dimension_numbers = #tpu.dot_dimension_numbers<[1], [0], [0], [1], [0, 0, 1, 1], [], []>} : vector<16x32xbf16>, vector<32x16xbf16>, vector<16x16xf32> -> vector<16x16xf32>
    %852 = vector.extract_strided_slice %760 {offsets = [0, 64], sizes = [16, 16], strides = [1, 1]} : vector<16x96xf32> to vector<16x16xf32>
    %853 = vector.extract_strided_slice %766 {offsets = [0, 64], sizes = [32, 16], strides = [1, 1]} : vector<32x96xf32> to vector<32x16xf32>
    %854 = vector.extract_strided_slice %767 {offsets = [0, 64], sizes = [32, 16], strides = [1, 1]} : vector<32x96xf32> to vector<32x16xf32>
    %855 = arith.truncf %852 : vector<16x16xf32> to vector<16x16xbf16>
    %856 = arith.truncf %853 : vector<32x16xf32> to vector<32x16xbf16>
    %cst_291 = arith.constant dense<0.000000e+00> : vector<16x32xf32>
    %857 = tpu.matmul %855, %856, %cst_291 {dimension_numbers = #tpu.dot_dimension_numbers<[1], [1], [0], [0], [0, 0, 1, 0], [], []>} : vector<16x16xbf16>, vector<32x16xbf16>, vector<16x32xf32> -> vector<16x32xf32>
    %cst_292 = arith.constant 2.500000e-01 : f32
    %858 = vector.broadcast %cst_292 : f32 to vector<16x32xf32>
    %859 = arith.mulf %857, %858 : vector<16x32xf32>
    %cst_293 = arith.constant dense<0xFF800000> : vector<16xf32>
    %860 = vector.multi_reduction <maximumf>, %859, %cst_293 [1] : vector<16x32xf32> to vector<16xf32>
    %861 = vector.shape_cast %860 : vector<16xf32> to vector<16x1xf32>
    %862 = vector.broadcast %861 : vector<16x1xf32> to vector<16x32xf32>
    %863 = arith.subf %859, %862 : vector<16x32xf32>
    %864 = math.exp %863 : vector<16x32xf32>
    %cst_294 = arith.constant dense<0.000000e+00> : vector<16xf32>
    %865 = vector.multi_reduction <add>, %864, %cst_294 [1] : vector<16x32xf32> to vector<16xf32>
    %866 = vector.shape_cast %865 : vector<16xf32> to vector<16x1xf32>
    %867 = tpu.reciprocal %866 : vector<16x1xf32> -> vector<16x1xf32>
    %868 = vector.broadcast %867 : vector<16x1xf32> to vector<16x32xf32>
    %869 = arith.mulf %864, %868 : vector<16x32xf32>
    %870 = arith.truncf %869 : vector<16x32xf32> to vector<16x32xbf16>
    %871 = arith.truncf %854 : vector<32x16xf32> to vector<32x16xbf16>
    %cst_295 = arith.constant dense<0.000000e+00> : vector<16x16xf32>
    %872 = tpu.matmul %870, %871, %cst_295 {dimension_numbers = #tpu.dot_dimension_numbers<[1], [0], [0], [1], [0, 0, 1, 1], [], []>} : vector<16x32xbf16>, vector<32x16xbf16>, vector<16x16xf32> -> vector<16x16xf32>
    %873 = vector.extract_strided_slice %760 {offsets = [0, 80], sizes = [16, 16], strides = [1, 1]} : vector<16x96xf32> to vector<16x16xf32>
    %874 = vector.extract_strided_slice %766 {offsets = [0, 80], sizes = [32, 16], strides = [1, 1]} : vector<32x96xf32> to vector<32x16xf32>
    %875 = vector.extract_strided_slice %767 {offsets = [0, 80], sizes = [32, 16], strides = [1, 1]} : vector<32x96xf32> to vector<32x16xf32>
    %876 = arith.truncf %873 : vector<16x16xf32> to vector<16x16xbf16>
    %877 = arith.truncf %874 : vector<32x16xf32> to vector<32x16xbf16>
    %cst_296 = arith.constant dense<0.000000e+00> : vector<16x32xf32>
    %878 = tpu.matmul %876, %877, %cst_296 {dimension_numbers = #tpu.dot_dimension_numbers<[1], [1], [0], [0], [0, 0, 1, 0], [], []>} : vector<16x16xbf16>, vector<32x16xbf16>, vector<16x32xf32> -> vector<16x32xf32>
    %cst_297 = arith.constant 2.500000e-01 : f32
    %879 = vector.broadcast %cst_297 : f32 to vector<16x32xf32>
    %880 = arith.mulf %878, %879 : vector<16x32xf32>
    %cst_298 = arith.constant dense<0xFF800000> : vector<16xf32>
    %881 = vector.multi_reduction <maximumf>, %880, %cst_298 [1] : vector<16x32xf32> to vector<16xf32>
    %882 = vector.shape_cast %881 : vector<16xf32> to vector<16x1xf32>
    %883 = vector.broadcast %882 : vector<16x1xf32> to vector<16x32xf32>
    %884 = arith.subf %880, %883 : vector<16x32xf32>
    %885 = math.exp %884 : vector<16x32xf32>
    %cst_299 = arith.constant dense<0.000000e+00> : vector<16xf32>
    %886 = vector.multi_reduction <add>, %885, %cst_299 [1] : vector<16x32xf32> to vector<16xf32>
    %887 = vector.shape_cast %886 : vector<16xf32> to vector<16x1xf32>
    %888 = tpu.reciprocal %887 : vector<16x1xf32> -> vector<16x1xf32>
    %889 = vector.broadcast %888 : vector<16x1xf32> to vector<16x32xf32>
    %890 = arith.mulf %885, %889 : vector<16x32xf32>
    %891 = arith.truncf %890 : vector<16x32xf32> to vector<16x32xbf16>
    %892 = arith.truncf %875 : vector<32x16xf32> to vector<32x16xbf16>
    %cst_300 = arith.constant dense<0.000000e+00> : vector<16x16xf32>
    %893 = tpu.matmul %891, %892, %cst_300 {dimension_numbers = #tpu.dot_dimension_numbers<[1], [0], [0], [1], [0, 0, 1, 1], [], []>} : vector<16x32xbf16>, vector<32x16xbf16>, vector<16x16xf32> -> vector<16x16xf32>
    %894 = tpu.concatenate %788, %809, %830, %851, %872, %893 in 1 : vector<16x16xf32>, vector<16x16xf32>, vector<16x16xf32>, vector<16x16xf32>, vector<16x16xf32>, vector<16x16xf32> -> vector<16x96xf32>
    %895 = arith.truncf %894 : vector<16x96xf32> to vector<16x96xbf16>
    %896 = arith.truncf %753 : vector<96x96xf32> to vector<96x96xbf16>
    %cst_301 = arith.constant dense<0.000000e+00> : vector<16x96xf32>
    %897 = tpu.matmul %895, %896, %cst_301 {dimension_numbers = #tpu.dot_dimension_numbers<[1], [0], [0], [1], [0, 0, 1, 1], [], []>} : vector<16x96xbf16>, vector<96x96xbf16>, vector<16x96xf32> -> vector<16x96xf32>
    %898 = vector.broadcast %755 : vector<1x96xf32> to vector<16x96xf32>
    %899 = arith.addf %897, %898 : vector<16x96xf32>
    %900 = arith.addf %695, %899 : vector<16x96xf32>
    %c1_302 = arith.constant 1 : index
    %c0_303 = arith.constant 0 : index
    %c0_304 = arith.constant 0 : index
    %901 = vector.load %arg24[%c1_302, %c0_303, %c0_304] : memref<2x1x96xf32, #tpu.memory_space<vmem>>, vector<1x1x96xf32>
    %902 = vector.shape_cast %901 : vector<1x1x96xf32> to vector<1x96xf32>
    %c1_305 = arith.constant 1 : index
    %c0_306 = arith.constant 0 : index
    %c0_307 = arith.constant 0 : index
    %903 = vector.load %arg25[%c1_305, %c0_306, %c0_307] : memref<2x1x96xf32, #tpu.memory_space<vmem>>, vector<1x1x96xf32>
    %904 = vector.shape_cast %903 : vector<1x1x96xf32> to vector<1x96xf32>
    %cst_308 = arith.constant dense<0.000000e+00> : vector<16xf32>
    %905 = vector.multi_reduction <add>, %900, %cst_308 [1] : vector<16x96xf32> to vector<16xf32>
    %906 = vector.shape_cast %905 : vector<16xf32> to vector<16x1xf32>
    %cst_309 = arith.constant 9.600000e+01 : f32
    %907 = vector.broadcast %cst_309 : f32 to vector<16x1xf32>
    %908 = arith.divf %906, %907 : vector<16x1xf32>
    %909 = vector.broadcast %908 : vector<16x1xf32> to vector<16x96xf32>
    %910 = arith.subf %900, %909 : vector<16x96xf32>
    %911 = arith.mulf %910, %910 : vector<16x96xf32>
    %cst_310 = arith.constant dense<0.000000e+00> : vector<16xf32>
    %912 = vector.multi_reduction <add>, %911, %cst_310 [1] : vector<16x96xf32> to vector<16xf32>
    %913 = vector.shape_cast %912 : vector<16xf32> to vector<16x1xf32>
    %cst_311 = arith.constant 9.600000e+01 : f32
    %914 = vector.broadcast %cst_311 : f32 to vector<16x1xf32>
    %915 = arith.divf %913, %914 : vector<16x1xf32>
    %cst_312 = arith.constant 9.99999997E-7 : f32
    %916 = vector.broadcast %cst_312 : f32 to vector<16x1xf32>
    %917 = arith.addf %915, %916 : vector<16x1xf32>
    %918 = math.rsqrt %917 : vector<16x1xf32>
    %919 = vector.broadcast %918 : vector<16x1xf32> to vector<16x96xf32>
    %920 = arith.mulf %910, %919 : vector<16x96xf32>
    %921 = vector.broadcast %902 : vector<1x96xf32> to vector<16x96xf32>
    %922 = arith.mulf %920, %921 : vector<16x96xf32>
    %923 = vector.broadcast %904 : vector<1x96xf32> to vector<16x96xf32>
    %924 = arith.addf %922, %923 : vector<16x96xf32>
    %c1_313 = arith.constant 1 : index
    %c0_314 = arith.constant 0 : index
    %c0_315 = arith.constant 0 : index
    %925 = vector.load %arg26[%c1_313, %c0_314, %c0_315] : memref<2x96x19xf32, #tpu.memory_space<vmem>>, vector<1x96x19xf32>
    %926 = vector.shape_cast %925 : vector<1x96x19xf32> to vector<96x19xf32>
    %c1_316 = arith.constant 1 : index
    %c0_317 = arith.constant 0 : index
    %c0_318 = arith.constant 0 : index
    %927 = vector.load %arg27[%c1_316, %c0_317, %c0_318] : memref<2x1x19xf32, #tpu.memory_space<vmem>>, vector<1x1x19xf32>
    %928 = vector.shape_cast %927 : vector<1x1x19xf32> to vector<1x19xf32>
    %c1_319 = arith.constant 1 : index
    %c0_320 = arith.constant 0 : index
    %c0_321 = arith.constant 0 : index
    %929 = vector.load %arg28[%c1_319, %c0_320, %c0_321] : memref<2x9x19xf32, #tpu.memory_space<vmem>>, vector<1x9x19xf32>
    %930 = vector.shape_cast %929 : vector<1x9x19xf32> to vector<9x19xf32>
    %c1_322 = arith.constant 1 : index
    %c0_323 = arith.constant 0 : index
    %c0_324 = arith.constant 0 : index
    %931 = vector.load %arg29[%c1_322, %c0_323, %c0_324] : memref<2x1x19xf32, #tpu.memory_space<vmem>>, vector<1x1x19xf32>
    %932 = vector.shape_cast %931 : vector<1x1x19xf32> to vector<1x19xf32>
    %c1_325 = arith.constant 1 : index
    %c0_326 = arith.constant 0 : index
    %c0_327 = arith.constant 0 : index
    %933 = vector.load %arg30[%c1_325, %c0_326, %c0_327] : memref<2x19x96xf32, #tpu.memory_space<vmem>>, vector<1x19x96xf32>
    %934 = vector.shape_cast %933 : vector<1x19x96xf32> to vector<19x96xf32>
    %c1_328 = arith.constant 1 : index
    %c0_329 = arith.constant 0 : index
    %c0_330 = arith.constant 0 : index
    %935 = vector.load %arg31[%c1_328, %c0_329, %c0_330] : memref<2x1x96xf32, #tpu.memory_space<vmem>>, vector<1x1x96xf32>
    %936 = vector.shape_cast %935 : vector<1x1x96xf32> to vector<1x96xf32>
    %937 = arith.truncf %924 : vector<16x96xf32> to vector<16x96xbf16>
    %938 = arith.truncf %926 : vector<96x19xf32> to vector<96x19xbf16>
    %cst_331 = arith.constant dense<0.000000e+00> : vector<16x19xf32>
    %939 = tpu.matmul %937, %938, %cst_331 {dimension_numbers = #tpu.dot_dimension_numbers<[1], [0], [0], [1], [0, 0, 1, 1], [], []>} : vector<16x96xbf16>, vector<96x19xbf16>, vector<16x19xf32> -> vector<16x19xf32>
    %940 = vector.broadcast %928 : vector<1x19xf32> to vector<16x19xf32>
    %941 = arith.addf %939, %940 : vector<16x19xf32>
    %cst_332 = arith.constant 0.000000e+00 : f32
    %942 = vector.broadcast %cst_332 : f32 to vector<5x19xf32>
    %943 = tpu.concatenate %942, %941, %942 in 0 : vector<5x19xf32>, vector<16x19xf32>, vector<5x19xf32> -> vector<26x19xf32>
    %944 = tpu.iota {dimensions = array<i32: 0>} : vector<16x1xi32>
    %c4_i32_333 = arith.constant 4 : i32
    %c0_i32_334 = arith.constant 0 : i32
    %945 = arith.cmpi eq, %c4_i32_333, %c0_i32_334 : i32
    %c1_i32_335 = arith.constant 1 : i32
    %946 = arith.select %945, %c1_i32_335, %c4_i32_333 : i32
    %947 = vector.broadcast %946 : i32 to vector<16x1xi32>
    %948 = arith.remsi %944, %947 : vector<16x1xi32>
    %c0_i32_336 = arith.constant 0 : i32
    %949 = vector.broadcast %c0_i32_336 : i32 to vector<16x1xi32>
    %950 = arith.cmpi ne, %948, %949 : vector<16x1xi32>
    %c0_i32_337 = arith.constant 0 : i32
    %951 = vector.broadcast %c0_i32_337 : i32 to vector<16x1xi32>
    %952 = arith.cmpi slt, %948, %951 : vector<16x1xi32>
    %c0_i32_338 = arith.constant 0 : i32
    %953 = arith.cmpi slt, %946, %c0_i32_338 : i32
    %954 = vector.broadcast %953 : i1 to vector<16x1xi1>
    %955 = vector.broadcast %954 : vector<16x1xi1> to vector<16x1xi1>
    %956 = arith.xori %952, %955 : vector<16x1xi1>
    %957 = arith.andi %956, %950 : vector<16x1xi1>
    %958 = vector.broadcast %946 : i32 to vector<16x1xi32>
    %959 = arith.addi %948, %958 : vector<16x1xi32>
    %960 = arith.select %957, %959, %948 : vector<16x1xi1>, vector<16x1xi32>
    %cst_339 = arith.constant 0.000000e+00 : f32
    %961 = vector.broadcast %cst_339 : f32 to vector<16x19xf32>
    %962 = vector.extract_strided_slice %943 {offsets = [0, 0], sizes = [16, 19], strides = [1, 1]} : vector<26x19xf32> to vector<16x19xf32>
    %c-1_i32_340 = arith.constant -1 : i32
    %963 = vector.broadcast %c-1_i32_340 : i32 to vector<16x1xi32>
    %964 = arith.addi %960, %963 : vector<16x1xi32>
    %c0_i32_341 = arith.constant 0 : i32
    %965 = vector.broadcast %c0_i32_341 : i32 to vector<16x1xi32>
    %966 = arith.cmpi sge, %964, %965 : vector<16x1xi32>
    %c-1_i32_342 = arith.constant -1 : i32
    %967 = vector.broadcast %c-1_i32_342 : i32 to vector<16x1xi32>
    %968 = arith.addi %960, %967 : vector<16x1xi32>
    %c4_i32_343 = arith.constant 4 : i32
    %969 = vector.broadcast %c4_i32_343 : i32 to vector<16x1xi32>
    %970 = arith.cmpi slt, %968, %969 : vector<16x1xi32>
    %971 = arith.andi %966, %970 : vector<16x1xi1>
    %972 = arith.extui %971 : vector<16x1xi1> to vector<16x1xi32>
    %973 = arith.sitofp %972 : vector<16x1xi32> to vector<16x1xf32>
    %974 = vector.broadcast %973 : vector<16x1xf32> to vector<16x19xf32>
    %975 = arith.mulf %962, %974 : vector<16x19xf32>
    %976 = vector.extract_strided_slice %930 {offsets = [0, 0], sizes = [1, 19], strides = [1, 1]} : vector<9x19xf32> to vector<1x19xf32>
    %977 = vector.broadcast %976 : vector<1x19xf32> to vector<16x19xf32>
    %978 = arith.mulf %975, %977 : vector<16x19xf32>
    %979 = arith.addf %961, %978 : vector<16x19xf32>
    %980 = vector.extract_strided_slice %943 {offsets = [1, 0], sizes = [16, 19], strides = [1, 1]} : vector<26x19xf32> to vector<16x19xf32>
    %c0_i32_344 = arith.constant 0 : i32
    %981 = vector.broadcast %c0_i32_344 : i32 to vector<16x1xi32>
    %982 = arith.addi %960, %981 : vector<16x1xi32>
    %c0_i32_345 = arith.constant 0 : i32
    %983 = vector.broadcast %c0_i32_345 : i32 to vector<16x1xi32>
    %984 = arith.cmpi sge, %982, %983 : vector<16x1xi32>
    %c0_i32_346 = arith.constant 0 : i32
    %985 = vector.broadcast %c0_i32_346 : i32 to vector<16x1xi32>
    %986 = arith.addi %960, %985 : vector<16x1xi32>
    %c4_i32_347 = arith.constant 4 : i32
    %987 = vector.broadcast %c4_i32_347 : i32 to vector<16x1xi32>
    %988 = arith.cmpi slt, %986, %987 : vector<16x1xi32>
    %989 = arith.andi %984, %988 : vector<16x1xi1>
    %990 = arith.extui %989 : vector<16x1xi1> to vector<16x1xi32>
    %991 = arith.sitofp %990 : vector<16x1xi32> to vector<16x1xf32>
    %992 = vector.broadcast %991 : vector<16x1xf32> to vector<16x19xf32>
    %993 = arith.mulf %980, %992 : vector<16x19xf32>
    %994 = vector.extract_strided_slice %930 {offsets = [1, 0], sizes = [1, 19], strides = [1, 1]} : vector<9x19xf32> to vector<1x19xf32>
    %995 = vector.broadcast %994 : vector<1x19xf32> to vector<16x19xf32>
    %996 = arith.mulf %993, %995 : vector<16x19xf32>
    %997 = arith.addf %979, %996 : vector<16x19xf32>
    %998 = vector.extract_strided_slice %943 {offsets = [2, 0], sizes = [16, 19], strides = [1, 1]} : vector<26x19xf32> to vector<16x19xf32>
    %c1_i32_348 = arith.constant 1 : i32
    %999 = vector.broadcast %c1_i32_348 : i32 to vector<16x1xi32>
    %1000 = arith.addi %960, %999 : vector<16x1xi32>
    %c0_i32_349 = arith.constant 0 : i32
    %1001 = vector.broadcast %c0_i32_349 : i32 to vector<16x1xi32>
    %1002 = arith.cmpi sge, %1000, %1001 : vector<16x1xi32>
    %c1_i32_350 = arith.constant 1 : i32
    %1003 = vector.broadcast %c1_i32_350 : i32 to vector<16x1xi32>
    %1004 = arith.addi %960, %1003 : vector<16x1xi32>
    %c4_i32_351 = arith.constant 4 : i32
    %1005 = vector.broadcast %c4_i32_351 : i32 to vector<16x1xi32>
    %1006 = arith.cmpi slt, %1004, %1005 : vector<16x1xi32>
    %1007 = arith.andi %1002, %1006 : vector<16x1xi1>
    %1008 = arith.extui %1007 : vector<16x1xi1> to vector<16x1xi32>
    %1009 = arith.sitofp %1008 : vector<16x1xi32> to vector<16x1xf32>
    %1010 = vector.broadcast %1009 : vector<16x1xf32> to vector<16x19xf32>
    %1011 = arith.mulf %998, %1010 : vector<16x19xf32>
    %1012 = vector.extract_strided_slice %930 {offsets = [2, 0], sizes = [1, 19], strides = [1, 1]} : vector<9x19xf32> to vector<1x19xf32>
    %1013 = vector.broadcast %1012 : vector<1x19xf32> to vector<16x19xf32>
    %1014 = arith.mulf %1011, %1013 : vector<16x19xf32>
    %1015 = arith.addf %997, %1014 : vector<16x19xf32>
    %1016 = vector.extract_strided_slice %943 {offsets = [4, 0], sizes = [16, 19], strides = [1, 1]} : vector<26x19xf32> to vector<16x19xf32>
    %c-1_i32_352 = arith.constant -1 : i32
    %1017 = vector.broadcast %c-1_i32_352 : i32 to vector<16x1xi32>
    %1018 = arith.addi %960, %1017 : vector<16x1xi32>
    %c0_i32_353 = arith.constant 0 : i32
    %1019 = vector.broadcast %c0_i32_353 : i32 to vector<16x1xi32>
    %1020 = arith.cmpi sge, %1018, %1019 : vector<16x1xi32>
    %c-1_i32_354 = arith.constant -1 : i32
    %1021 = vector.broadcast %c-1_i32_354 : i32 to vector<16x1xi32>
    %1022 = arith.addi %960, %1021 : vector<16x1xi32>
    %c4_i32_355 = arith.constant 4 : i32
    %1023 = vector.broadcast %c4_i32_355 : i32 to vector<16x1xi32>
    %1024 = arith.cmpi slt, %1022, %1023 : vector<16x1xi32>
    %1025 = arith.andi %1020, %1024 : vector<16x1xi1>
    %1026 = arith.extui %1025 : vector<16x1xi1> to vector<16x1xi32>
    %1027 = arith.sitofp %1026 : vector<16x1xi32> to vector<16x1xf32>
    %1028 = vector.broadcast %1027 : vector<16x1xf32> to vector<16x19xf32>
    %1029 = arith.mulf %1016, %1028 : vector<16x19xf32>
    %1030 = vector.extract_strided_slice %930 {offsets = [3, 0], sizes = [1, 19], strides = [1, 1]} : vector<9x19xf32> to vector<1x19xf32>
    %1031 = vector.broadcast %1030 : vector<1x19xf32> to vector<16x19xf32>
    %1032 = arith.mulf %1029, %1031 : vector<16x19xf32>
    %1033 = arith.addf %1015, %1032 : vector<16x19xf32>
    %1034 = vector.extract_strided_slice %943 {offsets = [5, 0], sizes = [16, 19], strides = [1, 1]} : vector<26x19xf32> to vector<16x19xf32>
    %c0_i32_356 = arith.constant 0 : i32
    %1035 = vector.broadcast %c0_i32_356 : i32 to vector<16x1xi32>
    %1036 = arith.addi %960, %1035 : vector<16x1xi32>
    %c0_i32_357 = arith.constant 0 : i32
    %1037 = vector.broadcast %c0_i32_357 : i32 to vector<16x1xi32>
    %1038 = arith.cmpi sge, %1036, %1037 : vector<16x1xi32>
    %c0_i32_358 = arith.constant 0 : i32
    %1039 = vector.broadcast %c0_i32_358 : i32 to vector<16x1xi32>
    %1040 = arith.addi %960, %1039 : vector<16x1xi32>
    %c4_i32_359 = arith.constant 4 : i32
    %1041 = vector.broadcast %c4_i32_359 : i32 to vector<16x1xi32>
    %1042 = arith.cmpi slt, %1040, %1041 : vector<16x1xi32>
    %1043 = arith.andi %1038, %1042 : vector<16x1xi1>
    %1044 = arith.extui %1043 : vector<16x1xi1> to vector<16x1xi32>
    %1045 = arith.sitofp %1044 : vector<16x1xi32> to vector<16x1xf32>
    %1046 = vector.broadcast %1045 : vector<16x1xf32> to vector<16x19xf32>
    %1047 = arith.mulf %1034, %1046 : vector<16x19xf32>
    %1048 = vector.extract_strided_slice %930 {offsets = [4, 0], sizes = [1, 19], strides = [1, 1]} : vector<9x19xf32> to vector<1x19xf32>
    %1049 = vector.broadcast %1048 : vector<1x19xf32> to vector<16x19xf32>
    %1050 = arith.mulf %1047, %1049 : vector<16x19xf32>
    %1051 = arith.addf %1033, %1050 : vector<16x19xf32>
    %1052 = vector.extract_strided_slice %943 {offsets = [6, 0], sizes = [16, 19], strides = [1, 1]} : vector<26x19xf32> to vector<16x19xf32>
    %c1_i32_360 = arith.constant 1 : i32
    %1053 = vector.broadcast %c1_i32_360 : i32 to vector<16x1xi32>
    %1054 = arith.addi %960, %1053 : vector<16x1xi32>
    %c0_i32_361 = arith.constant 0 : i32
    %1055 = vector.broadcast %c0_i32_361 : i32 to vector<16x1xi32>
    %1056 = arith.cmpi sge, %1054, %1055 : vector<16x1xi32>
    %c1_i32_362 = arith.constant 1 : i32
    %1057 = vector.broadcast %c1_i32_362 : i32 to vector<16x1xi32>
    %1058 = arith.addi %960, %1057 : vector<16x1xi32>
    %c4_i32_363 = arith.constant 4 : i32
    %1059 = vector.broadcast %c4_i32_363 : i32 to vector<16x1xi32>
    %1060 = arith.cmpi slt, %1058, %1059 : vector<16x1xi32>
    %1061 = arith.andi %1056, %1060 : vector<16x1xi1>
    %1062 = arith.extui %1061 : vector<16x1xi1> to vector<16x1xi32>
    %1063 = arith.sitofp %1062 : vector<16x1xi32> to vector<16x1xf32>
    %1064 = vector.broadcast %1063 : vector<16x1xf32> to vector<16x19xf32>
    %1065 = arith.mulf %1052, %1064 : vector<16x19xf32>
    %1066 = vector.extract_strided_slice %930 {offsets = [5, 0], sizes = [1, 19], strides = [1, 1]} : vector<9x19xf32> to vector<1x19xf32>
    %1067 = vector.broadcast %1066 : vector<1x19xf32> to vector<16x19xf32>
    %1068 = arith.mulf %1065, %1067 : vector<16x19xf32>
    %1069 = arith.addf %1051, %1068 : vector<16x19xf32>
    %1070 = vector.extract_strided_slice %943 {offsets = [8, 0], sizes = [16, 19], strides = [1, 1]} : vector<26x19xf32> to vector<16x19xf32>
    %c-1_i32_364 = arith.constant -1 : i32
    %1071 = vector.broadcast %c-1_i32_364 : i32 to vector<16x1xi32>
    %1072 = arith.addi %960, %1071 : vector<16x1xi32>
    %c0_i32_365 = arith.constant 0 : i32
    %1073 = vector.broadcast %c0_i32_365 : i32 to vector<16x1xi32>
    %1074 = arith.cmpi sge, %1072, %1073 : vector<16x1xi32>
    %c-1_i32_366 = arith.constant -1 : i32
    %1075 = vector.broadcast %c-1_i32_366 : i32 to vector<16x1xi32>
    %1076 = arith.addi %960, %1075 : vector<16x1xi32>
    %c4_i32_367 = arith.constant 4 : i32
    %1077 = vector.broadcast %c4_i32_367 : i32 to vector<16x1xi32>
    %1078 = arith.cmpi slt, %1076, %1077 : vector<16x1xi32>
    %1079 = arith.andi %1074, %1078 : vector<16x1xi1>
    %1080 = arith.extui %1079 : vector<16x1xi1> to vector<16x1xi32>
    %1081 = arith.sitofp %1080 : vector<16x1xi32> to vector<16x1xf32>
    %1082 = vector.broadcast %1081 : vector<16x1xf32> to vector<16x19xf32>
    %1083 = arith.mulf %1070, %1082 : vector<16x19xf32>
    %1084 = vector.extract_strided_slice %930 {offsets = [6, 0], sizes = [1, 19], strides = [1, 1]} : vector<9x19xf32> to vector<1x19xf32>
    %1085 = vector.broadcast %1084 : vector<1x19xf32> to vector<16x19xf32>
    %1086 = arith.mulf %1083, %1085 : vector<16x19xf32>
    %1087 = arith.addf %1069, %1086 : vector<16x19xf32>
    %1088 = vector.extract_strided_slice %943 {offsets = [9, 0], sizes = [16, 19], strides = [1, 1]} : vector<26x19xf32> to vector<16x19xf32>
    %c0_i32_368 = arith.constant 0 : i32
    %1089 = vector.broadcast %c0_i32_368 : i32 to vector<16x1xi32>
    %1090 = arith.addi %960, %1089 : vector<16x1xi32>
    %c0_i32_369 = arith.constant 0 : i32
    %1091 = vector.broadcast %c0_i32_369 : i32 to vector<16x1xi32>
    %1092 = arith.cmpi sge, %1090, %1091 : vector<16x1xi32>
    %c0_i32_370 = arith.constant 0 : i32
    %1093 = vector.broadcast %c0_i32_370 : i32 to vector<16x1xi32>
    %1094 = arith.addi %960, %1093 : vector<16x1xi32>
    %c4_i32_371 = arith.constant 4 : i32
    %1095 = vector.broadcast %c4_i32_371 : i32 to vector<16x1xi32>
    %1096 = arith.cmpi slt, %1094, %1095 : vector<16x1xi32>
    %1097 = arith.andi %1092, %1096 : vector<16x1xi1>
    %1098 = arith.extui %1097 : vector<16x1xi1> to vector<16x1xi32>
    %1099 = arith.sitofp %1098 : vector<16x1xi32> to vector<16x1xf32>
    %1100 = vector.broadcast %1099 : vector<16x1xf32> to vector<16x19xf32>
    %1101 = arith.mulf %1088, %1100 : vector<16x19xf32>
    %1102 = vector.extract_strided_slice %930 {offsets = [7, 0], sizes = [1, 19], strides = [1, 1]} : vector<9x19xf32> to vector<1x19xf32>
    %1103 = vector.broadcast %1102 : vector<1x19xf32> to vector<16x19xf32>
    %1104 = arith.mulf %1101, %1103 : vector<16x19xf32>
    %1105 = arith.addf %1087, %1104 : vector<16x19xf32>
    %1106 = vector.extract_strided_slice %943 {offsets = [10, 0], sizes = [16, 19], strides = [1, 1]} : vector<26x19xf32> to vector<16x19xf32>
    %c1_i32_372 = arith.constant 1 : i32
    %1107 = vector.broadcast %c1_i32_372 : i32 to vector<16x1xi32>
    %1108 = arith.addi %960, %1107 : vector<16x1xi32>
    %c0_i32_373 = arith.constant 0 : i32
    %1109 = vector.broadcast %c0_i32_373 : i32 to vector<16x1xi32>
    %1110 = arith.cmpi sge, %1108, %1109 : vector<16x1xi32>
    %c1_i32_374 = arith.constant 1 : i32
    %1111 = vector.broadcast %c1_i32_374 : i32 to vector<16x1xi32>
    %1112 = arith.addi %960, %1111 : vector<16x1xi32>
    %c4_i32_375 = arith.constant 4 : i32
    %1113 = vector.broadcast %c4_i32_375 : i32 to vector<16x1xi32>
    %1114 = arith.cmpi slt, %1112, %1113 : vector<16x1xi32>
    %1115 = arith.andi %1110, %1114 : vector<16x1xi1>
    %1116 = arith.extui %1115 : vector<16x1xi1> to vector<16x1xi32>
    %1117 = arith.sitofp %1116 : vector<16x1xi32> to vector<16x1xf32>
    %1118 = vector.broadcast %1117 : vector<16x1xf32> to vector<16x19xf32>
    %1119 = arith.mulf %1106, %1118 : vector<16x19xf32>
    %1120 = vector.extract_strided_slice %930 {offsets = [8, 0], sizes = [1, 19], strides = [1, 1]} : vector<9x19xf32> to vector<1x19xf32>
    %1121 = vector.broadcast %1120 : vector<1x19xf32> to vector<16x19xf32>
    %1122 = arith.mulf %1119, %1121 : vector<16x19xf32>
    %1123 = arith.addf %1105, %1122 : vector<16x19xf32>
    %1124 = vector.broadcast %932 : vector<1x19xf32> to vector<16x19xf32>
    %1125 = arith.addf %1123, %1124 : vector<16x19xf32>
    %cst_376 = arith.constant 5.000000e-01 : f32
    %1126 = vector.broadcast %cst_376 : f32 to vector<16x19xf32>
    %1127 = arith.mulf %1126, %1125 : vector<16x19xf32>
    %cst_377 = arith.constant 4.471500e-02 : f32
    %1128 = vector.broadcast %cst_377 : f32 to vector<16x19xf32>
    %1129 = arith.mulf %1128, %1125 : vector<16x19xf32>
    %1130 = arith.mulf %1129, %1125 : vector<16x19xf32>
    %1131 = arith.mulf %1130, %1125 : vector<16x19xf32>
    %1132 = arith.addf %1125, %1131 : vector<16x19xf32>
    %cst_378 = arith.constant 0.797884583 : f32
    %1133 = vector.broadcast %cst_378 : f32 to vector<16x19xf32>
    %1134 = arith.mulf %1133, %1132 : vector<16x19xf32>
    %1135 = math.tanh %1134 : vector<16x19xf32>
    %cst_379 = arith.constant 1.000000e+00 : f32
    %1136 = vector.broadcast %cst_379 : f32 to vector<16x19xf32>
    %1137 = arith.addf %1136, %1135 : vector<16x19xf32>
    %1138 = arith.mulf %1127, %1137 : vector<16x19xf32>
    %1139 = arith.truncf %1138 : vector<16x19xf32> to vector<16x19xbf16>
    %1140 = arith.truncf %934 : vector<19x96xf32> to vector<19x96xbf16>
    %cst_380 = arith.constant dense<0.000000e+00> : vector<16x96xf32>
    %1141 = tpu.matmul %1139, %1140, %cst_380 {dimension_numbers = #tpu.dot_dimension_numbers<[1], [0], [0], [1], [0, 0, 1, 1], [], []>} : vector<16x19xbf16>, vector<19x96xbf16>, vector<16x96xf32> -> vector<16x96xf32>
    %1142 = vector.broadcast %936 : vector<1x96xf32> to vector<16x96xf32>
    %1143 = arith.addf %1141, %1142 : vector<16x96xf32>
    %1144 = arith.addf %900, %1143 : vector<16x96xf32>
    %c0_381 = arith.constant 0 : index
    %c0_382 = arith.constant 0 : index
    %c0_383 = arith.constant 0 : index
    %1145 = vector.load %arg33[%c0_381, %c0_382, %c0_383] : memref<1x16x96xf32, #tpu.memory_space<vmem>>, vector<1x16x96xf32>
    %1146 = vector.shape_cast %1145 : vector<1x16x96xf32> to vector<16x96xf32>
    %1147 = vector.shape_cast %1144 : vector<16x96xf32> to vector<1x16x96xf32>
    tpu.vector_store %arg33[%c0_381, %c0_382, %c0_383], %1147 {strides = array<i32>} : memref<1x16x96xf32, #tpu.memory_space<vmem>>, vector<1x16x96xf32>,
    return
  }
  func.func @transform_0(%arg0: i32) -> (i32, i32, i32) {
    %c0_i32 = arith.constant 0 : i32
    %c0_i32_0 = arith.constant 0 : i32
    %c0_i32_1 = arith.constant 0 : i32
    return %arg0, %c0_i32, %c0_i32_0 : i32, i32, i32
  }
  func.func @transform_1(%arg0: i32) -> (i32, i32, i32) {
    %c0_i32 = arith.constant 0 : i32
    %c0_i32_0 = arith.constant 0 : i32
    %c0_i32_1 = arith.constant 0 : i32
    return %arg0, %c0_i32, %c0_i32_0 : i32, i32, i32
  }
  func.func @transform_2(%arg0: i32) -> (i32, i32) {
    %c0_i32 = arith.constant 0 : i32
    %c0_i32_0 = arith.constant 0 : i32
    %c0_i32_1 = arith.constant 0 : i32
    return %c0_i32, %c0_i32_0 : i32, i32
  }
  func.func @transform_3(%arg0: i32) -> (i32, i32) {
    %c0_i32 = arith.constant 0 : i32
    %c0_i32_0 = arith.constant 0 : i32
    %c0_i32_1 = arith.constant 0 : i32
    return %c0_i32, %c0_i32_0 : i32, i32
  }
  func.func @transform_4(%arg0: i32) -> (i32, i32) {
    %c0_i32 = arith.constant 0 : i32
    %c0_i32_0 = arith.constant 0 : i32
    %c0_i32_1 = arith.constant 0 : i32
    return %c0_i32, %c0_i32_0 : i32, i32
  }
  func.func @transform_5(%arg0: i32) -> (i32, i32) {
    %c0_i32 = arith.constant 0 : i32
    %c0_i32_0 = arith.constant 0 : i32
    %c0_i32_1 = arith.constant 0 : i32
    return %c0_i32, %c0_i32_0 : i32, i32
  }
  func.func @transform_6(%arg0: i32) -> (i32, i32) {
    %c0_i32 = arith.constant 0 : i32
    %c0_i32_0 = arith.constant 0 : i32
    %c0_i32_1 = arith.constant 0 : i32
    return %c0_i32, %c0_i32_0 : i32, i32
  }
  func.func @transform_7(%arg0: i32) -> (i32, i32) {
    %c0_i32 = arith.constant 0 : i32
    %c0_i32_0 = arith.constant 0 : i32
    %c0_i32_1 = arith.constant 0 : i32
    return %c0_i32, %c0_i32_0 : i32, i32
  }
  func.func @transform_8(%arg0: i32) -> (i32, i32) {
    %c0_i32 = arith.constant 0 : i32
    %c0_i32_0 = arith.constant 0 : i32
    %c0_i32_1 = arith.constant 0 : i32
    return %c0_i32, %c0_i32_0 : i32, i32
  }
  func.func @transform_9(%arg0: i32) -> (i32, i32) {
    %c0_i32 = arith.constant 0 : i32
    %c0_i32_0 = arith.constant 0 : i32
    %c0_i32_1 = arith.constant 0 : i32
    return %c0_i32, %c0_i32_0 : i32, i32
  }
  func.func @transform_10(%arg0: i32) -> (i32, i32) {
    %c0_i32 = arith.constant 0 : i32
    %c0_i32_0 = arith.constant 0 : i32
    %c0_i32_1 = arith.constant 0 : i32
    return %c0_i32, %c0_i32_0 : i32, i32
  }
  func.func @transform_11(%arg0: i32) -> (i32, i32) {
    %c0_i32 = arith.constant 0 : i32
    %c0_i32_0 = arith.constant 0 : i32
    %c0_i32_1 = arith.constant 0 : i32
    return %c0_i32, %c0_i32_0 : i32, i32
  }
  func.func @transform_12(%arg0: i32) -> (i32, i32) {
    %c0_i32 = arith.constant 0 : i32
    %c0_i32_0 = arith.constant 0 : i32
    %c0_i32_1 = arith.constant 0 : i32
    return %c0_i32, %c0_i32_0 : i32, i32
  }
  func.func @transform_13(%arg0: i32) -> (i32, i32, i32) {
    %c0_i32 = arith.constant 0 : i32
    %c0_i32_0 = arith.constant 0 : i32
    %c0_i32_1 = arith.constant 0 : i32
    %c0_i32_2 = arith.constant 0 : i32
    return %c0_i32, %c0_i32_0, %c0_i32_1 : i32, i32, i32
  }
  func.func @transform_14(%arg0: i32) -> (i32, i32, i32) {
    %c0_i32 = arith.constant 0 : i32
    %c0_i32_0 = arith.constant 0 : i32
    %c0_i32_1 = arith.constant 0 : i32
    %c0_i32_2 = arith.constant 0 : i32
    return %c0_i32, %c0_i32_0, %c0_i32_1 : i32, i32, i32
  }
  func.func @transform_15(%arg0: i32) -> (i32, i32, i32) {
    %c0_i32 = arith.constant 0 : i32
    %c0_i32_0 = arith.constant 0 : i32
    %c0_i32_1 = arith.constant 0 : i32
    %c0_i32_2 = arith.constant 0 : i32
    return %c0_i32, %c0_i32_0, %c0_i32_1 : i32, i32, i32
  }
  func.func @transform_16(%arg0: i32) -> (i32, i32, i32) {
    %c0_i32 = arith.constant 0 : i32
    %c0_i32_0 = arith.constant 0 : i32
    %c0_i32_1 = arith.constant 0 : i32
    %c0_i32_2 = arith.constant 0 : i32
    return %c0_i32, %c0_i32_0, %c0_i32_1 : i32, i32, i32
  }
  func.func @transform_17(%arg0: i32) -> (i32, i32, i32) {
    %c0_i32 = arith.constant 0 : i32
    %c0_i32_0 = arith.constant 0 : i32
    %c0_i32_1 = arith.constant 0 : i32
    %c0_i32_2 = arith.constant 0 : i32
    return %c0_i32, %c0_i32_0, %c0_i32_1 : i32, i32, i32
  }
  func.func @transform_18(%arg0: i32) -> (i32, i32, i32) {
    %c0_i32 = arith.constant 0 : i32
    %c0_i32_0 = arith.constant 0 : i32
    %c0_i32_1 = arith.constant 0 : i32
    %c0_i32_2 = arith.constant 0 : i32
    return %c0_i32, %c0_i32_0, %c0_i32_1 : i32, i32, i32
  }
  func.func @transform_19(%arg0: i32) -> (i32, i32, i32) {
    %c0_i32 = arith.constant 0 : i32
    %c0_i32_0 = arith.constant 0 : i32
    %c0_i32_1 = arith.constant 0 : i32
    %c0_i32_2 = arith.constant 0 : i32
    return %c0_i32, %c0_i32_0, %c0_i32_1 : i32, i32, i32
  }
  func.func @transform_20(%arg0: i32) -> (i32, i32, i32) {
    %c0_i32 = arith.constant 0 : i32
    %c0_i32_0 = arith.constant 0 : i32
    %c0_i32_1 = arith.constant 0 : i32
    %c0_i32_2 = arith.constant 0 : i32
    return %c0_i32, %c0_i32_0, %c0_i32_1 : i32, i32, i32
  }
  func.func @transform_21(%arg0: i32) -> (i32, i32, i32) {
    %c0_i32 = arith.constant 0 : i32
    %c0_i32_0 = arith.constant 0 : i32
    %c0_i32_1 = arith.constant 0 : i32
    %c0_i32_2 = arith.constant 0 : i32
    return %c0_i32, %c0_i32_0, %c0_i32_1 : i32, i32, i32
  }
  func.func @transform_22(%arg0: i32) -> (i32, i32, i32) {
    %c0_i32 = arith.constant 0 : i32
    %c0_i32_0 = arith.constant 0 : i32
    %c0_i32_1 = arith.constant 0 : i32
    %c0_i32_2 = arith.constant 0 : i32
    return %c0_i32, %c0_i32_0, %c0_i32_1 : i32, i32, i32
  }
  func.func @transform_23(%arg0: i32) -> (i32, i32, i32) {
    %c0_i32 = arith.constant 0 : i32
    %c0_i32_0 = arith.constant 0 : i32
    %c0_i32_1 = arith.constant 0 : i32
    %c0_i32_2 = arith.constant 0 : i32
    return %c0_i32, %c0_i32_0, %c0_i32_1 : i32, i32, i32
  }
  func.func @transform_24(%arg0: i32) -> (i32, i32, i32) {
    %c0_i32 = arith.constant 0 : i32
    %c0_i32_0 = arith.constant 0 : i32
    %c0_i32_1 = arith.constant 0 : i32
    %c0_i32_2 = arith.constant 0 : i32
    return %c0_i32, %c0_i32_0, %c0_i32_1 : i32, i32, i32
  }
  func.func @transform_25(%arg0: i32) -> (i32, i32, i32) {
    %c0_i32 = arith.constant 0 : i32
    %c0_i32_0 = arith.constant 0 : i32
    %c0_i32_1 = arith.constant 0 : i32
    %c0_i32_2 = arith.constant 0 : i32
    return %c0_i32, %c0_i32_0, %c0_i32_1 : i32, i32, i32
  }
  func.func @transform_26(%arg0: i32) -> (i32, i32, i32) {
    %c0_i32 = arith.constant 0 : i32
    %c0_i32_0 = arith.constant 0 : i32
    %c0_i32_1 = arith.constant 0 : i32
    %c0_i32_2 = arith.constant 0 : i32
    return %c0_i32, %c0_i32_0, %c0_i32_1 : i32, i32, i32
  }
  func.func @transform_27(%arg0: i32) -> (i32, i32, i32) {
    %c0_i32 = arith.constant 0 : i32
    %c0_i32_0 = arith.constant 0 : i32
    %c0_i32_1 = arith.constant 0 : i32
    %c0_i32_2 = arith.constant 0 : i32
    return %c0_i32, %c0_i32_0, %c0_i32_1 : i32, i32, i32
  }
  func.func @transform_28(%arg0: i32) -> (i32, i32, i32) {
    %c0_i32 = arith.constant 0 : i32
    %c0_i32_0 = arith.constant 0 : i32
    %c0_i32_1 = arith.constant 0 : i32
    %c0_i32_2 = arith.constant 0 : i32
    return %c0_i32, %c0_i32_0, %c0_i32_1 : i32, i32, i32
  }
  func.func @transform_29(%arg0: i32) -> (i32, i32, i32) {
    %c0_i32 = arith.constant 0 : i32
    %c0_i32_0 = arith.constant 0 : i32
    %c0_i32_1 = arith.constant 0 : i32
    %c0_i32_2 = arith.constant 0 : i32
    return %c0_i32, %c0_i32_0, %c0_i32_1 : i32, i32, i32
  }
  func.func @transform_30(%arg0: i32) -> (i32, i32, i32) {
    %c0_i32 = arith.constant 0 : i32
    %c0_i32_0 = arith.constant 0 : i32
    %c0_i32_1 = arith.constant 0 : i32
    %c0_i32_2 = arith.constant 0 : i32
    return %c0_i32, %c0_i32_0, %c0_i32_1 : i32, i32, i32
  }
  func.func @transform_31(%arg0: i32) -> (i32, i32, i32) {
    %c0_i32 = arith.constant 0 : i32
    %c0_i32_0 = arith.constant 0 : i32
    %c0_i32_1 = arith.constant 0 : i32
    return %arg0, %c0_i32, %c0_i32_0 : i32, i32, i32
  }
  func.func @transform_32(%arg0: i32) -> (i32, i32, i32) {
    %c0_i32 = arith.constant 0 : i32
    %c0_i32_0 = arith.constant 0 : i32
    %c0_i32_1 = arith.constant 0 : i32
    return %arg0, %c0_i32, %c0_i32_0 : i32, i32, i32
  }
}

</mosaic_0001>

<llo_original>
// kernel: interaction_block.1
$region0: #{interaction_block.1}
  #allocation0 [shape = 'u32[]', space=smem, size = 0x4, offset = 0x4, fixed_abs, tag = 'smem constant byte address 0x4 - core index']
  #allocation1 [shape = 'u32[144,128]{1,0:T(1,128)}', space=vmem, size = 0x12000, scoped, tag = 'internal scratch']
  %s0 = inlined_call_operand.smem [shape: u32[33], index: -1, kind: input, shape index: {}]
  %s1 = sld [smem:[%s0]]
  %s2 = scalar_lea.smem %s0, 1
  %s3 = sld [smem:[%s2]]
  %s4 = scalar_lea.smem %s0, 2
  %s5 = sld [smem:[%s4]]
  %s6 = scalar_lea.smem %s0, 3
  %s7 = sld [smem:[%s6]]
  %s8 = scalar_lea.smem %s0, 4
  %s9 = sld [smem:[%s8]]
  %s10 = scalar_lea.smem %s0, 5
  %s11 = sld [smem:[%s10]]
  %s12 = scalar_lea.smem %s0, 6
  %s13 = sld [smem:[%s12]]
  %s14 = scalar_lea.smem %s0, 7
  %s15 = sld [smem:[%s14]]
  %s16 = scalar_lea.smem %s0, 8
  %s17 = sld [smem:[%s16]]
  %s18 = scalar_lea.smem %s0, 9
  %s19 = sld [smem:[%s18]]
  %s20 = scalar_lea.smem %s0, 10
  %s21 = sld [smem:[%s20]]
  %s22 = scalar_lea.smem %s0, 11
  %s23 = sld [smem:[%s22]]
  %s24 = scalar_lea.smem %s0, 12
  %s25 = sld [smem:[%s24]]
  %s26 = scalar_lea.smem %s0, 13
  %s27 = sld [smem:[%s26]]
  %s28 = scalar_lea.smem %s0, 14
  %s29 = sld [smem:[%s28]]
  %s30 = scalar_lea.smem %s0, 15
  %s31 = sld [smem:[%s30]]
  %s32 = scalar_lea.smem %s0, 16
  %s33 = sld [smem:[%s32]]
  %s34 = scalar_lea.smem %s0, 17
  %s35 = sld [smem:[%s34]]
  %s36 = scalar_lea.smem %s0, 18
  %s37 = sld [smem:[%s36]]
  %s38 = scalar_lea.smem %s0, 19
  %s39 = sld [smem:[%s38]]
  %s40 = scalar_lea.smem %s0, 20
  %s41 = sld [smem:[%s40]]
  %s42 = scalar_lea.smem %s0, 21
  %s43 = sld [smem:[%s42]]
  %s44 = scalar_lea.smem %s0, 22
  %s45 = sld [smem:[%s44]]
  %s46 = scalar_lea.smem %s0, 23
  %s47 = sld [smem:[%s46]]
  %s48 = scalar_lea.smem %s0, 24
  %s49 = sld [smem:[%s48]]
  %s50 = scalar_lea.smem %s0, 25
  %s51 = sld [smem:[%s50]]
  %s52 = scalar_lea.smem %s0, 26
  %s53 = sld [smem:[%s52]]
  %s54 = scalar_lea.smem %s0, 27
  %s55 = sld [smem:[%s54]]
  %s56 = scalar_lea.smem %s0, 28
  %s57 = sld [smem:[%s56]]
  %s58 = scalar_lea.smem %s0, 29
  %s59 = sld [smem:[%s58]]
  %s60 = scalar_lea.smem %s0, 30
  %s61 = sld [smem:[%s60]]
  %s62 = scalar_lea.smem %s0, 31
  %s63 = sld [smem:[%s62]]
  %s64 = scalar_lea.smem %s0, 32
  %s65 = sld [smem:[%s64]]
  %66 = xla_tuple %s63, %s65
  %s67 = sld [smem:[#allocation0]]
  $region165: #{interaction_block.1} parent=0
    _
  %s69 = ssub.s32 1, %s67
  %s70 = scalar_select 0, %s69, %s67
  $region1: #{interaction_block.1} parent=0
    #allocation2 [shape = 'u8[32768]{0}', space=vmem, size = 0x8000, scoped, tag = 'output window, operand 0']
    #allocation3 [shape = 's32[2]{0}', space=sflag, size = 0x8, scoped, tag = 'scoped memory for interaction_block.1']
    #allocation4 [shape = 'u8[16384]{0}', space=vmem, size = 0x4000, scoped, tag = 'output window, operand 1']
    #allocation5 [shape = 's32[2]{0}', space=sflag, size = 0x8, scoped, tag = 'scoped memory for interaction_block.1']
    %71 = vsyncpa [#allocation3], 0
    %s72 = scalar_lea.sflag [#allocation3], 1
    %73 = vsyncpa %s72, 0
    %74 = vsyncpa [#allocation5], 0
    %s75 = scalar_lea.sflag [#allocation5], 1
    %76 = vsyncpa %s75, 0
    loop: start=0, step=1, limit=4
    $region2: #{interaction_block.1} parent=1 // loop_pre_header
      _
    $region3: #{interaction_block.1} parent=1 // loop_header
      %s78 = sphi 0, %s82
      %p79 = scmp.ge.s32.totalorder %s78, 4
      %s88 = sphi 0, %s90
      %s91 = sphi 0, %s88
      %s92 = sphi 0, %s91
      %s108 = sphi 0, %s92
      %s114 = sphi 0, %s116
      %s117 = sphi 0, %s114
      %s118 = sphi 0, %s117
      %s134 = sphi 0, %s118
      %s138 = sphi 0, %s138
      %s140 = sphi 0, %s138
      %s141 = sphi 0, %s140
      %s155 = sphi 0, %s141
      %s159 = sphi 0, %s159
      %s161 = sphi 0, %s159
      %s162 = sphi 0, %s161
      %s176 = sphi 0, %s162
      %s180 = sphi 0, %s180
      %s182 = sphi 0, %s180
      %s183 = sphi 0, %s182
      %s197 = sphi 0, %s183
      %s201 = sphi 0, %s201
      %s203 = sphi 0, %s201
      %s204 = sphi 0, %s203
      %s218 = sphi 0, %s204
      %s222 = sphi 0, %s222
      %s224 = sphi 0, %s222
      %s225 = sphi 0, %s224
      %s239 = sphi 0, %s225
      %s243 = sphi 0, %s243
      %s245 = sphi 0, %s243
      %s246 = sphi 0, %s245
      %s260 = sphi 0, %s246
      %s264 = sphi 0, %s264
      %s266 = sphi 0, %s264
      %s267 = sphi 0, %s266
      %s281 = sphi 0, %s267
      %s285 = sphi 0, %s285
      %s287 = sphi 0, %s285
      %s288 = sphi 0, %s287
      %s302 = sphi 0, %s288
      %s306 = sphi 0, %s306
      %s308 = sphi 0, %s306
      %s309 = sphi 0, %s308
      %s323 = sphi 0, %s309
      %s327 = sphi 0, %s327
      %s329 = sphi 0, %s327
      %s330 = sphi 0, %s329
      %s344 = sphi 0, %s330
      %s348 = sphi 0, %s348
      %s350 = sphi 0, %s348
      %s351 = sphi 0, %s350
      %s365 = sphi 0, %s351
      %s369 = sphi 0, %s369
      %s371 = sphi 0, %s369
      %s372 = sphi 0, %s371
      %s386 = sphi 0, %s372
      %s390 = sphi 0, %s390
      %s392 = sphi 0, %s390
      %s393 = sphi 0, %s392
      %s407 = sphi 0, %s393
      %s411 = sphi 0, %s411
      %s413 = sphi 0, %s411
      %s414 = sphi 0, %s413
      %s428 = sphi 0, %s414
      %s432 = sphi 0, %s432
      %s434 = sphi 0, %s432
      %s435 = sphi 0, %s434
      %s449 = sphi 0, %s435
      %s453 = sphi 0, %s453
      %s455 = sphi 0, %s453
      %s456 = sphi 0, %s455
      %s470 = sphi 0, %s456
      %s474 = sphi 0, %s474
      %s476 = sphi 0, %s474
      %s477 = sphi 0, %s476
      %s491 = sphi 0, %s477
      %s495 = sphi 0, %s495
      %s497 = sphi 0, %s495
      %s498 = sphi 0, %s497
      %s512 = sphi 0, %s498
      %s516 = sphi 0, %s516
      %s518 = sphi 0, %s516
      %s519 = sphi 0, %s518
      %s533 = sphi 0, %s519
      %s537 = sphi 0, %s537
      %s539 = sphi 0, %s537
      %s540 = sphi 0, %s539
      %s554 = sphi 0, %s540
      %s558 = sphi 0, %s558
      %s560 = sphi 0, %s558
      %s561 = sphi 0, %s560
      %s575 = sphi 0, %s561
      %s579 = sphi 0, %s579
      %s581 = sphi 0, %s579
      %s582 = sphi 0, %s581
      %s596 = sphi 0, %s582
      %s600 = sphi 0, %s600
      %s602 = sphi 0, %s600
      %s603 = sphi 0, %s602
      %s617 = sphi 0, %s603
      %s621 = sphi 0, %s621
      %s623 = sphi 0, %s621
      %s624 = sphi 0, %s623
      %s638 = sphi 0, %s624
      %s642 = sphi 0, %s642
      %s644 = sphi 0, %s642
      %s645 = sphi 0, %s644
      %s659 = sphi 0, %s645
      %s663 = sphi 0, %s663
      %s665 = sphi 0, %s663
      %s666 = sphi 0, %s665
      %s680 = sphi 0, %s666
      %s684 = sphi 0, %s684
      %s686 = sphi 0, %s684
      %s687 = sphi 0, %s686
      %s701 = sphi 0, %s687
      %s705 = sphi 0, %s705
      %s707 = sphi 0, %s705
      %s708 = sphi 0, %s707
      %s722 = sphi 0, %s708
      %s726 = sphi 0, %s726
      %s728 = sphi 0, %s726
      %s729 = sphi 0, %s728
      %s743 = sphi 0, %s729
      %s749 = sphi 0, %s751
      %s752 = sphi 0, %s749
      %s753 = sphi 0, %s752
      %s769 = sphi 0, %s753
      %s775 = sphi 0, %s777
      %s778 = sphi 0, %s775
      %s779 = sphi 0, %s778
      %s795 = sphi 0, %s779
    $region4: #{interaction_block.1} parent=1 // loop_header_branch
      %81 = sbr.rel (%p79) target = $region8
    $region5: #{interaction_block.1} parent=1 // loop_body
      %s83 = ssub.s32 %s78, 1
      %s84 = ssub.s32 %s78, 2
      %s85 = sadd.s32 %s78, 1
      %s86 = ssub.s32 %s78, %s85
      %p87 = scmp.eq.s32.totalorder %s86, 0
      %s89 = sadd.s32 %s88, 1
      %s90 = scalar_select %p87, %s88, %s89
      %p93 = pneg %p87
      %p94 = scmp.eq.s32.totalorder %s78, 1
      %p95 = por %p93, %p94
      %p96 = scmp.ne.s32.totalorder %s88, %s91
      %p97 = scmp.eq.s32.totalorder %s78, 0
      %p98 = por %p96, %p97
      %p99 = scmp.ne.s32.totalorder %s88, %s91
      %p100 = scmp.eq.s32.totalorder %s83, 1
      %p101 = por %p99, %p100
      %p102 = scmp.ne.s32.totalorder %s91, %s92
      %p103 = scmp.eq.s32.totalorder %s83, 0
      %p104 = por %p102, %p103
      %p105 = scmp.ne.s32.totalorder %s91, %s92
      %p106 = scmp.eq.s32.totalorder %s84, 1
      %p107 = por %p105, %p106
      %p109 = scmp.ne.s32.totalorder %s92, %s108
      %p110 = scmp.eq.s32.totalorder %s84, 0
      %p111 = por %p109, %p110
      %s112 = ssub.s32 %s78, %s85
      %p113 = scmp.eq.s32.totalorder %s112, 0
      %s115 = sadd.s32 %s114, 1
      %s116 = scalar_select %p113, %s114, %s115
      %p119 = pneg %p113
      %p120 = scmp.eq.s32.totalorder %s78, 1
      %p121 = por %p119, %p120
      %p122 = scmp.ne.s32.totalorder %s114, %s117
      %p123 = scmp.eq.s32.totalorder %s78, 0
      %p124 = por %p122, %p123
      %p125 = scmp.ne.s32.totalorder %s114, %s117
      %p126 = scmp.eq.s32.totalorder %s83, 1
      %p127 = por %p125, %p126
      %p128 = scmp.ne.s32.totalorder %s117, %s118
      %p129 = scmp.eq.s32.totalorder %s83, 0
      %p130 = por %p128, %p129
      %p131 = scmp.ne.s32.totalorder %s117, %s118
      %p132 = scmp.eq.s32.totalorder %s84, 1
      %p133 = por %p131, %p132
      %p135 = scmp.ne.s32.totalorder %s118, %s134
      %p136 = scmp.eq.s32.totalorder %s84, 0
      %p137 = por %p135, %p136
      %s139 = sadd.s32 %s138, 1
      %p142 = scmp.eq.s32.totalorder %s78, 1
      %p143 = scmp.ne.s32.totalorder %s138, %s140
      %p144 = scmp.eq.s32.totalorder %s78, 0
      %p145 = por %p143, %p144
      %p146 = scmp.ne.s32.totalorder %s138, %s140
      %p147 = scmp.eq.s32.totalorder %s83, 1
      %p148 = por %p146, %p147
      %p149 = scmp.ne.s32.totalorder %s140, %s141
      %p150 = scmp.eq.s32.totalorder %s83, 0
      %p151 = por %p149, %p150
      %p152 = scmp.ne.s32.totalorder %s140, %s141
      %p153 = scmp.eq.s32.totalorder %s84, 1
      %p154 = por %p152, %p153
      %p156 = scmp.ne.s32.totalorder %s141, %s155
      %p157 = scmp.eq.s32.totalorder %s84, 0
      %p158 = por %p156, %p157
      %s160 = sadd.s32 %s159, 1
      %p163 = scmp.eq.s32.totalorder %s78, 1
      %p164 = scmp.ne.s32.totalorder %s159, %s161
      %p165 = scmp.eq.s32.totalorder %s78, 0
      %p166 = por %p164, %p165
      %p167 = scmp.ne.s32.totalorder %s159, %s161
      %p168 = scmp.eq.s32.totalorder %s83, 1
      %p169 = por %p167, %p168
      %p170 = scmp.ne.s32.totalorder %s161, %s162
      %p171 = scmp.eq.s32.totalorder %s83, 0
      %p172 = por %p170, %p171
      %p173 = scmp.ne.s32.totalorder %s161, %s162
      %p174 = scmp.eq.s32.totalorder %s84, 1
      %p175 = por %p173, %p174
      %p177 = scmp.ne.s32.totalorder %s162, %s176
      %p178 = scmp.eq.s32.totalorder %s84, 0
      %p179 = por %p177, %p178
      %s181 = sadd.s32 %s180, 1
      %p184 = scmp.eq.s32.totalorder %s78, 1
      %p185 = scmp.ne.s32.totalorder %s180, %s182
      %p186 = scmp.eq.s32.totalorder %s78, 0
      %p187 = por %p185, %p186
      %p188 = scmp.ne.s32.totalorder %s180, %s182
      %p189 = scmp.eq.s32.totalorder %s83, 1
      %p190 = por %p188, %p189
      %p191 = scmp.ne.s32.totalorder %s182, %s183
      %p192 = scmp.eq.s32.totalorder %s83, 0
      %p193 = por %p191, %p192
      %p194 = scmp.ne.s32.totalorder %s182, %s183
      %p195 = scmp.eq.s32.totalorder %s84, 1
      %p196 = por %p194, %p195
      %p198 = scmp.ne.s32.totalorder %s183, %s197
      %p199 = scmp.eq.s32.totalorder %s84, 0
      %p200 = por %p198, %p199
      %s202 = sadd.s32 %s201, 1
      %p205 = scmp.eq.s32.totalorder %s78, 1
      %p206 = scmp.ne.s32.totalorder %s201, %s203
      %p207 = scmp.eq.s32.totalorder %s78, 0
      %p208 = por %p206, %p207
      %p209 = scmp.ne.s32.totalorder %s201, %s203
      %p210 = scmp.eq.s32.totalorder %s83, 1
      %p211 = por %p209, %p210
      %p212 = scmp.ne.s32.totalorder %s203, %s204
      %p213 = scmp.eq.s32.totalorder %s83, 0
      %p214 = por %p212, %p213
      %p215 = scmp.ne.s32.totalorder %s203, %s204
      %p216 = scmp.eq.s32.totalorder %s84, 1
      %p217 = por %p215, %p216
      %p219 = scmp.ne.s32.totalorder %s204, %s218
      %p220 = scmp.eq.s32.totalorder %s84, 0
      %p221 = por %p219, %p220
      %s223 = sadd.s32 %s222, 1
      %p226 = scmp.eq.s32.totalorder %s78, 1
      %p227 = scmp.ne.s32.totalorder %s222, %s224
      %p228 = scmp.eq.s32.totalorder %s78, 0
      %p229 = por %p227, %p228
      %p230 = scmp.ne.s32.totalorder %s222, %s224
      %p231 = scmp.eq.s32.totalorder %s83, 1
      %p232 = por %p230, %p231
      %p233 = scmp.ne.s32.totalorder %s224, %s225
      %p234 = scmp.eq.s32.totalorder %s83, 0
      %p235 = por %p233, %p234
      %p236 = scmp.ne.s32.totalorder %s224, %s225
      %p237 = scmp.eq.s32.totalorder %s84, 1
      %p238 = por %p236, %p237
      %p240 = scmp.ne.s32.totalorder %s225, %s239
      %p241 = scmp.eq.s32.totalorder %s84, 0
      %p242 = por %p240, %p241
      %s244 = sadd.s32 %s243, 1
      %p247 = scmp.eq.s32.totalorder %s78, 1
      %p248 = scmp.ne.s32.totalorder %s243, %s245
      %p249 = scmp.eq.s32.totalorder %s78, 0
      %p250 = por %p248, %p249
      %p251 = scmp.ne.s32.totalorder %s243, %s245
      %p252 = scmp.eq.s32.totalorder %s83, 1
      %p253 = por %p251, %p252
      %p254 = scmp.ne.s32.totalorder %s245, %s246
      %p255 = scmp.eq.s32.totalorder %s83, 0
      %p256 = por %p254, %p255
      %p257 = scmp.ne.s32.totalorder %s245, %s246
      %p258 = scmp.eq.s32.totalorder %s84, 1
      %p259 = por %p257, %p258
      %p261 = scmp.ne.s32.totalorder %s246, %s260
      %p262 = scmp.eq.s32.totalorder %s84, 0
      %p263 = por %p261, %p262
      %s265 = sadd.s32 %s264, 1
      %p268 = scmp.eq.s32.totalorder %s78, 1
      %p269 = scmp.ne.s32.totalorder %s264, %s266
      %p270 = scmp.eq.s32.totalorder %s78, 0
      %p271 = por %p269, %p270
      %p272 = scmp.ne.s32.totalorder %s264, %s266
      %p273 = scmp.eq.s32.totalorder %s83, 1
      %p274 = por %p272, %p273
      %p275 = scmp.ne.s32.totalorder %s266, %s267
      %p276 = scmp.eq.s32.totalorder %s83, 0
      %p277 = por %p275, %p276
      %p278 = scmp.ne.s32.totalorder %s266, %s267
      %p279 = scmp.eq.s32.totalorder %s84, 1
      %p280 = por %p278, %p279
      %p282 = scmp.ne.s32.totalorder %s267, %s281
      %p283 = scmp.eq.s32.totalorder %s84, 0
      %p284 = por %p282, %p283
      %s286 = sadd.s32 %s285, 1
      %p289 = scmp.eq.s32.totalorder %s78, 1
      %p290 = scmp.ne.s32.totalorder %s285, %s287
      %p291 = scmp.eq.s32.totalorder %s78, 0
      %p292 = por %p290, %p291
      %p293 = scmp.ne.s32.totalorder %s285, %s287
      %p294 = scmp.eq.s32.totalorder %s83, 1
      %p295 = por %p293, %p294
      %p296 = scmp.ne.s32.totalorder %s287, %s288
      %p297 = scmp.eq.s32.totalorder %s83, 0
      %p298 = por %p296, %p297
      %p299 = scmp.ne.s32.totalorder %s287, %s288
      %p300 = scmp.eq.s32.totalorder %s84, 1
      %p301 = por %p299, %p300
      %p303 = scmp.ne.s32.totalorder %s288, %s302
      %p304 = scmp.eq.s32.totalorder %s84, 0
      %p305 = por %p303, %p304
      %s307 = sadd.s32 %s306, 1
      %p310 = scmp.eq.s32.totalorder %s78, 1
      %p311 = scmp.ne.s32.totalorder %s306, %s308
      %p312 = scmp.eq.s32.totalorder %s78, 0
      %p313 = por %p311, %p312
      %p314 = scmp.ne.s32.totalorder %s306, %s308
      %p315 = scmp.eq.s32.totalorder %s83, 1
      %p316 = por %p314, %p315
      %p317 = scmp.ne.s32.totalorder %s308, %s309
      %p318 = scmp.eq.s32.totalorder %s83, 0
      %p319 = por %p317, %p318
      %p320 = scmp.ne.s32.totalorder %s308, %s309
      %p321 = scmp.eq.s32.totalorder %s84, 1
      %p322 = por %p320, %p321
      %p324 = scmp.ne.s32.totalorder %s309, %s323
      %p325 = scmp.eq.s32.totalorder %s84, 0
      %p326 = por %p324, %p325
      %s328 = sadd.s32 %s327, 1
      %p331 = scmp.eq.s32.totalorder %s78, 1
      %p332 = scmp.ne.s32.totalorder %s327, %s329
      %p333 = scmp.eq.s32.totalorder %s78, 0
      %p334 = por %p332, %p333
      %p335 = scmp.ne.s32.totalorder %s327, %s329
      %p336 = scmp.eq.s32.totalorder %s83, 1
      %p337 = por %p335, %p336
      %p338 = scmp.ne.s32.totalorder %s329, %s330
      %p339 = scmp.eq.s32.totalorder %s83, 0
      %p340 = por %p338, %p339
      %p341 = scmp.ne.s32.totalorder %s329, %s330
      %p342 = scmp.eq.s32.totalorder %s84, 1
      %p343 = por %p341, %p342
      %p345 = scmp.ne.s32.totalorder %s330, %s344
      %p346 = scmp.eq.s32.totalorder %s84, 0
      %p347 = por %p345, %p346
      %s349 = sadd.s32 %s348, 1
      %p352 = scmp.eq.s32.totalorder %s78, 1
      %p353 = scmp.ne.s32.totalorder %s348, %s350
      %p354 = scmp.eq.s32.totalorder %s78, 0
      %p355 = por %p353, %p354
      %p356 = scmp.ne.s32.totalorder %s348, %s350
      %p357 = scmp.eq.s32.totalorder %s83, 1
      %p358 = por %p356, %p357
      %p359 = scmp.ne.s32.totalorder %s350, %s351
      %p360 = scmp.eq.s32.totalorder %s83, 0
      %p361 = por %p359, %p360
      %p362 = scmp.ne.s32.totalorder %s350, %s351
      %p363 = scmp.eq.s32.totalorder %s84, 1
      %p364 = por %p362, %p363
      %p366 = scmp.ne.s32.totalorder %s351, %s365
      %p367 = scmp.eq.s32.totalorder %s84, 0
      %p368 = por %p366, %p367
      %s370 = sadd.s32 %s369, 1
      %p373 = scmp.eq.s32.totalorder %s78, 1
      %p374 = scmp.ne.s32.totalorder %s369, %s371
      %p375 = scmp.eq.s32.totalorder %s78, 0
      %p376 = por %p374, %p375
      %p377 = scmp.ne.s32.totalorder %s369, %s371
      %p378 = scmp.eq.s32.totalorder %s83, 1
      %p379 = por %p377, %p378
      %p380 = scmp.ne.s32.totalorder %s371, %s372
      %p381 = scmp.eq.s32.totalorder %s83, 0
      %p382 = por %p380, %p381
      %p383 = scmp.ne.s32.totalorder %s371, %s372
      %p384 = scmp.eq.s32.totalorder %s84, 1
      %p385 = por %p383, %p384
      %p387 = scmp.ne.s32.totalorder %s372, %s386
      %p388 = scmp.eq.s32.totalorder %s84, 0
      %p389 = por %p387, %p388
      %s391 = sadd.s32 %s390, 1
      %p394 = scmp.eq.s32.totalorder %s78, 1
      %p395 = scmp.ne.s32.totalorder %s390, %s392
      %p396 = scmp.eq.s32.totalorder %s78, 0
      %p397 = por %p395, %p396
      %p398 = scmp.ne.s32.totalorder %s390, %s392
      %p399 = scmp.eq.s32.totalorder %s83, 1
      %p400 = por %p398, %p399
      %p401 = scmp.ne.s32.totalorder %s392, %s393
      %p402 = scmp.eq.s32.totalorder %s83, 0
      %p403 = por %p401, %p402
      %p404 = scmp.ne.s32.totalorder %s392, %s393
      %p405 = scmp.eq.s32.totalorder %s84, 1
      %p406 = por %p404, %p405
      %p408 = scmp.ne.s32.totalorder %s393, %s407
      %p409 = scmp.eq.s32.totalorder %s84, 0
      %p410 = por %p408, %p409
      %s412 = sadd.s32 %s411, 1
      %p415 = scmp.eq.s32.totalorder %s78, 1
      %p416 = scmp.ne.s32.totalorder %s411, %s413
      %p417 = scmp.eq.s32.totalorder %s78, 0
      %p418 = por %p416, %p417
      %p419 = scmp.ne.s32.totalorder %s411, %s413
      %p420 = scmp.eq.s32.totalorder %s83, 1
      %p421 = por %p419, %p420
      %p422 = scmp.ne.s32.totalorder %s413, %s414
      %p423 = scmp.eq.s32.totalorder %s83, 0
      %p424 = por %p422, %p423
      %p425 = scmp.ne.s32.totalorder %s413, %s414
      %p426 = scmp.eq.s32.totalorder %s84, 1
      %p427 = por %p425, %p426
      %p429 = scmp.ne.s32.totalorder %s414, %s428
      %p430 = scmp.eq.s32.totalorder %s84, 0
      %p431 = por %p429, %p430
      %s433 = sadd.s32 %s432, 1
      %p436 = scmp.eq.s32.totalorder %s78, 1
      %p437 = scmp.ne.s32.totalorder %s432, %s434
      %p438 = scmp.eq.s32.totalorder %s78, 0
      %p439 = por %p437, %p438
      %p440 = scmp.ne.s32.totalorder %s432, %s434
      %p441 = scmp.eq.s32.totalorder %s83, 1
      %p442 = por %p440, %p441
      %p443 = scmp.ne.s32.totalorder %s434, %s435
      %p444 = scmp.eq.s32.totalorder %s83, 0
      %p445 = por %p443, %p444
      %p446 = scmp.ne.s32.totalorder %s434, %s435
      %p447 = scmp.eq.s32.totalorder %s84, 1
      %p448 = por %p446, %p447
      %p450 = scmp.ne.s32.totalorder %s435, %s449
      %p451 = scmp.eq.s32.totalorder %s84, 0
      %p452 = por %p450, %p451
      %s454 = sadd.s32 %s453, 1
      %p457 = scmp.eq.s32.totalorder %s78, 1
      %p458 = scmp.ne.s32.totalorder %s453, %s455
      %p459 = scmp.eq.s32.totalorder %s78, 0
      %p460 = por %p458, %p459
      %p461 = scmp.ne.s32.totalorder %s453, %s455
      %p462 = scmp.eq.s32.totalorder %s83, 1
      %p463 = por %p461, %p462
      %p464 = scmp.ne.s32.totalorder %s455, %s456
      %p465 = scmp.eq.s32.totalorder %s83, 0
      %p466 = por %p464, %p465
      %p467 = scmp.ne.s32.totalorder %s455, %s456
      %p468 = scmp.eq.s32.totalorder %s84, 1
      %p469 = por %p467, %p468
      %p471 = scmp.ne.s32.totalorder %s456, %s470
      %p472 = scmp.eq.s32.totalorder %s84, 0
      %p473 = por %p471, %p472
      %s475 = sadd.s32 %s474, 1
      %p478 = scmp.eq.s32.totalorder %s78, 1
      %p479 = scmp.ne.s32.totalorder %s474, %s476
      %p480 = scmp.eq.s32.totalorder %s78, 0
      %p481 = por %p479, %p480
      %p482 = scmp.ne.s32.totalorder %s474, %s476
      %p483 = scmp.eq.s32.totalorder %s83, 1
      %p484 = por %p482, %p483
      %p485 = scmp.ne.s32.totalorder %s476, %s477
      %p486 = scmp.eq.s32.totalorder %s83, 0
      %p487 = por %p485, %p486
      %p488 = scmp.ne.s32.totalorder %s476, %s477
      %p489 = scmp.eq.s32.totalorder %s84, 1
      %p490 = por %p488, %p489
      %p492 = scmp.ne.s32.totalorder %s477, %s491
      %p493 = scmp.eq.s32.totalorder %s84, 0
      %p494 = por %p492, %p493
      %s496 = sadd.s32 %s495, 1
      %p499 = scmp.eq.s32.totalorder %s78, 1
      %p500 = scmp.ne.s32.totalorder %s495, %s497
      %p501 = scmp.eq.s32.totalorder %s78, 0
      %p502 = por %p500, %p501
      %p503 = scmp.ne.s32.totalorder %s495, %s497
      %p504 = scmp.eq.s32.totalorder %s83, 1
      %p505 = por %p503, %p504
      %p506 = scmp.ne.s32.totalorder %s497, %s498
      %p507 = scmp.eq.s32.totalorder %s83, 0
      %p508 = por %p506, %p507
      %p509 = scmp.ne.s32.totalorder %s497, %s498
      %p510 = scmp.eq.s32.totalorder %s84, 1
      %p511 = por %p509, %p510
      %p513 = scmp.ne.s32.totalorder %s498, %s512
      %p514 = scmp.eq.s32.totalorder %s84, 0
      %p515 = por %p513, %p514
      %s517 = sadd.s32 %s516, 1
      %p520 = scmp.eq.s32.totalorder %s78, 1
      %p521 = scmp.ne.s32.totalorder %s516, %s518
      %p522 = scmp.eq.s32.totalorder %s78, 0
      %p523 = por %p521, %p522
      %p524 = scmp.ne.s32.totalorder %s516, %s518
      %p525 = scmp.eq.s32.totalorder %s83, 1
      %p526 = por %p524, %p525
      %p527 = scmp.ne.s32.totalorder %s518, %s519
      %p528 = scmp.eq.s32.totalorder %s83, 0
      %p529 = por %p527, %p528
      %p530 = scmp.ne.s32.totalorder %s518, %s519
      %p531 = scmp.eq.s32.totalorder %s84, 1
      %p532 = por %p530, %p531
      %p534 = scmp.ne.s32.totalorder %s519, %s533
      %p535 = scmp.eq.s32.totalorder %s84, 0
      %p536 = por %p534, %p535
      %s538 = sadd.s32 %s537, 1
      %p541 = scmp.eq.s32.totalorder %s78, 1
      %p542 = scmp.ne.s32.totalorder %s537, %s539
      %p543 = scmp.eq.s32.totalorder %s78, 0
      %p544 = por %p542, %p543
      %p545 = scmp.ne.s32.totalorder %s537, %s539
      %p546 = scmp.eq.s32.totalorder %s83, 1
      %p547 = por %p545, %p546
      %p548 = scmp.ne.s32.totalorder %s539, %s540
      %p549 = scmp.eq.s32.totalorder %s83, 0
      %p550 = por %p548, %p549
      %p551 = scmp.ne.s32.totalorder %s539, %s540
      %p552 = scmp.eq.s32.totalorder %s84, 1
      %p553 = por %p551, %p552
      %p555 = scmp.ne.s32.totalorder %s540, %s554
      %p556 = scmp.eq.s32.totalorder %s84, 0
      %p557 = por %p555, %p556
      %s559 = sadd.s32 %s558, 1
      %p562 = scmp.eq.s32.totalorder %s78, 1
      %p563 = scmp.ne.s32.totalorder %s558, %s560
      %p564 = scmp.eq.s32.totalorder %s78, 0
      %p565 = por %p563, %p564
      %p566 = scmp.ne.s32.totalorder %s558, %s560
      %p567 = scmp.eq.s32.totalorder %s83, 1
      %p568 = por %p566, %p567
      %p569 = scmp.ne.s32.totalorder %s560, %s561
      %p570 = scmp.eq.s32.totalorder %s83, 0
      %p571 = por %p569, %p570
      %p572 = scmp.ne.s32.totalorder %s560, %s561
      %p573 = scmp.eq.s32.totalorder %s84, 1
      %p574 = por %p572, %p573
      %p576 = scmp.ne.s32.totalorder %s561, %s575
      %p577 = scmp.eq.s32.totalorder %s84, 0
      %p578 = por %p576, %p577
      %s580 = sadd.s32 %s579, 1
      %p583 = scmp.eq.s32.totalorder %s78, 1
      %p584 = scmp.ne.s32.totalorder %s579, %s581
      %p585 = scmp.eq.s32.totalorder %s78, 0
      %p586 = por %p584, %p585
      %p587 = scmp.ne.s32.totalorder %s579, %s581
      %p588 = scmp.eq.s32.totalorder %s83, 1
      %p589 = por %p587, %p588
      %p590 = scmp.ne.s32.totalorder %s581, %s582
      %p591 = scmp.eq.s32.totalorder %s83, 0
      %p592 = por %p590, %p591
      %p593 = scmp.ne.s32.totalorder %s581, %s582
      %p594 = scmp.eq.s32.totalorder %s84, 1
      %p595 = por %p593, %p594
      %p597 = scmp.ne.s32.totalorder %s582, %s596
      %p598 = scmp.eq.s32.totalorder %s84, 0
      %p599 = por %p597, %p598
      %s601 = sadd.s32 %s600, 1
      %p604 = scmp.eq.s32.totalorder %s78, 1
      %p605 = scmp.ne.s32.totalorder %s600, %s602
      %p606 = scmp.eq.s32.totalorder %s78, 0
      %p607 = por %p605, %p606
      %p608 = scmp.ne.s32.totalorder %s600, %s602
      %p609 = scmp.eq.s32.totalorder %s83, 1
      %p610 = por %p608, %p609
      %p611 = scmp.ne.s32.totalorder %s602, %s603
      %p612 = scmp.eq.s32.totalorder %s83, 0
      %p613 = por %p611, %p612
      %p614 = scmp.ne.s32.totalorder %s602, %s603
      %p615 = scmp.eq.s32.totalorder %s84, 1
      %p616 = por %p614, %p615
      %p618 = scmp.ne.s32.totalorder %s603, %s617
      %p619 = scmp.eq.s32.totalorder %s84, 0
      %p620 = por %p618, %p619
      %s622 = sadd.s32 %s621, 1
      %p625 = scmp.eq.s32.totalorder %s78, 1
      %p626 = scmp.ne.s32.totalorder %s621, %s623
      %p627 = scmp.eq.s32.totalorder %s78, 0
      %p628 = por %p626, %p627
      %p629 = scmp.ne.s32.totalorder %s621, %s623
      %p630 = scmp.eq.s32.totalorder %s83, 1
      %p631 = por %p629, %p630
      %p632 = scmp.ne.s32.totalorder %s623, %s624
      %p633 = scmp.eq.s32.totalorder %s83, 0
      %p634 = por %p632, %p633
      %p635 = scmp.ne.s32.totalorder %s623, %s624
      %p636 = scmp.eq.s32.totalorder %s84, 1
      %p637 = por %p635, %p636
      %p639 = scmp.ne.s32.totalorder %s624, %s638
      %p640 = scmp.eq.s32.totalorder %s84, 0
      %p641 = por %p639, %p640
      %s643 = sadd.s32 %s642, 1
      %p646 = scmp.eq.s32.totalorder %s78, 1
      %p647 = scmp.ne.s32.totalorder %s642, %s644
      %p648 = scmp.eq.s32.totalorder %s78, 0
      %p649 = por %p647, %p648
      %p650 = scmp.ne.s32.totalorder %s642, %s644
      %p651 = scmp.eq.s32.totalorder %s83, 1
      %p652 = por %p650, %p651
      %p653 = scmp.ne.s32.totalorder %s644, %s645
      %p654 = scmp.eq.s32.totalorder %s83, 0
      %p655 = por %p653, %p654
      %p656 = scmp.ne.s32.totalorder %s644, %s645
      %p657 = scmp.eq.s32.totalorder %s84, 1
      %p658 = por %p656, %p657
      %p660 = scmp.ne.s32.totalorder %s645, %s659
      %p661 = scmp.eq.s32.totalorder %s84, 0
      %p662 = por %p660, %p661
      %s664 = sadd.s32 %s663, 1
      %p667 = scmp.eq.s32.totalorder %s78, 1
      %p668 = scmp.ne.s32.totalorder %s663, %s665
      %p669 = scmp.eq.s32.totalorder %s78, 0
      %p670 = por %p668, %p669
      %p671 = scmp.ne.s32.totalorder %s663, %s665
      %p672 = scmp.eq.s32.totalorder %s83, 1
      %p673 = por %p671, %p672
      %p674 = scmp.ne.s32.totalorder %s665, %s666
      %p675 = scmp.eq.s32.totalorder %s83, 0
      %p676 = por %p674, %p675
      %p677 = scmp.ne.s32.totalorder %s665, %s666
      %p678 = scmp.eq.s32.totalorder %s84, 1
      %p679 = por %p677, %p678
      %p681 = scmp.ne.s32.totalorder %s666, %s680
      %p682 = scmp.eq.s32.totalorder %s84, 0
      %p683 = por %p681, %p682
      %s685 = sadd.s32 %s684, 1
      %p688 = scmp.eq.s32.totalorder %s78, 1
      %p689 = scmp.ne.s32.totalorder %s684, %s686
      %p690 = scmp.eq.s32.totalorder %s78, 0
      %p691 = por %p689, %p690
      %p692 = scmp.ne.s32.totalorder %s684, %s686
      %p693 = scmp.eq.s32.totalorder %s83, 1
      %p694 = por %p692, %p693
      %p695 = scmp.ne.s32.totalorder %s686, %s687
      %p696 = scmp.eq.s32.totalorder %s83, 0
      %p697 = por %p695, %p696
      %p698 = scmp.ne.s32.totalorder %s686, %s687
      %p699 = scmp.eq.s32.totalorder %s84, 1
      %p700 = por %p698, %p699
      %p702 = scmp.ne.s32.totalorder %s687, %s701
      %p703 = scmp.eq.s32.totalorder %s84, 0
      %p704 = por %p702, %p703
      %s706 = sadd.s32 %s705, 1
      %p709 = scmp.eq.s32.totalorder %s78, 1
      %p710 = scmp.ne.s32.totalorder %s705, %s707
      %p711 = scmp.eq.s32.totalorder %s78, 0
      %p712 = por %p710, %p711
      %p713 = scmp.ne.s32.totalorder %s705, %s707
      %p714 = scmp.eq.s32.totalorder %s83, 1
      %p715 = por %p713, %p714
      %p716 = scmp.ne.s32.totalorder %s707, %s708
      %p717 = scmp.eq.s32.totalorder %s83, 0
      %p718 = por %p716, %p717
      %p719 = scmp.ne.s32.totalorder %s707, %s708
      %p720 = scmp.eq.s32.totalorder %s84, 1
      %p721 = por %p719, %p720
      %p723 = scmp.ne.s32.totalorder %s708, %s722
      %p724 = scmp.eq.s32.totalorder %s84, 0
      %p725 = por %p723, %p724
      %s727 = sadd.s32 %s726, 1
      %p730 = scmp.eq.s32.totalorder %s78, 1
      %p731 = scmp.ne.s32.totalorder %s726, %s728
      %p732 = scmp.eq.s32.totalorder %s78, 0
      %p733 = por %p731, %p732
      %p734 = scmp.ne.s32.totalorder %s726, %s728
      %p735 = scmp.eq.s32.totalorder %s83, 1
      %p736 = por %p734, %p735
      %p737 = scmp.ne.s32.totalorder %s728, %s729
      %p738 = scmp.eq.s32.totalorder %s83, 0
      %p739 = por %p737, %p738
      %p740 = scmp.ne.s32.totalorder %s728, %s729
      %p741 = scmp.eq.s32.totalorder %s84, 1
      %p742 = por %p740, %p741
      %p744 = scmp.ne.s32.totalorder %s729, %s743
      %p745 = scmp.eq.s32.totalorder %s84, 0
      %p746 = por %p744, %p745
      %s747 = ssub.s32 %s78, %s85
      %p748 = scmp.eq.s32.totalorder %s747, 0
      %s750 = sadd.s32 %s749, 1
      %s751 = scalar_select %p748, %s749, %s750
      %p754 = pneg %p748
      %p755 = scmp.eq.s32.totalorder %s78, 1
      %p756 = por %p754, %p755
      %p757 = scmp.ne.s32.totalorder %s749, %s752
      %p758 = scmp.eq.s32.totalorder %s78, 0
      %p759 = por %p757, %p758
      %p760 = scmp.ne.s32.totalorder %s749, %s752
      %p761 = scmp.eq.s32.totalorder %s83, 1
      %p762 = por %p760, %p761
      %p763 = scmp.ne.s32.totalorder %s752, %s753
      %p764 = scmp.eq.s32.totalorder %s83, 0
      %p765 = por %p763, %p764
      %p766 = scmp.ne.s32.totalorder %s752, %s753
      %p767 = scmp.eq.s32.totalorder %s84, 1
      %p768 = por %p766, %p767
      %p770 = scmp.ne.s32.totalorder %s753, %s769
      %p771 = scmp.eq.s32.totalorder %s84, 0
      %p772 = por %p770, %p771
      %s773 = ssub.s32 %s78, %s85
      %p774 = scmp.eq.s32.totalorder %s773, 0
      %s776 = sadd.s32 %s775, 1
      %s777 = scalar_select %p774, %s775, %s776
      %p780 = pneg %p774
      %p781 = scmp.eq.s32.totalorder %s78, 1
      %p782 = por %p780, %p781
      %p783 = scmp.ne.s32.totalorder %s775, %s778
      %p784 = scmp.eq.s32.totalorder %s78, 0
      %p785 = por %p783, %p784
      %p786 = scmp.ne.s32.totalorder %s775, %s778
      %p787 = scmp.eq.s32.totalorder %s83, 1
      %p788 = por %p786, %p787
      %p789 = scmp.ne.s32.totalorder %s778, %s779
      %p790 = scmp.eq.s32.totalorder %s83, 0
      %p791 = por %p789, %p790
      %p792 = scmp.ne.s32.totalorder %s778, %s779
      %p793 = scmp.eq.s32.totalorder %s84, 1
      %p794 = por %p792, %p793
      %p796 = scmp.ne.s32.totalorder %s779, %s795
      %p797 = scmp.eq.s32.totalorder %s84, 0
      %p798 = por %p796, %p797
      %p799 = scmp.le.s32.totalorder 1, %s78
      %p800 = scmp.lt.s32.totalorder %s78, 3
      %p801 = pnand %p799, %p800
      %p802 = pneg %p801
      // Predicated region
      $region9: #{interaction_block.1} parent=5 // pred_check
        _
      $region10: #{interaction_block.1} parent=5 // pred_check_branch
        %804 = sbr.rel (%p801) target = $region12
      $region11: #{interaction_block.1} parent=5 // pred_region
        %s805 = ssub.s32 %s78, 1
        // Predicated region
        $region13: #{interaction_block.1} parent=11 // pred_check
          %p806 = pneg %p151
        $region14: #{interaction_block.1} parent=11 // pred_check_branch
          %808 = sbr.rel (%p806) target = $region16
        $region15: #{interaction_block.1} parent=11 // pred_region
          _
        $region16: #{interaction_block.1} parent=11 // pred_fallthru
          _
        // Predicated region
        $region17: #{interaction_block.1} parent=11 // pred_check
          %p809 = pneg %p172
        $region18: #{interaction_block.1} parent=11 // pred_check_branch
          %811 = sbr.rel (%p809) target = $region20
        $region19: #{interaction_block.1} parent=11 // pred_region
          _
        $region20: #{interaction_block.1} parent=11 // pred_fallthru
          _
        // Predicated region
        $region21: #{interaction_block.1} parent=11 // pred_check
          %p812 = pneg %p193
        $region22: #{interaction_block.1} parent=11 // pred_check_branch
          %814 = sbr.rel (%p812) target = $region24
        $region23: #{interaction_block.1} parent=11 // pred_region
          _
        $region24: #{interaction_block.1} parent=11 // pred_fallthru
          _
        // Predicated region
        $region25: #{interaction_block.1} parent=11 // pred_check
          %p815 = pneg %p214
        $region26: #{interaction_block.1} parent=11 // pred_check_branch
          %817 = sbr.rel (%p815) target = $region28
        $region27: #{interaction_block.1} parent=11 // pred_region
          _
        $region28: #{interaction_block.1} parent=11 // pred_fallthru
          _
        // Predicated region
        $region29: #{interaction_block.1} parent=11 // pred_check
          %p818 = pneg %p235
        $region30: #{interaction_block.1} parent=11 // pred_check_branch
          %820 = sbr.rel (%p818) target = $region32
        $region31: #{interaction_block.1} parent=11 // pred_region
          _
        $region32: #{interaction_block.1} parent=11 // pred_fallthru
          _
        // Predicated region
        $region33: #{interaction_block.1} parent=11 // pred_check
          %p821 = pneg %p256
        $region34: #{interaction_block.1} parent=11 // pred_check_branch
          %823 = sbr.rel (%p821) target = $region36
        $region35: #{interaction_block.1} parent=11 // pred_region
          _
        $region36: #{interaction_block.1} parent=11 // pred_fallthru
          _
        // Predicated region
        $region37: #{interaction_block.1} parent=11 // pred_check
          %p824 = pneg %p277
        $region38: #{interaction_block.1} parent=11 // pred_check_branch
          %826 = sbr.rel (%p824) target = $region40
        $region39: #{interaction_block.1} parent=11 // pred_region
          _
        $region40: #{interaction_block.1} parent=11 // pred_fallthru
          _
        // Predicated region
        $region41: #{interaction_block.1} parent=11 // pred_check
          %p827 = pneg %p298
        $region42: #{interaction_block.1} parent=11 // pred_check_branch
          %829 = sbr.rel (%p827) target = $region44
        $region43: #{interaction_block.1} parent=11 // pred_region
          _
        $region44: #{interaction_block.1} parent=11 // pred_fallthru
          _
        // Predicated region
        $region45: #{interaction_block.1} parent=11 // pred_check
          %p830 = pneg %p319
        $region46: #{interaction_block.1} parent=11 // pred_check_branch
          %832 = sbr.rel (%p830) target = $region48
        $region47: #{interaction_block.1} parent=11 // pred_region
          _
        $region48: #{interaction_block.1} parent=11 // pred_fallthru
          _
        // Predicated region
        $region49: #{interaction_block.1} parent=11 // pred_check
          %p833 = pneg %p340
        $region50: #{interaction_block.1} parent=11 // pred_check_branch
          %835 = sbr.rel (%p833) target = $region52
        $region51: #{interaction_block.1} parent=11 // pred_region
          _
        $region52: #{interaction_block.1} parent=11 // pred_fallthru
          _
        // Predicated region
        $region53: #{interaction_block.1} parent=11 // pred_check
          %p836 = pneg %p361
        $region54: #{interaction_block.1} parent=11 // pred_check_branch
          %838 = sbr.rel (%p836) target = $region56
        $region55: #{interaction_block.1} parent=11 // pred_region
          _
        $region56: #{interaction_block.1} parent=11 // pred_fallthru
          _
        // Predicated region
        $region57: #{interaction_block.1} parent=11 // pred_check
          %p839 = pneg %p382
        $region58: #{interaction_block.1} parent=11 // pred_check_branch
          %841 = sbr.rel (%p839) target = $region60
        $region59: #{interaction_block.1} parent=11 // pred_region
          _
        $region60: #{interaction_block.1} parent=11 // pred_fallthru
          _
        // Predicated region
        $region61: #{interaction_block.1} parent=11 // pred_check
          %p842 = pneg %p403
        $region62: #{interaction_block.1} parent=11 // pred_check_branch
          %844 = sbr.rel (%p842) target = $region64
        $region63: #{interaction_block.1} parent=11 // pred_region
          _
        $region64: #{interaction_block.1} parent=11 // pred_fallthru
          _
        // Predicated region
        $region65: #{interaction_block.1} parent=11 // pred_check
          %p845 = pneg %p424
        $region66: #{interaction_block.1} parent=11 // pred_check_branch
          %847 = sbr.rel (%p845) target = $region68
        $region67: #{interaction_block.1} parent=11 // pred_region
          _
        $region68: #{interaction_block.1} parent=11 // pred_fallthru
          _
        // Predicated region
        $region69: #{interaction_block.1} parent=11 // pred_check
          %p848 = pneg %p445
        $region70: #{interaction_block.1} parent=11 // pred_check_branch
          %850 = sbr.rel (%p848) target = $region72
        $region71: #{interaction_block.1} parent=11 // pred_region
          _
        $region72: #{interaction_block.1} parent=11 // pred_fallthru
          _
        // Predicated region
        $region73: #{interaction_block.1} parent=11 // pred_check
          %p851 = pneg %p466
        $region74: #{interaction_block.1} parent=11 // pred_check_branch
          %853 = sbr.rel (%p851) target = $region76
        $region75: #{interaction_block.1} parent=11 // pred_region
          _
        $region76: #{interaction_block.1} parent=11 // pred_fallthru
          _
        // Predicated region
        $region77: #{interaction_block.1} parent=11 // pred_check
          %p854 = pneg %p487
        $region78: #{interaction_block.1} parent=11 // pred_check_branch
          %856 = sbr.rel (%p854) target = $region80
        $region79: #{interaction_block.1} parent=11 // pred_region
          _
        $region80: #{interaction_block.1} parent=11 // pred_fallthru
          _
        // Predicated region
        $region81: #{interaction_block.1} parent=11 // pred_check
          %p857 = pneg %p508
        $region82: #{interaction_block.1} parent=11 // pred_check_branch
          %859 = sbr.rel (%p857) target = $region84
        $region83: #{interaction_block.1} parent=11 // pred_region
          _
        $region84: #{interaction_block.1} parent=11 // pred_fallthru
          _
        // Predicated region
        $region85: #{interaction_block.1} parent=11 // pred_check
          %p860 = pneg %p529
        $region86: #{interaction_block.1} parent=11 // pred_check_branch
          %862 = sbr.rel (%p860) target = $region88
        $region87: #{interaction_block.1} parent=11 // pred_region
          _
        $region88: #{interaction_block.1} parent=11 // pred_fallthru
          _
        // Predicated region
        $region89: #{interaction_block.1} parent=11 // pred_check
          %p863 = pneg %p550
        $region90: #{interaction_block.1} parent=11 // pred_check_branch
          %865 = sbr.rel (%p863) target = $region92
        $region91: #{interaction_block.1} parent=11 // pred_region
          _
        $region92: #{interaction_block.1} parent=11 // pred_fallthru
          _
        // Predicated region
        $region93: #{interaction_block.1} parent=11 // pred_check
          %p866 = pneg %p571
        $region94: #{interaction_block.1} parent=11 // pred_check_branch
          %868 = sbr.rel (%p866) target = $region96
        $region95: #{interaction_block.1} parent=11 // pred_region
          _
        $region96: #{interaction_block.1} parent=11 // pred_fallthru
          _
        // Predicated region
        $region97: #{interaction_block.1} parent=11 // pred_check
          %p869 = pneg %p592
        $region98: #{interaction_block.1} parent=11 // pred_check_branch
          %871 = sbr.rel (%p869) target = $region100
        $region99: #{interaction_block.1} parent=11 // pred_region
          _
        $region100: #{interaction_block.1} parent=11 // pred_fallthru
          _
        // Predicated region
        $region101: #{interaction_block.1} parent=11 // pred_check
          %p872 = pneg %p613
        $region102: #{interaction_block.1} parent=11 // pred_check_branch
          %874 = sbr.rel (%p872) target = $region104
        $region103: #{interaction_block.1} parent=11 // pred_region
          _
        $region104: #{interaction_block.1} parent=11 // pred_fallthru
          _
        // Predicated region
        $region105: #{interaction_block.1} parent=11 // pred_check
          %p875 = pneg %p634
        $region106: #{interaction_block.1} parent=11 // pred_check_branch
          %877 = sbr.rel (%p875) target = $region108
        $region107: #{interaction_block.1} parent=11 // pred_region
          _
        $region108: #{interaction_block.1} parent=11 // pred_fallthru
          _
        // Predicated region
        $region109: #{interaction_block.1} parent=11 // pred_check
          %p878 = pneg %p655
        $region110: #{interaction_block.1} parent=11 // pred_check_branch
          %880 = sbr.rel (%p878) target = $region112
        $region111: #{interaction_block.1} parent=11 // pred_region
          _
        $region112: #{interaction_block.1} parent=11 // pred_fallthru
          _
        // Predicated region
        $region113: #{interaction_block.1} parent=11 // pred_check
          %p881 = pneg %p676
        $region114: #{interaction_block.1} parent=11 // pred_check_branch
          %883 = sbr.rel (%p881) target = $region116
        $region115: #{interaction_block.1} parent=11 // pred_region
          _
        $region116: #{interaction_block.1} parent=11 // pred_fallthru
          _
        // Predicated region
        $region117: #{interaction_block.1} parent=11 // pred_check
          %p884 = pneg %p697
        $region118: #{interaction_block.1} parent=11 // pred_check_branch
          %886 = sbr.rel (%p884) target = $region120
        $region119: #{interaction_block.1} parent=11 // pred_region
          _
        $region120: #{interaction_block.1} parent=11 // pred_fallthru
          _
        // Predicated region
        $region121: #{interaction_block.1} parent=11 // pred_check
          %p887 = pneg %p718
        $region122: #{interaction_block.1} parent=11 // pred_check_branch
          %889 = sbr.rel (%p887) target = $region124
        $region123: #{interaction_block.1} parent=11 // pred_region
          _
        $region124: #{interaction_block.1} parent=11 // pred_fallthru
          _
        // Predicated region
        $region125: #{interaction_block.1} parent=11 // pred_check
          %p890 = pneg %p739
        $region126: #{interaction_block.1} parent=11 // pred_check_branch
          %892 = sbr.rel (%p890) target = $region128
        $region127: #{interaction_block.1} parent=11 // pred_region
          _
        $region128: #{interaction_block.1} parent=11 // pred_fallthru
          _
      $region12: #{interaction_block.1} parent=5 // pred_fallthru
        _
      %p893 = scmp.lt.s32.totalorder %s78, 2
      // Predicated region
      $region129: #{interaction_block.1} parent=5 // pred_check
        %p894 = pneg %p893
      $region130: #{interaction_block.1} parent=5 // pred_check_branch
        %896 = sbr.rel (%p894) target = $region132
      $region131: #{interaction_block.1} parent=5 // pred_region
        // Predicated region
        $region133: #{interaction_block.1} parent=131 // pred_check
          %p897 = pneg %p98
        $region134: #{interaction_block.1} parent=131 // pred_check_branch
          %899 = sbr.rel (%p897) target = $region136
        $region135: #{interaction_block.1} parent=131 // pred_region
          %p900 = scmp.lt.s32.totalorder %s78, 1
          %s901 = scalar_select %p900, %s78, 1
          %s902 = smul.addr %s901, 4
          %s903 = smul.addr %s902, 8
          %s904 = scalar_lea.vmem %s1, %s903
        $region136: #{interaction_block.1} parent=131 // pred_fallthru
          _
        // Predicated region
        $region137: #{interaction_block.1} parent=131 // pred_check
          %p905 = pneg %p124
        $region138: #{interaction_block.1} parent=131 // pred_check_branch
          %907 = sbr.rel (%p905) target = $region140
        $region139: #{interaction_block.1} parent=131 // pred_region
          %p908 = scmp.lt.s32.totalorder %s78, 1
          %s909 = scalar_select %p908, %s78, 1
          %s910 = smul.addr %s909, 2
          %s911 = smul.addr %s910, 8
          %s912 = scalar_lea.vmem %s3, %s911
        $region140: #{interaction_block.1} parent=131 // pred_fallthru
          _
      $region132: #{interaction_block.1} parent=5 // pred_fallthru
        _
      %p913 = scmp.le.s32.totalorder 1, %s78
      %p914 = scmp.lt.s32.totalorder %s78, 3
      %p915 = pnand %p913, %p914
      %p916 = pneg %p915
      // Predicated region
      $region141: #{interaction_block.1} parent=5 // pred_check
        _
      $region142: #{interaction_block.1} parent=5 // pred_check_branch
        %918 = sbr.rel (%p915) target = $region144
      $region143: #{interaction_block.1} parent=5 // pred_region
        %s919 = ssub.s32 %s78, 1
        %p920 = scmp.lt.s32.totalorder %s83, 1
        %s921 = scalar_select %p920, %s83, 1
        %s922 = smul.addr %s921, 4
        %s923 = smul.addr %s922, 8
        %s924 = scalar_lea.vmem %s1, %s923
        %p925 = pneg %p104
        %p926 = pneg %p101
        %p927 = scmp.lt.s32.totalorder %s83, 1
        %s928 = scalar_select %p927, %s83, 1
        %s929 = smul.addr %s928, 2
        %s930 = smul.addr %s929, 8
        %s931 = scalar_lea.vmem %s3, %s930
        %p932 = pneg %p130
        %p933 = pneg %p127
        %p934 = pneg %p151
        %p935 = pneg %p148
        %p936 = pneg %p172
        %p937 = pneg %p169
        %p938 = pneg %p193
        %p939 = pneg %p190
        %p940 = pneg %p214
        %p941 = pneg %p211
        %p942 = pneg %p235
        %p943 = pneg %p232
        %p944 = pneg %p256
        %p945 = pneg %p253
        %p946 = pneg %p277
        %p947 = pneg %p274
        %p948 = pneg %p298
        %p949 = pneg %p295
        %p950 = pneg %p319
        %p951 = pneg %p316
        %p952 = pneg %p340
        %p953 = pneg %p337
        %p954 = pneg %p361
        %p955 = pneg %p358
        %p956 = pneg %p382
        %p957 = pneg %p379
        %p958 = pneg %p403
        %p959 = pneg %p400
        %p960 = pneg %p424
        %p961 = pneg %p421
        %p962 = pneg %p445
        %p963 = pneg %p442
        %p964 = pneg %p466
        %p965 = pneg %p463
        %p966 = pneg %p487
        %p967 = pneg %p484
        %p968 = pneg %p508
        %p969 = pneg %p505
        %p970 = pneg %p529
        %p971 = pneg %p526
        %p972 = pneg %p550
        %p973 = pneg %p547
        %p974 = pneg %p571
        %p975 = pneg %p568
        %p976 = pneg %p592
        %p977 = pneg %p589
        %p978 = pneg %p613
        %p979 = pneg %p610
        %p980 = pneg %p634
        %p981 = pneg %p631
        %p982 = pneg %p655
        %p983 = pneg %p652
        %p984 = pneg %p676
        %p985 = pneg %p673
        %p986 = pneg %p697
        %p987 = pneg %p694
        %p988 = pneg %p718
        %p989 = pneg %p715
        %p990 = pneg %p739
        %p991 = pneg %p736
        %p992 = pneg %p765
        %p993 = pneg %p762
        %s994 = sand.u32 %s752, 1
        %s995 = scalar_lea.sflag [#allocation3], %s994
        %s996 = sand.u32 %s752, 1
        %s997 = smul.addr %s996, 32
        %s998 = scalar_lea.vmem [#allocation2], %s997
        %p999 = pneg %p791
        %p1000 = pneg %p788
        %s1001 = sand.u32 %s778, 1
        %s1002 = scalar_lea.sflag [#allocation5], %s1001
        %s1003 = sand.u32 %s778, 1
        %s1004 = smul.addr %s1003, 16
        %s1005 = scalar_lea.vmem [#allocation4], %s1004
        %p1006 = scmp.lt.s32.totalorder %s83, 1
        %s1007 = scalar_select %p1006, %s83, 1
        %s1008 = smul.addr %s1007, 4
        %s1009 = smul.addr %s1008, 8
        %s1010 = scalar_lea.vmem %s1, %s1009
        %p1011 = scmp.lt.s32.totalorder %s83, 1
        %s1012 = scalar_select %p1011, %s83, 1
        %s1013 = smul.addr %s1012, 2
        %s1014 = smul.addr %s1013, 8
        %s1015 = scalar_lea.vmem %s3, %s1014
        %v1017 = vld [vmem:[%s1010] sm:$0xff]
        %v1018 = vld [vmem:[%s1010 + $0x8] sm:$0xff]
        %v1019 = vld [vmem:[%s1010 + $0x10] sm:$0xff]
        %v1020 = vld [vmem:[%s1010 + $0x18] sm:$0xff]
        %v1021 = vld [vmem:[%s1015] sm:$0xff]
        %v1022 = vld [vmem:[%s1015 + $0x8] sm:$0xff]
        %v1023 = vld [vmem:[%s5] sm:$0x1]
        %v1024 = vld [vmem:[%s7] sm:$0x1]
        %vm1025 = vcmask 785408
        %v1026 = vsel %vm1025, %v1017, 0.0
        %1027 = vadd.xlane.f32.xlu0 %v1026
        %v1028 = vpop.xlane.xlu0 %1027
        %v1029 = vsel %vm1025, %v1018, 0.0
        %1030 = vadd.xlane.f32.xlu0 %v1029
        %v1031 = vpop.xlane.xlu0 %1030
        %v1032 = vsel %vm1025, %v1019, 0.0
        %1033 = vadd.xlane.f32.xlu0 %v1032
        %v1034 = vpop.xlane.xlu0 %1033
        %v1035 = vsel %vm1025, %v1020, 0.0
        %1036 = vadd.xlane.f32.xlu0 %v1035
        %v1037 = vpop.xlane.xlu0 %1036
        %v1038 = vrcp.pop 96.0
        %v1039 = vmul.f32 %v1028, %v1038
        %v1040 = vmul.f32 %v1031, %v1038
        %v1041 = vmul.f32 %v1034, %v1038
        %v1042 = vmul.f32 %v1037, %v1038
        %v1043 = vsub.f32 %v1017, %v1039
        %v1044 = vsub.f32 %v1018, %v1040
        %v1045 = vsub.f32 %v1019, %v1041
        %v1046 = vsub.f32 %v1020, %v1042
        %v1047 = vmul.f32 %v1043, %v1043
        %v1048 = vmul.f32 %v1044, %v1044
        %v1049 = vmul.f32 %v1045, %v1045
        %v1050 = vmul.f32 %v1046, %v1046
        %v1051 = vsel %vm1025, %v1047, 0.0
        %1052 = vadd.xlane.f32.xlu0 %v1051
        %v1053 = vpop.xlane.xlu0 %1052
        %v1054 = vsel %vm1025, %v1048, 0.0
        %1055 = vadd.xlane.f32.xlu0 %v1054
        %v1056 = vpop.xlane.xlu0 %1055
        %v1057 = vsel %vm1025, %v1049, 0.0
        %1058 = vadd.xlane.f32.xlu0 %v1057
        %v1059 = vpop.xlane.xlu0 %1058
        %v1060 = vsel %vm1025, %v1050, 0.0
        %1061 = vadd.xlane.f32.xlu0 %v1060
        %v1062 = vpop.xlane.xlu0 %1061
        %v1063 = vmul.f32 %v1053, %v1038
        %v1064 = vmul.f32 %v1056, %v1038
        %v1065 = vmul.f32 %v1059, %v1038
        %v1066 = vmul.f32 %v1062, %v1038
        %v1067 = vadd.f32 %v1063, 1e-06
        %v1068 = vadd.f32 %v1064, 1e-06
        %v1069 = vadd.f32 %v1065, 1e-06
        %v1070 = vadd.f32 %v1066, 1e-06
        %v1071 = vrsqrt.pop %v1067
        %v1072 = vrsqrt.pop %v1068
        %v1073 = vrsqrt.pop %v1069
        %v1074 = vrsqrt.pop %v1070
        %v1075 = vmul.f32 %v1043, %v1071
        %v1076 = vmul.f32 %v1044, %v1072
        %v1077 = vmul.f32 %v1045, %v1073
        %v1078 = vmul.f32 %v1046, %v1074
        %v1080 = vlaneseq
        %v1081 = vshrl.u32 %v1080, 7
        %v1082 = vsub.s32 0, %v1081
        %v1083 = vrot.slane %v1023, %v1082
        %v1085 = vmul.f32 %v1075, %v1083
        %v1086 = vmul.f32 %v1076, %v1083
        %v1087 = vmul.f32 %v1077, %v1083
        %v1088 = vmul.f32 %v1078, %v1083
        %v1090 = vlaneseq
        %v1091 = vshrl.u32 %v1090, 7
        %v1092 = vsub.s32 0, %v1091
        %v1093 = vrot.slane %v1024, %v1092
        %v1095 = vadd.f32 %v1085, %v1093
        %v1096 = vadd.f32 %v1086, %v1093
        %v1097 = vadd.f32 %v1087, %v1093
        %v1098 = vadd.f32 %v1088, %v1093
        %v1099 = vld [vmem:[%s9] sm:$0x1]
        %v1100 = vld [vmem:[%s11] sm:$0x1]
        %v1101 = vsel %vm1025, %v1021, 0.0
        %1102 = vadd.xlane.f32.xlu0 %v1101
        %v1103 = vpop.xlane.xlu0 %1102
        %v1104 = vsel %vm1025, %v1022, 0.0
        %1105 = vadd.xlane.f32.xlu0 %v1104
        %v1106 = vpop.xlane.xlu0 %1105
        %v1107 = vmul.f32 %v1103, %v1038
        %v1108 = vmul.f32 %v1106, %v1038
        %v1109 = vsub.f32 %v1021, %v1107
        %v1110 = vsub.f32 %v1022, %v1108
        %v1111 = vmul.f32 %v1109, %v1109
        %v1112 = vmul.f32 %v1110, %v1110
        %v1113 = vsel %vm1025, %v1111, 0.0
        %1114 = vadd.xlane.f32.xlu0 %v1113
        %v1115 = vpop.xlane.xlu0 %1114
        %v1116 = vsel %vm1025, %v1112, 0.0
        %1117 = vadd.xlane.f32.xlu0 %v1116
        %v1118 = vpop.xlane.xlu0 %1117
        %v1119 = vmul.f32 %v1115, %v1038
        %v1120 = vmul.f32 %v1118, %v1038
        %v1121 = vadd.f32 %v1119, 1e-06
        %v1122 = vadd.f32 %v1120, 1e-06
        %v1123 = vrsqrt.pop %v1121
        %v1124 = vrsqrt.pop %v1122
        %v1125 = vmul.f32 %v1109, %v1123
        %v1126 = vmul.f32 %v1110, %v1124
        %v1128 = vlaneseq
        %v1129 = vshrl.u32 %v1128, 7
        %v1130 = vsub.s32 0, %v1129
        %v1131 = vrot.slane %v1099, %v1130
        %v1133 = vmul.f32 %v1125, %v1131
        %v1134 = vmul.f32 %v1126, %v1131
        %v1136 = vlaneseq
        %v1137 = vshrl.u32 %v1136, 7
        %v1138 = vsub.s32 0, %v1137
        %v1139 = vrot.slane %v1100, %v1138
        %v1141 = vadd.f32 %v1133, %v1139
        %v1142 = vadd.f32 %v1134, %v1139
        %v1143 = vld [vmem:[%s13] sm:$0xff]
        %v1144 = vld [vmem:[%s13 + $0x8] sm:$0xff]
        %v1145 = vld [vmem:[%s13 + $0x10] sm:$0xff]
        %v1146 = vld [vmem:[%s13 + $0x18] sm:$0xff]
        %v1147 = vld [vmem:[%s13 + $0x20] sm:$0xff]
        %v1148 = vld [vmem:[%s13 + $0x28] sm:$0xff]
        %v1149 = vld [vmem:[%s13 + $0x30] sm:$0xff]
        %v1150 = vld [vmem:[%s13 + $0x38] sm:$0xff]
        %v1151 = vld [vmem:[%s13 + $0x40] sm:$0xff]
        %v1152 = vld [vmem:[%s13 + $0x48] sm:$0xff]
        %v1153 = vld [vmem:[%s13 + $0x50] sm:$0xff]
        %v1154 = vld [vmem:[%s13 + $0x58] sm:$0xff]
        %v1155 = vld [vmem:[%s15] sm:$0x1]
        %v1156 = vld [vmem:[%s17] sm:$0xff]
        %v1157 = vld [vmem:[%s17 + $0x8] sm:$0xff]
        %v1158 = vld [vmem:[%s17 + $0x10] sm:$0xff]
        %v1159 = vld [vmem:[%s17 + $0x18] sm:$0xff]
        %v1160 = vld [vmem:[%s17 + $0x20] sm:$0xff]
        %v1161 = vld [vmem:[%s17 + $0x28] sm:$0xff]
        %v1162 = vld [vmem:[%s17 + $0x30] sm:$0xff]
        %v1163 = vld [vmem:[%s17 + $0x38] sm:$0xff]
        %v1164 = vld [vmem:[%s17 + $0x40] sm:$0xff]
        %v1165 = vld [vmem:[%s17 + $0x48] sm:$0xff]
        %v1166 = vld [vmem:[%s17 + $0x50] sm:$0xff]
        %v1167 = vld [vmem:[%s17 + $0x58] sm:$0xff]
        %v1168 = vld [vmem:[%s17 + $0x60] sm:$0xff]
        %v1169 = vld [vmem:[%s17 + $0x68] sm:$0xff]
        %v1170 = vld [vmem:[%s17 + $0x70] sm:$0xff]
        %v1171 = vld [vmem:[%s17 + $0x78] sm:$0xff]
        %v1172 = vld [vmem:[%s17 + $0x80] sm:$0xff]
        %v1173 = vld [vmem:[%s17 + $0x88] sm:$0xff]
        %v1174 = vld [vmem:[%s17 + $0x90] sm:$0xff]
        %v1175 = vld [vmem:[%s17 + $0x98] sm:$0xff]
        %v1176 = vld [vmem:[%s17 + $0xa0] sm:$0xff]
        %v1177 = vld [vmem:[%s17 + $0xa8] sm:$0xff]
        %v1178 = vld [vmem:[%s17 + $0xb0] sm:$0xff]
        %v1179 = vld [vmem:[%s17 + $0xb8] sm:$0xff]
        %v1180 = vld [vmem:[%s19] sm:$0x3]
        %v1181 = vld [vmem:[%s21] sm:$0xff]
        %v1182 = vld [vmem:[%s21 + $0x8] sm:$0xff]
        %v1183 = vld [vmem:[%s21 + $0x10] sm:$0xff]
        %v1184 = vld [vmem:[%s21 + $0x18] sm:$0xff]
        %v1185 = vld [vmem:[%s21 + $0x20] sm:$0xff]
        %v1186 = vld [vmem:[%s21 + $0x28] sm:$0xff]
        %v1187 = vld [vmem:[%s21 + $0x30] sm:$0xff]
        %v1188 = vld [vmem:[%s21 + $0x38] sm:$0xff]
        %v1189 = vld [vmem:[%s21 + $0x40] sm:$0xff]
        %v1190 = vld [vmem:[%s21 + $0x48] sm:$0xff]
        %v1191 = vld [vmem:[%s21 + $0x50] sm:$0xff]
        %v1192 = vld [vmem:[%s21 + $0x58] sm:$0xff]
        %v1193 = vld [vmem:[%s23] sm:$0x1]
        %v1194 = vpack.c.bf16 %v1096, %v1095
        %v1195 = vpack.c.bf16 %v1098, %v1097
        %v1196 = vpack.c.bf16 %v1144, %v1143
        %v1197 = vpack.c.bf16 %v1146, %v1145
        %v1198 = vpack.c.bf16 %v1148, %v1147
        %v1199 = vpack.c.bf16 %v1150, %v1149
        %v1200 = vpack.c.bf16 %v1152, %v1151
        %v1201 = vpack.c.bf16 %v1154, %v1153
        %v1203 = vlaneseq
        %v1204 = vshrl.u32 %v1203, 7
        %v1205 = vsub.s32 0, %v1204
        %v1206 = vrot.slane %v1155, %v1205
        %v1209 = vsel %vm1025, %v1194, 0
        %v1212 = vsel %vm1025, %v1195, 0
        %1214 = vmatprep.subr.bf16.mxu0 0
        %1215 = vmatpush1.bf16.msra.mxu0 %v1196
        %1216 = vmatprep.subr.bf16.mxu0 0
        %1217 = vmatpush1.bf16.msra.mxu0 %v1197
        %1218 = vmatprep.subr.bf16.mxu0 0
        %1219 = vmatpush1.bf16.msra.mxu0 %v1198
        %1220 = vmatprep.subr.bf16.mxu0 0
        %1221 = vmatpush1.bf16.msra.mxu0 %v1199
        %1222 = vmatprep.subr.bf16.mxu0 0
        %1223 = vmatpush1.bf16.msra.mxu0 %v1200
        %1224 = vmatprep.subr.bf16.mxu0 0
        %1225 = vmatpush1.bf16.msra.mxu0 %v1201
        %1226 = vmatprep.subr.bf16.mxu0 0
        %1227 = vmatpush1.bf16.msra.mxu0 0
        %1228 = vmatprep.subr.bf16.mxu0 0
        %1229 = vmatpush1.bf16.msra.mxu0 0
        %1230 = vmatprep.subr.bf16.mxu0 0
        %1231 = vmatpush1.bf16.msra.mxu0 0
        %1232 = vmatprep.subr.bf16.mxu0 0
        %1233 = vmatpush1.bf16.msra.mxu0 0
        %1234 = vmatprep.subr.bf16.mxu0 0
        %1235 = vmatpush1.bf16.msra.mxu0 0
        %1236 = vmatprep.subr.bf16.mxu0 0
        %1237 = vmatpush1.bf16.msra.mxu0 0
        %1238 = vmatprep.subr.bf16.mxu0 0
        %1239 = vmatpush1.bf16.msra.mxu0 0
        %1240 = vmatprep.subr.bf16.mxu0 0
        %1241 = vmatpush1.bf16.msra.mxu0 0
        %1242 = vmatprep.subr.bf16.mxu0 0
        %1243 = vmatpush1.bf16.msra.mxu0 0
        %1244 = vmatprep.subr.bf16.mxu0 0
        %1245 = vmatpush1.bf16.msra.mxu0 0
        %1246 = vmatprep.mubr.bf16.mxu0 0
        %1247 = vmatmul.mubr.bf16.gmra.mrb[0].mxu0 %v1209
        %v1248 = vpop.f32.mrb[0].mxu0
        %v1249 = vadd.f32 %v1206, %v1248
        %v1250 = vpop.f32.mrb[0].mxu0
        %v1251 = vpop.f32.mrb[0].mxu0
        %v1252 = vadd.f32 %v1206, %v1251
        %v1253 = vpop.f32.mrb[0].mxu0
        %1254 = vmatprep.mubr.bf16.mxu0 0
        %1255 = vmatmul.mubr.bf16.gmra.mrb[0].mxu0 %v1212
        %v1256 = vpop.f32.mrb[0].mxu0
        %v1257 = vadd.f32 %v1206, %v1256
        %v1258 = vpop.f32.mrb[0].mxu0
        %v1259 = vpop.f32.mrb[0].mxu0
        %v1260 = vadd.f32 %v1206, %v1259
        %v1261 = vpop.f32.mrb[0].mxu0
        %1262 = vdwg.mxu0
        %v1263 = vpack.c.bf16 %v1142, %v1141
        %v1264 = vpack.c.bf16 %v1158, %v1156
        %v1265 = vpack.c.bf16 %v1159, %v1157
        %v1266 = vpack.c.bf16 %v1162, %v1160
        %v1267 = vpack.c.bf16 %v1163, %v1161
        %v1268 = vpack.c.bf16 %v1166, %v1164
        %v1269 = vpack.c.bf16 %v1167, %v1165
        %v1270 = vpack.c.bf16 %v1170, %v1168
        %v1271 = vpack.c.bf16 %v1171, %v1169
        %v1272 = vpack.c.bf16 %v1174, %v1172
        %v1273 = vpack.c.bf16 %v1175, %v1173
        %v1274 = vpack.c.bf16 %v1178, %v1176
        %v1275 = vpack.c.bf16 %v1179, %v1177
        %v1277 = vlaneseq
        %v1278 = vshrl.u32 %v1277, 7
        %v1279 = vsub.s32 0, %v1278
        %v1280 = vrot.slane %v1180, %v1279
        %v1281 = vlaneseq
        %v1282 = vshrl.u32 %v1281, 7
        %v1283 = vsub.s32 1, %v1282
        %v1284 = vrot.slane %v1180, %v1283
        %v1288 = vsel %vm1025, %v1263, 0
        %1290 = vmatprep.subr.bf16.mxu0 %v1265
        %1291 = vmatpush1.bf16.msra.mxu0 %v1264
        %1292 = vmatprep.subr.bf16.mxu0 %v1267
        %1293 = vmatpush1.bf16.msra.mxu0 %v1266
        %1294 = vmatprep.subr.bf16.mxu0 %v1269
        %1295 = vmatpush1.bf16.msra.mxu0 %v1268
        %1296 = vmatprep.subr.bf16.mxu0 %v1271
        %1297 = vmatpush1.bf16.msra.mxu0 %v1270
        %1298 = vmatprep.subr.bf16.mxu0 %v1273
        %1299 = vmatpush1.bf16.msra.mxu0 %v1272
        %1300 = vmatprep.subr.bf16.mxu0 %v1275
        %1301 = vmatpush1.bf16.msra.mxu0 %v1274
        %1302 = vmatprep.subr.bf16.mxu0 0
        %1303 = vmatpush1.bf16.msra.mxu0 0
        %1304 = vmatprep.subr.bf16.mxu0 0
        %1305 = vmatpush1.bf16.msra.mxu0 0
        %1306 = vmatprep.subr.bf16.mxu0 0
        %1307 = vmatpush1.bf16.msra.mxu0 0
        %1308 = vmatprep.subr.bf16.mxu0 0
        %1309 = vmatpush1.bf16.msra.mxu0 0
        %1310 = vmatprep.subr.bf16.mxu0 0
        %1311 = vmatpush1.bf16.msra.mxu0 0
        %1312 = vmatprep.subr.bf16.mxu0 0
        %1313 = vmatpush1.bf16.msra.mxu0 0
        %1314 = vmatprep.subr.bf16.mxu0 0
        %1315 = vmatpush1.bf16.msra.mxu0 0
        %1316 = vmatprep.subr.bf16.mxu0 0
        %1317 = vmatpush1.bf16.msra.mxu0 0
        %1318 = vmatprep.subr.bf16.mxu0 0
        %1319 = vmatpush1.bf16.msra.mxu0 0
        %1320 = vmatprep.subr.bf16.mxu0 0
        %1321 = vmatpush1.bf16.msra.mxu0 0
        %1322 = vmatprep.mubr.bf16.mxu0 0
        %1323 = vmatmul.mubr.bf16.gmra.mrb[0].mxu0 %v1288
        %v1324 = vpop.f32.mrb[0].mxu0
        %v1325 = vadd.f32 %v1280, %v1324
        %v1326 = vpop.f32.mrb[0].mxu0
        %v1327 = vadd.f32 %v1284, %v1326
        %v1328 = vpop.f32.mrb[0].mxu0
        %v1329 = vadd.f32 %v1280, %v1328
        %v1330 = vpop.f32.mrb[0].mxu0
        %v1331 = vadd.f32 %v1284, %v1330
        %1332 = vdwg.mxu0
        %v1333 = vpack.c.bf16 %v1252, %v1249
        %v1334 = vpack.c.bf16 %v1260, %v1257
        %v1335 = vpack.c.bf16 %v1329, %v1325
        %vm1336 = vcmask 97280
        %v1338 = vsel %vm1336, %v1333, 0
        %v1341 = vsel %vm1336, %v1334, 0
        %v1344 = vsel %vm1336, %v1335, 0
        %1346 = vmatprep.subr.bf16.mxu0 0
        %1347 = vmatpush1.bf16.xpose.msra.mxu0 %v1344
        %1348 = vmatprep.subr.bf16.mxu0 0
        %1349 = vmatpush1.bf16.xpose.msra.mxu0 0
        %1350 = vmatprep.subr.bf16.mxu0 0
        %1351 = vmatpush1.bf16.xpose.msra.mxu0 0
        %1352 = vmatprep.subr.bf16.mxu0 0
        %1353 = vmatpush1.bf16.xpose.msra.mxu0 0
        %1354 = vmatprep.subr.bf16.mxu0 0
        %1355 = vmatpush1.bf16.xpose.msra.mxu0 0
        %1356 = vmatprep.subr.bf16.mxu0 0
        %1357 = vmatpush1.bf16.xpose.msra.mxu0 0
        %1358 = vmatprep.subr.bf16.mxu0 0
        %1359 = vmatpush1.bf16.xpose.msra.mxu0 0
        %1360 = vmatprep.subr.bf16.mxu0 0
        %1361 = vmatpush1.bf16.xpose.msra.mxu0 0
        %1362 = vmatprep.subr.bf16.mxu0 0
        %1363 = vmatpush1.bf16.xpose.msra.mxu0 0
        %1364 = vmatprep.subr.bf16.mxu0 0
        %1365 = vmatpush1.bf16.xpose.msra.mxu0 0
        %1366 = vmatprep.subr.bf16.mxu0 0
        %1367 = vmatpush1.bf16.xpose.msra.mxu0 0
        %1368 = vmatprep.subr.bf16.mxu0 0
        %1369 = vmatpush1.bf16.xpose.msra.mxu0 0
        %1370 = vmatprep.subr.bf16.mxu0 0
        %1371 = vmatpush1.bf16.xpose.msra.mxu0 0
        %1372 = vmatprep.subr.bf16.mxu0 0
        %1373 = vmatpush1.bf16.xpose.msra.mxu0 0
        %1374 = vmatprep.subr.bf16.mxu0 0
        %1375 = vmatpush1.bf16.xpose.msra.mxu0 0
        %1376 = vmatprep.subr.bf16.mxu0 0
        %1377 = vmatpush1.bf16.xpose.msra.mxu0 0
        %1378 = vmatprep.mubr.bf16.mxu0 0
        %1379 = vmatmul.mubr.bf16.gmra.mrb[0].mxu0 %v1338
        %v1380 = vpop.f32.mrb[0].mxu0
        %v1381 = vadd.f32 0.0, %v1380
        %v1382 = vpop.f32.mrb[0].mxu0
        %v1383 = vpop.f32.mrb[0].mxu0
        %v1384 = vadd.f32 0.0, %v1383
        %v1385 = vpop.f32.mrb[0].mxu0
        %1386 = vmatprep.mubr.bf16.mxu0 0
        %1387 = vmatmul.mubr.bf16.gmra.mrb[0].mxu0 %v1341
        %v1388 = vpop.f32.mrb[0].mxu0
        %v1389 = vadd.f32 0.0, %v1388
        %v1390 = vpop.f32.mrb[0].mxu0
        %v1391 = vpop.f32.mrb[0].mxu0
        %v1392 = vadd.f32 0.0, %v1391
        %v1393 = vpop.f32.mrb[0].mxu0
        %1394 = vdwg.mxu0
        %v1395 = vmul.f32 %v1381, 0.28867513
        %v1396 = vmul.f32 %v1384, 0.28867513
        %v1397 = vmul.f32 %v1389, 0.28867513
        %v1398 = vmul.f32 %v1392, 0.28867513
        %vm1399 = vcmask 130048
        %v1400 = vsel %vm1399, %v1395, -inf
        %1401 = vmax.xlane.f32.xlu0 %v1400
        %v1402 = vpop.xlane.xlu0 %1401
        %v1403 = vsel %vm1399, %v1396, -inf
        %1404 = vmax.xlane.f32.xlu0 %v1403
        %v1405 = vpop.xlane.xlu0 %1404
        %v1406 = vsel %vm1399, %v1397, -inf
        %1407 = vmax.xlane.f32.xlu0 %v1406
        %v1408 = vpop.xlane.xlu0 %1407
        %v1409 = vsel %vm1399, %v1398, -inf
        %1410 = vmax.xlane.f32.xlu0 %v1409
        %v1411 = vpop.xlane.xlu0 %1410
        %v1412 = vsub.f32 %v1395, %v1402
        %v1413 = vsub.f32 %v1396, %v1405
        %v1414 = vsub.f32 %v1397, %v1408
        %v1415 = vsub.f32 %v1398, %v1411
        %v1416 = vmul.f32 %v1412, 1.442695
        %v1417 = vpow.pop %v1416
        %v1418 = vmul.f32 %v1413, 1.442695
        %v1419 = vpow.pop %v1418
        %v1420 = vmul.f32 %v1414, 1.442695
        %v1421 = vpow.pop %v1420
        %v1422 = vmul.f32 %v1415, 1.442695
        %v1423 = vpow.pop %v1422
        %v1424 = vsel %vm1399, %v1417, 0.0
        %1425 = vadd.xlane.f32.xlu0 %v1424
        %v1426 = vpop.xlane.xlu0 %1425
        %v1427 = vsel %vm1399, %v1419, 0.0
        %1428 = vadd.xlane.f32.xlu0 %v1427
        %v1429 = vpop.xlane.xlu0 %1428
        %v1430 = vsel %vm1399, %v1421, 0.0
        %1431 = vadd.xlane.f32.xlu0 %v1430
        %v1432 = vpop.xlane.xlu0 %1431
        %v1433 = vsel %vm1399, %v1423, 0.0
        %1434 = vadd.xlane.f32.xlu0 %v1433
        %v1435 = vpop.xlane.xlu0 %1434
        %v1436 = vrcp.pop %v1426
        %v1437 = vrcp.pop %v1429
        %v1438 = vrcp.pop %v1432
        %v1439 = vrcp.pop %v1435
        %v1440 = vmul.f32 %v1417, %v1436
        %v1441 = vmul.f32 %v1419, %v1437
        %v1442 = vmul.f32 %v1421, %v1438
        %v1443 = vmul.f32 %v1423, %v1439
        %v1444 = vpack.c.bf16 %v1441, %v1440
        %v1445 = vpack.c.bf16 %v1443, %v1442
        %1447 = vrot.lane.b32.xlu0 %v1335, 32
        %v1448 = vpop.permute.xlu0 %1447
        %v1451 = vsel %vm1399, %v1444, 0
        %v1454 = vsel %vm1399, %v1445, 0
        %1456 = vmatprep.subr.bf16.mxu0 0
        %1457 = vmatpush1.bf16.msra.mxu0 %v1448
        %1458 = vmatprep.subr.bf16.mxu0 0
        %1459 = vmatpush1.bf16.msra.mxu0 0
        %1460 = vmatprep.subr.bf16.mxu0 0
        %1461 = vmatpush1.bf16.msra.mxu0 0
        %1462 = vmatprep.subr.bf16.mxu0 0
        %1463 = vmatpush1.bf16.msra.mxu0 0
        %1464 = vmatprep.subr.bf16.mxu0 0
        %1465 = vmatpush1.bf16.msra.mxu0 0
        %1466 = vmatprep.subr.bf16.mxu0 0
        %1467 = vmatpush1.bf16.msra.mxu0 0
        %1468 = vmatprep.subr.bf16.mxu0 0
        %1469 = vmatpush1.bf16.msra.mxu0 0
        %1470 = vmatprep.subr.bf16.mxu0 0
        %1471 = vmatpush1.bf16.msra.mxu0 0
        %1472 = vmatprep.subr.bf16.mxu0 0
        %1473 = vmatpush1.bf16.msra.mxu0 0
        %1474 = vmatprep.subr.bf16.mxu0 0
        %1475 = vmatpush1.bf16.msra.mxu0 0
        %1476 = vmatprep.subr.bf16.mxu0 0
        %1477 = vmatpush1.bf16.msra.mxu0 0
        %1478 = vmatprep.subr.bf16.mxu0 0
        %1479 = vmatpush1.bf16.msra.mxu0 0
        %1480 = vmatprep.subr.bf16.mxu0 0
        %1481 = vmatpush1.bf16.msra.mxu0 0
        %1482 = vmatprep.subr.bf16.mxu0 0
        %1483 = vmatpush1.bf16.msra.mxu0 0
        %1484 = vmatprep.subr.bf16.mxu0 0
        %1485 = vmatpush1.bf16.msra.mxu0 0
        %1486 = vmatprep.subr.bf16.mxu0 0
        %1487 = vmatpush1.bf16.msra.mxu0 0
        %1488 = vmatprep.mubr.bf16.mxu0 0
        %1489 = vmatmul.mubr.bf16.gmra.mrb[0].mxu0 %v1451
        %v1490 = vpop.f32.mrb[0].mxu0
        %v1491 = vadd.f32 0.0, %v1490
        %v1492 = vpop.f32.mrb[0].mxu0
        %v1493 = vpop.f32.mrb[0].mxu0
        %v1494 = vadd.f32 0.0, %v1493
        %v1495 = vpop.f32.mrb[0].mxu0
        %1496 = vmatprep.mubr.bf16.mxu0 0
        %1497 = vmatmul.mubr.bf16.gmra.mrb[0].mxu0 %v1454
        %v1498 = vpop.f32.mrb[0].mxu0
        %v1499 = vadd.f32 0.0, %v1498
        %v1500 = vpop.f32.mrb[0].mxu0
        %v1501 = vpop.f32.mrb[0].mxu0
        %v1502 = vadd.f32 0.0, %v1501
        %v1503 = vpop.f32.mrb[0].mxu0
        %1504 = vdwg.mxu0
        %1507 = vrot.lane.b32.xlu0 %v1333, 116
        %v1508 = vpop.permute.xlu0 %1507
        %1509 = vrot.lane.b32.xlu0 %v1334, 116
        %v1510 = vpop.permute.xlu0 %1509
        %1511 = vrot.lane.b32.xlu0 %v1335, 116
        %v1512 = vpop.permute.xlu0 %1511
        %v1514 = vsel %vm1336, %v1508, 0
        %v1517 = vsel %vm1336, %v1510, 0
        %v1520 = vsel %vm1336, %v1512, 0
        %1522 = vmatprep.subr.bf16.mxu0 0
        %1523 = vmatpush1.bf16.xpose.msra.mxu0 %v1520
        %1524 = vmatprep.subr.bf16.mxu0 0
        %1525 = vmatpush1.bf16.xpose.msra.mxu0 0
        %1526 = vmatprep.subr.bf16.mxu0 0
        %1527 = vmatpush1.bf16.xpose.msra.mxu0 0
        %1528 = vmatprep.subr.bf16.mxu0 0
        %1529 = vmatpush1.bf16.xpose.msra.mxu0 0
        %1530 = vmatprep.subr.bf16.mxu0 0
        %1531 = vmatpush1.bf16.xpose.msra.mxu0 0
        %1532 = vmatprep.subr.bf16.mxu0 0
        %1533 = vmatpush1.bf16.xpose.msra.mxu0 0
        %1534 = vmatprep.subr.bf16.mxu0 0
        %1535 = vmatpush1.bf16.xpose.msra.mxu0 0
        %1536 = vmatprep.subr.bf16.mxu0 0
        %1537 = vmatpush1.bf16.xpose.msra.mxu0 0
        %1538 = vmatprep.subr.bf16.mxu0 0
        %1539 = vmatpush1.bf16.xpose.msra.mxu0 0
        %1540 = vmatprep.subr.bf16.mxu0 0
        %1541 = vmatpush1.bf16.xpose.msra.mxu0 0
        %1542 = vmatprep.subr.bf16.mxu0 0
        %1543 = vmatpush1.bf16.xpose.msra.mxu0 0
        %1544 = vmatprep.subr.bf16.mxu0 0
        %1545 = vmatpush1.bf16.xpose.msra.mxu0 0
        %1546 = vmatprep.subr.bf16.mxu0 0
        %1547 = vmatpush1.bf16.xpose.msra.mxu0 0
        %1548 = vmatprep.subr.bf16.mxu0 0
        %1549 = vmatpush1.bf16.xpose.msra.mxu0 0
        %1550 = vmatprep.subr.bf16.mxu0 0
        %1551 = vmatpush1.bf16.xpose.msra.mxu0 0
        %1552 = vmatprep.subr.bf16.mxu0 0
        %1553 = vmatpush1.bf16.xpose.msra.mxu0 0
        %1554 = vmatprep.mubr.bf16.mxu0 0
        %1555 = vmatmul.mubr.bf16.gmra.mrb[0].mxu0 %v1514
        %v1556 = vpop.f32.mrb[0].mxu0
        %v1557 = vadd.f32 0.0, %v1556
        %v1558 = vpop.f32.mrb[0].mxu0
        %v1559 = vpop.f32.mrb[0].mxu0
        %v1560 = vadd.f32 0.0, %v1559
        %v1561 = vpop.f32.mrb[0].mxu0
        %1562 = vmatprep.mubr.bf16.mxu0 0
        %1563 = vmatmul.mubr.bf16.gmra.mrb[0].mxu0 %v1517
        %v1564 = vpop.f32.mrb[0].mxu0
        %v1565 = vadd.f32 0.0, %v1564
        %v1566 = vpop.f32.mrb[0].mxu0
        %v1567 = vpop.f32.mrb[0].mxu0
        %v1568 = vadd.f32 0.0, %v1567
        %v1569 = vpop.f32.mrb[0].mxu0
        %1570 = vdwg.mxu0
        %v1571 = vmul.f32 %v1557, 0.28867513
        %v1572 = vmul.f32 %v1560, 0.28867513
        %v1573 = vmul.f32 %v1565, 0.28867513
        %v1574 = vmul.f32 %v1568, 0.28867513
        %v1575 = vsel %vm1399, %v1571, -inf
        %1576 = vmax.xlane.f32.xlu0 %v1575
        %v1577 = vpop.xlane.xlu0 %1576
        %v1578 = vsel %vm1399, %v1572, -inf
        %1579 = vmax.xlane.f32.xlu0 %v1578
        %v1580 = vpop.xlane.xlu0 %1579
        %v1581 = vsel %vm1399, %v1573, -inf
        %1582 = vmax.xlane.f32.xlu0 %v1581
        %v1583 = vpop.xlane.xlu0 %1582
        %v1584 = vsel %vm1399, %v1574, -inf
        %1585 = vmax.xlane.f32.xlu0 %v1584
        %v1586 = vpop.xlane.xlu0 %1585
        %v1587 = vsub.f32 %v1571, %v1577
        %v1588 = vsub.f32 %v1572, %v1580
        %v1589 = vsub.f32 %v1573, %v1583
        %v1590 = vsub.f32 %v1574, %v1586
        %v1591 = vmul.f32 %v1587, 1.442695
        %v1592 = vpow.pop %v1591
        %v1593 = vmul.f32 %v1588, 1.442695
        %v1594 = vpow.pop %v1593
        %v1595 = vmul.f32 %v1589, 1.442695
        %v1596 = vpow.pop %v1595
        %v1597 = vmul.f32 %v1590, 1.442695
        %v1598 = vpow.pop %v1597
        %v1599 = vsel %vm1399, %v1592, 0.0
        %1600 = vadd.xlane.f32.xlu0 %v1599
        %v1601 = vpop.xlane.xlu0 %1600
        %v1602 = vsel %vm1399, %v1594, 0.0
        %1603 = vadd.xlane.f32.xlu0 %v1602
        %v1604 = vpop.xlane.xlu0 %1603
        %v1605 = vsel %vm1399, %v1596, 0.0
        %1606 = vadd.xlane.f32.xlu0 %v1605
        %v1607 = vpop.xlane.xlu0 %1606
        %v1608 = vsel %vm1399, %v1598, 0.0
        %1609 = vadd.xlane.f32.xlu0 %v1608
        %v1610 = vpop.xlane.xlu0 %1609
        %v1611 = vrcp.pop %v1601
        %v1612 = vrcp.pop %v1604
        %v1613 = vrcp.pop %v1607
        %v1614 = vrcp.pop %v1610
        %v1615 = vmul.f32 %v1592, %v1611
        %v1616 = vmul.f32 %v1594, %v1612
        %v1617 = vmul.f32 %v1596, %v1613
        %v1618 = vmul.f32 %v1598, %v1614
        %v1619 = vpack.c.bf16 %v1616, %v1615
        %v1620 = vpack.c.bf16 %v1618, %v1617
        %1621 = vrot.lane.b32.xlu0 %v1335, 20
        %v1622 = vpop.permute.xlu0 %1621
        %v1625 = vsel %vm1399, %v1619, 0
        %v1628 = vsel %vm1399, %v1620, 0
        %1630 = vmatprep.subr.bf16.mxu0 0
        %1631 = vmatpush1.bf16.msra.mxu0 %v1622
        %1632 = vmatprep.subr.bf16.mxu0 0
        %1633 = vmatpush1.bf16.msra.mxu0 0
        %1634 = vmatprep.subr.bf16.mxu0 0
        %1635 = vmatpush1.bf16.msra.mxu0 0
        %1636 = vmatprep.subr.bf16.mxu0 0
        %1637 = vmatpush1.bf16.msra.mxu0 0
        %1638 = vmatprep.subr.bf16.mxu0 0
        %1639 = vmatpush1.bf16.msra.mxu0 0
        %1640 = vmatprep.subr.bf16.mxu0 0
        %1641 = vmatpush1.bf16.msra.mxu0 0
        %1642 = vmatprep.subr.bf16.mxu0 0
        %1643 = vmatpush1.bf16.msra.mxu0 0
        %1644 = vmatprep.subr.bf16.mxu0 0
        %1645 = vmatpush1.bf16.msra.mxu0 0
        %1646 = vmatprep.subr.bf16.mxu0 0
        %1647 = vmatpush1.bf16.msra.mxu0 0
        %1648 = vmatprep.subr.bf16.mxu0 0
        %1649 = vmatpush1.bf16.msra.mxu0 0
        %1650 = vmatprep.subr.bf16.mxu0 0
        %1651 = vmatpush1.bf16.msra.mxu0 0
        %1652 = vmatprep.subr.bf16.mxu0 0
        %1653 = vmatpush1.bf16.msra.mxu0 0
        %1654 = vmatprep.subr.bf16.mxu0 0
        %1655 = vmatpush1.bf16.msra.mxu0 0
        %1656 = vmatprep.subr.bf16.mxu0 0
        %1657 = vmatpush1.bf16.msra.mxu0 0
        %1658 = vmatprep.subr.bf16.mxu0 0
        %1659 = vmatpush1.bf16.msra.mxu0 0
        %1660 = vmatprep.subr.bf16.mxu0 0
        %1661 = vmatpush1.bf16.msra.mxu0 0
        %1662 = vmatprep.mubr.bf16.mxu0 0
        %1663 = vmatmul.mubr.bf16.gmra.mrb[0].mxu0 %v1625
        %v1664 = vpop.f32.mrb[0].mxu0
        %v1665 = vadd.f32 0.0, %v1664
        %v1666 = vpop.f32.mrb[0].mxu0
        %v1667 = vpop.f32.mrb[0].mxu0
        %v1668 = vadd.f32 0.0, %v1667
        %v1669 = vpop.f32.mrb[0].mxu0
        %1670 = vmatprep.mubr.bf16.mxu0 0
        %1671 = vmatmul.mubr.bf16.gmra.mrb[0].mxu0 %v1628
        %v1672 = vpop.f32.mrb[0].mxu0
        %v1673 = vadd.f32 0.0, %v1672
        %v1674 = vpop.f32.mrb[0].mxu0
        %v1675 = vpop.f32.mrb[0].mxu0
        %v1676 = vadd.f32 0.0, %v1675
        %v1677 = vpop.f32.mrb[0].mxu0
        %1678 = vdwg.mxu0
        %1679 = vrot.lane.b32.xlu0 %v1333, 104
        %v1680 = vpop.permute.xlu0 %1679
        %1681 = vrot.lane.b32.xlu0 %v1334, 104
        %v1682 = vpop.permute.xlu0 %1681
        %1683 = vrot.lane.b32.xlu0 %v1335, 104
        %v1684 = vpop.permute.xlu0 %1683
        %v1686 = vsel %vm1336, %v1680, 0
        %v1689 = vsel %vm1336, %v1682, 0
        %v1692 = vsel %vm1336, %v1684, 0
        %1694 = vmatprep.subr.bf16.mxu0 0
        %1695 = vmatpush1.bf16.xpose.msra.mxu0 %v1692
        %1696 = vmatprep.subr.bf16.mxu0 0
        %1697 = vmatpush1.bf16.xpose.msra.mxu0 0
        %1698 = vmatprep.subr.bf16.mxu0 0
        %1699 = vmatpush1.bf16.xpose.msra.mxu0 0
        %1700 = vmatprep.subr.bf16.mxu0 0
        %1701 = vmatpush1.bf16.xpose.msra.mxu0 0
        %1702 = vmatprep.subr.bf16.mxu0 0
        %1703 = vmatpush1.bf16.xpose.msra.mxu0 0
        %1704 = vmatprep.subr.bf16.mxu0 0
        %1705 = vmatpush1.bf16.xpose.msra.mxu0 0
        %1706 = vmatprep.subr.bf16.mxu0 0
        %1707 = vmatpush1.bf16.xpose.msra.mxu0 0
        %1708 = vmatprep.subr.bf16.mxu0 0
        %1709 = vmatpush1.bf16.xpose.msra.mxu0 0
        %1710 = vmatprep.subr.bf16.mxu0 0
        %1711 = vmatpush1.bf16.xpose.msra.mxu0 0
        %1712 = vmatprep.subr.bf16.mxu0 0
        %1713 = vmatpush1.bf16.xpose.msra.mxu0 0
        %1714 = vmatprep.subr.bf16.mxu0 0
        %1715 = vmatpush1.bf16.xpose.msra.mxu0 0
        %1716 = vmatprep.subr.bf16.mxu0 0
        %1717 = vmatpush1.bf16.xpose.msra.mxu0 0
        %1718 = vmatprep.subr.bf16.mxu0 0
        %1719 = vmatpush1.bf16.xpose.msra.mxu0 0
        %1720 = vmatprep.subr.bf16.mxu0 0
        %1721 = vmatpush1.bf16.xpose.msra.mxu0 0
        %1722 = vmatprep.subr.bf16.mxu0 0
        %1723 = vmatpush1.bf16.xpose.msra.mxu0 0
        %1724 = vmatprep.subr.bf16.mxu0 0
        %1725 = vmatpush1.bf16.xpose.msra.mxu0 0
        %1726 = vmatprep.mubr.bf16.mxu0 0
        %1727 = vmatmul.mubr.bf16.gmra.mrb[0].mxu0 %v1686
        %v1728 = vpop.f32.mrb[0].mxu0
        %v1729 = vadd.f32 0.0, %v1728
        %v1730 = vpop.f32.mrb[0].mxu0
        %v1731 = vpop.f32.mrb[0].mxu0
        %v1732 = vadd.f32 0.0, %v1731
        %v1733 = vpop.f32.mrb[0].mxu0
        %1734 = vmatprep.mubr.bf16.mxu0 0
        %1735 = vmatmul.mubr.bf16.gmra.mrb[0].mxu0 %v1689
        %v1736 = vpop.f32.mrb[0].mxu0
        %v1737 = vadd.f32 0.0, %v1736
        %v1738 = vpop.f32.mrb[0].mxu0
        %v1739 = vpop.f32.mrb[0].mxu0
        %v1740 = vadd.f32 0.0, %v1739
        %v1741 = vpop.f32.mrb[0].mxu0
        %1742 = vdwg.mxu0
        %v1743 = vmul.f32 %v1729, 0.28867513
        %v1744 = vmul.f32 %v1732, 0.28867513
        %v1745 = vmul.f32 %v1737, 0.28867513
        %v1746 = vmul.f32 %v1740, 0.28867513
        %v1747 = vsel %vm1399, %v1743, -inf
        %1748 = vmax.xlane.f32.xlu0 %v1747
        %v1749 = vpop.xlane.xlu0 %1748
        %v1750 = vsel %vm1399, %v1744, -inf
        %1751 = vmax.xlane.f32.xlu0 %v1750
        %v1752 = vpop.xlane.xlu0 %1751
        %v1753 = vsel %vm1399, %v1745, -inf
        %1754 = vmax.xlane.f32.xlu0 %v1753
        %v1755 = vpop.xlane.xlu0 %1754
        %v1756 = vsel %vm1399, %v1746, -inf
        %1757 = vmax.xlane.f32.xlu0 %v1756
        %v1758 = vpop.xlane.xlu0 %1757
        %v1759 = vsub.f32 %v1743, %v1749
        %v1760 = vsub.f32 %v1744, %v1752
        %v1761 = vsub.f32 %v1745, %v1755
        %v1762 = vsub.f32 %v1746, %v1758
        %v1763 = vmul.f32 %v1759, 1.442695
        %v1764 = vpow.pop %v1763
        %v1765 = vmul.f32 %v1760, 1.442695
        %v1766 = vpow.pop %v1765
        %v1767 = vmul.f32 %v1761, 1.442695
        %v1768 = vpow.pop %v1767
        %v1769 = vmul.f32 %v1762, 1.442695
        %v1770 = vpow.pop %v1769
        %v1771 = vsel %vm1399, %v1764, 0.0
        %1772 = vadd.xlane.f32.xlu0 %v1771
        %v1773 = vpop.xlane.xlu0 %1772
        %v1774 = vsel %vm1399, %v1766, 0.0
        %1775 = vadd.xlane.f32.xlu0 %v1774
        %v1776 = vpop.xlane.xlu0 %1775
        %v1777 = vsel %vm1399, %v1768, 0.0
        %1778 = vadd.xlane.f32.xlu0 %v1777
        %v1779 = vpop.xlane.xlu0 %1778
        %v1780 = vsel %vm1399, %v1770, 0.0
        %1781 = vadd.xlane.f32.xlu0 %v1780
        %v1782 = vpop.xlane.xlu0 %1781
        %v1783 = vrcp.pop %v1773
        %v1784 = vrcp.pop %v1776
        %v1785 = vrcp.pop %v1779
        %v1786 = vrcp.pop %v1782
        %v1787 = vmul.f32 %v1764, %v1783
        %v1788 = vmul.f32 %v1766, %v1784
        %v1789 = vmul.f32 %v1768, %v1785
        %v1790 = vmul.f32 %v1770, %v1786
        %v1791 = vpack.c.bf16 %v1788, %v1787
        %v1792 = vpack.c.bf16 %v1790, %v1789
        %v1793 = vpack.c.bf16 %v1331, %v1327
        %1795 = vrot.lane.b32.xlu0 %v1335, 8
        %v1796 = vpop.permute.xlu0 %1795
        %1797 = vrot.lane.b32.xlu0 %v1793, 8
        %v1798 = vpop.permute.xlu0 %1797
        %vm1799 = vcmask 64512
        %v1800 = vsel %vm1799, %v1796, %v1798
        %v1803 = vsel %vm1399, %v1791, 0
        %v1806 = vsel %vm1399, %v1792, 0
        %1808 = vmatprep.subr.bf16.mxu0 0
        %1809 = vmatpush1.bf16.msra.mxu0 %v1800
        %1810 = vmatprep.subr.bf16.mxu0 0
        %1811 = vmatpush1.bf16.msra.mxu0 0
        %1812 = vmatprep.subr.bf16.mxu0 0
        %1813 = vmatpush1.bf16.msra.mxu0 0
        %1814 = vmatprep.subr.bf16.mxu0 0
        %1815 = vmatpush1.bf16.msra.mxu0 0
        %1816 = vmatprep.subr.bf16.mxu0 0
        %1817 = vmatpush1.bf16.msra.mxu0 0
        %1818 = vmatprep.subr.bf16.mxu0 0
        %1819 = vmatpush1.bf16.msra.mxu0 0
        %1820 = vmatprep.subr.bf16.mxu0 0
        %1821 = vmatpush1.bf16.msra.mxu0 0
        %1822 = vmatprep.subr.bf16.mxu0 0
        %1823 = vmatpush1.bf16.msra.mxu0 0
        %1824 = vmatprep.subr.bf16.mxu0 0
        %1825 = vmatpush1.bf16.msra.mxu0 0
        %1826 = vmatprep.subr.bf16.mxu0 0
        %1827 = vmatpush1.bf16.msra.mxu0 0
        %1828 = vmatprep.subr.bf16.mxu0 0
        %1829 = vmatpush1.bf16.msra.mxu0 0
        %1830 = vmatprep.subr.bf16.mxu0 0
        %1831 = vmatpush1.bf16.msra.mxu0 0
        %1832 = vmatprep.subr.bf16.mxu0 0
        %1833 = vmatpush1.bf16.msra.mxu0 0
        %1834 = vmatprep.subr.bf16.mxu0 0
        %1835 = vmatpush1.bf16.msra.mxu0 0
        %1836 = vmatprep.subr.bf16.mxu0 0
        %1837 = vmatpush1.bf16.msra.mxu0 0
        %1838 = vmatprep.subr.bf16.mxu0 0
        %1839 = vmatpush1.bf16.msra.mxu0 0
        %1840 = vmatprep.mubr.bf16.mxu0 0
        %1841 = vmatmul.mubr.bf16.gmra.mrb[0].mxu0 %v1803
        %v1842 = vpop.f32.mrb[0].mxu0
        %v1843 = vadd.f32 0.0, %v1842
        %v1844 = vpop.f32.mrb[0].mxu0
        %v1845 = vpop.f32.mrb[0].mxu0
        %v1846 = vadd.f32 0.0, %v1845
        %v1847 = vpop.f32.mrb[0].mxu0
        %1848 = vmatprep.mubr.bf16.mxu0 0
        %1849 = vmatmul.mubr.bf16.gmra.mrb[0].mxu0 %v1806
        %v1850 = vpop.f32.mrb[0].mxu0
        %v1851 = vadd.f32 0.0, %v1850
        %v1852 = vpop.f32.mrb[0].mxu0
        %v1853 = vpop.f32.mrb[0].mxu0
        %v1854 = vadd.f32 0.0, %v1853
        %v1855 = vpop.f32.mrb[0].mxu0
        %1856 = vdwg.mxu0
        %1857 = vrot.lane.b32.xlu0 %v1333, 92
        %v1858 = vpop.permute.xlu0 %1857
        %1859 = vrot.lane.b32.xlu0 %v1334, 92
        %v1860 = vpop.permute.xlu0 %1859
        %1861 = vrot.lane.b32.xlu0 %v1335, 92
        %v1862 = vpop.permute.xlu0 %1861
        %v1864 = vsel %vm1336, %v1858, 0
        %v1867 = vsel %vm1336, %v1860, 0
        %v1870 = vsel %vm1336, %v1862, 0
        %1872 = vmatprep.subr.bf16.mxu0 0
        %1873 = vmatpush1.bf16.xpose.msra.mxu0 %v1870
        %1874 = vmatprep.subr.bf16.mxu0 0
        %1875 = vmatpush1.bf16.xpose.msra.mxu0 0
        %1876 = vmatprep.subr.bf16.mxu0 0
        %1877 = vmatpush1.bf16.xpose.msra.mxu0 0
        %1878 = vmatprep.subr.bf16.mxu0 0
        %1879 = vmatpush1.bf16.xpose.msra.mxu0 0
        %1880 = vmatprep.subr.bf16.mxu0 0
        %1881 = vmatpush1.bf16.xpose.msra.mxu0 0
        %1882 = vmatprep.subr.bf16.mxu0 0
        %1883 = vmatpush1.bf16.xpose.msra.mxu0 0
        %1884 = vmatprep.subr.bf16.mxu0 0
        %1885 = vmatpush1.bf16.xpose.msra.mxu0 0
        %1886 = vmatprep.subr.bf16.mxu0 0
        %1887 = vmatpush1.bf16.xpose.msra.mxu0 0
        %1888 = vmatprep.subr.bf16.mxu0 0
        %1889 = vmatpush1.bf16.xpose.msra.mxu0 0
        %1890 = vmatprep.subr.bf16.mxu0 0
        %1891 = vmatpush1.bf16.xpose.msra.mxu0 0
        %1892 = vmatprep.subr.bf16.mxu0 0
        %1893 = vmatpush1.bf16.xpose.msra.mxu0 0
        %1894 = vmatprep.subr.bf16.mxu0 0
        %1895 = vmatpush1.bf16.xpose.msra.mxu0 0
        %1896 = vmatprep.subr.bf16.mxu0 0
        %1897 = vmatpush1.bf16.xpose.msra.mxu0 0
        %1898 = vmatprep.subr.bf16.mxu0 0
        %1899 = vmatpush1.bf16.xpose.msra.mxu0 0
        %1900 = vmatprep.subr.bf16.mxu0 0
        %1901 = vmatpush1.bf16.xpose.msra.mxu0 0
        %1902 = vmatprep.subr.bf16.mxu0 0
        %1903 = vmatpush1.bf16.xpose.msra.mxu0 0
        %1904 = vmatprep.mubr.bf16.mxu0 0
        %1905 = vmatmul.mubr.bf16.gmra.mrb[0].mxu0 %v1864
        %v1906 = vpop.f32.mrb[0].mxu0
        %v1907 = vadd.f32 0.0, %v1906
        %v1908 = vpop.f32.mrb[0].mxu0
        %v1909 = vpop.f32.mrb[0].mxu0
        %v1910 = vadd.f32 0.0, %v1909
        %v1911 = vpop.f32.mrb[0].mxu0
        %1912 = vmatprep.mubr.bf16.mxu0 0
        %1913 = vmatmul.mubr.bf16.gmra.mrb[0].mxu0 %v1867
        %v1914 = vpop.f32.mrb[0].mxu0
        %v1915 = vadd.f32 0.0, %v1914
        %v1916 = vpop.f32.mrb[0].mxu0
        %v1917 = vpop.f32.mrb[0].mxu0
        %v1918 = vadd.f32 0.0, %v1917
        %v1919 = vpop.f32.mrb[0].mxu0
        %1920 = vdwg.mxu0
        %v1921 = vmul.f32 %v1907, 0.28867513
        %v1922 = vmul.f32 %v1910, 0.28867513
        %v1923 = vmul.f32 %v1915, 0.28867513
        %v1924 = vmul.f32 %v1918, 0.28867513
        %v1925 = vsel %vm1399, %v1921, -inf
        %1926 = vmax.xlane.f32.xlu0 %v1925
        %v1927 = vpop.xlane.xlu0 %1926
        %v1928 = vsel %vm1399, %v1922, -inf
        %1929 = vmax.xlane.f32.xlu0 %v1928
        %v1930 = vpop.xlane.xlu0 %1929
        %v1931 = vsel %vm1399, %v1923, -inf
        %1932 = vmax.xlane.f32.xlu0 %v1931
        %v1933 = vpop.xlane.xlu0 %1932
        %v1934 = vsel %vm1399, %v1924, -inf
        %1935 = vmax.xlane.f32.xlu0 %v1934
        %v1936 = vpop.xlane.xlu0 %1935
        %v1937 = vsub.f32 %v1921, %v1927
        %v1938 = vsub.f32 %v1922, %v1930
        %v1939 = vsub.f32 %v1923, %v1933
        %v1940 = vsub.f32 %v1924, %v1936
        %v1941 = vmul.f32 %v1937, 1.442695
        %v1942 = vpow.pop %v1941
        %v1943 = vmul.f32 %v1938, 1.442695
        %v1944 = vpow.pop %v1943
        %v1945 = vmul.f32 %v1939, 1.442695
        %v1946 = vpow.pop %v1945
        %v1947 = vmul.f32 %v1940, 1.442695
        %v1948 = vpow.pop %v1947
        %v1949 = vsel %vm1399, %v1942, 0.0
        %1950 = vadd.xlane.f32.xlu0 %v1949
        %v1951 = vpop.xlane.xlu0 %1950
        %v1952 = vsel %vm1399, %v1944, 0.0
        %1953 = vadd.xlane.f32.xlu0 %v1952
        %v1954 = vpop.xlane.xlu0 %1953
        %v1955 = vsel %vm1399, %v1946, 0.0
        %1956 = vadd.xlane.f32.xlu0 %v1955
        %v1957 = vpop.xlane.xlu0 %1956
        %v1958 = vsel %vm1399, %v1948, 0.0
        %1959 = vadd.xlane.f32.xlu0 %v1958
        %v1960 = vpop.xlane.xlu0 %1959
        %v1961 = vrcp.pop %v1951
        %v1962 = vrcp.pop %v1954
        %v1963 = vrcp.pop %v1957
        %v1964 = vrcp.pop %v1960
        %v1965 = vmul.f32 %v1942, %v1961
        %v1966 = vmul.f32 %v1944, %v1962
        %v1967 = vmul.f32 %v1946, %v1963
        %v1968 = vmul.f32 %v1948, %v1964
        %v1969 = vpack.c.bf16 %v1966, %v1965
        %v1970 = vpack.c.bf16 %v1968, %v1967
        %1971 = vrot.lane.b32.xlu0 %v1793, 124
        %v1972 = vpop.permute.xlu0 %1971
        %v1975 = vsel %vm1399, %v1969, 0
        %v1978 = vsel %vm1399, %v1970, 0
        %1980 = vmatprep.subr.bf16.mxu0 0
        %1981 = vmatpush1.bf16.msra.mxu0 %v1972
        %1982 = vmatprep.subr.bf16.mxu0 0
        %1983 = vmatpush1.bf16.msra.mxu0 0
        %1984 = vmatprep.subr.bf16.mxu0 0
        %1985 = vmatpush1.bf16.msra.mxu0 0
        %1986 = vmatprep.subr.bf16.mxu0 0
        %1987 = vmatpush1.bf16.msra.mxu0 0
        %1988 = vmatprep.subr.bf16.mxu0 0
        %1989 = vmatpush1.bf16.msra.mxu0 0
        %1990 = vmatprep.subr.bf16.mxu0 0
        %1991 = vmatpush1.bf16.msra.mxu0 0
        %1992 = vmatprep.subr.bf16.mxu0 0
        %1993 = vmatpush1.bf16.msra.mxu0 0
        %1994 = vmatprep.subr.bf16.mxu0 0
        %1995 = vmatpush1.bf16.msra.mxu0 0
        %1996 = vmatprep.subr.bf16.mxu0 0
        %1997 = vmatpush1.bf16.msra.mxu0 0
        %1998 = vmatprep.subr.bf16.mxu0 0
        %1999 = vmatpush1.bf16.msra.mxu0 0
        %2000 = vmatprep.subr.bf16.mxu0 0
        %2001 = vmatpush1.bf16.msra.mxu0 0
        %2002 = vmatprep.subr.bf16.mxu0 0
        %2003 = vmatpush1.bf16.msra.mxu0 0
        %2004 = vmatprep.subr.bf16.mxu0 0
        %2005 = vmatpush1.bf16.msra.mxu0 0
        %2006 = vmatprep.subr.bf16.mxu0 0
        %2007 = vmatpush1.bf16.msra.mxu0 0
        %2008 = vmatprep.subr.bf16.mxu0 0
        %2009 = vmatpush1.bf16.msra.mxu0 0
        %2010 = vmatprep.subr.bf16.mxu0 0
        %2011 = vmatpush1.bf16.msra.mxu0 0
        %2012 = vmatprep.mubr.bf16.mxu0 0
        %2013 = vmatmul.mubr.bf16.gmra.mrb[0].mxu0 %v1975
        %v2014 = vpop.f32.mrb[0].mxu0
        %v2015 = vadd.f32 0.0, %v2014
        %v2016 = vpop.f32.mrb[0].mxu0
        %v2017 = vpop.f32.mrb[0].mxu0
        %v2018 = vadd.f32 0.0, %v2017
        %v2019 = vpop.f32.mrb[0].mxu0
        %2020 = vmatprep.mubr.bf16.mxu0 0
        %2021 = vmatmul.mubr.bf16.gmra.mrb[0].mxu0 %v1978
        %v2022 = vpop.f32.mrb[0].mxu0
        %v2023 = vadd.f32 0.0, %v2022
        %v2024 = vpop.f32.mrb[0].mxu0
        %v2025 = vpop.f32.mrb[0].mxu0
        %v2026 = vadd.f32 0.0, %v2025
        %v2027 = vpop.f32.mrb[0].mxu0
        %2028 = vdwg.mxu0
        %2029 = vrot.lane.b32.xlu0 %v1333, 80
        %v2030 = vpop.permute.xlu0 %2029
        %2031 = vrot.lane.b32.xlu0 %v1334, 80
        %v2032 = vpop.permute.xlu0 %2031
        %2033 = vrot.lane.b32.xlu0 %v1335, 80
        %v2034 = vpop.permute.xlu0 %2033
        %v2036 = vsel %vm1336, %v2030, 0
        %v2039 = vsel %vm1336, %v2032, 0
        %v2042 = vsel %vm1336, %v2034, 0
        %2044 = vmatprep.subr.bf16.mxu0 0
        %2045 = vmatpush1.bf16.xpose.msra.mxu0 %v2042
        %2046 = vmatprep.subr.bf16.mxu0 0
        %2047 = vmatpush1.bf16.xpose.msra.mxu0 0
        %2048 = vmatprep.subr.bf16.mxu0 0
        %2049 = vmatpush1.bf16.xpose.msra.mxu0 0
        %2050 = vmatprep.subr.bf16.mxu0 0
        %2051 = vmatpush1.bf16.xpose.msra.mxu0 0
        %2052 = vmatprep.subr.bf16.mxu0 0
        %2053 = vmatpush1.bf16.xpose.msra.mxu0 0
        %2054 = vmatprep.subr.bf16.mxu0 0
        %2055 = vmatpush1.bf16.xpose.msra.mxu0 0
        %2056 = vmatprep.subr.bf16.mxu0 0
        %2057 = vmatpush1.bf16.xpose.msra.mxu0 0
        %2058 = vmatprep.subr.bf16.mxu0 0
        %2059 = vmatpush1.bf16.xpose.msra.mxu0 0
        %2060 = vmatprep.subr.bf16.mxu0 0
        %2061 = vmatpush1.bf16.xpose.msra.mxu0 0
        %2062 = vmatprep.subr.bf16.mxu0 0
        %2063 = vmatpush1.bf16.xpose.msra.mxu0 0
        %2064 = vmatprep.subr.bf16.mxu0 0
        %2065 = vmatpush1.bf16.xpose.msra.mxu0 0
        %2066 = vmatprep.subr.bf16.mxu0 0
        %2067 = vmatpush1.bf16.xpose.msra.mxu0 0
        %2068 = vmatprep.subr.bf16.mxu0 0
        %2069 = vmatpush1.bf16.xpose.msra.mxu0 0
        %2070 = vmatprep.subr.bf16.mxu0 0
        %2071 = vmatpush1.bf16.xpose.msra.mxu0 0
        %2072 = vmatprep.subr.bf16.mxu0 0
        %2073 = vmatpush1.bf16.xpose.msra.mxu0 0
        %2074 = vmatprep.subr.bf16.mxu0 0
        %2075 = vmatpush1.bf16.xpose.msra.mxu0 0
        %2076 = vmatprep.mubr.bf16.mxu0 0
        %2077 = vmatmul.mubr.bf16.gmra.mrb[0].mxu0 %v2036
        %v2078 = vpop.f32.mrb[0].mxu0
        %v2079 = vadd.f32 0.0, %v2078
        %v2080 = vpop.f32.mrb[0].mxu0
        %v2081 = vpop.f32.mrb[0].mxu0
        %v2082 = vadd.f32 0.0, %v2081
        %v2083 = vpop.f32.mrb[0].mxu0
        %2084 = vmatprep.mubr.bf16.mxu0 0
        %2085 = vmatmul.mubr.bf16.gmra.mrb[0].mxu0 %v2039
        %v2086 = vpop.f32.mrb[0].mxu0
        %v2087 = vadd.f32 0.0, %v2086
        %v2088 = vpop.f32.mrb[0].mxu0
        %v2089 = vpop.f32.mrb[0].mxu0
        %v2090 = vadd.f32 0.0, %v2089
        %v2091 = vpop.f32.mrb[0].mxu0
        %2092 = vdwg.mxu0
        %v2093 = vmul.f32 %v2079, 0.28867513
        %v2094 = vmul.f32 %v2082, 0.28867513
        %v2095 = vmul.f32 %v2087, 0.28867513
        %v2096 = vmul.f32 %v2090, 0.28867513
        %v2097 = vsel %vm1399, %v2093, -inf
        %2098 = vmax.xlane.f32.xlu0 %v2097
        %v2099 = vpop.xlane.xlu0 %2098
        %v2100 = vsel %vm1399, %v2094, -inf
        %2101 = vmax.xlane.f32.xlu0 %v2100
        %v2102 = vpop.xlane.xlu0 %2101
        %v2103 = vsel %vm1399, %v2095, -inf
        %2104 = vmax.xlane.f32.xlu0 %v2103
        %v2105 = vpop.xlane.xlu0 %2104
        %v2106 = vsel %vm1399, %v2096, -inf
        %2107 = vmax.xlane.f32.xlu0 %v2106
        %v2108 = vpop.xlane.xlu0 %2107
        %v2109 = vsub.f32 %v2093, %v2099
        %v2110 = vsub.f32 %v2094, %v2102
        %v2111 = vsub.f32 %v2095, %v2105
        %v2112 = vsub.f32 %v2096, %v2108
        %v2113 = vmul.f32 %v2109, 1.442695
        %v2114 = vpow.pop %v2113
        %v2115 = vmul.f32 %v2110, 1.442695
        %v2116 = vpow.pop %v2115
        %v2117 = vmul.f32 %v2111, 1.442695
        %v2118 = vpow.pop %v2117
        %v2119 = vmul.f32 %v2112, 1.442695
        %v2120 = vpow.pop %v2119
        %v2121 = vsel %vm1399, %v2114, 0.0
        %2122 = vadd.xlane.f32.xlu0 %v2121
        %v2123 = vpop.xlane.xlu0 %2122
        %v2124 = vsel %vm1399, %v2116, 0.0
        %2125 = vadd.xlane.f32.xlu0 %v2124
        %v2126 = vpop.xlane.xlu0 %2125
        %v2127 = vsel %vm1399, %v2118, 0.0
        %2128 = vadd.xlane.f32.xlu0 %v2127
        %v2129 = vpop.xlane.xlu0 %2128
        %v2130 = vsel %vm1399, %v2120, 0.0
        %2131 = vadd.xlane.f32.xlu0 %v2130
        %v2132 = vpop.xlane.xlu0 %2131
        %v2133 = vrcp.pop %v2123
        %v2134 = vrcp.pop %v2126
        %v2135 = vrcp.pop %v2129
        %v2136 = vrcp.pop %v2132
        %v2137 = vmul.f32 %v2114, %v2133
        %v2138 = vmul.f32 %v2116, %v2134
        %v2139 = vmul.f32 %v2118, %v2135
        %v2140 = vmul.f32 %v2120, %v2136
        %v2141 = vpack.c.bf16 %v2138, %v2137
        %v2142 = vpack.c.bf16 %v2140, %v2139
        %2143 = vrot.lane.b32.xlu0 %v1793, 112
        %v2144 = vpop.permute.xlu0 %2143
        %v2147 = vsel %vm1399, %v2141, 0
        %v2150 = vsel %vm1399, %v2142, 0
        %2152 = vmatprep.subr.bf16.mxu0 0
        %2153 = vmatpush1.bf16.msra.mxu0 %v2144
        %2154 = vmatprep.subr.bf16.mxu0 0
        %2155 = vmatpush1.bf16.msra.mxu0 0
        %2156 = vmatprep.subr.bf16.mxu0 0
        %2157 = vmatpush1.bf16.msra.mxu0 0
        %2158 = vmatprep.subr.bf16.mxu0 0
        %2159 = vmatpush1.bf16.msra.mxu0 0
        %2160 = vmatprep.subr.bf16.mxu0 0
        %2161 = vmatpush1.bf16.msra.mxu0 0
        %2162 = vmatprep.subr.bf16.mxu0 0
        %2163 = vmatpush1.bf16.msra.mxu0 0
        %2164 = vmatprep.subr.bf16.mxu0 0
        %2165 = vmatpush1.bf16.msra.mxu0 0
        %2166 = vmatprep.subr.bf16.mxu0 0
        %2167 = vmatpush1.bf16.msra.mxu0 0
        %2168 = vmatprep.subr.bf16.mxu0 0
        %2169 = vmatpush1.bf16.msra.mxu0 0
        %2170 = vmatprep.subr.bf16.mxu0 0
        %2171 = vmatpush1.bf16.msra.mxu0 0
        %2172 = vmatprep.subr.bf16.mxu0 0
        %2173 = vmatpush1.bf16.msra.mxu0 0
        %2174 = vmatprep.subr.bf16.mxu0 0
        %2175 = vmatpush1.bf16.msra.mxu0 0
        %2176 = vmatprep.subr.bf16.mxu0 0
        %2177 = vmatpush1.bf16.msra.mxu0 0
        %2178 = vmatprep.subr.bf16.mxu0 0
        %2179 = vmatpush1.bf16.msra.mxu0 0
        %2180 = vmatprep.subr.bf16.mxu0 0
        %2181 = vmatpush1.bf16.msra.mxu0 0
        %2182 = vmatprep.subr.bf16.mxu0 0
        %2183 = vmatpush1.bf16.msra.mxu0 0
        %2184 = vmatprep.mubr.bf16.mxu0 0
        %2185 = vmatmul.mubr.bf16.gmra.mrb[0].mxu0 %v2147
        %v2186 = vpop.f32.mrb[0].mxu0
        %v2187 = vadd.f32 0.0, %v2186
        %v2188 = vpop.f32.mrb[0].mxu0
        %v2189 = vpop.f32.mrb[0].mxu0
        %v2190 = vadd.f32 0.0, %v2189
        %v2191 = vpop.f32.mrb[0].mxu0
        %2192 = vmatprep.mubr.bf16.mxu0 0
        %2193 = vmatmul.mubr.bf16.gmra.mrb[0].mxu0 %v2150
        %v2194 = vpop.f32.mrb[0].mxu0
        %v2195 = vadd.f32 0.0, %v2194
        %v2196 = vpop.f32.mrb[0].mxu0
        %v2197 = vpop.f32.mrb[0].mxu0
        %v2198 = vadd.f32 0.0, %v2197
        %v2199 = vpop.f32.mrb[0].mxu0
        %2200 = vdwg.mxu0
        %2201 = vrot.lane.b32.xlu0 %v1333, 68
        %v2202 = vpop.permute.xlu0 %2201
        %2203 = vrot.lane.b32.xlu0 %v1334, 68
        %v2204 = vpop.permute.xlu0 %2203
        %2205 = vrot.lane.b32.xlu0 %v1335, 68
        %v2206 = vpop.permute.xlu0 %2205
        %v2208 = vsel %vm1336, %v2202, 0
        %v2211 = vsel %vm1336, %v2204, 0
        %v2214 = vsel %vm1336, %v2206, 0
        %2216 = vmatprep.subr.bf16.mxu0 0
        %2217 = vmatpush1.bf16.xpose.msra.mxu0 %v2214
        %2218 = vmatprep.subr.bf16.mxu0 0
        %2219 = vmatpush1.bf16.xpose.msra.mxu0 0
        %2220 = vmatprep.subr.bf16.mxu0 0
        %2221 = vmatpush1.bf16.xpose.msra.mxu0 0
        %2222 = vmatprep.subr.bf16.mxu0 0
        %2223 = vmatpush1.bf16.xpose.msra.mxu0 0
        %2224 = vmatprep.subr.bf16.mxu0 0
        %2225 = vmatpush1.bf16.xpose.msra.mxu0 0
        %2226 = vmatprep.subr.bf16.mxu0 0
        %2227 = vmatpush1.bf16.xpose.msra.mxu0 0
        %2228 = vmatprep.subr.bf16.mxu0 0
        %2229 = vmatpush1.bf16.xpose.msra.mxu0 0
        %2230 = vmatprep.subr.bf16.mxu0 0
        %2231 = vmatpush1.bf16.xpose.msra.mxu0 0
        %2232 = vmatprep.subr.bf16.mxu0 0
        %2233 = vmatpush1.bf16.xpose.msra.mxu0 0
        %2234 = vmatprep.subr.bf16.mxu0 0
        %2235 = vmatpush1.bf16.xpose.msra.mxu0 0
        %2236 = vmatprep.subr.bf16.mxu0 0
        %2237 = vmatpush1.bf16.xpose.msra.mxu0 0
        %2238 = vmatprep.subr.bf16.mxu0 0
        %2239 = vmatpush1.bf16.xpose.msra.mxu0 0
        %2240 = vmatprep.subr.bf16.mxu0 0
        %2241 = vmatpush1.bf16.xpose.msra.mxu0 0
        %2242 = vmatprep.subr.bf16.mxu0 0
        %2243 = vmatpush1.bf16.xpose.msra.mxu0 0
        %2244 = vmatprep.subr.bf16.mxu0 0
        %2245 = vmatpush1.bf16.xpose.msra.mxu0 0
        %2246 = vmatprep.subr.bf16.mxu0 0
        %2247 = vmatpush1.bf16.xpose.msra.mxu0 0
        %2248 = vmatprep.mubr.bf16.mxu0 0
        %2249 = vmatmul.mubr.bf16.gmra.mrb[0].mxu0 %v2208
        %v2250 = vpop.f32.mrb[0].mxu0
        %v2251 = vadd.f32 0.0, %v2250
        %v2252 = vpop.f32.mrb[0].mxu0
        %v2253 = vpop.f32.mrb[0].mxu0
        %v2254 = vadd.f32 0.0, %v2253
        %v2255 = vpop.f32.mrb[0].mxu0
        %2256 = vmatprep.mubr.bf16.mxu0 0
        %2257 = vmatmul.mubr.bf16.gmra.mrb[0].mxu0 %v2211
        %v2258 = vpop.f32.mrb[0].mxu0
        %v2259 = vadd.f32 0.0, %v2258
        %v2260 = vpop.f32.mrb[0].mxu0
        %v2261 = vpop.f32.mrb[0].mxu0
        %v2262 = vadd.f32 0.0, %v2261
        %v2263 = vpop.f32.mrb[0].mxu0
        %2264 = vdwg.mxu0
        %v2265 = vmul.f32 %v2251, 0.28867513
        %v2266 = vmul.f32 %v2254, 0.28867513
        %v2267 = vmul.f32 %v2259, 0.28867513
        %v2268 = vmul.f32 %v2262, 0.28867513
        %v2269 = vsel %vm1399, %v2265, -inf
        %2270 = vmax.xlane.f32.xlu0 %v2269
        %v2271 = vpop.xlane.xlu0 %2270
        %v2272 = vsel %vm1399, %v2266, -inf
        %2273 = vmax.xlane.f32.xlu0 %v2272
        %v2274 = vpop.xlane.xlu0 %2273
        %v2275 = vsel %vm1399, %v2267, -inf
        %2276 = vmax.xlane.f32.xlu0 %v2275
        %v2277 = vpop.xlane.xlu0 %2276
        %v2278 = vsel %vm1399, %v2268, -inf
        %2279 = vmax.xlane.f32.xlu0 %v2278
        %v2280 = vpop.xlane.xlu0 %2279
        %v2281 = vsub.f32 %v2265, %v2271
        %v2282 = vsub.f32 %v2266, %v2274
        %v2283 = vsub.f32 %v2267, %v2277
        %v2284 = vsub.f32 %v2268, %v2280
        %v2285 = vmul.f32 %v2281, 1.442695
        %v2286 = vpow.pop %v2285
        %v2287 = vmul.f32 %v2282, 1.442695
        %v2288 = vpow.pop %v2287
        %v2289 = vmul.f32 %v2283, 1.442695
        %v2290 = vpow.pop %v2289
        %v2291 = vmul.f32 %v2284, 1.442695
        %v2292 = vpow.pop %v2291
        %v2293 = vsel %vm1399, %v2286, 0.0
        %2294 = vadd.xlane.f32.xlu0 %v2293
        %v2295 = vpop.xlane.xlu0 %2294
        %v2296 = vsel %vm1399, %v2288, 0.0
        %2297 = vadd.xlane.f32.xlu0 %v2296
        %v2298 = vpop.xlane.xlu0 %2297
        %v2299 = vsel %vm1399, %v2290, 0.0
        %2300 = vadd.xlane.f32.xlu0 %v2299
        %v2301 = vpop.xlane.xlu0 %2300
        %v2302 = vsel %vm1399, %v2292, 0.0
        %2303 = vadd.xlane.f32.xlu0 %v2302
        %v2304 = vpop.xlane.xlu0 %2303
        %v2305 = vrcp.pop %v2295
        %v2306 = vrcp.pop %v2298
        %v2307 = vrcp.pop %v2301
        %v2308 = vrcp.pop %v2304
        %v2309 = vmul.f32 %v2286, %v2305
        %v2310 = vmul.f32 %v2288, %v2306
        %v2311 = vmul.f32 %v2290, %v2307
        %v2312 = vmul.f32 %v2292, %v2308
        %v2313 = vpack.c.bf16 %v2310, %v2309
        %v2314 = vpack.c.bf16 %v2312, %v2311
        %2315 = vrot.lane.b32.xlu0 %v1793, 100
        %v2316 = vpop.permute.xlu0 %2315
        %v2319 = vsel %vm1399, %v2313, 0
        %v2322 = vsel %vm1399, %v2314, 0
        %2324 = vmatprep.subr.bf16.mxu0 0
        %2325 = vmatpush1.bf16.msra.mxu0 %v2316
        %2326 = vmatprep.subr.bf16.mxu0 0
        %2327 = vmatpush1.bf16.msra.mxu0 0
        %2328 = vmatprep.subr.bf16.mxu0 0
        %2329 = vmatpush1.bf16.msra.mxu0 0
        %2330 = vmatprep.subr.bf16.mxu0 0
        %2331 = vmatpush1.bf16.msra.mxu0 0
        %2332 = vmatprep.subr.bf16.mxu0 0
        %2333 = vmatpush1.bf16.msra.mxu0 0
        %2334 = vmatprep.subr.bf16.mxu0 0
        %2335 = vmatpush1.bf16.msra.mxu0 0
        %2336 = vmatprep.subr.bf16.mxu0 0
        %2337 = vmatpush1.bf16.msra.mxu0 0
        %2338 = vmatprep.subr.bf16.mxu0 0
        %2339 = vmatpush1.bf16.msra.mxu0 0
        %2340 = vmatprep.subr.bf16.mxu0 0
        %2341 = vmatpush1.bf16.msra.mxu0 0
        %2342 = vmatprep.subr.bf16.mxu0 0
        %2343 = vmatpush1.bf16.msra.mxu0 0
        %2344 = vmatprep.subr.bf16.mxu0 0
        %2345 = vmatpush1.bf16.msra.mxu0 0
        %2346 = vmatprep.subr.bf16.mxu0 0
        %2347 = vmatpush1.bf16.msra.mxu0 0
        %2348 = vmatprep.subr.bf16.mxu0 0
        %2349 = vmatpush1.bf16.msra.mxu0 0
        %2350 = vmatprep.subr.bf16.mxu0 0
        %2351 = vmatpush1.bf16.msra.mxu0 0
        %2352 = vmatprep.subr.bf16.mxu0 0
        %2353 = vmatpush1.bf16.msra.mxu0 0
        %2354 = vmatprep.subr.bf16.mxu0 0
        %2355 = vmatpush1.bf16.msra.mxu0 0
        %2356 = vmatprep.mubr.bf16.mxu0 0
        %2357 = vmatmul.mubr.bf16.gmra.mrb[0].mxu0 %v2319
        %v2358 = vpop.f32.mrb[0].mxu0
        %v2359 = vadd.f32 0.0, %v2358
        %v2360 = vpop.f32.mrb[0].mxu0
        %v2361 = vpop.f32.mrb[0].mxu0
        %v2362 = vadd.f32 0.0, %v2361
        %v2363 = vpop.f32.mrb[0].mxu0
        %2364 = vmatprep.mubr.bf16.mxu0 0
        %2365 = vmatmul.mubr.bf16.gmra.mrb[0].mxu0 %v2322
        %v2366 = vpop.f32.mrb[0].mxu0
        %v2367 = vadd.f32 0.0, %v2366
        %v2368 = vpop.f32.mrb[0].mxu0
        %v2369 = vpop.f32.mrb[0].mxu0
        %v2370 = vadd.f32 0.0, %v2369
        %v2371 = vpop.f32.mrb[0].mxu0
        %2372 = vdwg.mxu0
        %2373 = vrot.lane.b32.xlu0 %v1333, 56
        %v2374 = vpop.permute.xlu0 %2373
        %2375 = vrot.lane.b32.xlu0 %v1334, 56
        %v2376 = vpop.permute.xlu0 %2375
        %2377 = vrot.lane.b32.xlu0 %v1335, 56
        %v2378 = vpop.permute.xlu0 %2377
        %v2380 = vsel %vm1336, %v2374, 0
        %v2383 = vsel %vm1336, %v2376, 0
        %v2386 = vsel %vm1336, %v2378, 0
        %2388 = vmatprep.subr.bf16.mxu0 0
        %2389 = vmatpush1.bf16.xpose.msra.mxu0 %v2386
        %2390 = vmatprep.subr.bf16.mxu0 0
        %2391 = vmatpush1.bf16.xpose.msra.mxu0 0
        %2392 = vmatprep.subr.bf16.mxu0 0
        %2393 = vmatpush1.bf16.xpose.msra.mxu0 0
        %2394 = vmatprep.subr.bf16.mxu0 0
        %2395 = vmatpush1.bf16.xpose.msra.mxu0 0
        %2396 = vmatprep.subr.bf16.mxu0 0
        %2397 = vmatpush1.bf16.xpose.msra.mxu0 0
        %2398 = vmatprep.subr.bf16.mxu0 0
        %2399 = vmatpush1.bf16.xpose.msra.mxu0 0
        %2400 = vmatprep.subr.bf16.mxu0 0
        %2401 = vmatpush1.bf16.xpose.msra.mxu0 0
        %2402 = vmatprep.subr.bf16.mxu0 0
        %2403 = vmatpush1.bf16.xpose.msra.mxu0 0
        %2404 = vmatprep.subr.bf16.mxu0 0
        %2405 = vmatpush1.bf16.xpose.msra.mxu0 0
        %2406 = vmatprep.subr.bf16.mxu0 0
        %2407 = vmatpush1.bf16.xpose.msra.mxu0 0
        %2408 = vmatprep.subr.bf16.mxu0 0
        %2409 = vmatpush1.bf16.xpose.msra.mxu0 0
        %2410 = vmatprep.subr.bf16.mxu0 0
        %2411 = vmatpush1.bf16.xpose.msra.mxu0 0
        %2412 = vmatprep.subr.bf16.mxu0 0
        %2413 = vmatpush1.bf16.xpose.msra.mxu0 0
        %2414 = vmatprep.subr.bf16.mxu0 0
        %2415 = vmatpush1.bf16.xpose.msra.mxu0 0
        %2416 = vmatprep.subr.bf16.mxu0 0
        %2417 = vmatpush1.bf16.xpose.msra.mxu0 0
        %2418 = vmatprep.subr.bf16.mxu0 0
        %2419 = vmatpush1.bf16.xpose.msra.mxu0 0
        %2420 = vmatprep.mubr.bf16.mxu0 0
        %2421 = vmatmul.mubr.bf16.gmra.mrb[0].mxu0 %v2380
        %v2422 = vpop.f32.mrb[0].mxu0
        %v2423 = vadd.f32 0.0, %v2422
        %v2424 = vpop.f32.mrb[0].mxu0
        %v2425 = vpop.f32.mrb[0].mxu0
        %v2426 = vadd.f32 0.0, %v2425
        %v2427 = vpop.f32.mrb[0].mxu0
        %2428 = vmatprep.mubr.bf16.mxu0 0
        %2429 = vmatmul.mubr.bf16.gmra.mrb[0].mxu0 %v2383
        %v2430 = vpop.f32.mrb[0].mxu0
        %v2431 = vadd.f32 0.0, %v2430
        %v2432 = vpop.f32.mrb[0].mxu0
        %v2433 = vpop.f32.mrb[0].mxu0
        %v2434 = vadd.f32 0.0, %v2433
        %v2435 = vpop.f32.mrb[0].mxu0
        %2436 = vdwg.mxu0
        %v2437 = vmul.f32 %v2423, 0.28867513
        %v2438 = vmul.f32 %v2426, 0.28867513
        %v2439 = vmul.f32 %v2431, 0.28867513
        %v2440 = vmul.f32 %v2434, 0.28867513
        %v2441 = vsel %vm1399, %v2437, -inf
        %2442 = vmax.xlane.f32.xlu0 %v2441
        %v2443 = vpop.xlane.xlu0 %2442
        %v2444 = vsel %vm1399, %v2438, -inf
        %2445 = vmax.xlane.f32.xlu0 %v2444
        %v2446 = vpop.xlane.xlu0 %2445
        %v2447 = vsel %vm1399, %v2439, -inf
        %2448 = vmax.xlane.f32.xlu0 %v2447
        %v2449 = vpop.xlane.xlu0 %2448
        %v2450 = vsel %vm1399, %v2440, -inf
        %2451 = vmax.xlane.f32.xlu0 %v2450
        %v2452 = vpop.xlane.xlu0 %2451
        %v2453 = vsub.f32 %v2437, %v2443
        %v2454 = vsub.f32 %v2438, %v2446
        %v2455 = vsub.f32 %v2439, %v2449
        %v2456 = vsub.f32 %v2440, %v2452
        %v2457 = vmul.f32 %v2453, 1.442695
        %v2458 = vpow.pop %v2457
        %v2459 = vmul.f32 %v2454, 1.442695
        %v2460 = vpow.pop %v2459
        %v2461 = vmul.f32 %v2455, 1.442695
        %v2462 = vpow.pop %v2461
        %v2463 = vmul.f32 %v2456, 1.442695
        %v2464 = vpow.pop %v2463
        %v2465 = vsel %vm1399, %v2458, 0.0
        %2466 = vadd.xlane.f32.xlu0 %v2465
        %v2467 = vpop.xlane.xlu0 %2466
        %v2468 = vsel %vm1399, %v2460, 0.0
        %2469 = vadd.xlane.f32.xlu0 %v2468
        %v2470 = vpop.xlane.xlu0 %2469
        %v2471 = vsel %vm1399, %v2462, 0.0
        %2472 = vadd.xlane.f32.xlu0 %v2471
        %v2473 = vpop.xlane.xlu0 %2472
        %v2474 = vsel %vm1399, %v2464, 0.0
        %2475 = vadd.xlane.f32.xlu0 %v2474
        %v2476 = vpop.xlane.xlu0 %2475
        %v2477 = vrcp.pop %v2467
        %v2478 = vrcp.pop %v2470
        %v2479 = vrcp.pop %v2473
        %v2480 = vrcp.pop %v2476
        %v2481 = vmul.f32 %v2458, %v2477
        %v2482 = vmul.f32 %v2460, %v2478
        %v2483 = vmul.f32 %v2462, %v2479
        %v2484 = vmul.f32 %v2464, %v2480
        %v2485 = vpack.c.bf16 %v2482, %v2481
        %v2486 = vpack.c.bf16 %v2484, %v2483
        %2487 = vrot.lane.b32.xlu0 %v1793, 88
        %v2488 = vpop.permute.xlu0 %2487
        %v2491 = vsel %vm1399, %v2485, 0
        %v2494 = vsel %vm1399, %v2486, 0
        %2496 = vmatprep.subr.bf16.mxu0 0
        %2497 = vmatpush1.bf16.msra.mxu0 %v2488
        %2498 = vmatprep.subr.bf16.mxu0 0
        %2499 = vmatpush1.bf16.msra.mxu0 0
        %2500 = vmatprep.subr.bf16.mxu0 0
        %2501 = vmatpush1.bf16.msra.mxu0 0
        %2502 = vmatprep.subr.bf16.mxu0 0
        %2503 = vmatpush1.bf16.msra.mxu0 0
        %2504 = vmatprep.subr.bf16.mxu0 0
        %2505 = vmatpush1.bf16.msra.mxu0 0
        %2506 = vmatprep.subr.bf16.mxu0 0
        %2507 = vmatpush1.bf16.msra.mxu0 0
        %2508 = vmatprep.subr.bf16.mxu0 0
        %2509 = vmatpush1.bf16.msra.mxu0 0
        %2510 = vmatprep.subr.bf16.mxu0 0
        %2511 = vmatpush1.bf16.msra.mxu0 0
        %2512 = vmatprep.subr.bf16.mxu0 0
        %2513 = vmatpush1.bf16.msra.mxu0 0
        %2514 = vmatprep.subr.bf16.mxu0 0
        %2515 = vmatpush1.bf16.msra.mxu0 0
        %2516 = vmatprep.subr.bf16.mxu0 0
        %2517 = vmatpush1.bf16.msra.mxu0 0
        %2518 = vmatprep.subr.bf16.mxu0 0
        %2519 = vmatpush1.bf16.msra.mxu0 0
        %2520 = vmatprep.subr.bf16.mxu0 0
        %2521 = vmatpush1.bf16.msra.mxu0 0
        %2522 = vmatprep.subr.bf16.mxu0 0
        %2523 = vmatpush1.bf16.msra.mxu0 0
        %2524 = vmatprep.subr.bf16.mxu0 0
        %2525 = vmatpush1.bf16.msra.mxu0 0
        %2526 = vmatprep.subr.bf16.mxu0 0
        %2527 = vmatpush1.bf16.msra.mxu0 0
        %2528 = vmatprep.mubr.bf16.mxu0 0
        %2529 = vmatmul.mubr.bf16.gmra.mrb[0].mxu0 %v2491
        %v2530 = vpop.f32.mrb[0].mxu0
        %v2531 = vadd.f32 0.0, %v2530
        %v2532 = vpop.f32.mrb[0].mxu0
        %v2533 = vpop.f32.mrb[0].mxu0
        %v2534 = vadd.f32 0.0, %v2533
        %v2535 = vpop.f32.mrb[0].mxu0
        %2536 = vmatprep.mubr.bf16.mxu0 0
        %2537 = vmatmul.mubr.bf16.gmra.mrb[0].mxu0 %v2494
        %v2538 = vpop.f32.mrb[0].mxu0
        %v2539 = vadd.f32 0.0, %v2538
        %v2540 = vpop.f32.mrb[0].mxu0
        %v2541 = vpop.f32.mrb[0].mxu0
        %v2542 = vadd.f32 0.0, %v2541
        %v2543 = vpop.f32.mrb[0].mxu0
        %2544 = vdwg.mxu0
        %2545 = vrot.lane.b32.xlu0 %v1333, 44
        %v2546 = vpop.permute.xlu0 %2545
        %2547 = vrot.lane.b32.xlu0 %v1334, 44
        %v2548 = vpop.permute.xlu0 %2547
        %2549 = vrot.lane.b32.xlu0 %v1335, 44
        %v2550 = vpop.permute.xlu0 %2549
        %v2552 = vsel %vm1336, %v2546, 0
        %v2555 = vsel %vm1336, %v2548, 0
        %v2558 = vsel %vm1336, %v2550, 0
        %2560 = vmatprep.subr.bf16.mxu0 0
        %2561 = vmatpush1.bf16.xpose.msra.mxu0 %v2558
        %2562 = vmatprep.subr.bf16.mxu0 0
        %2563 = vmatpush1.bf16.xpose.msra.mxu0 0
        %2564 = vmatprep.subr.bf16.mxu0 0
        %2565 = vmatpush1.bf16.xpose.msra.mxu0 0
        %2566 = vmatprep.subr.bf16.mxu0 0
        %2567 = vmatpush1.bf16.xpose.msra.mxu0 0
        %2568 = vmatprep.subr.bf16.mxu0 0
        %2569 = vmatpush1.bf16.xpose.msra.mxu0 0
        %2570 = vmatprep.subr.bf16.mxu0 0
        %2571 = vmatpush1.bf16.xpose.msra.mxu0 0
        %2572 = vmatprep.subr.bf16.mxu0 0
        %2573 = vmatpush1.bf16.xpose.msra.mxu0 0
        %2574 = vmatprep.subr.bf16.mxu0 0
        %2575 = vmatpush1.bf16.xpose.msra.mxu0 0
        %2576 = vmatprep.subr.bf16.mxu0 0
        %2577 = vmatpush1.bf16.xpose.msra.mxu0 0
        %2578 = vmatprep.subr.bf16.mxu0 0
        %2579 = vmatpush1.bf16.xpose.msra.mxu0 0
        %2580 = vmatprep.subr.bf16.mxu0 0
        %2581 = vmatpush1.bf16.xpose.msra.mxu0 0
        %2582 = vmatprep.subr.bf16.mxu0 0
        %2583 = vmatpush1.bf16.xpose.msra.mxu0 0
        %2584 = vmatprep.subr.bf16.mxu0 0
        %2585 = vmatpush1.bf16.xpose.msra.mxu0 0
        %2586 = vmatprep.subr.bf16.mxu0 0
        %2587 = vmatpush1.bf16.xpose.msra.mxu0 0
        %2588 = vmatprep.subr.bf16.mxu0 0
        %2589 = vmatpush1.bf16.xpose.msra.mxu0 0
        %2590 = vmatprep.subr.bf16.mxu0 0
        %2591 = vmatpush1.bf16.xpose.msra.mxu0 0
        %2592 = vmatprep.mubr.bf16.mxu0 0
        %2593 = vmatmul.mubr.bf16.gmra.mrb[0].mxu0 %v2552
        %v2594 = vpop.f32.mrb[0].mxu0
        %v2595 = vadd.f32 0.0, %v2594
        %v2596 = vpop.f32.mrb[0].mxu0
        %v2597 = vpop.f32.mrb[0].mxu0
        %v2598 = vadd.f32 0.0, %v2597
        %v2599 = vpop.f32.mrb[0].mxu0
        %2600 = vmatprep.mubr.bf16.mxu0 0
        %2601 = vmatmul.mubr.bf16.gmra.mrb[0].mxu0 %v2555
        %v2602 = vpop.f32.mrb[0].mxu0
        %v2603 = vadd.f32 0.0, %v2602
        %v2604 = vpop.f32.mrb[0].mxu0
        %v2605 = vpop.f32.mrb[0].mxu0
        %v2606 = vadd.f32 0.0, %v2605
        %v2607 = vpop.f32.mrb[0].mxu0
        %2608 = vdwg.mxu0
        %v2609 = vmul.f32 %v2595, 0.28867513
        %v2610 = vmul.f32 %v2598, 0.28867513
        %v2611 = vmul.f32 %v2603, 0.28867513
        %v2612 = vmul.f32 %v2606, 0.28867513
        %v2613 = vsel %vm1399, %v2609, -inf
        %2614 = vmax.xlane.f32.xlu0 %v2613
        %v2615 = vpop.xlane.xlu0 %2614
        %v2616 = vsel %vm1399, %v2610, -inf
        %2617 = vmax.xlane.f32.xlu0 %v2616
        %v2618 = vpop.xlane.xlu0 %2617
        %v2619 = vsel %vm1399, %v2611, -inf
        %2620 = vmax.xlane.f32.xlu0 %v2619
        %v2621 = vpop.xlane.xlu0 %2620
        %v2622 = vsel %vm1399, %v2612, -inf
        %2623 = vmax.xlane.f32.xlu0 %v2622
        %v2624 = vpop.xlane.xlu0 %2623
        %v2625 = vsub.f32 %v2609, %v2615
        %v2626 = vsub.f32 %v2610, %v2618
        %v2627 = vsub.f32 %v2611, %v2621
        %v2628 = vsub.f32 %v2612, %v2624
        %v2629 = vmul.f32 %v2625, 1.442695
        %v2630 = vpow.pop %v2629
        %v2631 = vmul.f32 %v2626, 1.442695
        %v2632 = vpow.pop %v2631
        %v2633 = vmul.f32 %v2627, 1.442695
        %v2634 = vpow.pop %v2633
        %v2635 = vmul.f32 %v2628, 1.442695
        %v2636 = vpow.pop %v2635
        %v2637 = vsel %vm1399, %v2630, 0.0
        %2638 = vadd.xlane.f32.xlu0 %v2637
        %v2639 = vpop.xlane.xlu0 %2638
        %v2640 = vsel %vm1399, %v2632, 0.0
        %2641 = vadd.xlane.f32.xlu0 %v2640
        %v2642 = vpop.xlane.xlu0 %2641
        %v2643 = vsel %vm1399, %v2634, 0.0
        %2644 = vadd.xlane.f32.xlu0 %v2643
        %v2645 = vpop.xlane.xlu0 %2644
        %v2646 = vsel %vm1399, %v2636, 0.0
        %2647 = vadd.xlane.f32.xlu0 %v2646
        %v2648 = vpop.xlane.xlu0 %2647
        %v2649 = vrcp.pop %v2639
        %v2650 = vrcp.pop %v2642
        %v2651 = vrcp.pop %v2645
        %v2652 = vrcp.pop %v2648
        %v2653 = vmul.f32 %v2630, %v2649
        %v2654 = vmul.f32 %v2632, %v2650
        %v2655 = vmul.f32 %v2634, %v2651
        %v2656 = vmul.f32 %v2636, %v2652
        %v2657 = vpack.c.bf16 %v2654, %v2653
        %v2658 = vpack.c.bf16 %v2656, %v2655
        %2659 = vrot.lane.b32.xlu0 %v1793, 76
        %v2660 = vpop.permute.xlu0 %2659
        %v2663 = vsel %vm1399, %v2657, 0
        %v2666 = vsel %vm1399, %v2658, 0
        %2668 = vmatprep.subr.bf16.mxu0 0
        %2669 = vmatpush1.bf16.msra.mxu0 %v2660
        %2670 = vmatprep.subr.bf16.mxu0 0
        %2671 = vmatpush1.bf16.msra.mxu0 0
        %2672 = vmatprep.subr.bf16.mxu0 0
        %2673 = vmatpush1.bf16.msra.mxu0 0
        %2674 = vmatprep.subr.bf16.mxu0 0
        %2675 = vmatpush1.bf16.msra.mxu0 0
        %2676 = vmatprep.subr.bf16.mxu0 0
        %2677 = vmatpush1.bf16.msra.mxu0 0
        %2678 = vmatprep.subr.bf16.mxu0 0
        %2679 = vmatpush1.bf16.msra.mxu0 0
        %2680 = vmatprep.subr.bf16.mxu0 0
        %2681 = vmatpush1.bf16.msra.mxu0 0
        %2682 = vmatprep.subr.bf16.mxu0 0
        %2683 = vmatpush1.bf16.msra.mxu0 0
        %2684 = vmatprep.subr.bf16.mxu0 0
        %2685 = vmatpush1.bf16.msra.mxu0 0
        %2686 = vmatprep.subr.bf16.mxu0 0
        %2687 = vmatpush1.bf16.msra.mxu0 0
        %2688 = vmatprep.subr.bf16.mxu0 0
        %2689 = vmatpush1.bf16.msra.mxu0 0
        %2690 = vmatprep.subr.bf16.mxu0 0
        %2691 = vmatpush1.bf16.msra.mxu0 0
        %2692 = vmatprep.subr.bf16.mxu0 0
        %2693 = vmatpush1.bf16.msra.mxu0 0
        %2694 = vmatprep.subr.bf16.mxu0 0
        %2695 = vmatpush1.bf16.msra.mxu0 0
        %2696 = vmatprep.subr.bf16.mxu0 0
        %2697 = vmatpush1.bf16.msra.mxu0 0
        %2698 = vmatprep.subr.bf16.mxu0 0
        %2699 = vmatpush1.bf16.msra.mxu0 0
        %2700 = vmatprep.mubr.bf16.mxu0 0
        %2701 = vmatmul.mubr.bf16.gmra.mrb[0].mxu0 %v2663
        %v2702 = vpop.f32.mrb[0].mxu0
        %v2703 = vadd.f32 0.0, %v2702
        %v2704 = vpop.f32.mrb[0].mxu0
        %v2705 = vpop.f32.mrb[0].mxu0
        %v2706 = vadd.f32 0.0, %v2705
        %v2707 = vpop.f32.mrb[0].mxu0
        %2708 = vmatprep.mubr.bf16.mxu0 0
        %2709 = vmatmul.mubr.bf16.gmra.mrb[0].mxu0 %v2666
        %v2710 = vpop.f32.mrb[0].mxu0
        %v2711 = vadd.f32 0.0, %v2710
        %v2712 = vpop.f32.mrb[0].mxu0
        %v2713 = vpop.f32.mrb[0].mxu0
        %v2714 = vadd.f32 0.0, %v2713
        %v2715 = vpop.f32.mrb[0].mxu0
        %2716 = vdwg.mxu0
        %2721 = vrot.lane.b32.xlu0 %v1665, 12
        %v2722 = vpop.permute.xlu0 %2721
        %2723 = vrot.lane.b32.xlu0 %v1668, 12
        %v2724 = vpop.permute.xlu0 %2723
        %2725 = vrot.lane.b32.xlu0 %v1673, 12
        %v2726 = vpop.permute.xlu0 %2725
        %2727 = vrot.lane.b32.xlu0 %v1676, 12
        %v2728 = vpop.permute.xlu0 %2727
        %2737 = vrot.lane.b32.xlu0 %v1843, 24
        %v2738 = vpop.permute.xlu0 %2737
        %2739 = vrot.lane.b32.xlu0 %v1846, 24
        %v2740 = vpop.permute.xlu0 %2739
        %2741 = vrot.lane.b32.xlu0 %v1851, 24
        %v2742 = vpop.permute.xlu0 %2741
        %2743 = vrot.lane.b32.xlu0 %v1854, 24
        %v2744 = vpop.permute.xlu0 %2743
        %2753 = vrot.lane.b32.xlu0 %v2015, 36
        %v2754 = vpop.permute.xlu0 %2753
        %2755 = vrot.lane.b32.xlu0 %v2018, 36
        %v2756 = vpop.permute.xlu0 %2755
        %2757 = vrot.lane.b32.xlu0 %v2023, 36
        %v2758 = vpop.permute.xlu0 %2757
        %2759 = vrot.lane.b32.xlu0 %v2026, 36
        %v2760 = vpop.permute.xlu0 %2759
        %2769 = vrot.lane.b32.xlu0 %v2187, 48
        %v2770 = vpop.permute.xlu0 %2769
        %2771 = vrot.lane.b32.xlu0 %v2190, 48
        %v2772 = vpop.permute.xlu0 %2771
        %2773 = vrot.lane.b32.xlu0 %v2195, 48
        %v2774 = vpop.permute.xlu0 %2773
        %2775 = vrot.lane.b32.xlu0 %v2198, 48
        %v2776 = vpop.permute.xlu0 %2775
        %2785 = vrot.lane.b32.xlu0 %v2359, 60
        %v2786 = vpop.permute.xlu0 %2785
        %2787 = vrot.lane.b32.xlu0 %v2362, 60
        %v2788 = vpop.permute.xlu0 %2787
        %2789 = vrot.lane.b32.xlu0 %v2367, 60
        %v2790 = vpop.permute.xlu0 %2789
        %2791 = vrot.lane.b32.xlu0 %v2370, 60
        %v2792 = vpop.permute.xlu0 %2791
        %2801 = vrot.lane.b32.xlu0 %v2531, 72
        %v2802 = vpop.permute.xlu0 %2801
        %2803 = vrot.lane.b32.xlu0 %v2534, 72
        %v2804 = vpop.permute.xlu0 %2803
        %2805 = vrot.lane.b32.xlu0 %v2539, 72
        %v2806 = vpop.permute.xlu0 %2805
        %2807 = vrot.lane.b32.xlu0 %v2542, 72
        %v2808 = vpop.permute.xlu0 %2807
        %2817 = vrot.lane.b32.xlu0 %v2703, 84
        %v2818 = vpop.permute.xlu0 %2817
        %2819 = vrot.lane.b32.xlu0 %v2706, 84
        %v2820 = vpop.permute.xlu0 %2819
        %2821 = vrot.lane.b32.xlu0 %v2711, 84
        %v2822 = vpop.permute.xlu0 %2821
        %2823 = vrot.lane.b32.xlu0 %v2714, 84
        %v2824 = vpop.permute.xlu0 %2823
        %v2829 = vsel %vm1336, %v1491, %v2722
        %v2830 = vsel %vm1336, %v1494, %v2724
        %v2831 = vsel %vm1336, %v1499, %v2726
        %v2832 = vsel %vm1336, %v1502, %v2728
        %vm2833 = vcmask 195584
        %v2834 = vsel %vm2833, %v2829, %v2738
        %v2835 = vsel %vm2833, %v2830, %v2740
        %v2836 = vsel %vm2833, %v2831, %v2742
        %v2837 = vsel %vm2833, %v2832, %v2744
        %vm2838 = vcmask 293888
        %v2839 = vsel %vm2838, %v2834, %v2754
        %v2840 = vsel %vm2838, %v2835, %v2756
        %v2841 = vsel %vm2838, %v2836, %v2758
        %v2842 = vsel %vm2838, %v2837, %v2760
        %vm2843 = vcmask 392192
        %v2844 = vsel %vm2843, %v2839, %v2770
        %v2845 = vsel %vm2843, %v2840, %v2772
        %v2846 = vsel %vm2843, %v2841, %v2774
        %v2847 = vsel %vm2843, %v2842, %v2776
        %vm2848 = vcmask 490496
        %v2849 = vsel %vm2848, %v2844, %v2786
        %v2850 = vsel %vm2848, %v2845, %v2788
        %v2851 = vsel %vm2848, %v2846, %v2790
        %v2852 = vsel %vm2848, %v2847, %v2792
        %vm2853 = vcmask 588800
        %v2854 = vsel %vm2853, %v2849, %v2802
        %v2855 = vsel %vm2853, %v2850, %v2804
        %v2856 = vsel %vm2853, %v2851, %v2806
        %v2857 = vsel %vm2853, %v2852, %v2808
        %vm2858 = vcmask 687104
        %v2859 = vsel %vm2858, %v2854, %v2818
        %v2860 = vsel %vm2858, %v2855, %v2820
        %v2861 = vsel %vm2858, %v2856, %v2822
        %v2862 = vsel %vm2858, %v2857, %v2824
        %v2863 = vpack.c.bf16 %v2860, %v2859
        %v2864 = vpack.c.bf16 %v2862, %v2861
        %v2865 = vpack.c.bf16 %v1182, %v1181
        %v2866 = vpack.c.bf16 %v1184, %v1183
        %v2867 = vpack.c.bf16 %v1186, %v1185
        %v2868 = vpack.c.bf16 %v1188, %v1187
        %v2869 = vpack.c.bf16 %v1190, %v1189
        %v2870 = vpack.c.bf16 %v1192, %v1191
        %v2872 = vlaneseq
        %v2873 = vshrl.u32 %v2872, 7
        %v2874 = vsub.s32 0, %v2873
        %v2875 = vrot.slane %v1193, %v2874
        %v2878 = vsel %vm1025, %v2863, 0
        %v2881 = vsel %vm1025, %v2864, 0
        %2883 = vmatprep.subr.bf16.mxu0 0
        %2884 = vmatpush1.bf16.msra.mxu0 %v2865
        %2885 = vmatprep.subr.bf16.mxu0 0
        %2886 = vmatpush1.bf16.msra.mxu0 %v2866
        %2887 = vmatprep.subr.bf16.mxu0 0
        %2888 = vmatpush1.bf16.msra.mxu0 %v2867
        %2889 = vmatprep.subr.bf16.mxu0 0
        %2890 = vmatpush1.bf16.msra.mxu0 %v2868
        %2891 = vmatprep.subr.bf16.mxu0 0
        %2892 = vmatpush1.bf16.msra.mxu0 %v2869
        %2893 = vmatprep.subr.bf16.mxu0 0
        %2894 = vmatpush1.bf16.msra.mxu0 %v2870
        %2895 = vmatprep.subr.bf16.mxu0 0
        %2896 = vmatpush1.bf16.msra.mxu0 0
        %2897 = vmatprep.subr.bf16.mxu0 0
        %2898 = vmatpush1.bf16.msra.mxu0 0
        %2899 = vmatprep.subr.bf16.mxu0 0
        %2900 = vmatpush1.bf16.msra.mxu0 0
        %2901 = vmatprep.subr.bf16.mxu0 0
        %2902 = vmatpush1.bf16.msra.mxu0 0
        %2903 = vmatprep.subr.bf16.mxu0 0
        %2904 = vmatpush1.bf16.msra.mxu0 0
        %2905 = vmatprep.subr.bf16.mxu0 0
        %2906 = vmatpush1.bf16.msra.mxu0 0
        %2907 = vmatprep.subr.bf16.mxu0 0
        %2908 = vmatpush1.bf16.msra.mxu0 0
        %2909 = vmatprep.subr.bf16.mxu0 0
        %2910 = vmatpush1.bf16.msra.mxu0 0
        %2911 = vmatprep.subr.bf16.mxu0 0
        %2912 = vmatpush1.bf16.msra.mxu0 0
        %2913 = vmatprep.subr.bf16.mxu0 0
        %2914 = vmatpush1.bf16.msra.mxu0 0
        %2915 = vmatprep.mubr.bf16.mxu0 0
        %2916 = vmatmul.mubr.bf16.gmra.mrb[0].mxu0 %v2878
        %v2917 = vpop.f32.mrb[0].mxu0
        %v2918 = vadd.f32 %v2875, %v2917
        %v2919 = vpop.f32.mrb[0].mxu0
        %v2920 = vpop.f32.mrb[0].mxu0
        %v2921 = vadd.f32 %v2875, %v2920
        %v2922 = vpop.f32.mrb[0].mxu0
        %2923 = vmatprep.mubr.bf16.mxu0 0
        %2924 = vmatmul.mubr.bf16.gmra.mrb[0].mxu0 %v2881
        %v2925 = vpop.f32.mrb[0].mxu0
        %v2926 = vadd.f32 %v2875, %v2925
        %v2927 = vpop.f32.mrb[0].mxu0
        %v2928 = vpop.f32.mrb[0].mxu0
        %v2929 = vadd.f32 %v2875, %v2928
        %v2930 = vpop.f32.mrb[0].mxu0
        %2931 = vdwg.mxu0
        %v2932 = vld [vmem:[%s25] sm:$0x1]
        %v2934 = vlaneseq
        %v2935 = vshrl.u32 %v2934, 7
        %v2936 = vsub.s32 0, %v2935
        %v2937 = vrot.slane %v2932, %v2936
        %v2939 = vmul.f32 %v2937, %v2918
        %v2940 = vmul.f32 %v2937, %v2921
        %v2941 = vmul.f32 %v2937, %v2926
        %v2942 = vmul.f32 %v2937, %v2929
        %v2943 = vadd.f32 %v1017, %v2939
        %v2944 = vadd.f32 %v1018, %v2940
        %v2945 = vadd.f32 %v1019, %v2941
        %v2946 = vadd.f32 %v1020, %v2942
        %2947 = vst.msk [vmem:[%s998] sm:$0xff] %vm1025, %v2943
        %2948 = vst.msk [vmem:[%s998 + $0x8] sm:$0xff] %vm1025, %v2944
        %2949 = vst.msk [vmem:[%s998 + $0x10] sm:$0xff] %vm1025, %v2945
        %2950 = vst.msk [vmem:[%s998 + $0x18] sm:$0xff] %vm1025, %v2946
        %v2951 = vld [vmem:[%s27] sm:$0x1]
        %v2952 = vld [vmem:[%s29] sm:$0x1]
        %v2954 = vlaneseq
        %v2955 = vshrl.u32 %v2954, 7
        %v2956 = vsub.s32 0, %v2955
        %v2957 = vrot.slane %v2951, %v2956
        %v2959 = vmul.f32 %v1125, %v2957
        %v2960 = vmul.f32 %v1126, %v2957
        %v2962 = vlaneseq
        %v2963 = vshrl.u32 %v2962, 7
        %v2964 = vsub.s32 0, %v2963
        %v2965 = vrot.slane %v2952, %v2964
        %v2967 = vadd.f32 %v2959, %v2965
        %v2968 = vadd.f32 %v2960, %v2965
        %v2969 = vld [vmem:[%s31] sm:$0x1]
        %v2970 = vld [vmem:[%s33] sm:$0x1]
        %v2971 = vsel %vm1025, %v2943, 0.0
        %2972 = vadd.xlane.f32.xlu0 %v2971
        %v2973 = vpop.xlane.xlu0 %2972
        %v2974 = vsel %vm1025, %v2944, 0.0
        %2975 = vadd.xlane.f32.xlu0 %v2974
        %v2976 = vpop.xlane.xlu0 %2975
        %v2977 = vsel %vm1025, %v2945, 0.0
        %2978 = vadd.xlane.f32.xlu0 %v2977
        %v2979 = vpop.xlane.xlu0 %2978
        %v2980 = vsel %vm1025, %v2946, 0.0
        %2981 = vadd.xlane.f32.xlu0 %v2980
        %v2982 = vpop.xlane.xlu0 %2981
        %v2983 = vmul.f32 %v2973, %v1038
        %v2984 = vmul.f32 %v2976, %v1038
        %v2985 = vmul.f32 %v2979, %v1038
        %v2986 = vmul.f32 %v2982, %v1038
        %v2987 = vsub.f32 %v2943, %v2983
        %v2988 = vsub.f32 %v2944, %v2984
        %v2989 = vsub.f32 %v2945, %v2985
        %v2990 = vsub.f32 %v2946, %v2986
        %v2991 = vmul.f32 %v2987, %v2987
        %v2992 = vmul.f32 %v2988, %v2988
        %v2993 = vmul.f32 %v2989, %v2989
        %v2994 = vmul.f32 %v2990, %v2990
        %v2995 = vsel %vm1025, %v2991, 0.0
        %2996 = vadd.xlane.f32.xlu0 %v2995
        %v2997 = vpop.xlane.xlu0 %2996
        %v2998 = vsel %vm1025, %v2992, 0.0
        %2999 = vadd.xlane.f32.xlu0 %v2998
        %v3000 = vpop.xlane.xlu0 %2999
        %v3001 = vsel %vm1025, %v2993, 0.0
        %3002 = vadd.xlane.f32.xlu0 %v3001
        %v3003 = vpop.xlane.xlu0 %3002
        %v3004 = vsel %vm1025, %v2994, 0.0
        %3005 = vadd.xlane.f32.xlu0 %v3004
        %v3006 = vpop.xlane.xlu0 %3005
        %v3007 = vmul.f32 %v2997, %v1038
        %v3008 = vmul.f32 %v3000, %v1038
        %v3009 = vmul.f32 %v3003, %v1038
        %v3010 = vmul.f32 %v3006, %v1038
        %v3011 = vadd.f32 %v3007, 1e-06
        %v3012 = vadd.f32 %v3008, 1e-06
        %v3013 = vadd.f32 %v3009, 1e-06
        %v3014 = vadd.f32 %v3010, 1e-06
        %v3015 = vrsqrt.pop %v3011
        %v3016 = vrsqrt.pop %v3012
        %v3017 = vrsqrt.pop %v3013
        %v3018 = vrsqrt.pop %v3014
        %v3019 = vmul.f32 %v2987, %v3015
        %v3020 = vmul.f32 %v2988, %v3016
        %v3021 = vmul.f32 %v2989, %v3017
        %v3022 = vmul.f32 %v2990, %v3018
        %v3024 = vlaneseq
        %v3025 = vshrl.u32 %v3024, 7
        %v3026 = vsub.s32 0, %v3025
        %v3027 = vrot.slane %v2969, %v3026
        %v3029 = vmul.f32 %v3019, %v3027
        %v3030 = vmul.f32 %v3020, %v3027
        %v3031 = vmul.f32 %v3021, %v3027
        %v3032 = vmul.f32 %v3022, %v3027
        %v3034 = vlaneseq
        %v3035 = vshrl.u32 %v3034, 7
        %v3036 = vsub.s32 0, %v3035
        %v3037 = vrot.slane %v2970, %v3036
        %v3039 = vadd.f32 %v3029, %v3037
        %v3040 = vadd.f32 %v3030, %v3037
        %v3041 = vadd.f32 %v3031, %v3037
        %v3042 = vadd.f32 %v3032, %v3037
        %v3043 = vld [vmem:[%s35] sm:$0xff]
        %v3044 = vld [vmem:[%s35 + $0x8] sm:$0xff]
        %v3045 = vld [vmem:[%s35 + $0x10] sm:$0xff]
        %v3046 = vld [vmem:[%s35 + $0x18] sm:$0xff]
        %v3047 = vld [vmem:[%s35 + $0x20] sm:$0xff]
        %v3048 = vld [vmem:[%s35 + $0x28] sm:$0xff]
        %v3049 = vld [vmem:[%s35 + $0x30] sm:$0xff]
        %v3050 = vld [vmem:[%s35 + $0x38] sm:$0xff]
        %v3051 = vld [vmem:[%s35 + $0x40] sm:$0xff]
        %v3052 = vld [vmem:[%s35 + $0x48] sm:$0xff]
        %v3053 = vld [vmem:[%s35 + $0x50] sm:$0xff]
        %v3054 = vld [vmem:[%s35 + $0x58] sm:$0xff]
        %v3055 = vld [vmem:[%s37] sm:$0x1]
        %v3056 = vld [vmem:[%s39] sm:$0xff]
        %v3057 = vld [vmem:[%s39 + $0x8] sm:$0xff]
        %v3058 = vld [vmem:[%s39 + $0x10] sm:$0xff]
        %v3059 = vld [vmem:[%s39 + $0x18] sm:$0xff]
        %v3060 = vld [vmem:[%s39 + $0x20] sm:$0xff]
        %v3061 = vld [vmem:[%s39 + $0x28] sm:$0xff]
        %v3062 = vld [vmem:[%s39 + $0x30] sm:$0xff]
        %v3063 = vld [vmem:[%s39 + $0x38] sm:$0xff]
        %v3064 = vld [vmem:[%s39 + $0x40] sm:$0xff]
        %v3065 = vld [vmem:[%s39 + $0x48] sm:$0xff]
        %v3066 = vld [vmem:[%s39 + $0x50] sm:$0xff]
        %v3067 = vld [vmem:[%s39 + $0x58] sm:$0xff]
        %v3068 = vld [vmem:[%s39 + $0x60] sm:$0xff]
        %v3069 = vld [vmem:[%s39 + $0x68] sm:$0xff]
        %v3070 = vld [vmem:[%s39 + $0x70] sm:$0xff]
        %v3071 = vld [vmem:[%s39 + $0x78] sm:$0xff]
        %v3072 = vld [vmem:[%s39 + $0x80] sm:$0xff]
        %v3073 = vld [vmem:[%s39 + $0x88] sm:$0xff]
        %v3074 = vld [vmem:[%s39 + $0x90] sm:$0xff]
        %v3075 = vld [vmem:[%s39 + $0x98] sm:$0xff]
        %v3076 = vld [vmem:[%s39 + $0xa0] sm:$0xff]
        %v3077 = vld [vmem:[%s39 + $0xa8] sm:$0xff]
        %v3078 = vld [vmem:[%s39 + $0xb0] sm:$0xff]
        %v3079 = vld [vmem:[%s39 + $0xb8] sm:$0xff]
        %v3080 = vld [vmem:[%s41] sm:$0x3]
        %v3081 = vld [vmem:[%s43] sm:$0xff]
        %v3082 = vld [vmem:[%s43 + $0x8] sm:$0xff]
        %v3083 = vld [vmem:[%s43 + $0x10] sm:$0xff]
        %v3084 = vld [vmem:[%s43 + $0x18] sm:$0xff]
        %v3085 = vld [vmem:[%s43 + $0x20] sm:$0xff]
        %v3086 = vld [vmem:[%s43 + $0x28] sm:$0xff]
        %v3087 = vld [vmem:[%s43 + $0x30] sm:$0xff]
        %v3088 = vld [vmem:[%s43 + $0x38] sm:$0xff]
        %v3089 = vld [vmem:[%s43 + $0x40] sm:$0xff]
        %v3090 = vld [vmem:[%s43 + $0x48] sm:$0xff]
        %v3091 = vld [vmem:[%s43 + $0x50] sm:$0xff]
        %v3092 = vld [vmem:[%s43 + $0x58] sm:$0xff]
        %v3093 = vld [vmem:[%s45] sm:$0x1]
        %v3094 = vpack.c.bf16 %v2968, %v2967
        %v3095 = vpack.c.bf16 %v3044, %v3043
        %v3096 = vpack.c.bf16 %v3046, %v3045
        %v3097 = vpack.c.bf16 %v3048, %v3047
        %v3098 = vpack.c.bf16 %v3050, %v3049
        %v3099 = vpack.c.bf16 %v3052, %v3051
        %v3100 = vpack.c.bf16 %v3054, %v3053
        %v3102 = vlaneseq
        %v3103 = vshrl.u32 %v3102, 7
        %v3104 = vsub.s32 0, %v3103
        %v3105 = vrot.slane %v3055, %v3104
        %v3108 = vsel %vm1025, %v3094, 0
        %3110 = vmatprep.subr.bf16.mxu0 0
        %3111 = vmatpush1.bf16.msra.mxu0 %v3095
        %3112 = vmatprep.subr.bf16.mxu0 0
        %3113 = vmatpush1.bf16.msra.mxu0 %v3096
        %3114 = vmatprep.subr.bf16.mxu0 0
        %3115 = vmatpush1.bf16.msra.mxu0 %v3097
        %3116 = vmatprep.subr.bf16.mxu0 0
        %3117 = vmatpush1.bf16.msra.mxu0 %v3098
        %3118 = vmatprep.subr.bf16.mxu0 0
        %3119 = vmatpush1.bf16.msra.mxu0 %v3099
        %3120 = vmatprep.subr.bf16.mxu0 0
        %3121 = vmatpush1.bf16.msra.mxu0 %v3100
        %3122 = vmatprep.subr.bf16.mxu0 0
        %3123 = vmatpush1.bf16.msra.mxu0 0
        %3124 = vmatprep.subr.bf16.mxu0 0
        %3125 = vmatpush1.bf16.msra.mxu0 0
        %3126 = vmatprep.subr.bf16.mxu0 0
        %3127 = vmatpush1.bf16.msra.mxu0 0
        %3128 = vmatprep.subr.bf16.mxu0 0
        %3129 = vmatpush1.bf16.msra.mxu0 0
        %3130 = vmatprep.subr.bf16.mxu0 0
        %3131 = vmatpush1.bf16.msra.mxu0 0
        %3132 = vmatprep.subr.bf16.mxu0 0
        %3133 = vmatpush1.bf16.msra.mxu0 0
        %3134 = vmatprep.subr.bf16.mxu0 0
        %3135 = vmatpush1.bf16.msra.mxu0 0
        %3136 = vmatprep.subr.bf16.mxu0 0
        %3137 = vmatpush1.bf16.msra.mxu0 0
        %3138 = vmatprep.subr.bf16.mxu0 0
        %3139 = vmatpush1.bf16.msra.mxu0 0
        %3140 = vmatprep.subr.bf16.mxu0 0
        %3141 = vmatpush1.bf16.msra.mxu0 0
        %3142 = vmatprep.mubr.bf16.mxu0 0
        %3143 = vmatmul.mubr.bf16.gmra.mrb[0].mxu0 %v3108
        %v3144 = vpop.f32.mrb[0].mxu0
        %v3145 = vadd.f32 %v3105, %v3144
        %v3146 = vpop.f32.mrb[0].mxu0
        %v3147 = vpop.f32.mrb[0].mxu0
        %v3148 = vadd.f32 %v3105, %v3147
        %v3149 = vpop.f32.mrb[0].mxu0
        %3150 = vdwg.mxu0
        %v3151 = vpack.c.bf16 %v3040, %v3039
        %v3152 = vpack.c.bf16 %v3042, %v3041
        %v3153 = vpack.c.bf16 %v3058, %v3056
        %v3154 = vpack.c.bf16 %v3059, %v3057
        %v3155 = vpack.c.bf16 %v3062, %v3060
        %v3156 = vpack.c.bf16 %v3063, %v3061
        %v3157 = vpack.c.bf16 %v3066, %v3064
        %v3158 = vpack.c.bf16 %v3067, %v3065
        %v3159 = vpack.c.bf16 %v3070, %v3068
        %v3160 = vpack.c.bf16 %v3071, %v3069
        %v3161 = vpack.c.bf16 %v3074, %v3072
        %v3162 = vpack.c.bf16 %v3075, %v3073
        %v3163 = vpack.c.bf16 %v3078, %v3076
        %v3164 = vpack.c.bf16 %v3079, %v3077
        %v3166 = vlaneseq
        %v3167 = vshrl.u32 %v3166, 7
        %v3168 = vsub.s32 0, %v3167
        %v3169 = vrot.slane %v3080, %v3168
        %v3170 = vlaneseq
        %v3171 = vshrl.u32 %v3170, 7
        %v3172 = vsub.s32 1, %v3171
        %v3173 = vrot.slane %v3080, %v3172
        %v3177 = vsel %vm1025, %v3151, 0
        %v3180 = vsel %vm1025, %v3152, 0
        %3182 = vmatprep.subr.bf16.mxu0 %v3154
        %3183 = vmatpush1.bf16.msra.mxu0 %v3153
        %3184 = vmatprep.subr.bf16.mxu0 %v3156
        %3185 = vmatpush1.bf16.msra.mxu0 %v3155
        %3186 = vmatprep.subr.bf16.mxu0 %v3158
        %3187 = vmatpush1.bf16.msra.mxu0 %v3157
        %3188 = vmatprep.subr.bf16.mxu0 %v3160
        %3189 = vmatpush1.bf16.msra.mxu0 %v3159
        %3190 = vmatprep.subr.bf16.mxu0 %v3162
        %3191 = vmatpush1.bf16.msra.mxu0 %v3161
        %3192 = vmatprep.subr.bf16.mxu0 %v3164
        %3193 = vmatpush1.bf16.msra.mxu0 %v3163
        %3194 = vmatprep.subr.bf16.mxu0 0
        %3195 = vmatpush1.bf16.msra.mxu0 0
        %3196 = vmatprep.subr.bf16.mxu0 0
        %3197 = vmatpush1.bf16.msra.mxu0 0
        %3198 = vmatprep.subr.bf16.mxu0 0
        %3199 = vmatpush1.bf16.msra.mxu0 0
        %3200 = vmatprep.subr.bf16.mxu0 0
        %3201 = vmatpush1.bf16.msra.mxu0 0
        %3202 = vmatprep.subr.bf16.mxu0 0
        %3203 = vmatpush1.bf16.msra.mxu0 0
        %3204 = vmatprep.subr.bf16.mxu0 0
        %3205 = vmatpush1.bf16.msra.mxu0 0
        %3206 = vmatprep.subr.bf16.mxu0 0
        %3207 = vmatpush1.bf16.msra.mxu0 0
        %3208 = vmatprep.subr.bf16.mxu0 0
        %3209 = vmatpush1.bf16.msra.mxu0 0
        %3210 = vmatprep.subr.bf16.mxu0 0
        %3211 = vmatpush1.bf16.msra.mxu0 0
        %3212 = vmatprep.subr.bf16.mxu0 0
        %3213 = vmatpush1.bf16.msra.mxu0 0
        %3214 = vmatprep.mubr.bf16.mxu0 0
        %3215 = vmatmul.mubr.bf16.gmra.mrb[0].mxu0 %v3177
        %v3216 = vpop.f32.mrb[0].mxu0
        %v3217 = vadd.f32 %v3169, %v3216
        %v3218 = vpop.f32.mrb[0].mxu0
        %v3219 = vadd.f32 %v3173, %v3218
        %v3220 = vpop.f32.mrb[0].mxu0
        %v3221 = vadd.f32 %v3169, %v3220
        %v3222 = vpop.f32.mrb[0].mxu0
        %v3223 = vadd.f32 %v3173, %v3222
        %3224 = vmatprep.mubr.bf16.mxu0 0
        %3225 = vmatmul.mubr.bf16.gmra.mrb[0].mxu0 %v3180
        %v3226 = vpop.f32.mrb[0].mxu0
        %v3227 = vadd.f32 %v3169, %v3226
        %v3228 = vpop.f32.mrb[0].mxu0
        %v3229 = vadd.f32 %v3173, %v3228
        %v3230 = vpop.f32.mrb[0].mxu0
        %v3231 = vadd.f32 %v3169, %v3230
        %v3232 = vpop.f32.mrb[0].mxu0
        %v3233 = vadd.f32 %v3173, %v3232
        %3234 = vdwg.mxu0
        %v3235 = vpack.c.bf16 %v3148, %v3145
        %v3236 = vpack.c.bf16 %v3221, %v3217
        %v3237 = vpack.c.bf16 %v3231, %v3227
        %v3239 = vsel %vm1399, %v3235, 0
        %v3242 = vsel %vm1399, %v3236, 0
        %v3245 = vsel %vm1399, %v3237, 0
        %3247 = vmatprep.subr.bf16.mxu0 0
        %3248 = vmatpush1.bf16.xpose.msra.mxu0 %v3242
        %3249 = vmatprep.subr.bf16.mxu0 0
        %3250 = vmatpush1.bf16.xpose.msra.mxu0 %v3245
        %3251 = vmatprep.subr.bf16.mxu0 0
        %3252 = vmatpush1.bf16.xpose.msra.mxu0 0
        %3253 = vmatprep.subr.bf16.mxu0 0
        %3254 = vmatpush1.bf16.xpose.msra.mxu0 0
        %3255 = vmatprep.subr.bf16.mxu0 0
        %3256 = vmatpush1.bf16.xpose.msra.mxu0 0
        %3257 = vmatprep.subr.bf16.mxu0 0
        %3258 = vmatpush1.bf16.xpose.msra.mxu0 0
        %3259 = vmatprep.subr.bf16.mxu0 0
        %3260 = vmatpush1.bf16.xpose.msra.mxu0 0
        %3261 = vmatprep.subr.bf16.mxu0 0
        %3262 = vmatpush1.bf16.xpose.msra.mxu0 0
        %3263 = vmatprep.subr.bf16.mxu0 0
        %3264 = vmatpush1.bf16.xpose.msra.mxu0 0
        %3265 = vmatprep.subr.bf16.mxu0 0
        %3266 = vmatpush1.bf16.xpose.msra.mxu0 0
        %3267 = vmatprep.subr.bf16.mxu0 0
        %3268 = vmatpush1.bf16.xpose.msra.mxu0 0
        %3269 = vmatprep.subr.bf16.mxu0 0
        %3270 = vmatpush1.bf16.xpose.msra.mxu0 0
        %3271 = vmatprep.subr.bf16.mxu0 0
        %3272 = vmatpush1.bf16.xpose.msra.mxu0 0
        %3273 = vmatprep.subr.bf16.mxu0 0
        %3274 = vmatpush1.bf16.xpose.msra.mxu0 0
        %3275 = vmatprep.subr.bf16.mxu0 0
        %3276 = vmatpush1.bf16.xpose.msra.mxu0 0
        %3277 = vmatprep.subr.bf16.mxu0 0
        %3278 = vmatpush1.bf16.xpose.msra.mxu0 0
        %3279 = vmatprep.mubr.bf16.mxu0 0
        %3280 = vmatmul.mubr.bf16.gmra.mrb[0].mxu0 %v3239
        %v3281 = vpop.f32.mrb[0].mxu0
        %v3282 = vadd.f32 0.0, %v3281
        %v3283 = vpop.f32.mrb[0].mxu0
        %v3284 = vpop.f32.mrb[0].mxu0
        %v3285 = vadd.f32 0.0, %v3284
        %v3286 = vpop.f32.mrb[0].mxu0
        %3287 = vdwg.mxu0
        %v3288 = vmul.f32 %v3282, 0.25
        %v3289 = vmul.f32 %v3285, 0.25
        %vm3290 = vcmask 261120
        %v3291 = vsel %vm3290, %v3288, -inf
        %3292 = vmax.xlane.f32.xlu0 %v3291
        %v3293 = vpop.xlane.xlu0 %3292
        %v3294 = vsel %vm3290, %v3289, -inf
        %3295 = vmax.xlane.f32.xlu0 %v3294
        %v3296 = vpop.xlane.xlu0 %3295
        %v3297 = vsub.f32 %v3288, %v3293
        %v3298 = vsub.f32 %v3289, %v3296
        %v3299 = vmul.f32 %v3297, 1.442695
        %v3300 = vpow.pop %v3299
        %v3301 = vmul.f32 %v3298, 1.442695
        %v3302 = vpow.pop %v3301
        %v3303 = vsel %vm3290, %v3300, 0.0
        %3304 = vadd.xlane.f32.xlu0 %v3303
        %v3305 = vpop.xlane.xlu0 %3304
        %v3306 = vsel %vm3290, %v3302, 0.0
        %3307 = vadd.xlane.f32.xlu0 %v3306
        %v3308 = vpop.xlane.xlu0 %3307
        %v3309 = vrcp.pop %v3305
        %v3310 = vrcp.pop %v3308
        %v3311 = vmul.f32 %v3300, %v3309
        %v3312 = vmul.f32 %v3302, %v3310
        %v3313 = vpack.c.bf16 %v3312, %v3311
        %3316 = vrot.lane.b32.xlu0 %v3236, 32
        %v3317 = vpop.permute.xlu0 %3316
        %3318 = vrot.lane.b32.xlu0 %v3237, 32
        %v3319 = vpop.permute.xlu0 %3318
        %v3323 = vsel %vm3290, %v3313, 0
        %3325 = vmatprep.subr.bf16.mxu0 0
        %3326 = vmatpush1.bf16.msra.mxu0 %v3317
        %3327 = vmatprep.subr.bf16.mxu0 0
        %3328 = vmatpush1.bf16.msra.mxu0 %v3319
        %3329 = vmatprep.subr.bf16.mxu0 0
        %3330 = vmatpush1.bf16.msra.mxu0 0
        %3331 = vmatprep.subr.bf16.mxu0 0
        %3332 = vmatpush1.bf16.msra.mxu0 0
        %3333 = vmatprep.subr.bf16.mxu0 0
        %3334 = vmatpush1.bf16.msra.mxu0 0
        %3335 = vmatprep.subr.bf16.mxu0 0
        %3336 = vmatpush1.bf16.msra.mxu0 0
        %3337 = vmatprep.subr.bf16.mxu0 0
        %3338 = vmatpush1.bf16.msra.mxu0 0
        %3339 = vmatprep.subr.bf16.mxu0 0
        %3340 = vmatpush1.bf16.msra.mxu0 0
        %3341 = vmatprep.subr.bf16.mxu0 0
        %3342 = vmatpush1.bf16.msra.mxu0 0
        %3343 = vmatprep.subr.bf16.mxu0 0
        %3344 = vmatpush1.bf16.msra.mxu0 0
        %3345 = vmatprep.subr.bf16.mxu0 0
        %3346 = vmatpush1.bf16.msra.mxu0 0
        %3347 = vmatprep.subr.bf16.mxu0 0
        %3348 = vmatpush1.bf16.msra.mxu0 0
        %3349 = vmatprep.subr.bf16.mxu0 0
        %3350 = vmatpush1.bf16.msra.mxu0 0
        %3351 = vmatprep.subr.bf16.mxu0 0
        %3352 = vmatpush1.bf16.msra.mxu0 0
        %3353 = vmatprep.subr.bf16.mxu0 0
        %3354 = vmatpush1.bf16.msra.mxu0 0
        %3355 = vmatprep.subr.bf16.mxu0 0
        %3356 = vmatpush1.bf16.msra.mxu0 0
        %3357 = vmatprep.mubr.bf16.mxu0 0
        %3358 = vmatmul.mubr.bf16.gmra.mrb[0].mxu0 %v3323
        %v3359 = vpop.f32.mrb[0].mxu0
        %v3360 = vadd.f32 0.0, %v3359
        %v3361 = vpop.f32.mrb[0].mxu0
        %v3362 = vpop.f32.mrb[0].mxu0
        %v3363 = vadd.f32 0.0, %v3362
        %v3364 = vpop.f32.mrb[0].mxu0
        %3365 = vdwg.mxu0
        %3367 = vrot.lane.b32.xlu0 %v3235, 112
        %v3368 = vpop.permute.xlu0 %3367
        %3369 = vrot.lane.b32.xlu0 %v3236, 112
        %v3370 = vpop.permute.xlu0 %3369
        %3371 = vrot.lane.b32.xlu0 %v3237, 112
        %v3372 = vpop.permute.xlu0 %3371
        %v3374 = vsel %vm1399, %v3368, 0
        %v3377 = vsel %vm1399, %v3370, 0
        %v3380 = vsel %vm1399, %v3372, 0
        %3382 = vmatprep.subr.bf16.mxu0 0
        %3383 = vmatpush1.bf16.xpose.msra.mxu0 %v3377
        %3384 = vmatprep.subr.bf16.mxu0 0
        %3385 = vmatpush1.bf16.xpose.msra.mxu0 %v3380
        %3386 = vmatprep.subr.bf16.mxu0 0
        %3387 = vmatpush1.bf16.xpose.msra.mxu0 0
        %3388 = vmatprep.subr.bf16.mxu0 0
        %3389 = vmatpush1.bf16.xpose.msra.mxu0 0
        %3390 = vmatprep.subr.bf16.mxu0 0
        %3391 = vmatpush1.bf16.xpose.msra.mxu0 0
        %3392 = vmatprep.subr.bf16.mxu0 0
        %3393 = vmatpush1.bf16.xpose.msra.mxu0 0
        %3394 = vmatprep.subr.bf16.mxu0 0
        %3395 = vmatpush1.bf16.xpose.msra.mxu0 0
        %3396 = vmatprep.subr.bf16.mxu0 0
        %3397 = vmatpush1.bf16.xpose.msra.mxu0 0
        %3398 = vmatprep.subr.bf16.mxu0 0
        %3399 = vmatpush1.bf16.xpose.msra.mxu0 0
        %3400 = vmatprep.subr.bf16.mxu0 0
        %3401 = vmatpush1.bf16.xpose.msra.mxu0 0
        %3402 = vmatprep.subr.bf16.mxu0 0
        %3403 = vmatpush1.bf16.xpose.msra.mxu0 0
        %3404 = vmatprep.subr.bf16.mxu0 0
        %3405 = vmatpush1.bf16.xpose.msra.mxu0 0
        %3406 = vmatprep.subr.bf16.mxu0 0
        %3407 = vmatpush1.bf16.xpose.msra.mxu0 0
        %3408 = vmatprep.subr.bf16.mxu0 0
        %3409 = vmatpush1.bf16.xpose.msra.mxu0 0
        %3410 = vmatprep.subr.bf16.mxu0 0
        %3411 = vmatpush1.bf16.xpose.msra.mxu0 0
        %3412 = vmatprep.subr.bf16.mxu0 0
        %3413 = vmatpush1.bf16.xpose.msra.mxu0 0
        %3414 = vmatprep.mubr.bf16.mxu0 0
        %3415 = vmatmul.mubr.bf16.gmra.mrb[0].mxu0 %v3374
        %v3416 = vpop.f32.mrb[0].mxu0
        %v3417 = vadd.f32 0.0, %v3416
        %v3418 = vpop.f32.mrb[0].mxu0
        %v3419 = vpop.f32.mrb[0].mxu0
        %v3420 = vadd.f32 0.0, %v3419
        %v3421 = vpop.f32.mrb[0].mxu0
        %3422 = vdwg.mxu0
        %v3423 = vmul.f32 %v3417, 0.25
        %v3424 = vmul.f32 %v3420, 0.25
        %v3425 = vsel %vm3290, %v3423, -inf
        %3426 = vmax.xlane.f32.xlu0 %v3425
        %v3427 = vpop.xlane.xlu0 %3426
        %v3428 = vsel %vm3290, %v3424, -inf
        %3429 = vmax.xlane.f32.xlu0 %v3428
        %v3430 = vpop.xlane.xlu0 %3429
        %v3431 = vsub.f32 %v3423, %v3427
        %v3432 = vsub.f32 %v3424, %v3430
        %v3433 = vmul.f32 %v3431, 1.442695
        %v3434 = vpow.pop %v3433
        %v3435 = vmul.f32 %v3432, 1.442695
        %v3436 = vpow.pop %v3435
        %v3437 = vsel %vm3290, %v3434, 0.0
        %3438 = vadd.xlane.f32.xlu0 %v3437
        %v3439 = vpop.xlane.xlu0 %3438
        %v3440 = vsel %vm3290, %v3436, 0.0
        %3441 = vadd.xlane.f32.xlu0 %v3440
        %v3442 = vpop.xlane.xlu0 %3441
        %v3443 = vrcp.pop %v3439
        %v3444 = vrcp.pop %v3442
        %v3445 = vmul.f32 %v3434, %v3443
        %v3446 = vmul.f32 %v3436, %v3444
        %v3447 = vpack.c.bf16 %v3446, %v3445
        %3448 = vrot.lane.b32.xlu0 %v3236, 16
        %v3449 = vpop.permute.xlu0 %3448
        %3450 = vrot.lane.b32.xlu0 %v3237, 16
        %v3451 = vpop.permute.xlu0 %3450
        %v3455 = vsel %vm3290, %v3447, 0
        %3457 = vmatprep.subr.bf16.mxu0 0
        %3458 = vmatpush1.bf16.msra.mxu0 %v3449
        %3459 = vmatprep.subr.bf16.mxu0 0
        %3460 = vmatpush1.bf16.msra.mxu0 %v3451
        %3461 = vmatprep.subr.bf16.mxu0 0
        %3462 = vmatpush1.bf16.msra.mxu0 0
        %3463 = vmatprep.subr.bf16.mxu0 0
        %3464 = vmatpush1.bf16.msra.mxu0 0
        %3465 = vmatprep.subr.bf16.mxu0 0
        %3466 = vmatpush1.bf16.msra.mxu0 0
        %3467 = vmatprep.subr.bf16.mxu0 0
        %3468 = vmatpush1.bf16.msra.mxu0 0
        %3469 = vmatprep.subr.bf16.mxu0 0
        %3470 = vmatpush1.bf16.msra.mxu0 0
        %3471 = vmatprep.subr.bf16.mxu0 0
        %3472 = vmatpush1.bf16.msra.mxu0 0
        %3473 = vmatprep.subr.bf16.mxu0 0
        %3474 = vmatpush1.bf16.msra.mxu0 0
        %3475 = vmatprep.subr.bf16.mxu0 0
        %3476 = vmatpush1.bf16.msra.mxu0 0
        %3477 = vmatprep.subr.bf16.mxu0 0
        %3478 = vmatpush1.bf16.msra.mxu0 0
        %3479 = vmatprep.subr.bf16.mxu0 0
        %3480 = vmatpush1.bf16.msra.mxu0 0
        %3481 = vmatprep.subr.bf16.mxu0 0
        %3482 = vmatpush1.bf16.msra.mxu0 0
        %3483 = vmatprep.subr.bf16.mxu0 0
        %3484 = vmatpush1.bf16.msra.mxu0 0
        %3485 = vmatprep.subr.bf16.mxu0 0
        %3486 = vmatpush1.bf16.msra.mxu0 0
        %3487 = vmatprep.subr.bf16.mxu0 0
        %3488 = vmatpush1.bf16.msra.mxu0 0
        %3489 = vmatprep.mubr.bf16.mxu0 0
        %3490 = vmatmul.mubr.bf16.gmra.mrb[0].mxu0 %v3455
        %v3491 = vpop.f32.mrb[0].mxu0
        %v3492 = vadd.f32 0.0, %v3491
        %v3493 = vpop.f32.mrb[0].mxu0
        %v3494 = vpop.f32.mrb[0].mxu0
        %v3495 = vadd.f32 0.0, %v3494
        %v3496 = vpop.f32.mrb[0].mxu0
        %3497 = vdwg.mxu0
        %3498 = vrot.lane.b32.xlu0 %v3235, 96
        %v3499 = vpop.permute.xlu0 %3498
        %3500 = vrot.lane.b32.xlu0 %v3236, 96
        %v3501 = vpop.permute.xlu0 %3500
        %3502 = vrot.lane.b32.xlu0 %v3237, 96
        %v3503 = vpop.permute.xlu0 %3502
        %v3505 = vsel %vm1399, %v3499, 0
        %v3508 = vsel %vm1399, %v3501, 0
        %v3511 = vsel %vm1399, %v3503, 0
        %3513 = vmatprep.subr.bf16.mxu0 0
        %3514 = vmatpush1.bf16.xpose.msra.mxu0 %v3508
        %3515 = vmatprep.subr.bf16.mxu0 0
        %3516 = vmatpush1.bf16.xpose.msra.mxu0 %v3511
        %3517 = vmatprep.subr.bf16.mxu0 0
        %3518 = vmatpush1.bf16.xpose.msra.mxu0 0
        %3519 = vmatprep.subr.bf16.mxu0 0
        %3520 = vmatpush1.bf16.xpose.msra.mxu0 0
        %3521 = vmatprep.subr.bf16.mxu0 0
        %3522 = vmatpush1.bf16.xpose.msra.mxu0 0
        %3523 = vmatprep.subr.bf16.mxu0 0
        %3524 = vmatpush1.bf16.xpose.msra.mxu0 0
        %3525 = vmatprep.subr.bf16.mxu0 0
        %3526 = vmatpush1.bf16.xpose.msra.mxu0 0
        %3527 = vmatprep.subr.bf16.mxu0 0
        %3528 = vmatpush1.bf16.xpose.msra.mxu0 0
        %3529 = vmatprep.subr.bf16.mxu0 0
        %3530 = vmatpush1.bf16.xpose.msra.mxu0 0
        %3531 = vmatprep.subr.bf16.mxu0 0
        %3532 = vmatpush1.bf16.xpose.msra.mxu0 0
        %3533 = vmatprep.subr.bf16.mxu0 0
        %3534 = vmatpush1.bf16.xpose.msra.mxu0 0
        %3535 = vmatprep.subr.bf16.mxu0 0
        %3536 = vmatpush1.bf16.xpose.msra.mxu0 0
        %3537 = vmatprep.subr.bf16.mxu0 0
        %3538 = vmatpush1.bf16.xpose.msra.mxu0 0
        %3539 = vmatprep.subr.bf16.mxu0 0
        %3540 = vmatpush1.bf16.xpose.msra.mxu0 0
        %3541 = vmatprep.subr.bf16.mxu0 0
        %3542 = vmatpush1.bf16.xpose.msra.mxu0 0
        %3543 = vmatprep.subr.bf16.mxu0 0
        %3544 = vmatpush1.bf16.xpose.msra.mxu0 0
        %3545 = vmatprep.mubr.bf16.mxu0 0
        %3546 = vmatmul.mubr.bf16.gmra.mrb[0].mxu0 %v3505
        %v3547 = vpop.f32.mrb[0].mxu0
        %v3548 = vadd.f32 0.0, %v3547
        %v3549 = vpop.f32.mrb[0].mxu0
        %v3550 = vpop.f32.mrb[0].mxu0
        %v3551 = vadd.f32 0.0, %v3550
        %v3552 = vpop.f32.mrb[0].mxu0
        %3553 = vdwg.mxu0
        %v3554 = vmul.f32 %v3548, 0.25
        %v3555 = vmul.f32 %v3551, 0.25
        %v3556 = vsel %vm3290, %v3554, -inf
        %3557 = vmax.xlane.f32.xlu0 %v3556
        %v3558 = vpop.xlane.xlu0 %3557
        %v3559 = vsel %vm3290, %v3555, -inf
        %3560 = vmax.xlane.f32.xlu0 %v3559
        %v3561 = vpop.xlane.xlu0 %3560
        %v3562 = vsub.f32 %v3554, %v3558
        %v3563 = vsub.f32 %v3555, %v3561
        %v3564 = vmul.f32 %v3562, 1.442695
        %v3565 = vpow.pop %v3564
        %v3566 = vmul.f32 %v3563, 1.442695
        %v3567 = vpow.pop %v3566
        %v3568 = vsel %vm3290, %v3565, 0.0
        %3569 = vadd.xlane.f32.xlu0 %v3568
        %v3570 = vpop.xlane.xlu0 %3569
        %v3571 = vsel %vm3290, %v3567, 0.0
        %3572 = vadd.xlane.f32.xlu0 %v3571
        %v3573 = vpop.xlane.xlu0 %3572
        %v3574 = vrcp.pop %v3570
        %v3575 = vrcp.pop %v3573
        %v3576 = vmul.f32 %v3565, %v3574
        %v3577 = vmul.f32 %v3567, %v3575
        %v3578 = vpack.c.bf16 %v3577, %v3576
        %v3579 = vpack.c.bf16 %v3223, %v3219
        %v3580 = vpack.c.bf16 %v3233, %v3229
        %v3582 = vsel %vm3290, %v3578, 0
        %3584 = vmatprep.subr.bf16.mxu0 0
        %3585 = vmatpush1.bf16.msra.mxu0 %v3579
        %3586 = vmatprep.subr.bf16.mxu0 0
        %3587 = vmatpush1.bf16.msra.mxu0 %v3580
        %3588 = vmatprep.subr.bf16.mxu0 0
        %3589 = vmatpush1.bf16.msra.mxu0 0
        %3590 = vmatprep.subr.bf16.mxu0 0
        %3591 = vmatpush1.bf16.msra.mxu0 0
        %3592 = vmatprep.subr.bf16.mxu0 0
        %3593 = vmatpush1.bf16.msra.mxu0 0
        %3594 = vmatprep.subr.bf16.mxu0 0
        %3595 = vmatpush1.bf16.msra.mxu0 0
        %3596 = vmatprep.subr.bf16.mxu0 0
        %3597 = vmatpush1.bf16.msra.mxu0 0
        %3598 = vmatprep.subr.bf16.mxu0 0
        %3599 = vmatpush1.bf16.msra.mxu0 0
        %3600 = vmatprep.subr.bf16.mxu0 0
        %3601 = vmatpush1.bf16.msra.mxu0 0
        %3602 = vmatprep.subr.bf16.mxu0 0
        %3603 = vmatpush1.bf16.msra.mxu0 0
        %3604 = vmatprep.subr.bf16.mxu0 0
        %3605 = vmatpush1.bf16.msra.mxu0 0
        %3606 = vmatprep.subr.bf16.mxu0 0
        %3607 = vmatpush1.bf16.msra.mxu0 0
        %3608 = vmatprep.subr.bf16.mxu0 0
        %3609 = vmatpush1.bf16.msra.mxu0 0
        %3610 = vmatprep.subr.bf16.mxu0 0
        %3611 = vmatpush1.bf16.msra.mxu0 0
        %3612 = vmatprep.subr.bf16.mxu0 0
        %3613 = vmatpush1.bf16.msra.mxu0 0
        %3614 = vmatprep.subr.bf16.mxu0 0
        %3615 = vmatpush1.bf16.msra.mxu0 0
        %3616 = vmatprep.mubr.bf16.mxu0 0
        %3617 = vmatmul.mubr.bf16.gmra.mrb[0].mxu0 %v3582
        %v3618 = vpop.f32.mrb[0].mxu0
        %v3619 = vadd.f32 0.0, %v3618
        %v3620 = vpop.f32.mrb[0].mxu0
        %v3621 = vpop.f32.mrb[0].mxu0
        %v3622 = vadd.f32 0.0, %v3621
        %v3623 = vpop.f32.mrb[0].mxu0
        %3624 = vdwg.mxu0
        %3625 = vrot.lane.b32.xlu0 %v3235, 80
        %v3626 = vpop.permute.xlu0 %3625
        %3627 = vrot.lane.b32.xlu0 %v3236, 80
        %v3628 = vpop.permute.xlu0 %3627
        %3629 = vrot.lane.b32.xlu0 %v3237, 80
        %v3630 = vpop.permute.xlu0 %3629
        %v3632 = vsel %vm1399, %v3626, 0
        %v3635 = vsel %vm1399, %v3628, 0
        %v3638 = vsel %vm1399, %v3630, 0
        %3640 = vmatprep.subr.bf16.mxu0 0
        %3641 = vmatpush1.bf16.xpose.msra.mxu0 %v3635
        %3642 = vmatprep.subr.bf16.mxu0 0
        %3643 = vmatpush1.bf16.xpose.msra.mxu0 %v3638
        %3644 = vmatprep.subr.bf16.mxu0 0
        %3645 = vmatpush1.bf16.xpose.msra.mxu0 0
        %3646 = vmatprep.subr.bf16.mxu0 0
        %3647 = vmatpush1.bf16.xpose.msra.mxu0 0
        %3648 = vmatprep.subr.bf16.mxu0 0
        %3649 = vmatpush1.bf16.xpose.msra.mxu0 0
        %3650 = vmatprep.subr.bf16.mxu0 0
        %3651 = vmatpush1.bf16.xpose.msra.mxu0 0
        %3652 = vmatprep.subr.bf16.mxu0 0
        %3653 = vmatpush1.bf16.xpose.msra.mxu0 0
        %3654 = vmatprep.subr.bf16.mxu0 0
        %3655 = vmatpush1.bf16.xpose.msra.mxu0 0
        %3656 = vmatprep.subr.bf16.mxu0 0
        %3657 = vmatpush1.bf16.xpose.msra.mxu0 0
        %3658 = vmatprep.subr.bf16.mxu0 0
        %3659 = vmatpush1.bf16.xpose.msra.mxu0 0
        %3660 = vmatprep.subr.bf16.mxu0 0
        %3661 = vmatpush1.bf16.xpose.msra.mxu0 0
        %3662 = vmatprep.subr.bf16.mxu0 0
        %3663 = vmatpush1.bf16.xpose.msra.mxu0 0
        %3664 = vmatprep.subr.bf16.mxu0 0
        %3665 = vmatpush1.bf16.xpose.msra.mxu0 0
        %3666 = vmatprep.subr.bf16.mxu0 0
        %3667 = vmatpush1.bf16.xpose.msra.mxu0 0
        %3668 = vmatprep.subr.bf16.mxu0 0
        %3669 = vmatpush1.bf16.xpose.msra.mxu0 0
        %3670 = vmatprep.subr.bf16.mxu0 0
        %3671 = vmatpush1.bf16.xpose.msra.mxu0 0
        %3672 = vmatprep.mubr.bf16.mxu0 0
        %3673 = vmatmul.mubr.bf16.gmra.mrb[0].mxu0 %v3632
        %v3674 = vpop.f32.mrb[0].mxu0
        %v3675 = vadd.f32 0.0, %v3674
        %v3676 = vpop.f32.mrb[0].mxu0
        %v3677 = vpop.f32.mrb[0].mxu0
        %v3678 = vadd.f32 0.0, %v3677
        %v3679 = vpop.f32.mrb[0].mxu0
        %3680 = vdwg.mxu0
        %v3681 = vmul.f32 %v3675, 0.25
        %v3682 = vmul.f32 %v3678, 0.25
        %v3683 = vsel %vm3290, %v3681, -inf
        %3684 = vmax.xlane.f32.xlu0 %v3683
        %v3685 = vpop.xlane.xlu0 %3684
        %v3686 = vsel %vm3290, %v3682, -inf
        %3687 = vmax.xlane.f32.xlu0 %v3686
        %v3688 = vpop.xlane.xlu0 %3687
        %v3689 = vsub.f32 %v3681, %v3685
        %v3690 = vsub.f32 %v3682, %v3688
        %v3691 = vmul.f32 %v3689, 1.442695
        %v3692 = vpow.pop %v3691
        %v3693 = vmul.f32 %v3690, 1.442695
        %v3694 = vpow.pop %v3693
        %v3695 = vsel %vm3290, %v3692, 0.0
        %3696 = vadd.xlane.f32.xlu0 %v3695
        %v3697 = vpop.xlane.xlu0 %3696
        %v3698 = vsel %vm3290, %v3694, 0.0
        %3699 = vadd.xlane.f32.xlu0 %v3698
        %v3700 = vpop.xlane.xlu0 %3699
        %v3701 = vrcp.pop %v3697
        %v3702 = vrcp.pop %v3700
        %v3703 = vmul.f32 %v3692, %v3701
        %v3704 = vmul.f32 %v3694, %v3702
        %v3705 = vpack.c.bf16 %v3704, %v3703
        %3708 = vrot.lane.b32.xlu0 %v3579, 112
        %v3709 = vpop.permute.xlu0 %3708
        %3710 = vrot.lane.b32.xlu0 %v3580, 112
        %v3711 = vpop.permute.xlu0 %3710
        %v3715 = vsel %vm3290, %v3705, 0
        %3717 = vmatprep.subr.bf16.mxu0 0
        %3718 = vmatpush1.bf16.msra.mxu0 %v3709
        %3719 = vmatprep.subr.bf16.mxu0 0
        %3720 = vmatpush1.bf16.msra.mxu0 %v3711
        %3721 = vmatprep.subr.bf16.mxu0 0
        %3722 = vmatpush1.bf16.msra.mxu0 0
        %3723 = vmatprep.subr.bf16.mxu0 0
        %3724 = vmatpush1.bf16.msra.mxu0 0
        %3725 = vmatprep.subr.bf16.mxu0 0
        %3726 = vmatpush1.bf16.msra.mxu0 0
        %3727 = vmatprep.subr.bf16.mxu0 0
        %3728 = vmatpush1.bf16.msra.mxu0 0
        %3729 = vmatprep.subr.bf16.mxu0 0
        %3730 = vmatpush1.bf16.msra.mxu0 0
        %3731 = vmatprep.subr.bf16.mxu0 0
        %3732 = vmatpush1.bf16.msra.mxu0 0
        %3733 = vmatprep.subr.bf16.mxu0 0
        %3734 = vmatpush1.bf16.msra.mxu0 0
        %3735 = vmatprep.subr.bf16.mxu0 0
        %3736 = vmatpush1.bf16.msra.mxu0 0
        %3737 = vmatprep.subr.bf16.mxu0 0
        %3738 = vmatpush1.bf16.msra.mxu0 0
        %3739 = vmatprep.subr.bf16.mxu0 0
        %3740 = vmatpush1.bf16.msra.mxu0 0
        %3741 = vmatprep.subr.bf16.mxu0 0
        %3742 = vmatpush1.bf16.msra.mxu0 0
        %3743 = vmatprep.subr.bf16.mxu0 0
        %3744 = vmatpush1.bf16.msra.mxu0 0
        %3745 = vmatprep.subr.bf16.mxu0 0
        %3746 = vmatpush1.bf16.msra.mxu0 0
        %3747 = vmatprep.subr.bf16.mxu0 0
        %3748 = vmatpush1.bf16.msra.mxu0 0
        %3749 = vmatprep.mubr.bf16.mxu0 0
        %3750 = vmatmul.mubr.bf16.gmra.mrb[0].mxu0 %v3715
        %v3751 = vpop.f32.mrb[0].mxu0
        %v3752 = vadd.f32 0.0, %v3751
        %v3753 = vpop.f32.mrb[0].mxu0
        %v3754 = vpop.f32.mrb[0].mxu0
        %v3755 = vadd.f32 0.0, %v3754
        %v3756 = vpop.f32.mrb[0].mxu0
        %3757 = vdwg.mxu0
        %3758 = vrot.lane.b32.xlu0 %v3235, 64
        %v3759 = vpop.permute.xlu0 %3758
        %3760 = vrot.lane.b32.xlu0 %v3236, 64
        %v3761 = vpop.permute.xlu0 %3760
        %3762 = vrot.lane.b32.xlu0 %v3237, 64
        %v3763 = vpop.permute.xlu0 %3762
        %v3765 = vsel %vm1399, %v3759, 0
        %v3768 = vsel %vm1399, %v3761, 0
        %v3771 = vsel %vm1399, %v3763, 0
        %3773 = vmatprep.subr.bf16.mxu0 0
        %3774 = vmatpush1.bf16.xpose.msra.mxu0 %v3768
        %3775 = vmatprep.subr.bf16.mxu0 0
        %3776 = vmatpush1.bf16.xpose.msra.mxu0 %v3771
        %3777 = vmatprep.subr.bf16.mxu0 0
        %3778 = vmatpush1.bf16.xpose.msra.mxu0 0
        %3779 = vmatprep.subr.bf16.mxu0 0
        %3780 = vmatpush1.bf16.xpose.msra.mxu0 0
        %3781 = vmatprep.subr.bf16.mxu0 0
        %3782 = vmatpush1.bf16.xpose.msra.mxu0 0
        %3783 = vmatprep.subr.bf16.mxu0 0
        %3784 = vmatpush1.bf16.xpose.msra.mxu0 0
        %3785 = vmatprep.subr.bf16.mxu0 0
        %3786 = vmatpush1.bf16.xpose.msra.mxu0 0
        %3787 = vmatprep.subr.bf16.mxu0 0
        %3788 = vmatpush1.bf16.xpose.msra.mxu0 0
        %3789 = vmatprep.subr.bf16.mxu0 0
        %3790 = vmatpush1.bf16.xpose.msra.mxu0 0
        %3791 = vmatprep.subr.bf16.mxu0 0
        %3792 = vmatpush1.bf16.xpose.msra.mxu0 0
        %3793 = vmatprep.subr.bf16.mxu0 0
        %3794 = vmatpush1.bf16.xpose.msra.mxu0 0
        %3795 = vmatprep.subr.bf16.mxu0 0
        %3796 = vmatpush1.bf16.xpose.msra.mxu0 0
        %3797 = vmatprep.subr.bf16.mxu0 0
        %3798 = vmatpush1.bf16.xpose.msra.mxu0 0
        %3799 = vmatprep.subr.bf16.mxu0 0
        %3800 = vmatpush1.bf16.xpose.msra.mxu0 0
        %3801 = vmatprep.subr.bf16.mxu0 0
        %3802 = vmatpush1.bf16.xpose.msra.mxu0 0
        %3803 = vmatprep.subr.bf16.mxu0 0
        %3804 = vmatpush1.bf16.xpose.msra.mxu0 0
        %3805 = vmatprep.mubr.bf16.mxu0 0
        %3806 = vmatmul.mubr.bf16.gmra.mrb[0].mxu0 %v3765
        %v3807 = vpop.f32.mrb[0].mxu0
        %v3808 = vadd.f32 0.0, %v3807
        %v3809 = vpop.f32.mrb[0].mxu0
        %v3810 = vpop.f32.mrb[0].mxu0
        %v3811 = vadd.f32 0.0, %v3810
        %v3812 = vpop.f32.mrb[0].mxu0
        %3813 = vdwg.mxu0
        %v3814 = vmul.f32 %v3808, 0.25
        %v3815 = vmul.f32 %v3811, 0.25
        %v3816 = vsel %vm3290, %v3814, -inf
        %3817 = vmax.xlane.f32.xlu0 %v3816
        %v3818 = vpop.xlane.xlu0 %3817
        %v3819 = vsel %vm3290, %v3815, -inf
        %3820 = vmax.xlane.f32.xlu0 %v3819
        %v3821 = vpop.xlane.xlu0 %3820
        %v3822 = vsub.f32 %v3814, %v3818
        %v3823 = vsub.f32 %v3815, %v3821
        %v3824 = vmul.f32 %v3822, 1.442695
        %v3825 = vpow.pop %v3824
        %v3826 = vmul.f32 %v3823, 1.442695
        %v3827 = vpow.pop %v3826
        %v3828 = vsel %vm3290, %v3825, 0.0
        %3829 = vadd.xlane.f32.xlu0 %v3828
        %v3830 = vpop.xlane.xlu0 %3829
        %v3831 = vsel %vm3290, %v3827, 0.0
        %3832 = vadd.xlane.f32.xlu0 %v3831
        %v3833 = vpop.xlane.xlu0 %3832
        %v3834 = vrcp.pop %v3830
        %v3835 = vrcp.pop %v3833
        %v3836 = vmul.f32 %v3825, %v3834
        %v3837 = vmul.f32 %v3827, %v3835
        %v3838 = vpack.c.bf16 %v3837, %v3836
        %3839 = vrot.lane.b32.xlu0 %v3579, 96
        %v3840 = vpop.permute.xlu0 %3839
        %3841 = vrot.lane.b32.xlu0 %v3580, 96
        %v3842 = vpop.permute.xlu0 %3841
        %v3846 = vsel %vm3290, %v3838, 0
        %3848 = vmatprep.subr.bf16.mxu0 0
        %3849 = vmatpush1.bf16.msra.mxu0 %v3840
        %3850 = vmatprep.subr.bf16.mxu0 0
        %3851 = vmatpush1.bf16.msra.mxu0 %v3842
        %3852 = vmatprep.subr.bf16.mxu0 0
        %3853 = vmatpush1.bf16.msra.mxu0 0
        %3854 = vmatprep.subr.bf16.mxu0 0
        %3855 = vmatpush1.bf16.msra.mxu0 0
        %3856 = vmatprep.subr.bf16.mxu0 0
        %3857 = vmatpush1.bf16.msra.mxu0 0
        %3858 = vmatprep.subr.bf16.mxu0 0
        %3859 = vmatpush1.bf16.msra.mxu0 0
        %3860 = vmatprep.subr.bf16.mxu0 0
        %3861 = vmatpush1.bf16.msra.mxu0 0
        %3862 = vmatprep.subr.bf16.mxu0 0
        %3863 = vmatpush1.bf16.msra.mxu0 0
        %3864 = vmatprep.subr.bf16.mxu0 0
        %3865 = vmatpush1.bf16.msra.mxu0 0
        %3866 = vmatprep.subr.bf16.mxu0 0
        %3867 = vmatpush1.bf16.msra.mxu0 0
        %3868 = vmatprep.subr.bf16.mxu0 0
        %3869 = vmatpush1.bf16.msra.mxu0 0
        %3870 = vmatprep.subr.bf16.mxu0 0
        %3871 = vmatpush1.bf16.msra.mxu0 0
        %3872 = vmatprep.subr.bf16.mxu0 0
        %3873 = vmatpush1.bf16.msra.mxu0 0
        %3874 = vmatprep.subr.bf16.mxu0 0
        %3875 = vmatpush1.bf16.msra.mxu0 0
        %3876 = vmatprep.subr.bf16.mxu0 0
        %3877 = vmatpush1.bf16.msra.mxu0 0
        %3878 = vmatprep.subr.bf16.mxu0 0
        %3879 = vmatpush1.bf16.msra.mxu0 0
        %3880 = vmatprep.mubr.bf16.mxu0 0
        %3881 = vmatmul.mubr.bf16.gmra.mrb[0].mxu0 %v3846
        %v3882 = vpop.f32.mrb[0].mxu0
        %v3883 = vadd.f32 0.0, %v3882
        %v3884 = vpop.f32.mrb[0].mxu0
        %v3885 = vpop.f32.mrb[0].mxu0
        %v3886 = vadd.f32 0.0, %v3885
        %v3887 = vpop.f32.mrb[0].mxu0
        %3888 = vdwg.mxu0
        %3889 = vrot.lane.b32.xlu0 %v3235, 48
        %v3890 = vpop.permute.xlu0 %3889
        %3891 = vrot.lane.b32.xlu0 %v3236, 48
        %v3892 = vpop.permute.xlu0 %3891
        %3893 = vrot.lane.b32.xlu0 %v3237, 48
        %v3894 = vpop.permute.xlu0 %3893
        %v3896 = vsel %vm1399, %v3890, 0
        %v3899 = vsel %vm1399, %v3892, 0
        %v3902 = vsel %vm1399, %v3894, 0
        %3904 = vmatprep.subr.bf16.mxu0 0
        %3905 = vmatpush1.bf16.xpose.msra.mxu0 %v3899
        %3906 = vmatprep.subr.bf16.mxu0 0
        %3907 = vmatpush1.bf16.xpose.msra.mxu0 %v3902
        %3908 = vmatprep.subr.bf16.mxu0 0
        %3909 = vmatpush1.bf16.xpose.msra.mxu0 0
        %3910 = vmatprep.subr.bf16.mxu0 0
        %3911 = vmatpush1.bf16.xpose.msra.mxu0 0
        %3912 = vmatprep.subr.bf16.mxu0 0
        %3913 = vmatpush1.bf16.xpose.msra.mxu0 0
        %3914 = vmatprep.subr.bf16.mxu0 0
        %3915 = vmatpush1.bf16.xpose.msra.mxu0 0
        %3916 = vmatprep.subr.bf16.mxu0 0
        %3917 = vmatpush1.bf16.xpose.msra.mxu0 0
        %3918 = vmatprep.subr.bf16.mxu0 0
        %3919 = vmatpush1.bf16.xpose.msra.mxu0 0
        %3920 = vmatprep.subr.bf16.mxu0 0
        %3921 = vmatpush1.bf16.xpose.msra.mxu0 0
        %3922 = vmatprep.subr.bf16.mxu0 0
        %3923 = vmatpush1.bf16.xpose.msra.mxu0 0
        %3924 = vmatprep.subr.bf16.mxu0 0
        %3925 = vmatpush1.bf16.xpose.msra.mxu0 0
        %3926 = vmatprep.subr.bf16.mxu0 0
        %3927 = vmatpush1.bf16.xpose.msra.mxu0 0
        %3928 = vmatprep.subr.bf16.mxu0 0
        %3929 = vmatpush1.bf16.xpose.msra.mxu0 0
        %3930 = vmatprep.subr.bf16.mxu0 0
        %3931 = vmatpush1.bf16.xpose.msra.mxu0 0
        %3932 = vmatprep.subr.bf16.mxu0 0
        %3933 = vmatpush1.bf16.xpose.msra.mxu0 0
        %3934 = vmatprep.subr.bf16.mxu0 0
        %3935 = vmatpush1.bf16.xpose.msra.mxu0 0
        %3936 = vmatprep.mubr.bf16.mxu0 0
        %3937 = vmatmul.mubr.bf16.gmra.mrb[0].mxu0 %v3896
        %v3938 = vpop.f32.mrb[0].mxu0
        %v3939 = vadd.f32 0.0, %v3938
        %v3940 = vpop.f32.mrb[0].mxu0
        %v3941 = vpop.f32.mrb[0].mxu0
        %v3942 = vadd.f32 0.0, %v3941
        %v3943 = vpop.f32.mrb[0].mxu0
        %3944 = vdwg.mxu0
        %v3945 = vmul.f32 %v3939, 0.25
        %v3946 = vmul.f32 %v3942, 0.25
        %v3947 = vsel %vm3290, %v3945, -inf
        %3948 = vmax.xlane.f32.xlu0 %v3947
        %v3949 = vpop.xlane.xlu0 %3948
        %v3950 = vsel %vm3290, %v3946, -inf
        %3951 = vmax.xlane.f32.xlu0 %v3950
        %v3952 = vpop.xlane.xlu0 %3951
        %v3953 = vsub.f32 %v3945, %v3949
        %v3954 = vsub.f32 %v3946, %v3952
        %v3955 = vmul.f32 %v3953, 1.442695
        %v3956 = vpow.pop %v3955
        %v3957 = vmul.f32 %v3954, 1.442695
        %v3958 = vpow.pop %v3957
        %v3959 = vsel %vm3290, %v3956, 0.0
        %3960 = vadd.xlane.f32.xlu0 %v3959
        %v3961 = vpop.xlane.xlu0 %3960
        %v3962 = vsel %vm3290, %v3958, 0.0
        %3963 = vadd.xlane.f32.xlu0 %v3962
        %v3964 = vpop.xlane.xlu0 %3963
        %v3965 = vrcp.pop %v3961
        %v3966 = vrcp.pop %v3964
        %v3967 = vmul.f32 %v3956, %v3965
        %v3968 = vmul.f32 %v3958, %v3966
        %v3969 = vpack.c.bf16 %v3968, %v3967
        %3970 = vrot.lane.b32.xlu0 %v3579, 80
        %v3971 = vpop.permute.xlu0 %3970
        %3972 = vrot.lane.b32.xlu0 %v3580, 80
        %v3973 = vpop.permute.xlu0 %3972
        %v3977 = vsel %vm3290, %v3969, 0
        %3979 = vmatprep.subr.bf16.mxu0 0
        %3980 = vmatpush1.bf16.msra.mxu0 %v3971
        %3981 = vmatprep.subr.bf16.mxu0 0
        %3982 = vmatpush1.bf16.msra.mxu0 %v3973
        %3983 = vmatprep.subr.bf16.mxu0 0
        %3984 = vmatpush1.bf16.msra.mxu0 0
        %3985 = vmatprep.subr.bf16.mxu0 0
        %3986 = vmatpush1.bf16.msra.mxu0 0
        %3987 = vmatprep.subr.bf16.mxu0 0
        %3988 = vmatpush1.bf16.msra.mxu0 0
        %3989 = vmatprep.subr.bf16.mxu0 0
        %3990 = vmatpush1.bf16.msra.mxu0 0
        %3991 = vmatprep.subr.bf16.mxu0 0
        %3992 = vmatpush1.bf16.msra.mxu0 0
        %3993 = vmatprep.subr.bf16.mxu0 0
        %3994 = vmatpush1.bf16.msra.mxu0 0
        %3995 = vmatprep.subr.bf16.mxu0 0
        %3996 = vmatpush1.bf16.msra.mxu0 0
        %3997 = vmatprep.subr.bf16.mxu0 0
        %3998 = vmatpush1.bf16.msra.mxu0 0
        %3999 = vmatprep.subr.bf16.mxu0 0
        %4000 = vmatpush1.bf16.msra.mxu0 0
        %4001 = vmatprep.subr.bf16.mxu0 0
        %4002 = vmatpush1.bf16.msra.mxu0 0
        %4003 = vmatprep.subr.bf16.mxu0 0
        %4004 = vmatpush1.bf16.msra.mxu0 0
        %4005 = vmatprep.subr.bf16.mxu0 0
        %4006 = vmatpush1.bf16.msra.mxu0 0
        %4007 = vmatprep.subr.bf16.mxu0 0
        %4008 = vmatpush1.bf16.msra.mxu0 0
        %4009 = vmatprep.subr.bf16.mxu0 0
        %4010 = vmatpush1.bf16.msra.mxu0 0
        %4011 = vmatprep.mubr.bf16.mxu0 0
        %4012 = vmatmul.mubr.bf16.gmra.mrb[0].mxu0 %v3977
        %v4013 = vpop.f32.mrb[0].mxu0
        %v4014 = vadd.f32 0.0, %v4013
        %v4015 = vpop.f32.mrb[0].mxu0
        %v4016 = vpop.f32.mrb[0].mxu0
        %v4017 = vadd.f32 0.0, %v4016
        %v4018 = vpop.f32.mrb[0].mxu0
        %4019 = vdwg.mxu0
        %4022 = vrot.lane.b32.xlu0 %v3492, 16
        %v4023 = vpop.permute.xlu0 %4022
        %4024 = vrot.lane.b32.xlu0 %v3495, 16
        %v4025 = vpop.permute.xlu0 %4024
        %4030 = vrot.lane.b32.xlu0 %v3619, 32
        %v4031 = vpop.permute.xlu0 %4030
        %4032 = vrot.lane.b32.xlu0 %v3622, 32
        %v4033 = vpop.permute.xlu0 %4032
        %4038 = vrot.lane.b32.xlu0 %v3752, 48
        %v4039 = vpop.permute.xlu0 %4038
        %4040 = vrot.lane.b32.xlu0 %v3755, 48
        %v4041 = vpop.permute.xlu0 %4040
        %4046 = vrot.lane.b32.xlu0 %v3883, 64
        %v4047 = vpop.permute.xlu0 %4046
        %4048 = vrot.lane.b32.xlu0 %v3886, 64
        %v4049 = vpop.permute.xlu0 %4048
        %4054 = vrot.lane.b32.xlu0 %v4014, 80
        %v4055 = vpop.permute.xlu0 %4054
        %4056 = vrot.lane.b32.xlu0 %v4017, 80
        %v4057 = vpop.permute.xlu0 %4056
        %v4060 = vsel %vm1399, %v3360, %v4023
        %v4061 = vsel %vm1399, %v3363, %v4025
        %v4062 = vsel %vm3290, %v4060, %v4031
        %v4063 = vsel %vm3290, %v4061, %v4033
        %v4064 = vsel %vm2843, %v4062, %v4039
        %v4065 = vsel %vm2843, %v4063, %v4041
        %vm4066 = vcmask 523264
        %v4067 = vsel %vm4066, %v4064, %v4047
        %v4068 = vsel %vm4066, %v4065, %v4049
        %vm4069 = vcmask 654336
        %v4070 = vsel %vm4069, %v4067, %v4055
        %v4071 = vsel %vm4069, %v4068, %v4057
        %v4072 = vpack.c.bf16 %v4071, %v4070
        %v4073 = vpack.c.bf16 %v3082, %v3081
        %v4074 = vpack.c.bf16 %v3084, %v3083
        %v4075 = vpack.c.bf16 %v3086, %v3085
        %v4076 = vpack.c.bf16 %v3088, %v3087
        %v4077 = vpack.c.bf16 %v3090, %v3089
        %v4078 = vpack.c.bf16 %v3092, %v3091
        %v4080 = vlaneseq
        %v4081 = vshrl.u32 %v4080, 7
        %v4082 = vsub.s32 0, %v4081
        %v4083 = vrot.slane %v3093, %v4082
        %v4086 = vsel %vm1025, %v4072, 0
        %4088 = vmatprep.subr.bf16.mxu0 0
        %4089 = vmatpush1.bf16.msra.mxu0 %v4073
        %4090 = vmatprep.subr.bf16.mxu0 0
        %4091 = vmatpush1.bf16.msra.mxu0 %v4074
        %4092 = vmatprep.subr.bf16.mxu0 0
        %4093 = vmatpush1.bf16.msra.mxu0 %v4075
        %4094 = vmatprep.subr.bf16.mxu0 0
        %4095 = vmatpush1.bf16.msra.mxu0 %v4076
        %4096 = vmatprep.subr.bf16.mxu0 0
        %4097 = vmatpush1.bf16.msra.mxu0 %v4077
        %4098 = vmatprep.subr.bf16.mxu0 0
        %4099 = vmatpush1.bf16.msra.mxu0 %v4078
        %4100 = vmatprep.subr.bf16.mxu0 0
        %4101 = vmatpush1.bf16.msra.mxu0 0
        %4102 = vmatprep.subr.bf16.mxu0 0
        %4103 = vmatpush1.bf16.msra.mxu0 0
        %4104 = vmatprep.subr.bf16.mxu0 0
        %4105 = vmatpush1.bf16.msra.mxu0 0
        %4106 = vmatprep.subr.bf16.mxu0 0
        %4107 = vmatpush1.bf16.msra.mxu0 0
        %4108 = vmatprep.subr.bf16.mxu0 0
        %4109 = vmatpush1.bf16.msra.mxu0 0
        %4110 = vmatprep.subr.bf16.mxu0 0
        %4111 = vmatpush1.bf16.msra.mxu0 0
        %4112 = vmatprep.subr.bf16.mxu0 0
        %4113 = vmatpush1.bf16.msra.mxu0 0
        %4114 = vmatprep.subr.bf16.mxu0 0
        %4115 = vmatpush1.bf16.msra.mxu0 0
        %4116 = vmatprep.subr.bf16.mxu0 0
        %4117 = vmatpush1.bf16.msra.mxu0 0
        %4118 = vmatprep.subr.bf16.mxu0 0
        %4119 = vmatpush1.bf16.msra.mxu0 0
        %4120 = vmatprep.mubr.bf16.mxu0 0
        %4121 = vmatmul.mubr.bf16.gmra.mrb[0].mxu0 %v4086
        %v4122 = vpop.f32.mrb[0].mxu0
        %v4123 = vadd.f32 %v4083, %v4122
        %v4124 = vpop.f32.mrb[0].mxu0
        %v4125 = vpop.f32.mrb[0].mxu0
        %v4126 = vadd.f32 %v4083, %v4125
        %v4127 = vpop.f32.mrb[0].mxu0
        %4128 = vdwg.mxu0
        %v4129 = vadd.f32 %v1021, %v4123
        %v4130 = vadd.f32 %v1022, %v4126
        %v4131 = vld [vmem:[%s47] sm:$0x1]
        %v4132 = vld [vmem:[%s49] sm:$0x1]
        %v4133 = vsel %vm1025, %v4129, 0.0
        %4134 = vadd.xlane.f32.xlu0 %v4133
        %v4135 = vpop.xlane.xlu0 %4134
        %v4136 = vsel %vm1025, %v4130, 0.0
        %4137 = vadd.xlane.f32.xlu0 %v4136
        %v4138 = vpop.xlane.xlu0 %4137
        %v4139 = vmul.f32 %v4135, %v1038
        %v4140 = vmul.f32 %v4138, %v1038
        %v4141 = vsub.f32 %v4129, %v4139
        %v4142 = vsub.f32 %v4130, %v4140
        %v4143 = vmul.f32 %v4141, %v4141
        %v4144 = vmul.f32 %v4142, %v4142
        %v4145 = vsel %vm1025, %v4143, 0.0
        %4146 = vadd.xlane.f32.xlu0 %v4145
        %v4147 = vpop.xlane.xlu0 %4146
        %v4148 = vsel %vm1025, %v4144, 0.0
        %4149 = vadd.xlane.f32.xlu0 %v4148
        %v4150 = vpop.xlane.xlu0 %4149
        %v4151 = vmul.f32 %v4147, %v1038
        %v4152 = vmul.f32 %v4150, %v1038
        %v4153 = vadd.f32 %v4151, 1e-06
        %v4154 = vadd.f32 %v4152, 1e-06
        %v4155 = vrsqrt.pop %v4153
        %v4156 = vrsqrt.pop %v4154
        %v4157 = vmul.f32 %v4141, %v4155
        %v4158 = vmul.f32 %v4142, %v4156
        %v4160 = vlaneseq
        %v4161 = vshrl.u32 %v4160, 7
        %v4162 = vsub.s32 0, %v4161
        %v4163 = vrot.slane %v4131, %v4162
        %v4165 = vmul.f32 %v4157, %v4163
        %v4166 = vmul.f32 %v4158, %v4163
        %v4168 = vlaneseq
        %v4169 = vshrl.u32 %v4168, 7
        %v4170 = vsub.s32 0, %v4169
        %v4171 = vrot.slane %v4132, %v4170
        %v4173 = vadd.f32 %v4165, %v4171
        %v4174 = vadd.f32 %v4166, %v4171
        %v4175 = vld [vmem:[%s51] sm:$0xff]
        %v4176 = vld [vmem:[%s51 + $0x8] sm:$0xff]
        %v4177 = vld [vmem:[%s51 + $0x10] sm:$0xff]
        %v4178 = vld [vmem:[%s51 + $0x18] sm:$0xff]
        %v4179 = vld [vmem:[%s51 + $0x20] sm:$0xff]
        %v4180 = vld [vmem:[%s51 + $0x28] sm:$0xff]
        %v4181 = vld [vmem:[%s51 + $0x30] sm:$0xff]
        %v4182 = vld [vmem:[%s51 + $0x38] sm:$0xff]
        %v4183 = vld [vmem:[%s51 + $0x40] sm:$0xff]
        %v4184 = vld [vmem:[%s51 + $0x48] sm:$0xff]
        %v4185 = vld [vmem:[%s51 + $0x50] sm:$0xff]
        %v4186 = vld [vmem:[%s51 + $0x58] sm:$0xff]
        %v4187 = vld [vmem:[%s53] sm:$0x1]
        %v4188 = vld [vmem:[%s55] sm:$0xff]
        %v4189 = vld [vmem:[%s55 + $0x8] sm:$0x1]
        %v4190 = vld [vmem:[%s57] sm:$0x1]
        %v4191 = vld [vmem:[%s59] sm:$0xff]
        %v4192 = vld [vmem:[%s59 + $0x8] sm:$0xff]
        %v4193 = vld [vmem:[%s59 + $0x10] sm:$0x7]
        %v4194 = vld [vmem:[%s61] sm:$0x1]
        %v4195 = vpack.c.bf16 %v4174, %v4173
        %v4196 = vpack.c.bf16 %v4176, %v4175
        %v4197 = vpack.c.bf16 %v4178, %v4177
        %v4198 = vpack.c.bf16 %v4180, %v4179
        %v4199 = vpack.c.bf16 %v4182, %v4181
        %v4200 = vpack.c.bf16 %v4184, %v4183
        %v4201 = vpack.c.bf16 %v4186, %v4185
        %v4203 = vlaneseq
        %v4204 = vshrl.u32 %v4203, 7
        %v4205 = vsub.s32 0, %v4204
        %v4206 = vrot.slane %v4187, %v4205
        %v4209 = vsel %vm1025, %v4195, 0
        %4211 = vmatprep.subr.bf16.mxu0 0
        %4212 = vmatpush1.bf16.msra.mxu0 %v4196
        %4213 = vmatprep.subr.bf16.mxu0 0
        %4214 = vmatpush1.bf16.msra.mxu0 %v4197
        %4215 = vmatprep.subr.bf16.mxu0 0
        %4216 = vmatpush1.bf16.msra.mxu0 %v4198
        %4217 = vmatprep.subr.bf16.mxu0 0
        %4218 = vmatpush1.bf16.msra.mxu0 %v4199
        %4219 = vmatprep.subr.bf16.mxu0 0
        %4220 = vmatpush1.bf16.msra.mxu0 %v4200
        %4221 = vmatprep.subr.bf16.mxu0 0
        %4222 = vmatpush1.bf16.msra.mxu0 %v4201
        %4223 = vmatprep.subr.bf16.mxu0 0
        %4224 = vmatpush1.bf16.msra.mxu0 0
        %4225 = vmatprep.subr.bf16.mxu0 0
        %4226 = vmatpush1.bf16.msra.mxu0 0
        %4227 = vmatprep.subr.bf16.mxu0 0
        %4228 = vmatpush1.bf16.msra.mxu0 0
        %4229 = vmatprep.subr.bf16.mxu0 0
        %4230 = vmatpush1.bf16.msra.mxu0 0
        %4231 = vmatprep.subr.bf16.mxu0 0
        %4232 = vmatpush1.bf16.msra.mxu0 0
        %4233 = vmatprep.subr.bf16.mxu0 0
        %4234 = vmatpush1.bf16.msra.mxu0 0
        %4235 = vmatprep.subr.bf16.mxu0 0
        %4236 = vmatpush1.bf16.msra.mxu0 0
        %4237 = vmatprep.subr.bf16.mxu0 0
        %4238 = vmatpush1.bf16.msra.mxu0 0
        %4239 = vmatprep.subr.bf16.mxu0 0
        %4240 = vmatpush1.bf16.msra.mxu0 0
        %4241 = vmatprep.subr.bf16.mxu0 0
        %4242 = vmatpush1.bf16.msra.mxu0 0
        %4243 = vmatprep.mubr.bf16.mxu0 0
        %4244 = vmatmul.mubr.bf16.gmra.mrb[0].mxu0 %v4209
        %v4245 = vpop.f32.mrb[0].mxu0
        %v4246 = vadd.f32 %v4206, %v4245
        %v4247 = vpop.f32.mrb[0].mxu0
        %v4248 = vpop.f32.mrb[0].mxu0
        %v4249 = vadd.f32 %v4206, %v4248
        %v4250 = vpop.f32.mrb[0].mxu0
        %4251 = vdwg.mxu0
        %vm4254 = vcmask 1044480
        %v4255 = vrot.slane %v4246, 3
        %v4256 = vrot.slane %v4249, 3
        %v4257 = vsel %vm4254, %v4255, %v4256
        %v4261 = vsel %vm4254, 0.0, %v4255
        %v4262 = vsel %vm4254, %v4256, 0.0
        %v4263 = vlaneseq
        %v4264 = vshrl.u32 %v4263, 7
        %v4265 = vadd.s32 %v4264, 8
        %vm4266 = vcmp.lt.s32.totalorder %v4264, 0
        %v4267 = vsub.s32 0, %v4264
        %v4268 = vsel %vm4266, %v4267, %v4264
        %v4269 = vshrl.u32 %v4268, 2
        %v4270 = vand.u32 %v4268, 3
        %v4271 = vsub.s32 0, %v4270
        %v4272 = vsel %vm4266, %v4271, %v4270
        %vm4273 = vcmp.lt.s32.totalorder %v4265, 0
        %v4274 = vsub.s32 0, %v4265
        %v4275 = vsel %vm4273, %v4274, %v4265
        %v4276 = vshrl.u32 %v4275, 2
        %v4277 = vand.u32 %v4275, 3
        %v4278 = vsub.s32 0, %v4277
        %v4279 = vsel %vm4273, %v4278, %v4277
        %vm4280 = vcmp.ne.s32.totalorder %v4272, 0
        %vm4281 = vcmp.ne.s32.totalorder %v4279, 0
        %vm4282 = vcmp.lt.s32.totalorder %v4272, 0
        %vm4283 = vcmp.lt.s32.totalorder %v4279, 0
        %vm4284 = vmand %vm4282, %vm4280
        %vm4285 = vmand %vm4283, %vm4281
        %v4286 = vadd.s32 %v4272, 4
        %v4287 = vadd.s32 %v4279, 4
        %v4288 = vsel %vm4284, %v4286, %v4272
        %v4289 = vsel %vm4285, %v4287, %v4279
        %v4290 = vadd.s32 %v4288, 4294967295
        %v4291 = vadd.s32 %v4289, 4294967295
        %vm4292 = vcmp.ge.s32.totalorder %v4290, 0
        %vm4293 = vcmp.ge.s32.totalorder %v4291, 0
        %vm4294 = vcmp.lt.s32.totalorder %v4290, 4
        %vm4295 = vcmp.lt.s32.totalorder %v4291, 4
        %vm4296 = vmand %vm4292, %vm4294
        %vm4297 = vmand %vm4293, %vm4295
        %v4298 = vsel %vm4296, 1, 0
        %v4299 = vsel %vm4297, 1, 0
        %v4300 = vcvt.s32.f32 %v4298
        %v4301 = vcvt.s32.f32 %v4299
        %v4302 = vmul.f32 %v4261, %v4300
        %v4303 = vmul.f32 %v4257, %v4301
        %v4304 = vlaneseq
        %v4305 = vshrl.u32 %v4304, 7
        %v4306 = vsub.s32 0, %v4305
        %v4307 = vrot.slane %v4188, %v4306
        %v4308 = vmul.f32 %v4302, %v4307
        %v4309 = vmul.f32 %v4303, %v4307
        %v4310 = vadd.f32 %v4308, 0.0
        %v4311 = vadd.f32 %v4309, 0.0
        %vm4312 = vcmp.ge.s32.totalorder %v4288, 0
        %vm4313 = vcmp.ge.s32.totalorder %v4289, 0
        %vm4314 = vcmp.lt.s32.totalorder %v4288, 4
        %vm4315 = vcmp.lt.s32.totalorder %v4289, 4
        %vm4316 = vmand %vm4312, %vm4314
        %vm4317 = vmand %vm4313, %vm4315
        %v4318 = vsel %vm4316, 1, 0
        %v4319 = vsel %vm4317, 1, 0
        %v4320 = vcvt.s32.f32 %v4318
        %v4321 = vcvt.s32.f32 %v4319
        %vm4324 = vcmask 1040384
        %v4325 = vrot.slane %v4320, 7
        %v4326 = vrot.slane %v4321, 7
        %v4327 = vsel %vm4324, %v4325, %v4326
        %v4331 = vmul.f32 %v4261, %v4325
        %v4332 = vmul.f32 %v4257, %v4327
        %v4333 = vmul.f32 %v4262, %v4326
        %v4334 = vlaneseq
        %v4335 = vshrl.u32 %v4334, 7
        %v4336 = vsub.s32 1, %v4335
        %v4337 = vrot.slane %v4188, %v4336
        %v4338 = vmul.f32 %v4331, %v4337
        %v4339 = vmul.f32 %v4332, %v4337
        %v4340 = vmul.f32 %v4333, %v4337
        %vm4344 = vcmask 1046528
        %v4345 = vrot.slane %v4338, 1
        %v4346 = vrot.slane %v4339, 1
        %v4347 = vsel %vm4344, %v4345, %v4346
        %v4348 = vrot.slane %v4340, 1
        %v4349 = vsel %vm4344, %v4346, %v4348
        %v4352 = vadd.f32 %v4310, %v4347
        %v4353 = vadd.f32 %v4311, %v4349
        %v4354 = vadd.s32 %v4288, 1
        %v4355 = vadd.s32 %v4289, 1
        %vm4356 = vcmp.ge.s32.totalorder %v4354, 0
        %vm4357 = vcmp.ge.s32.totalorder %v4355, 0
        %vm4358 = vcmp.lt.s32.totalorder %v4354, 4
        %vm4359 = vcmp.lt.s32.totalorder %v4355, 4
        %vm4360 = vmand %vm4356, %vm4358
        %vm4361 = vmand %vm4357, %vm4359
        %v4362 = vsel %vm4360, 1, 0
        %v4363 = vsel %vm4361, 1, 0
        %v4364 = vcvt.s32.f32 %v4362
        %v4365 = vcvt.s32.f32 %v4363
        %vm4368 = vcmask 1041408
        %v4369 = vrot.slane %v4364, 6
        %v4370 = vrot.slane %v4365, 6
        %v4371 = vsel %vm4368, %v4369, %v4370
        %v4375 = vmul.f32 %v4261, %v4369
        %v4376 = vmul.f32 %v4257, %v4371
        %v4377 = vmul.f32 %v4262, %v4370
        %v4378 = vlaneseq
        %v4379 = vshrl.u32 %v4378, 7
        %v4380 = vsub.s32 2, %v4379
        %v4381 = vrot.slane %v4188, %v4380
        %v4382 = vmul.f32 %v4375, %v4381
        %v4383 = vmul.f32 %v4376, %v4381
        %v4384 = vmul.f32 %v4377, %v4381
        %vm4388 = vcmask 1045504
        %v4389 = vrot.slane %v4382, 2
        %v4390 = vrot.slane %v4383, 2
        %v4391 = vsel %vm4388, %v4389, %v4390
        %v4392 = vrot.slane %v4384, 2
        %v4393 = vsel %vm4388, %v4390, %v4392
        %v4396 = vadd.f32 %v4352, %v4391
        %v4397 = vadd.f32 %v4353, %v4393
        %vm4400 = vcmask 1043456
        %v4401 = vrot.slane %v4300, 4
        %v4402 = vrot.slane %v4301, 4
        %v4403 = vsel %vm4400, %v4401, %v4402
        %v4407 = vmul.f32 %v4261, %v4401
        %v4408 = vmul.f32 %v4257, %v4403
        %v4409 = vmul.f32 %v4262, %v4402
        %v4410 = vlaneseq
        %v4411 = vshrl.u32 %v4410, 7
        %v4412 = vsub.s32 3, %v4411
        %v4413 = vrot.slane %v4188, %v4412
        %v4414 = vmul.f32 %v4407, %v4413
        %v4415 = vmul.f32 %v4408, %v4413
        %v4416 = vmul.f32 %v4409, %v4413
        %v4420 = vrot.slane %v4414, 4
        %v4421 = vrot.slane %v4415, 4
        %v4422 = vsel %vm4400, %v4420, %v4421
        %v4423 = vrot.slane %v4416, 4
        %v4424 = vsel %vm4400, %v4421, %v4423
        %v4427 = vadd.f32 %v4396, %v4422
        %v4428 = vadd.f32 %v4397, %v4424
        %v4429 = vrot.slane %v4320, 3
        %v4430 = vrot.slane %v4321, 3
        %v4431 = vsel %vm4254, %v4429, %v4430
        %v4435 = vmul.f32 %v4261, %v4429
        %v4436 = vmul.f32 %v4257, %v4431
        %v4437 = vmul.f32 %v4262, %v4430
        %v4438 = vlaneseq
        %v4439 = vshrl.u32 %v4438, 7
        %v4440 = vsub.s32 4, %v4439
        %v4441 = vrot.slane %v4188, %v4440
        %v4442 = vmul.f32 %v4435, %v4441
        %v4443 = vmul.f32 %v4436, %v4441
        %v4444 = vmul.f32 %v4437, %v4441
        %vm4448 = vcmask 1042432
        %v4449 = vrot.slane %v4442, 5
        %v4450 = vrot.slane %v4443, 5
        %v4451 = vsel %vm4448, %v4449, %v4450
        %v4452 = vrot.slane %v4444, 5
        %v4453 = vsel %vm4448, %v4450, %v4452
        %v4456 = vadd.f32 %v4427, %v4451
        %v4457 = vadd.f32 %v4428, %v4453
        %v4458 = vrot.slane %v4364, 2
        %v4459 = vrot.slane %v4365, 2
        %v4460 = vsel %vm4388, %v4458, %v4459
        %v4464 = vmul.f32 %v4261, %v4458
        %v4465 = vmul.f32 %v4257, %v4460
        %v4466 = vmul.f32 %v4262, %v4459
        %v4467 = vlaneseq
        %v4468 = vshrl.u32 %v4467, 7
        %v4469 = vsub.s32 5, %v4468
        %v4470 = vrot.slane %v4188, %v4469
        %v4471 = vmul.f32 %v4464, %v4470
        %v4472 = vmul.f32 %v4465, %v4470
        %v4473 = vmul.f32 %v4466, %v4470
        %v4477 = vrot.slane %v4471, 6
        %v4478 = vrot.slane %v4472, 6
        %v4479 = vsel %vm4368, %v4477, %v4478
        %v4480 = vrot.slane %v4473, 6
        %v4481 = vsel %vm4368, %v4478, %v4480
        %v4484 = vadd.f32 %v4456, %v4479
        %v4485 = vadd.f32 %v4457, %v4481
        %v4486 = vmul.f32 %v4257, %v4300
        %v4487 = vmul.f32 %v4262, %v4301
        %v4488 = vlaneseq
        %v4489 = vshrl.u32 %v4488, 7
        %v4490 = vsub.s32 6, %v4489
        %v4491 = vrot.slane %v4188, %v4490
        %v4492 = vmul.f32 %v4486, %v4491
        %v4493 = vmul.f32 %v4487, %v4491
        %v4494 = vadd.f32 %v4484, %v4492
        %v4495 = vadd.f32 %v4485, %v4493
        %v4496 = vmul.f32 %v4257, %v4325
        %v4497 = vmul.f32 %v4262, %v4327
        %v4498 = vmul.f32 %v4326, 0.0
        %v4499 = vlaneseq
        %v4500 = vshrl.u32 %v4499, 7
        %v4501 = vsub.s32 7, %v4500
        %v4502 = vrot.slane %v4188, %v4501
        %v4503 = vmul.f32 %v4496, %v4502
        %v4504 = vmul.f32 %v4497, %v4502
        %v4505 = vmul.f32 %v4498, %v4502
        %v4509 = vrot.slane %v4503, 1
        %v4510 = vrot.slane %v4504, 1
        %v4511 = vsel %vm4344, %v4509, %v4510
        %v4512 = vrot.slane %v4505, 1
        %v4513 = vsel %vm4344, %v4510, %v4512
        %v4516 = vadd.f32 %v4494, %v4511
        %v4517 = vadd.f32 %v4495, %v4513
        %v4518 = vmul.f32 %v4257, %v4369
        %v4519 = vmul.f32 %v4262, %v4371
        %v4520 = vmul.f32 %v4370, 0.0
        %v4521 = vlaneseq
        %v4522 = vshrl.u32 %v4521, 7
        %v4523 = vsub.s32 0, %v4522
        %v4524 = vrot.slane %v4189, %v4523
        %v4525 = vmul.f32 %v4518, %v4524
        %v4526 = vmul.f32 %v4519, %v4524
        %v4527 = vmul.f32 %v4520, %v4524
        %v4531 = vrot.slane %v4525, 2
        %v4532 = vrot.slane %v4526, 2
        %v4533 = vsel %vm4388, %v4531, %v4532
        %v4534 = vrot.slane %v4527, 2
        %v4535 = vsel %vm4388, %v4532, %v4534
        %v4538 = vadd.f32 %v4516, %v4533
        %v4539 = vadd.f32 %v4517, %v4535
        %v4541 = vlaneseq
        %v4542 = vshrl.u32 %v4541, 7
        %v4543 = vsub.s32 0, %v4542
        %v4544 = vrot.slane %v4190, %v4543
        %v4546 = vadd.f32 %v4538, %v4544
        %v4547 = vadd.f32 %v4539, %v4544
        %v4548 = vmul.f32 %v4546, 0.5
        %v4549 = vmul.f32 %v4547, 0.5
        %v4550 = vmul.f32 %v4546, 0.044715
        %v4551 = vmul.f32 %v4547, 0.044715
        %v4552 = vmul.f32 %v4550, %v4546
        %v4553 = vmul.f32 %v4551, %v4547
        %v4554 = vmul.f32 %v4552, %v4546
        %v4555 = vmul.f32 %v4553, %v4547
        %v4556 = vadd.f32 %v4546, %v4554
        %v4557 = vadd.f32 %v4547, %v4555
        %v4558 = vmul.f32 %v4556, 0.7978846
        %v4559 = vmul.f32 %v4557, 0.7978846
        %v4560 = vtanh.pop %v4558
        %v4561 = vtanh.pop %v4559
        %v4562 = vadd.f32 %v4560, 1.0
        %v4563 = vadd.f32 %v4561, 1.0
        %v4564 = vmul.f32 %v4548, %v4562
        %v4565 = vmul.f32 %v4549, %v4563
        %v4566 = vpack.c.bf16 %v4565, %v4564
        %v4567 = vpack.c.bf16 %v4192, %v4191
        %v4568 = vpack.c.bf16 %v4193, %v4193
        %v4570 = vlaneseq
        %v4571 = vshrl.u32 %v4570, 7
        %v4572 = vsub.s32 0, %v4571
        %v4573 = vrot.slane %v4194, %v4572
        %vm4575 = vcmask 154624
        %v4577 = vsel %vm4575, %v4566, 0
        %v4579 = vsel %vm4324, 4294967295, 65535
        %v4580 = vsel %vm4368, %v4579, 0
        %v4582 = vand.u32 %v4568, %v4580
        %4584 = vmatprep.subr.bf16.mxu0 0
        %4585 = vmatpush1.bf16.msra.mxu0 %v4567
        %4586 = vmatprep.subr.bf16.mxu0 0
        %4587 = vmatpush1.bf16.msra.mxu0 %v4582
        %4588 = vmatprep.subr.bf16.mxu0 0
        %4589 = vmatpush1.bf16.msra.mxu0 0
        %4590 = vmatprep.subr.bf16.mxu0 0
        %4591 = vmatpush1.bf16.msra.mxu0 0
        %4592 = vmatprep.subr.bf16.mxu0 0
        %4593 = vmatpush1.bf16.msra.mxu0 0
        %4594 = vmatprep.subr.bf16.mxu0 0
        %4595 = vmatpush1.bf16.msra.mxu0 0
        %4596 = vmatprep.subr.bf16.mxu0 0
        %4597 = vmatpush1.bf16.msra.mxu0 0
        %4598 = vmatprep.subr.bf16.mxu0 0
        %4599 = vmatpush1.bf16.msra.mxu0 0
        %4600 = vmatprep.subr.bf16.mxu0 0
        %4601 = vmatpush1.bf16.msra.mxu0 0
        %4602 = vmatprep.subr.bf16.mxu0 0
        %4603 = vmatpush1.bf16.msra.mxu0 0
        %4604 = vmatprep.subr.bf16.mxu0 0
        %4605 = vmatpush1.bf16.msra.mxu0 0
        %4606 = vmatprep.subr.bf16.mxu0 0
        %4607 = vmatpush1.bf16.msra.mxu0 0
        %4608 = vmatprep.subr.bf16.mxu0 0
        %4609 = vmatpush1.bf16.msra.mxu0 0
        %4610 = vmatprep.subr.bf16.mxu0 0
        %4611 = vmatpush1.bf16.msra.mxu0 0
        %4612 = vmatprep.subr.bf16.mxu0 0
        %4613 = vmatpush1.bf16.msra.mxu0 0
        %4614 = vmatprep.subr.bf16.mxu0 0
        %4615 = vmatpush1.bf16.msra.mxu0 0
        %4616 = vmatprep.mubr.bf16.mxu0 0
        %4617 = vmatmul.mubr.bf16.gmra.mrb[0].mxu0 %v4577
        %v4618 = vpop.f32.mrb[0].mxu0
        %v4619 = vadd.f32 %v4573, %v4618
        %v4620 = vpop.f32.mrb[0].mxu0
        %v4621 = vpop.f32.mrb[0].mxu0
        %v4622 = vadd.f32 %v4573, %v4621
        %v4623 = vpop.f32.mrb[0].mxu0
        %4624 = vdwg.mxu0
        %v4625 = vadd.f32 %v4129, %v4619
        %v4626 = vadd.f32 %v4130, %v4622
        %s4627 = scalar_lea.vmem %s27, 1
        %v4628 = vld [vmem:[%s4627] sm:$0x1]
        %s4629 = scalar_lea.vmem %s29, 1
        %v4630 = vld [vmem:[%s4629] sm:$0x1]
        %v4631 = vsel %vm1025, %v4625, 0.0
        %4632 = vadd.xlane.f32.xlu0 %v4631
        %v4633 = vpop.xlane.xlu0 %4632
        %v4634 = vsel %vm1025, %v4626, 0.0
        %4635 = vadd.xlane.f32.xlu0 %v4634
        %v4636 = vpop.xlane.xlu0 %4635
        %v4637 = vmul.f32 %v4633, %v1038
        %v4638 = vmul.f32 %v4636, %v1038
        %v4639 = vsub.f32 %v4625, %v4637
        %v4640 = vsub.f32 %v4626, %v4638
        %v4641 = vmul.f32 %v4639, %v4639
        %v4642 = vmul.f32 %v4640, %v4640
        %v4643 = vsel %vm1025, %v4641, 0.0
        %4644 = vadd.xlane.f32.xlu0 %v4643
        %v4645 = vpop.xlane.xlu0 %4644
        %v4646 = vsel %vm1025, %v4642, 0.0
        %4647 = vadd.xlane.f32.xlu0 %v4646
        %v4648 = vpop.xlane.xlu0 %4647
        %v4649 = vmul.f32 %v4645, %v1038
        %v4650 = vmul.f32 %v4648, %v1038
        %v4651 = vadd.f32 %v4649, 1e-06
        %v4652 = vadd.f32 %v4650, 1e-06
        %v4653 = vrsqrt.pop %v4651
        %v4654 = vrsqrt.pop %v4652
        %v4655 = vmul.f32 %v4639, %v4653
        %v4656 = vmul.f32 %v4640, %v4654
        %v4658 = vlaneseq
        %v4659 = vshrl.u32 %v4658, 7
        %v4660 = vsub.s32 0, %v4659
        %v4661 = vrot.slane %v4628, %v4660
        %v4663 = vmul.f32 %v4655, %v4661
        %v4664 = vmul.f32 %v4656, %v4661
        %v4666 = vlaneseq
        %v4667 = vshrl.u32 %v4666, 7
        %v4668 = vsub.s32 0, %v4667
        %v4669 = vrot.slane %v4630, %v4668
        %v4671 = vadd.f32 %v4663, %v4669
        %v4672 = vadd.f32 %v4664, %v4669
        %s4673 = scalar_lea.vmem %s31, 1
        %v4674 = vld [vmem:[%s4673] sm:$0x1]
        %s4675 = scalar_lea.vmem %s33, 1
        %v4676 = vld [vmem:[%s4675] sm:$0x1]
        %v4678 = vlaneseq
        %v4679 = vshrl.u32 %v4678, 7
        %v4680 = vsub.s32 0, %v4679
        %v4681 = vrot.slane %v4674, %v4680
        %v4683 = vmul.f32 %v3019, %v4681
        %v4684 = vmul.f32 %v3020, %v4681
        %v4685 = vmul.f32 %v3021, %v4681
        %v4686 = vmul.f32 %v3022, %v4681
        %v4688 = vlaneseq
        %v4689 = vshrl.u32 %v4688, 7
        %v4690 = vsub.s32 0, %v4689
        %v4691 = vrot.slane %v4676, %v4690
        %v4693 = vadd.f32 %v4683, %v4691
        %v4694 = vadd.f32 %v4684, %v4691
        %v4695 = vadd.f32 %v4685, %v4691
        %v4696 = vadd.f32 %v4686, %v4691
        %s4697 = scalar_lea.vmem %s35, 96
        %v4698 = vld [vmem:[%s4697] sm:$0xff]
        %v4699 = vld [vmem:[%s4697 + $0x8] sm:$0xff]
        %v4700 = vld [vmem:[%s4697 + $0x10] sm:$0xff]
        %v4701 = vld [vmem:[%s4697 + $0x18] sm:$0xff]
        %v4702 = vld [vmem:[%s4697 + $0x20] sm:$0xff]
        %v4703 = vld [vmem:[%s4697 + $0x28] sm:$0xff]
        %v4704 = vld [vmem:[%s4697 + $0x30] sm:$0xff]
        %v4705 = vld [vmem:[%s4697 + $0x38] sm:$0xff]
        %v4706 = vld [vmem:[%s4697 + $0x40] sm:$0xff]
        %v4707 = vld [vmem:[%s4697 + $0x48] sm:$0xff]
        %v4708 = vld [vmem:[%s4697 + $0x50] sm:$0xff]
        %v4709 = vld [vmem:[%s4697 + $0x58] sm:$0xff]
        %s4710 = scalar_lea.vmem %s37, 1
        %v4711 = vld [vmem:[%s4710] sm:$0x1]
        %s4712 = scalar_lea.vmem %s39, 192
        %v4713 = vld [vmem:[%s4712] sm:$0xff]
        %v4714 = vld [vmem:[%s4712 + $0x8] sm:$0xff]
        %v4715 = vld [vmem:[%s4712 + $0x10] sm:$0xff]
        %v4716 = vld [vmem:[%s4712 + $0x18] sm:$0xff]
        %v4717 = vld [vmem:[%s4712 + $0x20] sm:$0xff]
        %v4718 = vld [vmem:[%s4712 + $0x28] sm:$0xff]
        %v4719 = vld [vmem:[%s4712 + $0x30] sm:$0xff]
        %v4720 = vld [vmem:[%s4712 + $0x38] sm:$0xff]
        %v4721 = vld [vmem:[%s4712 + $0x40] sm:$0xff]
        %v4722 = vld [vmem:[%s4712 + $0x48] sm:$0xff]
        %v4723 = vld [vmem:[%s4712 + $0x50] sm:$0xff]
        %v4724 = vld [vmem:[%s4712 + $0x58] sm:$0xff]
        %v4725 = vld [vmem:[%s4712 + $0x60] sm:$0xff]
        %v4726 = vld [vmem:[%s4712 + $0x68] sm:$0xff]
        %v4727 = vld [vmem:[%s4712 + $0x70] sm:$0xff]
        %v4728 = vld [vmem:[%s4712 + $0x78] sm:$0xff]
        %v4729 = vld [vmem:[%s4712 + $0x80] sm:$0xff]
        %v4730 = vld [vmem:[%s4712 + $0x88] sm:$0xff]
        %v4731 = vld [vmem:[%s4712 + $0x90] sm:$0xff]
        %v4732 = vld [vmem:[%s4712 + $0x98] sm:$0xff]
        %v4733 = vld [vmem:[%s4712 + $0xa0] sm:$0xff]
        %v4734 = vld [vmem:[%s4712 + $0xa8] sm:$0xff]
        %v4735 = vld [vmem:[%s4712 + $0xb0] sm:$0xff]
        %v4736 = vld [vmem:[%s4712 + $0xb8] sm:$0xff]
        %s4737 = scalar_lea.vmem %s41, 2
        %v4738 = vld [vmem:[%s4737] sm:$0x3]
        %s4739 = scalar_lea.vmem %s43, 96
        %v4740 = vld [vmem:[%s4739] sm:$0xff]
        %v4741 = vld [vmem:[%s4739 + $0x8] sm:$0xff]
        %v4742 = vld [vmem:[%s4739 + $0x10] sm:$0xff]
        %v4743 = vld [vmem:[%s4739 + $0x18] sm:$0xff]
        %v4744 = vld [vmem:[%s4739 + $0x20] sm:$0xff]
        %v4745 = vld [vmem:[%s4739 + $0x28] sm:$0xff]
        %v4746 = vld [vmem:[%s4739 + $0x30] sm:$0xff]
        %v4747 = vld [vmem:[%s4739 + $0x38] sm:$0xff]
        %v4748 = vld [vmem:[%s4739 + $0x40] sm:$0xff]
        %v4749 = vld [vmem:[%s4739 + $0x48] sm:$0xff]
        %v4750 = vld [vmem:[%s4739 + $0x50] sm:$0xff]
        %v4751 = vld [vmem:[%s4739 + $0x58] sm:$0xff]
        %s4752 = scalar_lea.vmem %s45, 1
        %v4753 = vld [vmem:[%s4752] sm:$0x1]
        %v4754 = vpack.c.bf16 %v4672, %v4671
        %v4755 = vpack.c.bf16 %v4699, %v4698
        %v4756 = vpack.c.bf16 %v4701, %v4700
        %v4757 = vpack.c.bf16 %v4703, %v4702
        %v4758 = vpack.c.bf16 %v4705, %v4704
        %v4759 = vpack.c.bf16 %v4707, %v4706
        %v4760 = vpack.c.bf16 %v4709, %v4708
        %v4762 = vlaneseq
        %v4763 = vshrl.u32 %v4762, 7
        %v4764 = vsub.s32 0, %v4763
        %v4765 = vrot.slane %v4711, %v4764
        %v4768 = vsel %vm1025, %v4754, 0
        %4770 = vmatprep.subr.bf16.mxu0 0
        %4771 = vmatpush1.bf16.msra.mxu0 %v4755
        %4772 = vmatprep.subr.bf16.mxu0 0
        %4773 = vmatpush1.bf16.msra.mxu0 %v4756
        %4774 = vmatprep.subr.bf16.mxu0 0
        %4775 = vmatpush1.bf16.msra.mxu0 %v4757
        %4776 = vmatprep.subr.bf16.mxu0 0
        %4777 = vmatpush1.bf16.msra.mxu0 %v4758
        %4778 = vmatprep.subr.bf16.mxu0 0
        %4779 = vmatpush1.bf16.msra.mxu0 %v4759
        %4780 = vmatprep.subr.bf16.mxu0 0
        %4781 = vmatpush1.bf16.msra.mxu0 %v4760
        %4782 = vmatprep.subr.bf16.mxu0 0
        %4783 = vmatpush1.bf16.msra.mxu0 0
        %4784 = vmatprep.subr.bf16.mxu0 0
        %4785 = vmatpush1.bf16.msra.mxu0 0
        %4786 = vmatprep.subr.bf16.mxu0 0
        %4787 = vmatpush1.bf16.msra.mxu0 0
        %4788 = vmatprep.subr.bf16.mxu0 0
        %4789 = vmatpush1.bf16.msra.mxu0 0
        %4790 = vmatprep.subr.bf16.mxu0 0
        %4791 = vmatpush1.bf16.msra.mxu0 0
        %4792 = vmatprep.subr.bf16.mxu0 0
        %4793 = vmatpush1.bf16.msra.mxu0 0
        %4794 = vmatprep.subr.bf16.mxu0 0
        %4795 = vmatpush1.bf16.msra.mxu0 0
        %4796 = vmatprep.subr.bf16.mxu0 0
        %4797 = vmatpush1.bf16.msra.mxu0 0
        %4798 = vmatprep.subr.bf16.mxu0 0
        %4799 = vmatpush1.bf16.msra.mxu0 0
        %4800 = vmatprep.subr.bf16.mxu0 0
        %4801 = vmatpush1.bf16.msra.mxu0 0
        %4802 = vmatprep.mubr.bf16.mxu0 0
        %4803 = vmatmul.mubr.bf16.gmra.mrb[0].mxu0 %v4768
        %v4804 = vpop.f32.mrb[0].mxu0
        %v4805 = vadd.f32 %v4765, %v4804
        %v4806 = vpop.f32.mrb[0].mxu0
        %v4807 = vpop.f32.mrb[0].mxu0
        %v4808 = vadd.f32 %v4765, %v4807
        %v4809 = vpop.f32.mrb[0].mxu0
        %4810 = vdwg.mxu0
        %v4811 = vpack.c.bf16 %v4694, %v4693
        %v4812 = vpack.c.bf16 %v4696, %v4695
        %v4813 = vpack.c.bf16 %v4715, %v4713
        %v4814 = vpack.c.bf16 %v4716, %v4714
        %v4815 = vpack.c.bf16 %v4719, %v4717
        %v4816 = vpack.c.bf16 %v4720, %v4718
        %v4817 = vpack.c.bf16 %v4723, %v4721
        %v4818 = vpack.c.bf16 %v4724, %v4722
        %v4819 = vpack.c.bf16 %v4727, %v4725
        %v4820 = vpack.c.bf16 %v4728, %v4726
        %v4821 = vpack.c.bf16 %v4731, %v4729
        %v4822 = vpack.c.bf16 %v4732, %v4730
        %v4823 = vpack.c.bf16 %v4735, %v4733
        %v4824 = vpack.c.bf16 %v4736, %v4734
        %v4826 = vlaneseq
        %v4827 = vshrl.u32 %v4826, 7
        %v4828 = vsub.s32 0, %v4827
        %v4829 = vrot.slane %v4738, %v4828
        %v4830 = vlaneseq
        %v4831 = vshrl.u32 %v4830, 7
        %v4832 = vsub.s32 1, %v4831
        %v4833 = vrot.slane %v4738, %v4832
        %v4837 = vsel %vm1025, %v4811, 0
        %v4840 = vsel %vm1025, %v4812, 0
        %4842 = vmatprep.subr.bf16.mxu0 %v4814
        %4843 = vmatpush1.bf16.msra.mxu0 %v4813
        %4844 = vmatprep.subr.bf16.mxu0 %v4816
        %4845 = vmatpush1.bf16.msra.mxu0 %v4815
        %4846 = vmatprep.subr.bf16.mxu0 %v4818
        %4847 = vmatpush1.bf16.msra.mxu0 %v4817
        %4848 = vmatprep.subr.bf16.mxu0 %v4820
        %4849 = vmatpush1.bf16.msra.mxu0 %v4819
        %4850 = vmatprep.subr.bf16.mxu0 %v4822
        %4851 = vmatpush1.bf16.msra.mxu0 %v4821
        %4852 = vmatprep.subr.bf16.mxu0 %v4824
        %4853 = vmatpush1.bf16.msra.mxu0 %v4823
        %4854 = vmatprep.subr.bf16.mxu0 0
        %4855 = vmatpush1.bf16.msra.mxu0 0
        %4856 = vmatprep.subr.bf16.mxu0 0
        %4857 = vmatpush1.bf16.msra.mxu0 0
        %4858 = vmatprep.subr.bf16.mxu0 0
        %4859 = vmatpush1.bf16.msra.mxu0 0
        %4860 = vmatprep.subr.bf16.mxu0 0
        %4861 = vmatpush1.bf16.msra.mxu0 0
        %4862 = vmatprep.subr.bf16.mxu0 0
        %4863 = vmatpush1.bf16.msra.mxu0 0
        %4864 = vmatprep.subr.bf16.mxu0 0
        %4865 = vmatpush1.bf16.msra.mxu0 0
        %4866 = vmatprep.subr.bf16.mxu0 0
        %4867 = vmatpush1.bf16.msra.mxu0 0
        %4868 = vmatprep.subr.bf16.mxu0 0
        %4869 = vmatpush1.bf16.msra.mxu0 0
        %4870 = vmatprep.subr.bf16.mxu0 0
        %4871 = vmatpush1.bf16.msra.mxu0 0
        %4872 = vmatprep.subr.bf16.mxu0 0
        %4873 = vmatpush1.bf16.msra.mxu0 0
        %4874 = vmatprep.mubr.bf16.mxu0 0
        %4875 = vmatmul.mubr.bf16.gmra.mrb[0].mxu0 %v4837
        %v4876 = vpop.f32.mrb[0].mxu0
        %v4877 = vadd.f32 %v4829, %v4876
        %v4878 = vpop.f32.mrb[0].mxu0
        %v4879 = vadd.f32 %v4833, %v4878
        %v4880 = vpop.f32.mrb[0].mxu0
        %v4881 = vadd.f32 %v4829, %v4880
        %v4882 = vpop.f32.mrb[0].mxu0
        %v4883 = vadd.f32 %v4833, %v4882
        %4884 = vmatprep.mubr.bf16.mxu0 0
        %4885 = vmatmul.mubr.bf16.gmra.mrb[0].mxu0 %v4840
        %v4886 = vpop.f32.mrb[0].mxu0
        %v4887 = vadd.f32 %v4829, %v4886
        %v4888 = vpop.f32.mrb[0].mxu0
        %v4889 = vadd.f32 %v4833, %v4888
        %v4890 = vpop.f32.mrb[0].mxu0
        %v4891 = vadd.f32 %v4829, %v4890
        %v4892 = vpop.f32.mrb[0].mxu0
        %v4893 = vadd.f32 %v4833, %v4892
        %4894 = vdwg.mxu0
        %v4895 = vpack.c.bf16 %v4808, %v4805
        %v4896 = vpack.c.bf16 %v4881, %v4877
        %v4897 = vpack.c.bf16 %v4891, %v4887
        %v4899 = vsel %vm1399, %v4895, 0
        %v4902 = vsel %vm1399, %v4896, 0
        %v4905 = vsel %vm1399, %v4897, 0
        %4907 = vmatprep.subr.bf16.mxu0 0
        %4908 = vmatpush1.bf16.xpose.msra.mxu0 %v4902
        %4909 = vmatprep.subr.bf16.mxu0 0
        %4910 = vmatpush1.bf16.xpose.msra.mxu0 %v4905
        %4911 = vmatprep.subr.bf16.mxu0 0
        %4912 = vmatpush1.bf16.xpose.msra.mxu0 0
        %4913 = vmatprep.subr.bf16.mxu0 0
        %4914 = vmatpush1.bf16.xpose.msra.mxu0 0
        %4915 = vmatprep.subr.bf16.mxu0 0
        %4916 = vmatpush1.bf16.xpose.msra.mxu0 0
        %4917 = vmatprep.subr.bf16.mxu0 0
        %4918 = vmatpush1.bf16.xpose.msra.mxu0 0
        %4919 = vmatprep.subr.bf16.mxu0 0
        %4920 = vmatpush1.bf16.xpose.msra.mxu0 0
        %4921 = vmatprep.subr.bf16.mxu0 0
        %4922 = vmatpush1.bf16.xpose.msra.mxu0 0
        %4923 = vmatprep.subr.bf16.mxu0 0
        %4924 = vmatpush1.bf16.xpose.msra.mxu0 0
        %4925 = vmatprep.subr.bf16.mxu0 0
        %4926 = vmatpush1.bf16.xpose.msra.mxu0 0
        %4927 = vmatprep.subr.bf16.mxu0 0
        %4928 = vmatpush1.bf16.xpose.msra.mxu0 0
        %4929 = vmatprep.subr.bf16.mxu0 0
        %4930 = vmatpush1.bf16.xpose.msra.mxu0 0
        %4931 = vmatprep.subr.bf16.mxu0 0
        %4932 = vmatpush1.bf16.xpose.msra.mxu0 0
        %4933 = vmatprep.subr.bf16.mxu0 0
        %4934 = vmatpush1.bf16.xpose.msra.mxu0 0
        %4935 = vmatprep.subr.bf16.mxu0 0
        %4936 = vmatpush1.bf16.xpose.msra.mxu0 0
        %4937 = vmatprep.subr.bf16.mxu0 0
        %4938 = vmatpush1.bf16.xpose.msra.mxu0 0
        %4939 = vmatprep.mubr.bf16.mxu0 0
        %4940 = vmatmul.mubr.bf16.gmra.mrb[0].mxu0 %v4899
        %v4941 = vpop.f32.mrb[0].mxu0
        %v4942 = vadd.f32 0.0, %v4941
        %v4943 = vpop.f32.mrb[0].mxu0
        %v4944 = vpop.f32.mrb[0].mxu0
        %v4945 = vadd.f32 0.0, %v4944
        %v4946 = vpop.f32.mrb[0].mxu0
        %4947 = vdwg.mxu0
        %v4948 = vmul.f32 %v4942, 0.25
        %v4949 = vmul.f32 %v4945, 0.25
        %v4950 = vsel %vm3290, %v4948, -inf
        %4951 = vmax.xlane.f32.xlu0 %v4950
        %v4952 = vpop.xlane.xlu0 %4951
        %v4953 = vsel %vm3290, %v4949, -inf
        %4954 = vmax.xlane.f32.xlu0 %v4953
        %v4955 = vpop.xlane.xlu0 %4954
        %v4956 = vsub.f32 %v4948, %v4952
        %v4957 = vsub.f32 %v4949, %v4955
        %v4958 = vmul.f32 %v4956, 1.442695
        %v4959 = vpow.pop %v4958
        %v4960 = vmul.f32 %v4957, 1.442695
        %v4961 = vpow.pop %v4960
        %v4962 = vsel %vm3290, %v4959, 0.0
        %4963 = vadd.xlane.f32.xlu0 %v4962
        %v4964 = vpop.xlane.xlu0 %4963
        %v4965 = vsel %vm3290, %v4961, 0.0
        %4966 = vadd.xlane.f32.xlu0 %v4965
        %v4967 = vpop.xlane.xlu0 %4966
        %v4968 = vrcp.pop %v4964
        %v4969 = vrcp.pop %v4967
        %v4970 = vmul.f32 %v4959, %v4968
        %v4971 = vmul.f32 %v4961, %v4969
        %v4972 = vpack.c.bf16 %v4971, %v4970
        %4975 = vrot.lane.b32.xlu0 %v4896, 32
        %v4976 = vpop.permute.xlu0 %4975
        %4977 = vrot.lane.b32.xlu0 %v4897, 32
        %v4978 = vpop.permute.xlu0 %4977
        %v4982 = vsel %vm3290, %v4972, 0
        %4984 = vmatprep.subr.bf16.mxu0 0
        %4985 = vmatpush1.bf16.msra.mxu0 %v4976
        %4986 = vmatprep.subr.bf16.mxu0 0
        %4987 = vmatpush1.bf16.msra.mxu0 %v4978
        %4988 = vmatprep.subr.bf16.mxu0 0
        %4989 = vmatpush1.bf16.msra.mxu0 0
        %4990 = vmatprep.subr.bf16.mxu0 0
        %4991 = vmatpush1.bf16.msra.mxu0 0
        %4992 = vmatprep.subr.bf16.mxu0 0
        %4993 = vmatpush1.bf16.msra.mxu0 0
        %4994 = vmatprep.subr.bf16.mxu0 0
        %4995 = vmatpush1.bf16.msra.mxu0 0
        %4996 = vmatprep.subr.bf16.mxu0 0
        %4997 = vmatpush1.bf16.msra.mxu0 0
        %4998 = vmatprep.subr.bf16.mxu0 0
        %4999 = vmatpush1.bf16.msra.mxu0 0
        %5000 = vmatprep.subr.bf16.mxu0 0
        %5001 = vmatpush1.bf16.msra.mxu0 0
        %5002 = vmatprep.subr.bf16.mxu0 0
        %5003 = vmatpush1.bf16.msra.mxu0 0
        %5004 = vmatprep.subr.bf16.mxu0 0
        %5005 = vmatpush1.bf16.msra.mxu0 0
        %5006 = vmatprep.subr.bf16.mxu0 0
        %5007 = vmatpush1.bf16.msra.mxu0 0
        %5008 = vmatprep.subr.bf16.mxu0 0
        %5009 = vmatpush1.bf16.msra.mxu0 0
        %5010 = vmatprep.subr.bf16.mxu0 0
        %5011 = vmatpush1.bf16.msra.mxu0 0
        %5012 = vmatprep.subr.bf16.mxu0 0
        %5013 = vmatpush1.bf16.msra.mxu0 0
        %5014 = vmatprep.subr.bf16.mxu0 0
        %5015 = vmatpush1.bf16.msra.mxu0 0
        %5016 = vmatprep.mubr.bf16.mxu0 0
        %5017 = vmatmul.mubr.bf16.gmra.mrb[0].mxu0 %v4982
        %v5018 = vpop.f32.mrb[0].mxu0
        %v5019 = vadd.f32 0.0, %v5018
        %v5020 = vpop.f32.mrb[0].mxu0
        %v5021 = vpop.f32.mrb[0].mxu0
        %v5022 = vadd.f32 0.0, %v5021
        %v5023 = vpop.f32.mrb[0].mxu0
        %5024 = vdwg.mxu0
        %5026 = vrot.lane.b32.xlu0 %v4895, 112
        %v5027 = vpop.permute.xlu0 %5026
        %5028 = vrot.lane.b32.xlu0 %v4896, 112
        %v5029 = vpop.permute.xlu0 %5028
        %5030 = vrot.lane.b32.xlu0 %v4897, 112
        %v5031 = vpop.permute.xlu0 %5030
        %v5033 = vsel %vm1399, %v5027, 0
        %v5036 = vsel %vm1399, %v5029, 0
        %v5039 = vsel %vm1399, %v5031, 0
        %5041 = vmatprep.subr.bf16.mxu0 0
        %5042 = vmatpush1.bf16.xpose.msra.mxu0 %v5036
        %5043 = vmatprep.subr.bf16.mxu0 0
        %5044 = vmatpush1.bf16.xpose.msra.mxu0 %v5039
        %5045 = vmatprep.subr.bf16.mxu0 0
        %5046 = vmatpush1.bf16.xpose.msra.mxu0 0
        %5047 = vmatprep.subr.bf16.mxu0 0
        %5048 = vmatpush1.bf16.xpose.msra.mxu0 0
        %5049 = vmatprep.subr.bf16.mxu0 0
        %5050 = vmatpush1.bf16.xpose.msra.mxu0 0
        %5051 = vmatprep.subr.bf16.mxu0 0
        %5052 = vmatpush1.bf16.xpose.msra.mxu0 0
        %5053 = vmatprep.subr.bf16.mxu0 0
        %5054 = vmatpush1.bf16.xpose.msra.mxu0 0
        %5055 = vmatprep.subr.bf16.mxu0 0
        %5056 = vmatpush1.bf16.xpose.msra.mxu0 0
        %5057 = vmatprep.subr.bf16.mxu0 0
        %5058 = vmatpush1.bf16.xpose.msra.mxu0 0
        %5059 = vmatprep.subr.bf16.mxu0 0
        %5060 = vmatpush1.bf16.xpose.msra.mxu0 0
        %5061 = vmatprep.subr.bf16.mxu0 0
        %5062 = vmatpush1.bf16.xpose.msra.mxu0 0
        %5063 = vmatprep.subr.bf16.mxu0 0
        %5064 = vmatpush1.bf16.xpose.msra.mxu0 0
        %5065 = vmatprep.subr.bf16.mxu0 0
        %5066 = vmatpush1.bf16.xpose.msra.mxu0 0
        %5067 = vmatprep.subr.bf16.mxu0 0
        %5068 = vmatpush1.bf16.xpose.msra.mxu0 0
        %5069 = vmatprep.subr.bf16.mxu0 0
        %5070 = vmatpush1.bf16.xpose.msra.mxu0 0
        %5071 = vmatprep.subr.bf16.mxu0 0
        %5072 = vmatpush1.bf16.xpose.msra.mxu0 0
        %5073 = vmatprep.mubr.bf16.mxu0 0
        %5074 = vmatmul.mubr.bf16.gmra.mrb[0].mxu0 %v5033
        %v5075 = vpop.f32.mrb[0].mxu0
        %v5076 = vadd.f32 0.0, %v5075
        %v5077 = vpop.f32.mrb[0].mxu0
        %v5078 = vpop.f32.mrb[0].mxu0
        %v5079 = vadd.f32 0.0, %v5078
        %v5080 = vpop.f32.mrb[0].mxu0
        %5081 = vdwg.mxu0
        %v5082 = vmul.f32 %v5076, 0.25
        %v5083 = vmul.f32 %v5079, 0.25
        %v5084 = vsel %vm3290, %v5082, -inf
        %5085 = vmax.xlane.f32.xlu0 %v5084
        %v5086 = vpop.xlane.xlu0 %5085
        %v5087 = vsel %vm3290, %v5083, -inf
        %5088 = vmax.xlane.f32.xlu0 %v5087
        %v5089 = vpop.xlane.xlu0 %5088
        %v5090 = vsub.f32 %v5082, %v5086
        %v5091 = vsub.f32 %v5083, %v5089
        %v5092 = vmul.f32 %v5090, 1.442695
        %v5093 = vpow.pop %v5092
        %v5094 = vmul.f32 %v5091, 1.442695
        %v5095 = vpow.pop %v5094
        %v5096 = vsel %vm3290, %v5093, 0.0
        %5097 = vadd.xlane.f32.xlu0 %v5096
        %v5098 = vpop.xlane.xlu0 %5097
        %v5099 = vsel %vm3290, %v5095, 0.0
        %5100 = vadd.xlane.f32.xlu0 %v5099
        %v5101 = vpop.xlane.xlu0 %5100
        %v5102 = vrcp.pop %v5098
        %v5103 = vrcp.pop %v5101
        %v5104 = vmul.f32 %v5093, %v5102
        %v5105 = vmul.f32 %v5095, %v5103
        %v5106 = vpack.c.bf16 %v5105, %v5104
        %5107 = vrot.lane.b32.xlu0 %v4896, 16
        %v5108 = vpop.permute.xlu0 %5107
        %5109 = vrot.lane.b32.xlu0 %v4897, 16
        %v5110 = vpop.permute.xlu0 %5109
        %v5114 = vsel %vm3290, %v5106, 0
        %5116 = vmatprep.subr.bf16.mxu0 0
        %5117 = vmatpush1.bf16.msra.mxu0 %v5108
        %5118 = vmatprep.subr.bf16.mxu0 0
        %5119 = vmatpush1.bf16.msra.mxu0 %v5110
        %5120 = vmatprep.subr.bf16.mxu0 0
        %5121 = vmatpush1.bf16.msra.mxu0 0
        %5122 = vmatprep.subr.bf16.mxu0 0
        %5123 = vmatpush1.bf16.msra.mxu0 0
        %5124 = vmatprep.subr.bf16.mxu0 0
        %5125 = vmatpush1.bf16.msra.mxu0 0
        %5126 = vmatprep.subr.bf16.mxu0 0
        %5127 = vmatpush1.bf16.msra.mxu0 0
        %5128 = vmatprep.subr.bf16.mxu0 0
        %5129 = vmatpush1.bf16.msra.mxu0 0
        %5130 = vmatprep.subr.bf16.mxu0 0
        %5131 = vmatpush1.bf16.msra.mxu0 0
        %5132 = vmatprep.subr.bf16.mxu0 0
        %5133 = vmatpush1.bf16.msra.mxu0 0
        %5134 = vmatprep.subr.bf16.mxu0 0
        %5135 = vmatpush1.bf16.msra.mxu0 0
        %5136 = vmatprep.subr.bf16.mxu0 0
        %5137 = vmatpush1.bf16.msra.mxu0 0
        %5138 = vmatprep.subr.bf16.mxu0 0
        %5139 = vmatpush1.bf16.msra.mxu0 0
        %5140 = vmatprep.subr.bf16.mxu0 0
        %5141 = vmatpush1.bf16.msra.mxu0 0
        %5142 = vmatprep.subr.bf16.mxu0 0
        %5143 = vmatpush1.bf16.msra.mxu0 0
        %5144 = vmatprep.subr.bf16.mxu0 0
        %5145 = vmatpush1.bf16.msra.mxu0 0
        %5146 = vmatprep.subr.bf16.mxu0 0
        %5147 = vmatpush1.bf16.msra.mxu0 0
        %5148 = vmatprep.mubr.bf16.mxu0 0
        %5149 = vmatmul.mubr.bf16.gmra.mrb[0].mxu0 %v5114
        %v5150 = vpop.f32.mrb[0].mxu0
        %v5151 = vadd.f32 0.0, %v5150
        %v5152 = vpop.f32.mrb[0].mxu0
        %v5153 = vpop.f32.mrb[0].mxu0
        %v5154 = vadd.f32 0.0, %v5153
        %v5155 = vpop.f32.mrb[0].mxu0
        %5156 = vdwg.mxu0
        %5157 = vrot.lane.b32.xlu0 %v4895, 96
        %v5158 = vpop.permute.xlu0 %5157
        %5159 = vrot.lane.b32.xlu0 %v4896, 96
        %v5160 = vpop.permute.xlu0 %5159
        %5161 = vrot.lane.b32.xlu0 %v4897, 96
        %v5162 = vpop.permute.xlu0 %5161
        %v5164 = vsel %vm1399, %v5158, 0
        %v5167 = vsel %vm1399, %v5160, 0
        %v5170 = vsel %vm1399, %v5162, 0
        %5172 = vmatprep.subr.bf16.mxu0 0
        %5173 = vmatpush1.bf16.xpose.msra.mxu0 %v5167
        %5174 = vmatprep.subr.bf16.mxu0 0
        %5175 = vmatpush1.bf16.xpose.msra.mxu0 %v5170
        %5176 = vmatprep.subr.bf16.mxu0 0
        %5177 = vmatpush1.bf16.xpose.msra.mxu0 0
        %5178 = vmatprep.subr.bf16.mxu0 0
        %5179 = vmatpush1.bf16.xpose.msra.mxu0 0
        %5180 = vmatprep.subr.bf16.mxu0 0
        %5181 = vmatpush1.bf16.xpose.msra.mxu0 0
        %5182 = vmatprep.subr.bf16.mxu0 0
        %5183 = vmatpush1.bf16.xpose.msra.mxu0 0
        %5184 = vmatprep.subr.bf16.mxu0 0
        %5185 = vmatpush1.bf16.xpose.msra.mxu0 0
        %5186 = vmatprep.subr.bf16.mxu0 0
        %5187 = vmatpush1.bf16.xpose.msra.mxu0 0
        %5188 = vmatprep.subr.bf16.mxu0 0
        %5189 = vmatpush1.bf16.xpose.msra.mxu0 0
        %5190 = vmatprep.subr.bf16.mxu0 0
        %5191 = vmatpush1.bf16.xpose.msra.mxu0 0
        %5192 = vmatprep.subr.bf16.mxu0 0
        %5193 = vmatpush1.bf16.xpose.msra.mxu0 0
        %5194 = vmatprep.subr.bf16.mxu0 0
        %5195 = vmatpush1.bf16.xpose.msra.mxu0 0
        %5196 = vmatprep.subr.bf16.mxu0 0
        %5197 = vmatpush1.bf16.xpose.msra.mxu0 0
        %5198 = vmatprep.subr.bf16.mxu0 0
        %5199 = vmatpush1.bf16.xpose.msra.mxu0 0
        %5200 = vmatprep.subr.bf16.mxu0 0
        %5201 = vmatpush1.bf16.xpose.msra.mxu0 0
        %5202 = vmatprep.subr.bf16.mxu0 0
        %5203 = vmatpush1.bf16.xpose.msra.mxu0 0
        %5204 = vmatprep.mubr.bf16.mxu0 0
        %5205 = vmatmul.mubr.bf16.gmra.mrb[0].mxu0 %v5164
        %v5206 = vpop.f32.mrb[0].mxu0
        %v5207 = vadd.f32 0.0, %v5206
        %v5208 = vpop.f32.mrb[0].mxu0
        %v5209 = vpop.f32.mrb[0].mxu0
        %v5210 = vadd.f32 0.0, %v5209
        %v5211 = vpop.f32.mrb[0].mxu0
        %5212 = vdwg.mxu0
        %v5213 = vmul.f32 %v5207, 0.25
        %v5214 = vmul.f32 %v5210, 0.25
        %v5215 = vsel %vm3290, %v5213, -inf
        %5216 = vmax.xlane.f32.xlu0 %v5215
        %v5217 = vpop.xlane.xlu0 %5216
        %v5218 = vsel %vm3290, %v5214, -inf
        %5219 = vmax.xlane.f32.xlu0 %v5218
        %v5220 = vpop.xlane.xlu0 %5219
        %v5221 = vsub.f32 %v5213, %v5217
        %v5222 = vsub.f32 %v5214, %v5220
        %v5223 = vmul.f32 %v5221, 1.442695
        %v5224 = vpow.pop %v5223
        %v5225 = vmul.f32 %v5222, 1.442695
        %v5226 = vpow.pop %v5225
        %v5227 = vsel %vm3290, %v5224, 0.0
        %5228 = vadd.xlane.f32.xlu0 %v5227
        %v5229 = vpop.xlane.xlu0 %5228
        %v5230 = vsel %vm3290, %v5226, 0.0
        %5231 = vadd.xlane.f32.xlu0 %v5230
        %v5232 = vpop.xlane.xlu0 %5231
        %v5233 = vrcp.pop %v5229
        %v5234 = vrcp.pop %v5232
        %v5235 = vmul.f32 %v5224, %v5233
        %v5236 = vmul.f32 %v5226, %v5234
        %v5237 = vpack.c.bf16 %v5236, %v5235
        %v5238 = vpack.c.bf16 %v4883, %v4879
        %v5239 = vpack.c.bf16 %v4893, %v4889
        %v5241 = vsel %vm3290, %v5237, 0
        %5243 = vmatprep.subr.bf16.mxu0 0
        %5244 = vmatpush1.bf16.msra.mxu0 %v5238
        %5245 = vmatprep.subr.bf16.mxu0 0
        %5246 = vmatpush1.bf16.msra.mxu0 %v5239
        %5247 = vmatprep.subr.bf16.mxu0 0
        %5248 = vmatpush1.bf16.msra.mxu0 0
        %5249 = vmatprep.subr.bf16.mxu0 0
        %5250 = vmatpush1.bf16.msra.mxu0 0
        %5251 = vmatprep.subr.bf16.mxu0 0
        %5252 = vmatpush1.bf16.msra.mxu0 0
        %5253 = vmatprep.subr.bf16.mxu0 0
        %5254 = vmatpush1.bf16.msra.mxu0 0
        %5255 = vmatprep.subr.bf16.mxu0 0
        %5256 = vmatpush1.bf16.msra.mxu0 0
        %5257 = vmatprep.subr.bf16.mxu0 0
        %5258 = vmatpush1.bf16.msra.mxu0 0
        %5259 = vmatprep.subr.bf16.mxu0 0
        %5260 = vmatpush1.bf16.msra.mxu0 0
        %5261 = vmatprep.subr.bf16.mxu0 0
        %5262 = vmatpush1.bf16.msra.mxu0 0
        %5263 = vmatprep.subr.bf16.mxu0 0
        %5264 = vmatpush1.bf16.msra.mxu0 0
        %5265 = vmatprep.subr.bf16.mxu0 0
        %5266 = vmatpush1.bf16.msra.mxu0 0
        %5267 = vmatprep.subr.bf16.mxu0 0
        %5268 = vmatpush1.bf16.msra.mxu0 0
        %5269 = vmatprep.subr.bf16.mxu0 0
        %5270 = vmatpush1.bf16.msra.mxu0 0
        %5271 = vmatprep.subr.bf16.mxu0 0
        %5272 = vmatpush1.bf16.msra.mxu0 0
        %5273 = vmatprep.subr.bf16.mxu0 0
        %5274 = vmatpush1.bf16.msra.mxu0 0
        %5275 = vmatprep.mubr.bf16.mxu0 0
        %5276 = vmatmul.mubr.bf16.gmra.mrb[0].mxu0 %v5241
        %v5277 = vpop.f32.mrb[0].mxu0
        %v5278 = vadd.f32 0.0, %v5277
        %v5279 = vpop.f32.mrb[0].mxu0
        %v5280 = vpop.f32.mrb[0].mxu0
        %v5281 = vadd.f32 0.0, %v5280
        %v5282 = vpop.f32.mrb[0].mxu0
        %5283 = vdwg.mxu0
        %5284 = vrot.lane.b32.xlu0 %v4895, 80
        %v5285 = vpop.permute.xlu0 %5284
        %5286 = vrot.lane.b32.xlu0 %v4896, 80
        %v5287 = vpop.permute.xlu0 %5286
        %5288 = vrot.lane.b32.xlu0 %v4897, 80
        %v5289 = vpop.permute.xlu0 %5288
        %v5291 = vsel %vm1399, %v5285, 0
        %v5294 = vsel %vm1399, %v5287, 0
        %v5297 = vsel %vm1399, %v5289, 0
        %5299 = vmatprep.subr.bf16.mxu0 0
        %5300 = vmatpush1.bf16.xpose.msra.mxu0 %v5294
        %5301 = vmatprep.subr.bf16.mxu0 0
        %5302 = vmatpush1.bf16.xpose.msra.mxu0 %v5297
        %5303 = vmatprep.subr.bf16.mxu0 0
        %5304 = vmatpush1.bf16.xpose.msra.mxu0 0
        %5305 = vmatprep.subr.bf16.mxu0 0
        %5306 = vmatpush1.bf16.xpose.msra.mxu0 0
        %5307 = vmatprep.subr.bf16.mxu0 0
        %5308 = vmatpush1.bf16.xpose.msra.mxu0 0
        %5309 = vmatprep.subr.bf16.mxu0 0
        %5310 = vmatpush1.bf16.xpose.msra.mxu0 0
        %5311 = vmatprep.subr.bf16.mxu0 0
        %5312 = vmatpush1.bf16.xpose.msra.mxu0 0
        %5313 = vmatprep.subr.bf16.mxu0 0
        %5314 = vmatpush1.bf16.xpose.msra.mxu0 0
        %5315 = vmatprep.subr.bf16.mxu0 0
        %5316 = vmatpush1.bf16.xpose.msra.mxu0 0
        %5317 = vmatprep.subr.bf16.mxu0 0
        %5318 = vmatpush1.bf16.xpose.msra.mxu0 0
        %5319 = vmatprep.subr.bf16.mxu0 0
        %5320 = vmatpush1.bf16.xpose.msra.mxu0 0
        %5321 = vmatprep.subr.bf16.mxu0 0
        %5322 = vmatpush1.bf16.xpose.msra.mxu0 0
        %5323 = vmatprep.subr.bf16.mxu0 0
        %5324 = vmatpush1.bf16.xpose.msra.mxu0 0
        %5325 = vmatprep.subr.bf16.mxu0 0
        %5326 = vmatpush1.bf16.xpose.msra.mxu0 0
        %5327 = vmatprep.subr.bf16.mxu0 0
        %5328 = vmatpush1.bf16.xpose.msra.mxu0 0
        %5329 = vmatprep.subr.bf16.mxu0 0
        %5330 = vmatpush1.bf16.xpose.msra.mxu0 0
        %5331 = vmatprep.mubr.bf16.mxu0 0
        %5332 = vmatmul.mubr.bf16.gmra.mrb[0].mxu0 %v5291
        %v5333 = vpop.f32.mrb[0].mxu0
        %v5334 = vadd.f32 0.0, %v5333
        %v5335 = vpop.f32.mrb[0].mxu0
        %v5336 = vpop.f32.mrb[0].mxu0
        %v5337 = vadd.f32 0.0, %v5336
        %v5338 = vpop.f32.mrb[0].mxu0
        %5339 = vdwg.mxu0
        %v5340 = vmul.f32 %v5334, 0.25
        %v5341 = vmul.f32 %v5337, 0.25
        %v5342 = vsel %vm3290, %v5340, -inf
        %5343 = vmax.xlane.f32.xlu0 %v5342
        %v5344 = vpop.xlane.xlu0 %5343
        %v5345 = vsel %vm3290, %v5341, -inf
        %5346 = vmax.xlane.f32.xlu0 %v5345
        %v5347 = vpop.xlane.xlu0 %5346
        %v5348 = vsub.f32 %v5340, %v5344
        %v5349 = vsub.f32 %v5341, %v5347
        %v5350 = vmul.f32 %v5348, 1.442695
        %v5351 = vpow.pop %v5350
        %v5352 = vmul.f32 %v5349, 1.442695
        %v5353 = vpow.pop %v5352
        %v5354 = vsel %vm3290, %v5351, 0.0
        %5355 = vadd.xlane.f32.xlu0 %v5354
        %v5356 = vpop.xlane.xlu0 %5355
        %v5357 = vsel %vm3290, %v5353, 0.0
        %5358 = vadd.xlane.f32.xlu0 %v5357
        %v5359 = vpop.xlane.xlu0 %5358
        %v5360 = vrcp.pop %v5356
        %v5361 = vrcp.pop %v5359
        %v5362 = vmul.f32 %v5351, %v5360
        %v5363 = vmul.f32 %v5353, %v5361
        %v5364 = vpack.c.bf16 %v5363, %v5362
        %5367 = vrot.lane.b32.xlu0 %v5238, 112
        %v5368 = vpop.permute.xlu0 %5367
        %5369 = vrot.lane.b32.xlu0 %v5239, 112
        %v5370 = vpop.permute.xlu0 %5369
        %v5374 = vsel %vm3290, %v5364, 0
        %5376 = vmatprep.subr.bf16.mxu0 0
        %5377 = vmatpush1.bf16.msra.mxu0 %v5368
        %5378 = vmatprep.subr.bf16.mxu0 0
        %5379 = vmatpush1.bf16.msra.mxu0 %v5370
        %5380 = vmatprep.subr.bf16.mxu0 0
        %5381 = vmatpush1.bf16.msra.mxu0 0
        %5382 = vmatprep.subr.bf16.mxu0 0
        %5383 = vmatpush1.bf16.msra.mxu0 0
        %5384 = vmatprep.subr.bf16.mxu0 0
        %5385 = vmatpush1.bf16.msra.mxu0 0
        %5386 = vmatprep.subr.bf16.mxu0 0
        %5387 = vmatpush1.bf16.msra.mxu0 0
        %5388 = vmatprep.subr.bf16.mxu0 0
        %5389 = vmatpush1.bf16.msra.mxu0 0
        %5390 = vmatprep.subr.bf16.mxu0 0
        %5391 = vmatpush1.bf16.msra.mxu0 0
        %5392 = vmatprep.subr.bf16.mxu0 0
        %5393 = vmatpush1.bf16.msra.mxu0 0
        %5394 = vmatprep.subr.bf16.mxu0 0
        %5395 = vmatpush1.bf16.msra.mxu0 0
        %5396 = vmatprep.subr.bf16.mxu0 0
        %5397 = vmatpush1.bf16.msra.mxu0 0
        %5398 = vmatprep.subr.bf16.mxu0 0
        %5399 = vmatpush1.bf16.msra.mxu0 0
        %5400 = vmatprep.subr.bf16.mxu0 0
        %5401 = vmatpush1.bf16.msra.mxu0 0
        %5402 = vmatprep.subr.bf16.mxu0 0
        %5403 = vmatpush1.bf16.msra.mxu0 0
        %5404 = vmatprep.subr.bf16.mxu0 0
        %5405 = vmatpush1.bf16.msra.mxu0 0
        %5406 = vmatprep.subr.bf16.mxu0 0
        %5407 = vmatpush1.bf16.msra.mxu0 0
        %5408 = vmatprep.mubr.bf16.mxu0 0
        %5409 = vmatmul.mubr.bf16.gmra.mrb[0].mxu0 %v5374
        %v5410 = vpop.f32.mrb[0].mxu0
        %v5411 = vadd.f32 0.0, %v5410
        %v5412 = vpop.f32.mrb[0].mxu0
        %v5413 = vpop.f32.mrb[0].mxu0
        %v5414 = vadd.f32 0.0, %v5413
        %v5415 = vpop.f32.mrb[0].mxu0
        %5416 = vdwg.mxu0
        %5417 = vrot.lane.b32.xlu0 %v4895, 64
        %v5418 = vpop.permute.xlu0 %5417
        %5419 = vrot.lane.b32.xlu0 %v4896, 64
        %v5420 = vpop.permute.xlu0 %5419
        %5421 = vrot.lane.b32.xlu0 %v4897, 64
        %v5422 = vpop.permute.xlu0 %5421
        %v5424 = vsel %vm1399, %v5418, 0
        %v5427 = vsel %vm1399, %v5420, 0
        %v5430 = vsel %vm1399, %v5422, 0
        %5432 = vmatprep.subr.bf16.mxu0 0
        %5433 = vmatpush1.bf16.xpose.msra.mxu0 %v5427
        %5434 = vmatprep.subr.bf16.mxu0 0
        %5435 = vmatpush1.bf16.xpose.msra.mxu0 %v5430
        %5436 = vmatprep.subr.bf16.mxu0 0
        %5437 = vmatpush1.bf16.xpose.msra.mxu0 0
        %5438 = vmatprep.subr.bf16.mxu0 0
        %5439 = vmatpush1.bf16.xpose.msra.mxu0 0
        %5440 = vmatprep.subr.bf16.mxu0 0
        %5441 = vmatpush1.bf16.xpose.msra.mxu0 0
        %5442 = vmatprep.subr.bf16.mxu0 0
        %5443 = vmatpush1.bf16.xpose.msra.mxu0 0
        %5444 = vmatprep.subr.bf16.mxu0 0
        %5445 = vmatpush1.bf16.xpose.msra.mxu0 0
        %5446 = vmatprep.subr.bf16.mxu0 0
        %5447 = vmatpush1.bf16.xpose.msra.mxu0 0
        %5448 = vmatprep.subr.bf16.mxu0 0
        %5449 = vmatpush1.bf16.xpose.msra.mxu0 0
        %5450 = vmatprep.subr.bf16.mxu0 0
        %5451 = vmatpush1.bf16.xpose.msra.mxu0 0
        %5452 = vmatprep.subr.bf16.mxu0 0
        %5453 = vmatpush1.bf16.xpose.msra.mxu0 0
        %5454 = vmatprep.subr.bf16.mxu0 0
        %5455 = vmatpush1.bf16.xpose.msra.mxu0 0
        %5456 = vmatprep.subr.bf16.mxu0 0
        %5457 = vmatpush1.bf16.xpose.msra.mxu0 0
        %5458 = vmatprep.subr.bf16.mxu0 0
        %5459 = vmatpush1.bf16.xpose.msra.mxu0 0
        %5460 = vmatprep.subr.bf16.mxu0 0
        %5461 = vmatpush1.bf16.xpose.msra.mxu0 0
        %5462 = vmatprep.subr.bf16.mxu0 0
        %5463 = vmatpush1.bf16.xpose.msra.mxu0 0
        %5464 = vmatprep.mubr.bf16.mxu0 0
        %5465 = vmatmul.mubr.bf16.gmra.mrb[0].mxu0 %v5424
        %v5466 = vpop.f32.mrb[0].mxu0
        %v5467 = vadd.f32 0.0, %v5466
        %v5468 = vpop.f32.mrb[0].mxu0
        %v5469 = vpop.f32.mrb[0].mxu0
        %v5470 = vadd.f32 0.0, %v5469
        %v5471 = vpop.f32.mrb[0].mxu0
        %5472 = vdwg.mxu0
        %v5473 = vmul.f32 %v5467, 0.25
        %v5474 = vmul.f32 %v5470, 0.25
        %v5475 = vsel %vm3290, %v5473, -inf
        %5476 = vmax.xlane.f32.xlu0 %v5475
        %v5477 = vpop.xlane.xlu0 %5476
        %v5478 = vsel %vm3290, %v5474, -inf
        %5479 = vmax.xlane.f32.xlu0 %v5478
        %v5480 = vpop.xlane.xlu0 %5479
        %v5481 = vsub.f32 %v5473, %v5477
        %v5482 = vsub.f32 %v5474, %v5480
        %v5483 = vmul.f32 %v5481, 1.442695
        %v5484 = vpow.pop %v5483
        %v5485 = vmul.f32 %v5482, 1.442695
        %v5486 = vpow.pop %v5485
        %v5487 = vsel %vm3290, %v5484, 0.0
        %5488 = vadd.xlane.f32.xlu0 %v5487
        %v5489 = vpop.xlane.xlu0 %5488
        %v5490 = vsel %vm3290, %v5486, 0.0
        %5491 = vadd.xlane.f32.xlu0 %v5490
        %v5492 = vpop.xlane.xlu0 %5491
        %v5493 = vrcp.pop %v5489
        %v5494 = vrcp.pop %v5492
        %v5495 = vmul.f32 %v5484, %v5493
        %v5496 = vmul.f32 %v5486, %v5494
        %v5497 = vpack.c.bf16 %v5496, %v5495
        %5498 = vrot.lane.b32.xlu0 %v5238, 96
        %v5499 = vpop.permute.xlu0 %5498
        %5500 = vrot.lane.b32.xlu0 %v5239, 96
        %v5501 = vpop.permute.xlu0 %5500
        %v5505 = vsel %vm3290, %v5497, 0
        %5507 = vmatprep.subr.bf16.mxu0 0
        %5508 = vmatpush1.bf16.msra.mxu0 %v5499
        %5509 = vmatprep.subr.bf16.mxu0 0
        %5510 = vmatpush1.bf16.msra.mxu0 %v5501
        %5511 = vmatprep.subr.bf16.mxu0 0
        %5512 = vmatpush1.bf16.msra.mxu0 0
        %5513 = vmatprep.subr.bf16.mxu0 0
        %5514 = vmatpush1.bf16.msra.mxu0 0
        %5515 = vmatprep.subr.bf16.mxu0 0
        %5516 = vmatpush1.bf16.msra.mxu0 0
        %5517 = vmatprep.subr.bf16.mxu0 0
        %5518 = vmatpush1.bf16.msra.mxu0 0
        %5519 = vmatprep.subr.bf16.mxu0 0
        %5520 = vmatpush1.bf16.msra.mxu0 0
        %5521 = vmatprep.subr.bf16.mxu0 0
        %5522 = vmatpush1.bf16.msra.mxu0 0
        %5523 = vmatprep.subr.bf16.mxu0 0
        %5524 = vmatpush1.bf16.msra.mxu0 0
        %5525 = vmatprep.subr.bf16.mxu0 0
        %5526 = vmatpush1.bf16.msra.mxu0 0
        %5527 = vmatprep.subr.bf16.mxu0 0
        %5528 = vmatpush1.bf16.msra.mxu0 0
        %5529 = vmatprep.subr.bf16.mxu0 0
        %5530 = vmatpush1.bf16.msra.mxu0 0
        %5531 = vmatprep.subr.bf16.mxu0 0
        %5532 = vmatpush1.bf16.msra.mxu0 0
        %5533 = vmatprep.subr.bf16.mxu0 0
        %5534 = vmatpush1.bf16.msra.mxu0 0
        %5535 = vmatprep.subr.bf16.mxu0 0
        %5536 = vmatpush1.bf16.msra.mxu0 0
        %5537 = vmatprep.subr.bf16.mxu0 0
        %5538 = vmatpush1.bf16.msra.mxu0 0
        %5539 = vmatprep.mubr.bf16.mxu0 0
        %5540 = vmatmul.mubr.bf16.gmra.mrb[0].mxu0 %v5505
        %v5541 = vpop.f32.mrb[0].mxu0
        %v5542 = vadd.f32 0.0, %v5541
        %v5543 = vpop.f32.mrb[0].mxu0
        %v5544 = vpop.f32.mrb[0].mxu0
        %v5545 = vadd.f32 0.0, %v5544
        %v5546 = vpop.f32.mrb[0].mxu0
        %5547 = vdwg.mxu0
        %5548 = vrot.lane.b32.xlu0 %v4895, 48
        %v5549 = vpop.permute.xlu0 %5548
        %5550 = vrot.lane.b32.xlu0 %v4896, 48
        %v5551 = vpop.permute.xlu0 %5550
        %5552 = vrot.lane.b32.xlu0 %v4897, 48
        %v5553 = vpop.permute.xlu0 %5552
        %v5555 = vsel %vm1399, %v5549, 0
        %v5558 = vsel %vm1399, %v5551, 0
        %v5561 = vsel %vm1399, %v5553, 0
        %5563 = vmatprep.subr.bf16.mxu0 0
        %5564 = vmatpush1.bf16.xpose.msra.mxu0 %v5558
        %5565 = vmatprep.subr.bf16.mxu0 0
        %5566 = vmatpush1.bf16.xpose.msra.mxu0 %v5561
        %5567 = vmatprep.subr.bf16.mxu0 0
        %5568 = vmatpush1.bf16.xpose.msra.mxu0 0
        %5569 = vmatprep.subr.bf16.mxu0 0
        %5570 = vmatpush1.bf16.xpose.msra.mxu0 0
        %5571 = vmatprep.subr.bf16.mxu0 0
        %5572 = vmatpush1.bf16.xpose.msra.mxu0 0
        %5573 = vmatprep.subr.bf16.mxu0 0
        %5574 = vmatpush1.bf16.xpose.msra.mxu0 0
        %5575 = vmatprep.subr.bf16.mxu0 0
        %5576 = vmatpush1.bf16.xpose.msra.mxu0 0
        %5577 = vmatprep.subr.bf16.mxu0 0
        %5578 = vmatpush1.bf16.xpose.msra.mxu0 0
        %5579 = vmatprep.subr.bf16.mxu0 0
        %5580 = vmatpush1.bf16.xpose.msra.mxu0 0
        %5581 = vmatprep.subr.bf16.mxu0 0
        %5582 = vmatpush1.bf16.xpose.msra.mxu0 0
        %5583 = vmatprep.subr.bf16.mxu0 0
        %5584 = vmatpush1.bf16.xpose.msra.mxu0 0
        %5585 = vmatprep.subr.bf16.mxu0 0
        %5586 = vmatpush1.bf16.xpose.msra.mxu0 0
        %5587 = vmatprep.subr.bf16.mxu0 0
        %5588 = vmatpush1.bf16.xpose.msra.mxu0 0
        %5589 = vmatprep.subr.bf16.mxu0 0
        %5590 = vmatpush1.bf16.xpose.msra.mxu0 0
        %5591 = vmatprep.subr.bf16.mxu0 0
        %5592 = vmatpush1.bf16.xpose.msra.mxu0 0
        %5593 = vmatprep.subr.bf16.mxu0 0
        %5594 = vmatpush1.bf16.xpose.msra.mxu0 0
        %5595 = vmatprep.mubr.bf16.mxu0 0
        %5596 = vmatmul.mubr.bf16.gmra.mrb[0].mxu0 %v5555
        %v5597 = vpop.f32.mrb[0].mxu0
        %v5598 = vadd.f32 0.0, %v5597
        %v5599 = vpop.f32.mrb[0].mxu0
        %v5600 = vpop.f32.mrb[0].mxu0
        %v5601 = vadd.f32 0.0, %v5600
        %v5602 = vpop.f32.mrb[0].mxu0
        %5603 = vdwg.mxu0
        %v5604 = vmul.f32 %v5598, 0.25
        %v5605 = vmul.f32 %v5601, 0.25
        %v5606 = vsel %vm3290, %v5604, -inf
        %5607 = vmax.xlane.f32.xlu0 %v5606
        %v5608 = vpop.xlane.xlu0 %5607
        %v5609 = vsel %vm3290, %v5605, -inf
        %5610 = vmax.xlane.f32.xlu0 %v5609
        %v5611 = vpop.xlane.xlu0 %5610
        %v5612 = vsub.f32 %v5604, %v5608
        %v5613 = vsub.f32 %v5605, %v5611
        %v5614 = vmul.f32 %v5612, 1.442695
        %v5615 = vpow.pop %v5614
        %v5616 = vmul.f32 %v5613, 1.442695
        %v5617 = vpow.pop %v5616
        %v5618 = vsel %vm3290, %v5615, 0.0
        %5619 = vadd.xlane.f32.xlu0 %v5618
        %v5620 = vpop.xlane.xlu0 %5619
        %v5621 = vsel %vm3290, %v5617, 0.0
        %5622 = vadd.xlane.f32.xlu0 %v5621
        %v5623 = vpop.xlane.xlu0 %5622
        %v5624 = vrcp.pop %v5620
        %v5625 = vrcp.pop %v5623
        %v5626 = vmul.f32 %v5615, %v5624
        %v5627 = vmul.f32 %v5617, %v5625
        %v5628 = vpack.c.bf16 %v5627, %v5626
        %5629 = vrot.lane.b32.xlu0 %v5238, 80
        %v5630 = vpop.permute.xlu0 %5629
        %5631 = vrot.lane.b32.xlu0 %v5239, 80
        %v5632 = vpop.permute.xlu0 %5631
        %v5636 = vsel %vm3290, %v5628, 0
        %5638 = vmatprep.subr.bf16.mxu0 0
        %5639 = vmatpush1.bf16.msra.mxu0 %v5630
        %5640 = vmatprep.subr.bf16.mxu0 0
        %5641 = vmatpush1.bf16.msra.mxu0 %v5632
        %5642 = vmatprep.subr.bf16.mxu0 0
        %5643 = vmatpush1.bf16.msra.mxu0 0
        %5644 = vmatprep.subr.bf16.mxu0 0
        %5645 = vmatpush1.bf16.msra.mxu0 0
        %5646 = vmatprep.subr.bf16.mxu0 0
        %5647 = vmatpush1.bf16.msra.mxu0 0
        %5648 = vmatprep.subr.bf16.mxu0 0
        %5649 = vmatpush1.bf16.msra.mxu0 0
        %5650 = vmatprep.subr.bf16.mxu0 0
        %5651 = vmatpush1.bf16.msra.mxu0 0
        %5652 = vmatprep.subr.bf16.mxu0 0
        %5653 = vmatpush1.bf16.msra.mxu0 0
        %5654 = vmatprep.subr.bf16.mxu0 0
        %5655 = vmatpush1.bf16.msra.mxu0 0
        %5656 = vmatprep.subr.bf16.mxu0 0
        %5657 = vmatpush1.bf16.msra.mxu0 0
        %5658 = vmatprep.subr.bf16.mxu0 0
        %5659 = vmatpush1.bf16.msra.mxu0 0
        %5660 = vmatprep.subr.bf16.mxu0 0
        %5661 = vmatpush1.bf16.msra.mxu0 0
        %5662 = vmatprep.subr.bf16.mxu0 0
        %5663 = vmatpush1.bf16.msra.mxu0 0
        %5664 = vmatprep.subr.bf16.mxu0 0
        %5665 = vmatpush1.bf16.msra.mxu0 0
        %5666 = vmatprep.subr.bf16.mxu0 0
        %5667 = vmatpush1.bf16.msra.mxu0 0
        %5668 = vmatprep.subr.bf16.mxu0 0
        %5669 = vmatpush1.bf16.msra.mxu0 0
        %5670 = vmatprep.mubr.bf16.mxu0 0
        %5671 = vmatmul.mubr.bf16.gmra.mrb[0].mxu0 %v5636
        %v5672 = vpop.f32.mrb[0].mxu0
        %v5673 = vadd.f32 0.0, %v5672
        %v5674 = vpop.f32.mrb[0].mxu0
        %v5675 = vpop.f32.mrb[0].mxu0
        %v5676 = vadd.f32 0.0, %v5675
        %v5677 = vpop.f32.mrb[0].mxu0
        %5678 = vdwg.mxu0
        %5681 = vrot.lane.b32.xlu0 %v5151, 16
        %v5682 = vpop.permute.xlu0 %5681
        %5683 = vrot.lane.b32.xlu0 %v5154, 16
        %v5684 = vpop.permute.xlu0 %5683
        %5689 = vrot.lane.b32.xlu0 %v5278, 32
        %v5690 = vpop.permute.xlu0 %5689
        %5691 = vrot.lane.b32.xlu0 %v5281, 32
        %v5692 = vpop.permute.xlu0 %5691
        %5697 = vrot.lane.b32.xlu0 %v5411, 48
        %v5698 = vpop.permute.xlu0 %5697
        %5699 = vrot.lane.b32.xlu0 %v5414, 48
        %v5700 = vpop.permute.xlu0 %5699
        %5705 = vrot.lane.b32.xlu0 %v5542, 64
        %v5706 = vpop.permute.xlu0 %5705
        %5707 = vrot.lane.b32.xlu0 %v5545, 64
        %v5708 = vpop.permute.xlu0 %5707
        %5713 = vrot.lane.b32.xlu0 %v5673, 80
        %v5714 = vpop.permute.xlu0 %5713
        %5715 = vrot.lane.b32.xlu0 %v5676, 80
        %v5716 = vpop.permute.xlu0 %5715
        %v5719 = vsel %vm1399, %v5019, %v5682
        %v5720 = vsel %vm1399, %v5022, %v5684
        %v5721 = vsel %vm3290, %v5719, %v5690
        %v5722 = vsel %vm3290, %v5720, %v5692
        %v5723 = vsel %vm2843, %v5721, %v5698
        %v5724 = vsel %vm2843, %v5722, %v5700
        %v5725 = vsel %vm4066, %v5723, %v5706
        %v5726 = vsel %vm4066, %v5724, %v5708
        %v5727 = vsel %vm4069, %v5725, %v5714
        %v5728 = vsel %vm4069, %v5726, %v5716
        %v5729 = vpack.c.bf16 %v5728, %v5727
        %v5730 = vpack.c.bf16 %v4741, %v4740
        %v5731 = vpack.c.bf16 %v4743, %v4742
        %v5732 = vpack.c.bf16 %v4745, %v4744
        %v5733 = vpack.c.bf16 %v4747, %v4746
        %v5734 = vpack.c.bf16 %v4749, %v4748
        %v5735 = vpack.c.bf16 %v4751, %v4750
        %v5737 = vlaneseq
        %v5738 = vshrl.u32 %v5737, 7
        %v5739 = vsub.s32 0, %v5738
        %v5740 = vrot.slane %v4753, %v5739
        %v5743 = vsel %vm1025, %v5729, 0
        %5745 = vmatprep.subr.bf16.mxu0 0
        %5746 = vmatpush1.bf16.msra.mxu0 %v5730
        %5747 = vmatprep.subr.bf16.mxu0 0
        %5748 = vmatpush1.bf16.msra.mxu0 %v5731
        %5749 = vmatprep.subr.bf16.mxu0 0
        %5750 = vmatpush1.bf16.msra.mxu0 %v5732
        %5751 = vmatprep.subr.bf16.mxu0 0
        %5752 = vmatpush1.bf16.msra.mxu0 %v5733
        %5753 = vmatprep.subr.bf16.mxu0 0
        %5754 = vmatpush1.bf16.msra.mxu0 %v5734
        %5755 = vmatprep.subr.bf16.mxu0 0
        %5756 = vmatpush1.bf16.msra.mxu0 %v5735
        %5757 = vmatprep.subr.bf16.mxu0 0
        %5758 = vmatpush1.bf16.msra.mxu0 0
        %5759 = vmatprep.subr.bf16.mxu0 0
        %5760 = vmatpush1.bf16.msra.mxu0 0
        %5761 = vmatprep.subr.bf16.mxu0 0
        %5762 = vmatpush1.bf16.msra.mxu0 0
        %5763 = vmatprep.subr.bf16.mxu0 0
        %5764 = vmatpush1.bf16.msra.mxu0 0
        %5765 = vmatprep.subr.bf16.mxu0 0
        %5766 = vmatpush1.bf16.msra.mxu0 0
        %5767 = vmatprep.subr.bf16.mxu0 0
        %5768 = vmatpush1.bf16.msra.mxu0 0
        %5769 = vmatprep.subr.bf16.mxu0 0
        %5770 = vmatpush1.bf16.msra.mxu0 0
        %5771 = vmatprep.subr.bf16.mxu0 0
        %5772 = vmatpush1.bf16.msra.mxu0 0
        %5773 = vmatprep.subr.bf16.mxu0 0
        %5774 = vmatpush1.bf16.msra.mxu0 0
        %5775 = vmatprep.subr.bf16.mxu0 0
        %5776 = vmatpush1.bf16.msra.mxu0 0
        %5777 = vmatprep.mubr.bf16.mxu0 0
        %5778 = vmatmul.mubr.bf16.gmra.mrb[0].mxu0 %v5743
        %v5779 = vpop.f32.mrb[0].mxu0
        %v5780 = vadd.f32 %v5740, %v5779
        %v5781 = vpop.f32.mrb[0].mxu0
        %v5782 = vpop.f32.mrb[0].mxu0
        %v5783 = vadd.f32 %v5740, %v5782
        %v5784 = vpop.f32.mrb[0].mxu0
        %5785 = vdwg.mxu0
        %v5786 = vadd.f32 %v4625, %v5780
        %v5787 = vadd.f32 %v4626, %v5783
        %s5788 = scalar_lea.vmem %s47, 1
        %v5789 = vld [vmem:[%s5788] sm:$0x1]
        %s5790 = scalar_lea.vmem %s49, 1
        %v5791 = vld [vmem:[%s5790] sm:$0x1]
        %v5792 = vsel %vm1025, %v5786, 0.0
        %5793 = vadd.xlane.f32.xlu0 %v5792
        %v5794 = vpop.xlane.xlu0 %5793
        %v5795 = vsel %vm1025, %v5787, 0.0
        %5796 = vadd.xlane.f32.xlu0 %v5795
        %v5797 = vpop.xlane.xlu0 %5796
        %v5798 = vmul.f32 %v5794, %v1038
        %v5799 = vmul.f32 %v5797, %v1038
        %v5800 = vsub.f32 %v5786, %v5798
        %v5801 = vsub.f32 %v5787, %v5799
        %v5802 = vmul.f32 %v5800, %v5800
        %v5803 = vmul.f32 %v5801, %v5801
        %v5804 = vsel %vm1025, %v5802, 0.0
        %5805 = vadd.xlane.f32.xlu0 %v5804
        %v5806 = vpop.xlane.xlu0 %5805
        %v5807 = vsel %vm1025, %v5803, 0.0
        %5808 = vadd.xlane.f32.xlu0 %v5807
        %v5809 = vpop.xlane.xlu0 %5808
        %v5810 = vmul.f32 %v5806, %v1038
        %v5811 = vmul.f32 %v5809, %v1038
        %v5812 = vadd.f32 %v5810, 1e-06
        %v5813 = vadd.f32 %v5811, 1e-06
        %v5814 = vrsqrt.pop %v5812
        %v5815 = vrsqrt.pop %v5813
        %v5816 = vmul.f32 %v5800, %v5814
        %v5817 = vmul.f32 %v5801, %v5815
        %v5819 = vlaneseq
        %v5820 = vshrl.u32 %v5819, 7
        %v5821 = vsub.s32 0, %v5820
        %v5822 = vrot.slane %v5789, %v5821
        %v5824 = vmul.f32 %v5816, %v5822
        %v5825 = vmul.f32 %v5817, %v5822
        %v5827 = vlaneseq
        %v5828 = vshrl.u32 %v5827, 7
        %v5829 = vsub.s32 0, %v5828
        %v5830 = vrot.slane %v5791, %v5829
        %v5832 = vadd.f32 %v5824, %v5830
        %v5833 = vadd.f32 %v5825, %v5830
        %s5834 = scalar_lea.vmem %s51, 96
        %v5835 = vld [vmem:[%s5834] sm:$0xff]
        %v5836 = vld [vmem:[%s5834 + $0x8] sm:$0xff]
        %v5837 = vld [vmem:[%s5834 + $0x10] sm:$0xff]
        %v5838 = vld [vmem:[%s5834 + $0x18] sm:$0xff]
        %v5839 = vld [vmem:[%s5834 + $0x20] sm:$0xff]
        %v5840 = vld [vmem:[%s5834 + $0x28] sm:$0xff]
        %v5841 = vld [vmem:[%s5834 + $0x30] sm:$0xff]
        %v5842 = vld [vmem:[%s5834 + $0x38] sm:$0xff]
        %v5843 = vld [vmem:[%s5834 + $0x40] sm:$0xff]
        %v5844 = vld [vmem:[%s5834 + $0x48] sm:$0xff]
        %v5845 = vld [vmem:[%s5834 + $0x50] sm:$0xff]
        %v5846 = vld [vmem:[%s5834 + $0x58] sm:$0xff]
        %s5847 = scalar_lea.vmem %s53, 1
        %v5848 = vld [vmem:[%s5847] sm:$0x1]
        %s5849 = scalar_lea.vmem %s55, 16
        %v5850 = vld [vmem:[%s5849] sm:$0xff]
        %v5851 = vld [vmem:[%s5849 + $0x8] sm:$0x1]
        %s5852 = scalar_lea.vmem %s57, 1
        %v5853 = vld [vmem:[%s5852] sm:$0x1]
        %s5854 = scalar_lea.vmem %s59, 24
        %v5855 = vld [vmem:[%s5854] sm:$0xff]
        %v5856 = vld [vmem:[%s5854 + $0x8] sm:$0xff]
        %v5857 = vld [vmem:[%s5854 + $0x10] sm:$0x7]
        %s5858 = scalar_lea.vmem %s61, 1
        %v5859 = vld [vmem:[%s5858] sm:$0x1]
        %v5860 = vpack.c.bf16 %v5833, %v5832
        %v5861 = vpack.c.bf16 %v5836, %v5835
        %v5862 = vpack.c.bf16 %v5838, %v5837
        %v5863 = vpack.c.bf16 %v5840, %v5839
        %v5864 = vpack.c.bf16 %v5842, %v5841
        %v5865 = vpack.c.bf16 %v5844, %v5843
        %v5866 = vpack.c.bf16 %v5846, %v5845
        %v5868 = vlaneseq
        %v5869 = vshrl.u32 %v5868, 7
        %v5870 = vsub.s32 0, %v5869
        %v5871 = vrot.slane %v5848, %v5870
        %v5874 = vsel %vm1025, %v5860, 0
        %5876 = vmatprep.subr.bf16.mxu0 0
        %5877 = vmatpush1.bf16.msra.mxu0 %v5861
        %5878 = vmatprep.subr.bf16.mxu0 0
        %5879 = vmatpush1.bf16.msra.mxu0 %v5862
        %5880 = vmatprep.subr.bf16.mxu0 0
        %5881 = vmatpush1.bf16.msra.mxu0 %v5863
        %5882 = vmatprep.subr.bf16.mxu0 0
        %5883 = vmatpush1.bf16.msra.mxu0 %v5864
        %5884 = vmatprep.subr.bf16.mxu0 0
        %5885 = vmatpush1.bf16.msra.mxu0 %v5865
        %5886 = vmatprep.subr.bf16.mxu0 0
        %5887 = vmatpush1.bf16.msra.mxu0 %v5866
        %5888 = vmatprep.subr.bf16.mxu0 0
        %5889 = vmatpush1.bf16.msra.mxu0 0
        %5890 = vmatprep.subr.bf16.mxu0 0
        %5891 = vmatpush1.bf16.msra.mxu0 0
        %5892 = vmatprep.subr.bf16.mxu0 0
        %5893 = vmatpush1.bf16.msra.mxu0 0
        %5894 = vmatprep.subr.bf16.mxu0 0
        %5895 = vmatpush1.bf16.msra.mxu0 0
        %5896 = vmatprep.subr.bf16.mxu0 0
        %5897 = vmatpush1.bf16.msra.mxu0 0
        %5898 = vmatprep.subr.bf16.mxu0 0
        %5899 = vmatpush1.bf16.msra.mxu0 0
        %5900 = vmatprep.subr.bf16.mxu0 0
        %5901 = vmatpush1.bf16.msra.mxu0 0
        %5902 = vmatprep.subr.bf16.mxu0 0
        %5903 = vmatpush1.bf16.msra.mxu0 0
        %5904 = vmatprep.subr.bf16.mxu0 0
        %5905 = vmatpush1.bf16.msra.mxu0 0
        %5906 = vmatprep.subr.bf16.mxu0 0
        %5907 = vmatpush1.bf16.msra.mxu0 0
        %5908 = vmatprep.mubr.bf16.mxu0 0
        %5909 = vmatmul.mubr.bf16.gmra.mrb[0].mxu0 %v5874
        %v5910 = vpop.f32.mrb[0].mxu0
        %v5911 = vadd.f32 %v5871, %v5910
        %v5912 = vpop.f32.mrb[0].mxu0
        %v5913 = vpop.f32.mrb[0].mxu0
        %v5914 = vadd.f32 %v5871, %v5913
        %v5915 = vpop.f32.mrb[0].mxu0
        %5916 = vdwg.mxu0
        %v5919 = vrot.slane %v5911, 3
        %v5920 = vrot.slane %v5914, 3
        %v5921 = vsel %vm4254, %v5919, %v5920
        %v5925 = vsel %vm4254, 0.0, %v5919
        %v5926 = vsel %vm4254, %v5920, 0.0
        %v5927 = vmul.f32 %v5925, %v4300
        %v5928 = vmul.f32 %v5921, %v4301
        %v5929 = vlaneseq
        %v5930 = vshrl.u32 %v5929, 7
        %v5931 = vsub.s32 0, %v5930
        %v5932 = vrot.slane %v5850, %v5931
        %v5933 = vmul.f32 %v5927, %v5932
        %v5934 = vmul.f32 %v5928, %v5932
        %v5935 = vadd.f32 %v5933, 0.0
        %v5936 = vadd.f32 %v5934, 0.0
        %v5937 = vmul.f32 %v5925, %v4325
        %v5938 = vmul.f32 %v5921, %v4327
        %v5939 = vmul.f32 %v5926, %v4326
        %v5940 = vlaneseq
        %v5941 = vshrl.u32 %v5940, 7
        %v5942 = vsub.s32 1, %v5941
        %v5943 = vrot.slane %v5850, %v5942
        %v5944 = vmul.f32 %v5937, %v5943
        %v5945 = vmul.f32 %v5938, %v5943
        %v5946 = vmul.f32 %v5939, %v5943
        %v5950 = vrot.slane %v5944, 1
        %v5951 = vrot.slane %v5945, 1
        %v5952 = vsel %vm4344, %v5950, %v5951
        %v5953 = vrot.slane %v5946, 1
        %v5954 = vsel %vm4344, %v5951, %v5953
        %v5957 = vadd.f32 %v5935, %v5952
        %v5958 = vadd.f32 %v5936, %v5954
        %v5959 = vmul.f32 %v5925, %v4369
        %v5960 = vmul.f32 %v5921, %v4371
        %v5961 = vmul.f32 %v5926, %v4370
        %v5962 = vlaneseq
        %v5963 = vshrl.u32 %v5962, 7
        %v5964 = vsub.s32 2, %v5963
        %v5965 = vrot.slane %v5850, %v5964
        %v5966 = vmul.f32 %v5959, %v5965
        %v5967 = vmul.f32 %v5960, %v5965
        %v5968 = vmul.f32 %v5961, %v5965
        %v5972 = vrot.slane %v5966, 2
        %v5973 = vrot.slane %v5967, 2
        %v5974 = vsel %vm4388, %v5972, %v5973
        %v5975 = vrot.slane %v5968, 2
        %v5976 = vsel %vm4388, %v5973, %v5975
        %v5979 = vadd.f32 %v5957, %v5974
        %v5980 = vadd.f32 %v5958, %v5976
        %v5981 = vmul.f32 %v5925, %v4401
        %v5982 = vmul.f32 %v5921, %v4403
        %v5983 = vmul.f32 %v5926, %v4402
        %v5984 = vlaneseq
        %v5985 = vshrl.u32 %v5984, 7
        %v5986 = vsub.s32 3, %v5985
        %v5987 = vrot.slane %v5850, %v5986
        %v5988 = vmul.f32 %v5981, %v5987
        %v5989 = vmul.f32 %v5982, %v5987
        %v5990 = vmul.f32 %v5983, %v5987
        %v5994 = vrot.slane %v5988, 4
        %v5995 = vrot.slane %v5989, 4
        %v5996 = vsel %vm4400, %v5994, %v5995
        %v5997 = vrot.slane %v5990, 4
        %v5998 = vsel %vm4400, %v5995, %v5997
        %v6001 = vadd.f32 %v5979, %v5996
        %v6002 = vadd.f32 %v5980, %v5998
        %v6003 = vmul.f32 %v5925, %v4429
        %v6004 = vmul.f32 %v5921, %v4431
        %v6005 = vmul.f32 %v5926, %v4430
        %v6006 = vlaneseq
        %v6007 = vshrl.u32 %v6006, 7
        %v6008 = vsub.s32 4, %v6007
        %v6009 = vrot.slane %v5850, %v6008
        %v6010 = vmul.f32 %v6003, %v6009
        %v6011 = vmul.f32 %v6004, %v6009
        %v6012 = vmul.f32 %v6005, %v6009
        %v6016 = vrot.slane %v6010, 5
        %v6017 = vrot.slane %v6011, 5
        %v6018 = vsel %vm4448, %v6016, %v6017
        %v6019 = vrot.slane %v6012, 5
        %v6020 = vsel %vm4448, %v6017, %v6019
        %v6023 = vadd.f32 %v6001, %v6018
        %v6024 = vadd.f32 %v6002, %v6020
        %v6025 = vmul.f32 %v5925, %v4458
        %v6026 = vmul.f32 %v5921, %v4460
        %v6027 = vmul.f32 %v5926, %v4459
        %v6028 = vlaneseq
        %v6029 = vshrl.u32 %v6028, 7
        %v6030 = vsub.s32 5, %v6029
        %v6031 = vrot.slane %v5850, %v6030
        %v6032 = vmul.f32 %v6025, %v6031
        %v6033 = vmul.f32 %v6026, %v6031
        %v6034 = vmul.f32 %v6027, %v6031
        %v6038 = vrot.slane %v6032, 6
        %v6039 = vrot.slane %v6033, 6
        %v6040 = vsel %vm4368, %v6038, %v6039
        %v6041 = vrot.slane %v6034, 6
        %v6042 = vsel %vm4368, %v6039, %v6041
        %v6045 = vadd.f32 %v6023, %v6040
        %v6046 = vadd.f32 %v6024, %v6042
        %v6047 = vmul.f32 %v5921, %v4300
        %v6048 = vmul.f32 %v5926, %v4301
        %v6049 = vlaneseq
        %v6050 = vshrl.u32 %v6049, 7
        %v6051 = vsub.s32 6, %v6050
        %v6052 = vrot.slane %v5850, %v6051
        %v6053 = vmul.f32 %v6047, %v6052
        %v6054 = vmul.f32 %v6048, %v6052
        %v6055 = vadd.f32 %v6045, %v6053
        %v6056 = vadd.f32 %v6046, %v6054
        %v6057 = vmul.f32 %v5921, %v4325
        %v6058 = vmul.f32 %v5926, %v4327
        %v6059 = vlaneseq
        %v6060 = vshrl.u32 %v6059, 7
        %v6061 = vsub.s32 7, %v6060
        %v6062 = vrot.slane %v5850, %v6061
        %v6063 = vmul.f32 %v6057, %v6062
        %v6064 = vmul.f32 %v6058, %v6062
        %v6065 = vmul.f32 %v4498, %v6062
        %v6069 = vrot.slane %v6063, 1
        %v6070 = vrot.slane %v6064, 1
        %v6071 = vsel %vm4344, %v6069, %v6070
        %v6072 = vrot.slane %v6065, 1
        %v6073 = vsel %vm4344, %v6070, %v6072
        %v6076 = vadd.f32 %v6055, %v6071
        %v6077 = vadd.f32 %v6056, %v6073
        %v6078 = vmul.f32 %v5921, %v4369
        %v6079 = vmul.f32 %v5926, %v4371
        %v6080 = vlaneseq
        %v6081 = vshrl.u32 %v6080, 7
        %v6082 = vsub.s32 0, %v6081
        %v6083 = vrot.slane %v5851, %v6082
        %v6084 = vmul.f32 %v6078, %v6083
        %v6085 = vmul.f32 %v6079, %v6083
        %v6086 = vmul.f32 %v4520, %v6083
        %v6090 = vrot.slane %v6084, 2
        %v6091 = vrot.slane %v6085, 2
        %v6092 = vsel %vm4388, %v6090, %v6091
        %v6093 = vrot.slane %v6086, 2
        %v6094 = vsel %vm4388, %v6091, %v6093
        %v6097 = vadd.f32 %v6076, %v6092
        %v6098 = vadd.f32 %v6077, %v6094
        %v6100 = vlaneseq
        %v6101 = vshrl.u32 %v6100, 7
        %v6102 = vsub.s32 0, %v6101
        %v6103 = vrot.slane %v5853, %v6102
        %v6105 = vadd.f32 %v6097, %v6103
        %v6106 = vadd.f32 %v6098, %v6103
        %v6107 = vmul.f32 %v6105, 0.5
        %v6108 = vmul.f32 %v6106, 0.5
        %v6109 = vmul.f32 %v6105, 0.044715
        %v6110 = vmul.f32 %v6106, 0.044715
        %v6111 = vmul.f32 %v6109, %v6105
        %v6112 = vmul.f32 %v6110, %v6106
        %v6113 = vmul.f32 %v6111, %v6105
        %v6114 = vmul.f32 %v6112, %v6106
        %v6115 = vadd.f32 %v6105, %v6113
        %v6116 = vadd.f32 %v6106, %v6114
        %v6117 = vmul.f32 %v6115, 0.7978846
        %v6118 = vmul.f32 %v6116, 0.7978846
        %v6119 = vtanh.pop %v6117
        %v6120 = vtanh.pop %v6118
        %v6121 = vadd.f32 %v6119, 1.0
        %v6122 = vadd.f32 %v6120, 1.0
        %v6123 = vmul.f32 %v6107, %v6121
        %v6124 = vmul.f32 %v6108, %v6122
        %v6125 = vpack.c.bf16 %v6124, %v6123
        %v6126 = vpack.c.bf16 %v5856, %v5855
        %v6127 = vpack.c.bf16 %v5857, %v5857
        %v6129 = vlaneseq
        %v6130 = vshrl.u32 %v6129, 7
        %v6131 = vsub.s32 0, %v6130
        %v6132 = vrot.slane %v5859, %v6131
        %v6135 = vsel %vm4575, %v6125, 0
        %v6138 = vand.u32 %v6127, %v4580
        %6140 = vmatprep.subr.bf16.mxu0 0
        %6141 = vmatpush1.bf16.msra.mxu0 %v6126
        %6142 = vmatprep.subr.bf16.mxu0 0
        %6143 = vmatpush1.bf16.msra.mxu0 %v6138
        %6144 = vmatprep.subr.bf16.mxu0 0
        %6145 = vmatpush1.bf16.msra.mxu0 0
        %6146 = vmatprep.subr.bf16.mxu0 0
        %6147 = vmatpush1.bf16.msra.mxu0 0
        %6148 = vmatprep.subr.bf16.mxu0 0
        %6149 = vmatpush1.bf16.msra.mxu0 0
        %6150 = vmatprep.subr.bf16.mxu0 0
        %6151 = vmatpush1.bf16.msra.mxu0 0
        %6152 = vmatprep.subr.bf16.mxu0 0
        %6153 = vmatpush1.bf16.msra.mxu0 0
        %6154 = vmatprep.subr.bf16.mxu0 0
        %6155 = vmatpush1.bf16.msra.mxu0 0
        %6156 = vmatprep.subr.bf16.mxu0 0
        %6157 = vmatpush1.bf16.msra.mxu0 0
        %6158 = vmatprep.subr.bf16.mxu0 0
        %6159 = vmatpush1.bf16.msra.mxu0 0
        %6160 = vmatprep.subr.bf16.mxu0 0
        %6161 = vmatpush1.bf16.msra.mxu0 0
        %6162 = vmatprep.subr.bf16.mxu0 0
        %6163 = vmatpush1.bf16.msra.mxu0 0
        %6164 = vmatprep.subr.bf16.mxu0 0
        %6165 = vmatpush1.bf16.msra.mxu0 0
        %6166 = vmatprep.subr.bf16.mxu0 0
        %6167 = vmatpush1.bf16.msra.mxu0 0
        %6168 = vmatprep.subr.bf16.mxu0 0
        %6169 = vmatpush1.bf16.msra.mxu0 0
        %6170 = vmatprep.subr.bf16.mxu0 0
        %6171 = vmatpush1.bf16.msra.mxu0 0
        %6172 = vmatprep.mubr.bf16.mxu0 0
        %6173 = vmatmul.mubr.bf16.gmra.mrb[0].mxu0 %v6135
        %v6174 = vpop.f32.mrb[0].mxu0
        %v6175 = vadd.f32 %v6132, %v6174
        %v6176 = vpop.f32.mrb[0].mxu0
        %v6177 = vpop.f32.mrb[0].mxu0
        %v6178 = vadd.f32 %v6132, %v6177
        %v6179 = vpop.f32.mrb[0].mxu0
        %6180 = vdwg.mxu0
        %v6181 = vadd.f32 %v5786, %v6175
        %v6182 = vadd.f32 %v5787, %v6178
        %6183 = vst.msk [vmem:[%s1005] sm:$0xff] %vm1025, %v6181
        %6184 = vst.msk [vmem:[%s1005 + $0x8] sm:$0xff] %vm1025, %v6182
        %s6185 = sand.u32 %s752, 1
        %s6186 = scalar_lea.sflag [#allocation3], %s6185
        %s6187 = sand.u32 %s752, 1
        %s6188 = smul.addr %s6187, 32
        %s6189 = scalar_lea.vmem [#allocation2], %s6188
        %s6190 = sand.u32 %s778, 1
        %s6191 = scalar_lea.sflag [#allocation5], %s6190
        %s6192 = sand.u32 %s778, 1
        %s6193 = smul.addr %s6192, 16
        %s6194 = scalar_lea.vmem [#allocation4], %s6193
        // Predicated region
        $region145: #{interaction_block.1} parent=143 // pred_check
          %p6195 = pneg %p762
        $region146: #{interaction_block.1} parent=143 // pred_check_branch
          %6197 = sbr.rel (%p6195) target = $region148
        $region147: #{interaction_block.1} parent=143 // pred_region
          %s6199 = ssub.s32 512, 512
          %6200 = vsyncadd %s6186, %s6199
          %s6201 = smul.addr %s83, 4
          %s6202 = smul.addr %s6201, 128
          %s6203 = scalar_lea.hbm %s63, %s6202
          %s6204 = sshll.u32 %s6189, 4
          %s6205 = int_to_ptr.vmem [resolvable:$true] %s6204
          %6210 = dma.vmem_to_hbm [thread:$0]  %s6205, 512, %s6203, %s6186, 128, 128, 8
        $region148: #{interaction_block.1} parent=143 // pred_fallthru
          _
        // Predicated region
        $region149: #{interaction_block.1} parent=143 // pred_check
          %p6211 = pneg %p788
        $region150: #{interaction_block.1} parent=143 // pred_check_branch
          %6213 = sbr.rel (%p6211) target = $region152
        $region151: #{interaction_block.1} parent=143 // pred_region
          %s6215 = ssub.s32 256, 256
          %6216 = vsyncadd %s6191, %s6215
          %s6217 = smul.addr %s83, 2
          %s6218 = smul.addr %s6217, 128
          %s6219 = scalar_lea.hbm %s65, %s6218
          %s6220 = sshll.u32 %s6194, 4
          %s6221 = int_to_ptr.vmem [resolvable:$true] %s6220
          %6226 = dma.vmem_to_hbm [thread:$0]  %s6221, 256, %s6219, %s6191, 128, 128, 8
        $region152: #{interaction_block.1} parent=143 // pred_fallthru
          _
      $region144: #{interaction_block.1} parent=5 // pred_fallthru
        _
      %p6227 = scmp.le.s32.totalorder 2, %s78
      // Predicated region
      $region153: #{interaction_block.1} parent=5 // pred_check
        %p6228 = pneg %p6227
      $region154: #{interaction_block.1} parent=5 // pred_check_branch
        %6230 = sbr.rel (%p6228) target = $region156
      $region155: #{interaction_block.1} parent=5 // pred_region
        %s6231 = ssub.s32 %s78, 2
        // Predicated region
        $region157: #{interaction_block.1} parent=155 // pred_check
          %p6232 = pneg %p768
        $region158: #{interaction_block.1} parent=155 // pred_check_branch
          %6234 = sbr.rel (%p6232) target = $region160
        $region159: #{interaction_block.1} parent=155 // pred_region
          %s6235 = sand.u32 %s753, 1
          %s6236 = scalar_lea.sflag [#allocation3], %s6235
          %s6237 = sand.u32 %s753, 1
          %s6238 = smul.addr %s6237, 32
          %s6239 = scalar_lea.vmem [#allocation2], %s6238
          %6240 = dma.done %s6236, 512
        $region160: #{interaction_block.1} parent=155 // pred_fallthru
          _
        // Predicated region
        $region161: #{interaction_block.1} parent=155 // pred_check
          %p6241 = pneg %p794
        $region162: #{interaction_block.1} parent=155 // pred_check_branch
          %6243 = sbr.rel (%p6241) target = $region164
        $region163: #{interaction_block.1} parent=155 // pred_region
          %s6244 = sand.u32 %s779, 1
          %s6245 = scalar_lea.sflag [#allocation5], %s6244
          %s6246 = sand.u32 %s779, 1
          %s6247 = smul.addr %s6246, 16
          %s6248 = scalar_lea.vmem [#allocation4], %s6247
          %6249 = dma.done %s6245, 256
        $region164: #{interaction_block.1} parent=155 // pred_fallthru
          _
      $region156: #{interaction_block.1} parent=5 // pred_fallthru
        _
    $region6: #{interaction_block.1} parent=1 // loop_footer
      %s82 = sadd.s32 1, %s78
    $region7: #{interaction_block.1} parent=1 // loop_footer_branch
      %77 = sbr.rel target = $region3
    $region8: #{interaction_block.1} parent=1 // loop_exit
      _
    %6250 = vsyncpa [#allocation3], 1
    %s6251 = scalar_lea.sflag [#allocation3], 1
    %6252 = vsyncpa %s6251, 1
    %6253 = vsyncpa [#allocation5], 1
    %s6254 = scalar_lea.sflag [#allocation5], 1
    %6255 = vsyncpa %s6254, 1

</llo_original>
